<compile_context>
chip_gen: v6e
topology: v6e:2x2x1
jax: 0.10.0
libtpu: 0.0.40
codegen_flags: <defaults>
</compile_context>

<pallas_src>
import numpy as np
import jax
import jax.numpy as jnp
from jax.experimental import pallas as pl
from jax.experimental.pallas import tpu as pltpu


def _round_up(x, m):
    return (x + m - 1) // m * m


def _pick_batch_tile(b):
    """Batch tile: multiple of 8 (sublane tile), <=128, >=2 grid steps once
    there is enough work (v7x megacore).  Tiny batches run as one step."""
    bp = _round_up(b, 8)
    for bt in (128, 64, 32, 16, 8):
        if bp % bt == 0 and bp >= 2 * bt:
            return bt, bp
    return bp, bp


# --------------------- one-time weight preparation (host) -------------------

def _conv_pool_matrices(w_oihw, h_in, w_in, in_order):
    """Per-pool-position dense ("Toeplitz") matrices for a VALID 5x5 conv
    followed by 2x2/stride-2 max-pool.

    Returns float32 (4, C*H*W, Ho*Wo*O); mats[2*pi+pj] maps the flattened
    input (layout `in_order`: "CHW" or "HWC") to the HWC-flattened pre-pool
    conv output sampled at pool-window position (pi, pj).  Taking the max over
    the leading 4, then +bias and ReLU, reproduces conv->ReLU->maxpool exactly
    (bias is per-channel-constant over each window and ReLU is monotone)."""
    w = np.asarray(w_oihw, np.float32)
    o_ch, c_ch, k, _ = w.shape
    hc, wc = h_in - k + 1, w_in - k + 1
    ho, wo = hc // 2, wc // 2
    mats = np.zeros((4, c_ch * h_in * w_in, ho * wo * o_ch), np.float32)
    aa, bb = np.meshgrid(np.arange(ho), np.arange(wo), indexing="ij")
    cols = (aa[:, :, None] * wo + bb[:, :, None]) * o_ch + np.arange(o_ch)
    for pi in range(2):
        for pj in range(2):
            p = 2 * pi + pj
            for c in range(c_ch):
                for ki in range(k):
                    for kj in range(k):
                        hh = 2 * aa + pi + ki
                        ww = 2 * bb + pj + kj
                        if in_order == "CHW":
                            rows = c * h_in * w_in + hh * w_in + ww
                        else:  # "HWC"
                            rows = (hh * w_in + ww) * c_ch + c
                        mats[p, rows[:, :, None], cols] = w[:, c, ki, kj]
    return mats


def prepare_params(p):
    """One-time prep: fold conv+pool into 4 Toeplitz matrices per conv layer,
    fold the torch NCHW-flatten permutation into fc1, cast weights to bf16."""
    w1 = _conv_pool_matrices(p["conv1_w"], 28, 28, "CHW")     # (4, 784, 864)
    w2 = _conv_pool_matrices(p["conv2_w"], 12, 12, "HWC")     # (4, 864, 192)
    # fc1 columns reordered from torch's (c,h,w) flatten to the kernel's (h,w,c).
    fc1 = jnp.transpose(p["fc1_w"].reshape(120, 12, 4, 4), (0, 2, 3, 1))
    fc1 = fc1.reshape(120, 192)
    return {
        "W1": jnp.asarray(w1, jnp.bfloat16),
        "b1": jnp.tile(p["conv1_b"], 12 * 12).reshape(1, 864).astype(jnp.float32),
        "W2": jnp.asarray(w2, jnp.bfloat16),
        "b2": jnp.tile(p["conv2_b"], 4 * 4).reshape(1, 192).astype(jnp.float32),
        "fc1_w": fc1.T.astype(jnp.bfloat16),                  # (192, 120)
        "fc1_b": p["fc1_b"].reshape(1, 120).astype(jnp.float32),
        "fc2_w": p["fc2_w"].T.astype(jnp.bfloat16),            # (120, 60)
        "fc2_b": p["fc2_b"].reshape(1, 60).astype(jnp.float32),
        "out_w": jnp.pad(p["out_w"].T, ((0, 0), (0, 118))).astype(jnp.bfloat16),
        "out_b": jnp.pad(p["out_b"], (0, 118)).reshape(1, 128).astype(jnp.float32),
    }


# ------------------------------ Pallas kernel --------------------------------

def _lenet_kernel(x_ref, w1_ref, b1_ref, w2_ref, b2_ref,
                  wf1_ref, bf1_ref, wf2_ref, bf2_ref, wo_ref, bo_ref, o_ref):
    """Whole network for one batch tile; everything stays in VMEM/vregs."""
    x = x_ref[...]                                            # (BT, 784) bf16

    # conv1 (+bias+ReLU) fused with 2x2 max-pool: max over 4 pool positions.
    m = jnp.dot(x, w1_ref[0], preferred_element_type=jnp.float32)
    for p in range(1, 4):
        m = jnp.maximum(m, jnp.dot(x, w1_ref[p],
                                   preferred_element_type=jnp.float32))
    t = jnp.maximum(m + b1_ref[...], 0.0).astype(jnp.bfloat16)   # (BT, 864)

    # conv2 (+bias+ReLU) fused with 2x2 max-pool.
    m = jnp.dot(t, w2_ref[0], preferred_element_type=jnp.float32)
    for p in range(1, 4):
        m = jnp.maximum(m, jnp.dot(t, w2_ref[p],
                                   preferred_element_type=jnp.float32))
    t = jnp.maximum(m + b2_ref[...], 0.0).astype(jnp.bfloat16)   # (BT, 192)

    # fc1 -> ReLU -> fc2 -> ReLU -> out (intermediates never leave VMEM).
    t = jnp.maximum(jnp.dot(t, wf1_ref[...], preferred_element_type=jnp.float32)
                    + bf1_ref[...], 0.0).astype(jnp.bfloat16)     # (BT, 120)
    t = jnp.maximum(jnp.dot(t, wf2_ref[...], preferred_element_type=jnp.float32)
                    + bf2_ref[...], 0.0).astype(jnp.bfloat16)     # (BT, 60)
    o_ref[...] = jnp.dot(t, wo_ref[...],
                         preferred_element_type=jnp.float32) + bo_ref[...]


def network_forward(pp, x_nchw):
    """pp: prepare_params() output.  x_nchw: (B, 1, 28, 28) f32 -> (B, 10)."""
    B = x_nchw.shape[0]
    x = x_nchw.reshape(B, 784).astype(jnp.bfloat16)   # NCHW C=1 -> free reshape
    BT, Bp = _pick_batch_tile(B)
    if Bp != B:
        x = jnp.pad(x, ((0, Bp - B), (0, 0)))

    cmap2 = lambda i: (0, 0)
    cmap3 = lambda i: (0, 0, 0)
    out = pl.pallas_call(
        _lenet_kernel,
        out_shape=jax.ShapeDtypeStruct((Bp, 128), jnp.float32),
        grid=(Bp // BT,),
        in_specs=[
            pl.BlockSpec((BT, 784), lambda i: (i, 0)),        # x (batch-tiled)
            pl.BlockSpec((4, 784, 864), cmap3),               # conv1+pool maps
            pl.BlockSpec((1, 864), cmap2),                    # conv1 bias
            pl.BlockSpec((4, 864, 192), cmap3),               # conv2+pool maps
            pl.BlockSpec((1, 192), cmap2),                    # conv2 bias
            pl.BlockSpec((192, 120), cmap2),                  # fc1
            pl.BlockSpec((1, 120), cmap2),
            pl.BlockSpec((120, 60), cmap2),                   # fc2
            pl.BlockSpec((1, 60), cmap2),
            pl.BlockSpec((60, 128), cmap2),                   # out (N padded)
            pl.BlockSpec((1, 128), cmap2),
        ],
        out_specs=pl.BlockSpec((BT, 128), lambda i: (i, 0)),
        compiler_params=pltpu.CompilerParams(
            dimension_semantics=("parallel",),
            vmem_limit_bytes=32 * 1024 * 1024),
    )(x, pp["W1"], pp["b1"], pp["W2"], pp["b2"],
      pp["fc1_w"], pp["fc1_b"], pp["fc2_w"], pp["fc2_b"],
      pp["out_w"], pp["out_b"])
    return out[:B, :10]


# ------------------------------- init / reference ----------------------------

def init_params(key):
    """Deterministic PyTorch-style U(-1/sqrt(fan_in), 1/sqrt(fan_in)) init."""
    ks = jax.random.split(key, 10)

    def u(k, shape, fan_in):
        bound = 1.0 / jnp.sqrt(jnp.float32(fan_in))
        return jax.random.uniform(k, shape, jnp.float32, -bound, bound)

    return {
        "conv1_w": u(ks[0], (6, 1, 5, 5), 1 * 25),
        "conv1_b": u(ks[1], (6,), 1 * 25),
        "conv2_w": u(ks[2], (12, 6, 5, 5), 6 * 25),
        "conv2_b": u(ks[3], (12,), 6 * 25),
        "fc1_w": u(ks[4], (120, 12 * 4 * 4), 12 * 4 * 4),
        "fc1_b": u(ks[5], (120,), 12 * 4 * 4),
        "fc2_w": u(ks[6], (60, 120), 120),
        "fc2_b": u(ks[7], (60,), 120),
        "out_w": u(ks[8], (10, 60), 60),
        "out_b": u(ks[9], (10,), 60),
    }


def reference_forward(params, x_nchw):
    dn = ("NCHW", "OIHW", "NCHW")
    t = jax.lax.conv_general_dilated(x_nchw, params["conv1_w"], (1, 1), "VALID",
                                     dimension_numbers=dn)
    t = jax.nn.relu(t + params["conv1_b"][None, :, None, None])
    t = jax.lax.reduce_window(t, -jnp.inf, jax.lax.max, (1, 1, 2, 2),
                              (1, 1, 2, 2), "VALID")
    t = jax.lax.conv_general_dilated(t, params["conv2_w"], (1, 1), "VALID",
                                     dimension_numbers=dn)
    t = jax.nn.relu(t + params["conv2_b"][None, :, None, None])
    t = jax.lax.reduce_window(t, -jnp.inf, jax.lax.max, (1, 1, 2, 2),
                              (1, 1, 2, 2), "VALID")
    t = t.reshape(t.shape[0], -1)
    t = jax.nn.relu(t @ params["fc1_w"].T + params["fc1_b"])
    t = jax.nn.relu(t @ params["fc2_w"].T + params["fc2_b"])
    return t @ params["out_w"].T + params["out_b"]


if __name__ == "__main__":
    key = jax.random.PRNGKey(0)
    pkey, xkey = jax.random.split(key)
    params = init_params(pkey)
    prepped = prepare_params(params)          # one-time weight prep
    fwd = jax.jit(network_forward)

    # B=2 (single grid step) and B=32 (grid=2, exercises the pipelined path).
    for bsz in (2, 32):
        x = jax.random.normal(jax.random.fold_in(xkey, bsz),
                              (bsz, 1, 28, 28), jnp.float32)
        out = jax.block_until_ready(fwd(prepped, x))
        ref = reference_forward(params, x)
        assert out.shape == (bsz, 10), out.shape
        assert bool(jnp.allclose(out, ref, atol=2e-2, rtol=2e-2)), (
            f"Pallas output mismatch vs JAX reference at B={bsz}; "
            f"max abs diff = {float(jnp.max(jnp.abs(out - ref)))}")
    print("KERNEL_OK")
</pallas_src>

<mosaic_0001>
module attributes {stable_mosaic.version = 11 : i64} {
  func.func @_lenet_kernel(%arg0: i32, %arg1: memref<8x784xbf16, #tpu.memory_space<vmem>>, %arg2: memref<4x784x864xbf16, #tpu.memory_space<vmem>>, %arg3: memref<1x864xf32, #tpu.memory_space<vmem>>, %arg4: memref<4x864x192xbf16, #tpu.memory_space<vmem>>, %arg5: memref<1x192xf32, #tpu.memory_space<vmem>>, %arg6: memref<192x120xbf16, #tpu.memory_space<vmem>>, %arg7: memref<1x120xf32, #tpu.memory_space<vmem>>, %arg8: memref<120x60xbf16, #tpu.memory_space<vmem>>, %arg9: memref<1x60xf32, #tpu.memory_space<vmem>>, %arg10: memref<60x128xbf16, #tpu.memory_space<vmem>>, %arg11: memref<1x128xf32, #tpu.memory_space<vmem>>, %arg12: memref<8x128xf32, #tpu.memory_space<vmem>>) attributes {dimension_semantics = [#tpu.dimension_semantics<parallel>], iteration_bounds = array<i64: 1>, scalar_prefetch = 0 : i64, scratch_operands = 0 : i64, tpu.core_type = #tpu.core_type<tc>, window_params = [{transform_indices = @transform_0, window_bounds = array<i64: 8, 784>}, {pipeline_mode = #tpu.pipeline_mode<synchronous>, transform_indices = @transform_1, window_bounds = array<i64: 4, 784, 864>}, {pipeline_mode = #tpu.pipeline_mode<synchronous>, transform_indices = @transform_2, window_bounds = array<i64: 1, 864>}, {pipeline_mode = #tpu.pipeline_mode<synchronous>, transform_indices = @transform_3, window_bounds = array<i64: 4, 864, 192>}, {pipeline_mode = #tpu.pipeline_mode<synchronous>, transform_indices = @transform_4, window_bounds = array<i64: 1, 192>}, {pipeline_mode = #tpu.pipeline_mode<synchronous>, transform_indices = @transform_5, window_bounds = array<i64: 192, 120>}, {pipeline_mode = #tpu.pipeline_mode<synchronous>, transform_indices = @transform_6, window_bounds = array<i64: 1, 120>}, {pipeline_mode = #tpu.pipeline_mode<synchronous>, transform_indices = @transform_7, window_bounds = array<i64: 120, 60>}, {pipeline_mode = #tpu.pipeline_mode<synchronous>, transform_indices = @transform_8, window_bounds = array<i64: 1, 60>}, {pipeline_mode = #tpu.pipeline_mode<synchronous>, transform_indices = @transform_9, window_bounds = array<i64: 60, 128>}, {pipeline_mode = #tpu.pipeline_mode<synchronous>, transform_indices = @transform_10, window_bounds = array<i64: 1, 128>}, {transform_indices = @transform_11, window_bounds = array<i64: 8, 128>}]} {
    %c0 = arith.constant 0 : index
    %c0_0 = arith.constant 0 : index
    %0 = vector.load %arg1[%c0, %c0_0] : memref<8x784xbf16, #tpu.memory_space<vmem>>, vector<8x784xbf16>
    %c0_1 = arith.constant 0 : index
    %c0_2 = arith.constant 0 : index
    %c0_3 = arith.constant 0 : index
    %1 = vector.load %arg2[%c0_1, %c0_2, %c0_3] : memref<4x784x864xbf16, #tpu.memory_space<vmem>>, vector<1x784x864xbf16>
    %2 = vector.shape_cast %1 : vector<1x784x864xbf16> to vector<784x864xbf16>
    %cst = arith.constant dense<0.000000e+00> : vector<8x864xf32>
    %3 = tpu.matmul %0, %2, %cst {dimension_numbers = #tpu.dot_dimension_numbers<[1], [0], [0], [1], [0, 0, 1, 1], [], []>} : vector<8x784xbf16>, vector<784x864xbf16>, vector<8x864xf32> -> vector<8x864xf32>
    %c1 = arith.constant 1 : index
    %c0_4 = arith.constant 0 : index
    %c0_5 = arith.constant 0 : index
    %4 = vector.load %arg2[%c1, %c0_4, %c0_5] : memref<4x784x864xbf16, #tpu.memory_space<vmem>>, vector<1x784x864xbf16>
    %5 = vector.shape_cast %4 : vector<1x784x864xbf16> to vector<784x864xbf16>
    %cst_6 = arith.constant dense<0.000000e+00> : vector<8x864xf32>
    %6 = tpu.matmul %0, %5, %cst_6 {dimension_numbers = #tpu.dot_dimension_numbers<[1], [0], [0], [1], [0, 0, 1, 1], [], []>} : vector<8x784xbf16>, vector<784x864xbf16>, vector<8x864xf32> -> vector<8x864xf32>
    %7 = arith.maximumf %3, %6 : vector<8x864xf32>
    %c2 = arith.constant 2 : index
    %c0_7 = arith.constant 0 : index
    %c0_8 = arith.constant 0 : index
    %8 = vector.load %arg2[%c2, %c0_7, %c0_8] : memref<4x784x864xbf16, #tpu.memory_space<vmem>>, vector<1x784x864xbf16>
    %9 = vector.shape_cast %8 : vector<1x784x864xbf16> to vector<784x864xbf16>
    %cst_9 = arith.constant dense<0.000000e+00> : vector<8x864xf32>
    %10 = tpu.matmul %0, %9, %cst_9 {dimension_numbers = #tpu.dot_dimension_numbers<[1], [0], [0], [1], [0, 0, 1, 1], [], []>} : vector<8x784xbf16>, vector<784x864xbf16>, vector<8x864xf32> -> vector<8x864xf32>
    %11 = arith.maximumf %7, %10 : vector<8x864xf32>
    %c3 = arith.constant 3 : index
    %c0_10 = arith.constant 0 : index
    %c0_11 = arith.constant 0 : index
    %12 = vector.load %arg2[%c3, %c0_10, %c0_11] : memref<4x784x864xbf16, #tpu.memory_space<vmem>>, vector<1x784x864xbf16>
    %13 = vector.shape_cast %12 : vector<1x784x864xbf16> to vector<784x864xbf16>
    %cst_12 = arith.constant dense<0.000000e+00> : vector<8x864xf32>
    %14 = tpu.matmul %0, %13, %cst_12 {dimension_numbers = #tpu.dot_dimension_numbers<[1], [0], [0], [1], [0, 0, 1, 1], [], []>} : vector<8x784xbf16>, vector<784x864xbf16>, vector<8x864xf32> -> vector<8x864xf32>
    %15 = arith.maximumf %11, %14 : vector<8x864xf32>
    %c0_13 = arith.constant 0 : index
    %c0_14 = arith.constant 0 : index
    %16 = vector.load %arg3[%c0_13, %c0_14] : memref<1x864xf32, #tpu.memory_space<vmem>>, vector<1x864xf32>
    %17 = vector.broadcast %16 : vector<1x864xf32> to vector<8x864xf32>
    %18 = arith.addf %15, %17 : vector<8x864xf32>
    %cst_15 = arith.constant 0.000000e+00 : f32
    %19 = vector.broadcast %cst_15 : f32 to vector<8x864xf32>
    %20 = arith.maximumf %18, %19 : vector<8x864xf32>
    %21 = arith.truncf %20 : vector<8x864xf32> to vector<8x864xbf16>
    %c0_16 = arith.constant 0 : index
    %c0_17 = arith.constant 0 : index
    %c0_18 = arith.constant 0 : index
    %22 = vector.load %arg4[%c0_16, %c0_17, %c0_18] : memref<4x864x192xbf16, #tpu.memory_space<vmem>>, vector<1x864x192xbf16>
    %23 = vector.shape_cast %22 : vector<1x864x192xbf16> to vector<864x192xbf16>
    %cst_19 = arith.constant dense<0.000000e+00> : vector<8x192xf32>
    %24 = tpu.matmul %21, %23, %cst_19 {dimension_numbers = #tpu.dot_dimension_numbers<[1], [0], [0], [1], [0, 0, 1, 1], [], []>} : vector<8x864xbf16>, vector<864x192xbf16>, vector<8x192xf32> -> vector<8x192xf32>
    %c1_20 = arith.constant 1 : index
    %c0_21 = arith.constant 0 : index
    %c0_22 = arith.constant 0 : index
    %25 = vector.load %arg4[%c1_20, %c0_21, %c0_22] : memref<4x864x192xbf16, #tpu.memory_space<vmem>>, vector<1x864x192xbf16>
    %26 = vector.shape_cast %25 : vector<1x864x192xbf16> to vector<864x192xbf16>
    %cst_23 = arith.constant dense<0.000000e+00> : vector<8x192xf32>
    %27 = tpu.matmul %21, %26, %cst_23 {dimension_numbers = #tpu.dot_dimension_numbers<[1], [0], [0], [1], [0, 0, 1, 1], [], []>} : vector<8x864xbf16>, vector<864x192xbf16>, vector<8x192xf32> -> vector<8x192xf32>
    %28 = arith.maximumf %24, %27 : vector<8x192xf32>
    %c2_24 = arith.constant 2 : index
    %c0_25 = arith.constant 0 : index
    %c0_26 = arith.constant 0 : index
    %29 = vector.load %arg4[%c2_24, %c0_25, %c0_26] : memref<4x864x192xbf16, #tpu.memory_space<vmem>>, vector<1x864x192xbf16>
    %30 = vector.shape_cast %29 : vector<1x864x192xbf16> to vector<864x192xbf16>
    %cst_27 = arith.constant dense<0.000000e+00> : vector<8x192xf32>
    %31 = tpu.matmul %21, %30, %cst_27 {dimension_numbers = #tpu.dot_dimension_numbers<[1], [0], [0], [1], [0, 0, 1, 1], [], []>} : vector<8x864xbf16>, vector<864x192xbf16>, vector<8x192xf32> -> vector<8x192xf32>
    %32 = arith.maximumf %28, %31 : vector<8x192xf32>
    %c3_28 = arith.constant 3 : index
    %c0_29 = arith.constant 0 : index
    %c0_30 = arith.constant 0 : index
    %33 = vector.load %arg4[%c3_28, %c0_29, %c0_30] : memref<4x864x192xbf16, #tpu.memory_space<vmem>>, vector<1x864x192xbf16>
    %34 = vector.shape_cast %33 : vector<1x864x192xbf16> to vector<864x192xbf16>
    %cst_31 = arith.constant dense<0.000000e+00> : vector<8x192xf32>
    %35 = tpu.matmul %21, %34, %cst_31 {dimension_numbers = #tpu.dot_dimension_numbers<[1], [0], [0], [1], [0, 0, 1, 1], [], []>} : vector<8x864xbf16>, vector<864x192xbf16>, vector<8x192xf32> -> vector<8x192xf32>
    %36 = arith.maximumf %32, %35 : vector<8x192xf32>
    %c0_32 = arith.constant 0 : index
    %c0_33 = arith.constant 0 : index
    %37 = vector.load %arg5[%c0_32, %c0_33] : memref<1x192xf32, #tpu.memory_space<vmem>>, vector<1x192xf32>
    %38 = vector.broadcast %37 : vector<1x192xf32> to vector<8x192xf32>
    %39 = arith.addf %36, %38 : vector<8x192xf32>
    %cst_34 = arith.constant 0.000000e+00 : f32
    %40 = vector.broadcast %cst_34 : f32 to vector<8x192xf32>
    %41 = arith.maximumf %39, %40 : vector<8x192xf32>
    %42 = arith.truncf %41 : vector<8x192xf32> to vector<8x192xbf16>
    %c0_35 = arith.constant 0 : index
    %c0_36 = arith.constant 0 : index
    %43 = vector.load %arg6[%c0_35, %c0_36] : memref<192x120xbf16, #tpu.memory_space<vmem>>, vector<192x120xbf16>
    %cst_37 = arith.constant dense<0.000000e+00> : vector<8x120xf32>
    %44 = tpu.matmul %42, %43, %cst_37 {dimension_numbers = #tpu.dot_dimension_numbers<[1], [0], [0], [1], [0, 0, 1, 1], [], []>} : vector<8x192xbf16>, vector<192x120xbf16>, vector<8x120xf32> -> vector<8x120xf32>
    %c0_38 = arith.constant 0 : index
    %c0_39 = arith.constant 0 : index
    %45 = vector.load %arg7[%c0_38, %c0_39] : memref<1x120xf32, #tpu.memory_space<vmem>>, vector<1x120xf32>
    %46 = vector.broadcast %45 : vector<1x120xf32> to vector<8x120xf32>
    %47 = arith.addf %44, %46 : vector<8x120xf32>
    %cst_40 = arith.constant 0.000000e+00 : f32
    %48 = vector.broadcast %cst_40 : f32 to vector<8x120xf32>
    %49 = arith.maximumf %47, %48 : vector<8x120xf32>
    %50 = arith.truncf %49 : vector<8x120xf32> to vector<8x120xbf16>
    %c0_41 = arith.constant 0 : index
    %c0_42 = arith.constant 0 : index
    %51 = vector.load %arg8[%c0_41, %c0_42] : memref<120x60xbf16, #tpu.memory_space<vmem>>, vector<120x60xbf16>
    %cst_43 = arith.constant dense<0.000000e+00> : vector<8x60xf32>
    %52 = tpu.matmul %50, %51, %cst_43 {dimension_numbers = #tpu.dot_dimension_numbers<[1], [0], [0], [1], [0, 0, 1, 1], [], []>} : vector<8x120xbf16>, vector<120x60xbf16>, vector<8x60xf32> -> vector<8x60xf32>
    %c0_44 = arith.constant 0 : index
    %c0_45 = arith.constant 0 : index
    %53 = vector.load %arg9[%c0_44, %c0_45] : memref<1x60xf32, #tpu.memory_space<vmem>>, vector<1x60xf32>
    %54 = vector.broadcast %53 : vector<1x60xf32> to vector<8x60xf32>
    %55 = arith.addf %52, %54 : vector<8x60xf32>
    %cst_46 = arith.constant 0.000000e+00 : f32
    %56 = vector.broadcast %cst_46 : f32 to vector<8x60xf32>
    %57 = arith.maximumf %55, %56 : vector<8x60xf32>
    %58 = arith.truncf %57 : vector<8x60xf32> to vector<8x60xbf16>
    %c0_47 = arith.constant 0 : index
    %c0_48 = arith.constant 0 : index
    %59 = vector.load %arg10[%c0_47, %c0_48] : memref<60x128xbf16, #tpu.memory_space<vmem>>, vector<60x128xbf16>
    %cst_49 = arith.constant dense<0.000000e+00> : vector<8x128xf32>
    %60 = tpu.matmul %58, %59, %cst_49 {dimension_numbers = #tpu.dot_dimension_numbers<[1], [0], [0], [1], [0, 0, 1, 1], [], []>} : vector<8x60xbf16>, vector<60x128xbf16>, vector<8x128xf32> -> vector<8x128xf32>
    %c0_50 = arith.constant 0 : index
    %c0_51 = arith.constant 0 : index
    %61 = vector.load %arg11[%c0_50, %c0_51] : memref<1x128xf32, #tpu.memory_space<vmem>>, vector<1x128xf32>
    %62 = vector.broadcast %61 : vector<1x128xf32> to vector<8x128xf32>
    %63 = arith.addf %60, %62 : vector<8x128xf32>
    %c0_52 = arith.constant 0 : index
    %c0_53 = arith.constant 0 : index
    %64 = vector.load %arg12[%c0_52, %c0_53] : memref<8x128xf32, #tpu.memory_space<vmem>>, vector<8x128xf32>
    tpu.vector_store %arg12[%c0_52, %c0_53], %63 {strides = array<i32>} : memref<8x128xf32, #tpu.memory_space<vmem>>, vector<8x128xf32>,
    return
  }
  func.func @transform_0(%arg0: i32) -> (i32, i32) {
    %c0_i32 = arith.constant 0 : i32
    %c0_i32_0 = arith.constant 0 : i32
    return %arg0, %c0_i32 : i32, i32
  }
  func.func @transform_1(%arg0: i32) -> (i32, i32, i32) {
    %c0_i32 = arith.constant 0 : i32
    %c0_i32_0 = arith.constant 0 : i32
    %c0_i32_1 = arith.constant 0 : i32
    %c0_i32_2 = arith.constant 0 : i32
    return %c0_i32, %c0_i32_0, %c0_i32_1 : i32, i32, i32
  }
  func.func @transform_2(%arg0: i32) -> (i32, i32) {
    %c0_i32 = arith.constant 0 : i32
    %c0_i32_0 = arith.constant 0 : i32
    %c0_i32_1 = arith.constant 0 : i32
    return %c0_i32, %c0_i32_0 : i32, i32
  }
  func.func @transform_3(%arg0: i32) -> (i32, i32, i32) {
    %c0_i32 = arith.constant 0 : i32
    %c0_i32_0 = arith.constant 0 : i32
    %c0_i32_1 = arith.constant 0 : i32
    %c0_i32_2 = arith.constant 0 : i32
    return %c0_i32, %c0_i32_0, %c0_i32_1 : i32, i32, i32
  }
  func.func @transform_4(%arg0: i32) -> (i32, i32) {
    %c0_i32 = arith.constant 0 : i32
    %c0_i32_0 = arith.constant 0 : i32
    %c0_i32_1 = arith.constant 0 : i32
    return %c0_i32, %c0_i32_0 : i32, i32
  }
  func.func @transform_5(%arg0: i32) -> (i32, i32) {
    %c0_i32 = arith.constant 0 : i32
    %c0_i32_0 = arith.constant 0 : i32
    %c0_i32_1 = arith.constant 0 : i32
    return %c0_i32, %c0_i32_0 : i32, i32
  }
  func.func @transform_6(%arg0: i32) -> (i32, i32) {
    %c0_i32 = arith.constant 0 : i32
    %c0_i32_0 = arith.constant 0 : i32
    %c0_i32_1 = arith.constant 0 : i32
    return %c0_i32, %c0_i32_0 : i32, i32
  }
  func.func @transform_7(%arg0: i32) -> (i32, i32) {
    %c0_i32 = arith.constant 0 : i32
    %c0_i32_0 = arith.constant 0 : i32
    %c0_i32_1 = arith.constant 0 : i32
    return %c0_i32, %c0_i32_0 : i32, i32
  }
  func.func @transform_8(%arg0: i32) -> (i32, i32) {
    %c0_i32 = arith.constant 0 : i32
    %c0_i32_0 = arith.constant 0 : i32
    %c0_i32_1 = arith.constant 0 : i32
    return %c0_i32, %c0_i32_0 : i32, i32
  }
  func.func @transform_9(%arg0: i32) -> (i32, i32) {
    %c0_i32 = arith.constant 0 : i32
    %c0_i32_0 = arith.constant 0 : i32
    %c0_i32_1 = arith.constant 0 : i32
    return %c0_i32, %c0_i32_0 : i32, i32
  }
  func.func @transform_10(%arg0: i32) -> (i32, i32) {
    %c0_i32 = arith.constant 0 : i32
    %c0_i32_0 = arith.constant 0 : i32
    %c0_i32_1 = arith.constant 0 : i32
    return %c0_i32, %c0_i32_0 : i32, i32
  }
  func.func @transform_11(%arg0: i32) -> (i32, i32) {
    %c0_i32 = arith.constant 0 : i32
    %c0_i32_0 = arith.constant 0 : i32
    return %arg0, %c0_i32 : i32, i32
  }
}

</mosaic_0001>

<llo_original>
// kernel: network_forward.1
$region0: #{network_forward.1}
  #allocation0 [shape = 'u32[]', space=smem, size = 0x4, offset = 0x4, fixed_abs, tag = 'smem constant byte address 0x4 - core index']
  #allocation1 [shape = 'u32[144,128]{1,0:T(1,128)}', space=vmem, size = 0x12000, scoped, tag = 'internal scratch']
  %s0 = inlined_call_operand.vmem [shape: bf16[8,784], index: 0, kind: input, shape index: {}]
  %s1 = inlined_call_operand.hbm [shape: bf16[4,784,864], index: 1, kind: input, shape index: {}]
  %s2 = inlined_call_operand.vmem [shape: f32[1,864], index: 2, kind: input, shape index: {}]
  %s3 = inlined_call_operand.vmem [shape: bf16[4,864,192], index: 3, kind: input, shape index: {}]
  %s4 = inlined_call_operand.vmem [shape: f32[1,192], index: 4, kind: input, shape index: {}]
  %s5 = inlined_call_operand.vmem [shape: bf16[192,120], index: 5, kind: input, shape index: {}]
  %s6 = inlined_call_operand.vmem [shape: f32[1,120], index: 6, kind: input, shape index: {}]
  %s7 = inlined_call_operand.vmem [shape: bf16[120,60], index: 7, kind: input, shape index: {}]
  %s8 = inlined_call_operand.vmem [shape: f32[1,60], index: 8, kind: input, shape index: {}]
  %s9 = inlined_call_operand.vmem [shape: bf16[60,128], index: 9, kind: input, shape index: {}]
  %s10 = inlined_call_operand.vmem [shape: f32[1,128], index: 10, kind: input, shape index: {}]
  %s11 = inlined_call_operand.vmem [shape: f32[8,128], index: 11, kind: output, shape index: {}]
  %s12 = sld [smem:[#allocation0]]
  $region58: #{network_forward.1} parent=0
    _
  %s14 = ssub.s32 1, %s12
  %s15 = scalar_select 0, %s14, %s12
  $region1: #{network_forward.1} parent=0
    #allocation2 [shape = 'u8[5619712]{0}', space=vmem, size = 0x55c000, scoped, tag = 'input window, operand 1, single buffered']
    #allocation3 [shape = 's32[1]{0}', space=sflag, size = 0x4, scoped, tag = 'scoped memory for network_forward.1']
    %16 = vsyncpa [#allocation3], 0
    // Predicated region
    $region2: #{network_forward.1} parent=1 // pred_check
      _
    $region3: #{network_forward.1} parent=1 // pred_check_branch
      %18 = sbr.rel (0) target = $region5
    $region4: #{network_forward.1} parent=1 // pred_region
      _
    $region5: #{network_forward.1} parent=1 // pred_fallthru
      _
    // Predicated region
    $region6: #{network_forward.1} parent=1 // pred_check
      _
    $region7: #{network_forward.1} parent=1 // pred_check_branch
      %20 = sbr.rel (0) target = $region9
    $region8: #{network_forward.1} parent=1 // pred_region
      %s22 = ssub.s32 175616, 175616
      %23 = vsyncadd [#allocation3], %s22
      %s24 = sshll.u32 [#allocation2], 4
      %s25 = int_to_ptr.vmem [resolvable:$true] %s24
      %30 = dma.hbm_to_vmem [thread:$0]  %s1, 175616, %s25, [#allocation3], 448, 448, 28
    $region9: #{network_forward.1} parent=1 // pred_fallthru
      _
    // Predicated region
    $region10: #{network_forward.1} parent=1 // pred_check
      _
    $region11: #{network_forward.1} parent=1 // pred_check_branch
      %32 = sbr.rel (0) target = $region13
    $region12: #{network_forward.1} parent=1 // pred_region
      _
    $region13: #{network_forward.1} parent=1 // pred_fallthru
      _
    // Predicated region
    $region14: #{network_forward.1} parent=1 // pred_check
      _
    $region15: #{network_forward.1} parent=1 // pred_check_branch
      %34 = sbr.rel (0) target = $region17
    $region16: #{network_forward.1} parent=1 // pred_region
      _
    $region17: #{network_forward.1} parent=1 // pred_fallthru
      _
    // Predicated region
    $region18: #{network_forward.1} parent=1 // pred_check
      _
    $region19: #{network_forward.1} parent=1 // pred_check_branch
      %36 = sbr.rel (0) target = $region21
    $region20: #{network_forward.1} parent=1 // pred_region
      _
    $region21: #{network_forward.1} parent=1 // pred_fallthru
      _
    // Predicated region
    $region22: #{network_forward.1} parent=1 // pred_check
      _
    $region23: #{network_forward.1} parent=1 // pred_check_branch
      %38 = sbr.rel (0) target = $region25
    $region24: #{network_forward.1} parent=1 // pred_region
      _
    $region25: #{network_forward.1} parent=1 // pred_fallthru
      _
    // Predicated region
    $region26: #{network_forward.1} parent=1 // pred_check
      _
    $region27: #{network_forward.1} parent=1 // pred_check_branch
      %40 = sbr.rel (0) target = $region29
    $region28: #{network_forward.1} parent=1 // pred_region
      _
    $region29: #{network_forward.1} parent=1 // pred_fallthru
      _
    // Predicated region
    $region30: #{network_forward.1} parent=1 // pred_check
      _
    $region31: #{network_forward.1} parent=1 // pred_check_branch
      %42 = sbr.rel (0) target = $region33
    $region32: #{network_forward.1} parent=1 // pred_region
      _
    $region33: #{network_forward.1} parent=1 // pred_fallthru
      _
    // Predicated region
    $region34: #{network_forward.1} parent=1 // pred_check
      _
    $region35: #{network_forward.1} parent=1 // pred_check_branch
      %44 = sbr.rel (0) target = $region37
    $region36: #{network_forward.1} parent=1 // pred_region
      _
    $region37: #{network_forward.1} parent=1 // pred_fallthru
      _
    // Predicated region
    $region38: #{network_forward.1} parent=1 // pred_check
      _
    $region39: #{network_forward.1} parent=1 // pred_check_branch
      %46 = sbr.rel (0) target = $region41
    $region40: #{network_forward.1} parent=1 // pred_region
      _
    $region41: #{network_forward.1} parent=1 // pred_fallthru
      _
    // Predicated region
    $region42: #{network_forward.1} parent=1 // pred_check
      _
    $region43: #{network_forward.1} parent=1 // pred_check_branch
      %48 = sbr.rel (0) target = $region45
    $region44: #{network_forward.1} parent=1 // pred_region
      _
    $region45: #{network_forward.1} parent=1 // pred_fallthru
      _
    // Predicated region
    $region46: #{network_forward.1} parent=1 // pred_check
      _
    $region47: #{network_forward.1} parent=1 // pred_check_branch
      %50 = sbr.rel (0) target = $region49
    $region48: #{network_forward.1} parent=1 // pred_region
      %51 = dma.done [#allocation3], 175616
    $region49: #{network_forward.1} parent=1 // pred_fallthru
      _
    %v53 = vld [vmem:[%s0] sm:$0xff]
    %v54 = vld [vmem:[%s0 + $0x8] sm:$0xff]
    %v55 = vld [vmem:[%s0 + $0x10] sm:$0xff]
    %v56 = vld [vmem:[%s0 + $0x18] sm:$0xf]
    %v57 = vld [vmem:[#allocation2] sm:$0xff]
    %v58 = vld [vmem:[#allocation2 + $0x8] sm:$0xff]
    %v59 = vld [vmem:[#allocation2 + $0x10] sm:$0xff]
    %v60 = vld [vmem:[#allocation2 + $0x18] sm:$0xf]
    %v61 = vld [vmem:[#allocation2 + $0x1c] sm:$0xff]
    %v62 = vld [vmem:[#allocation2 + $0x24] sm:$0xff]
    %v63 = vld [vmem:[#allocation2 + $0x2c] sm:$0xff]
    %v64 = vld [vmem:[#allocation2 + $0x34] sm:$0xf]
    %v65 = vld [vmem:[#allocation2 + $0x38] sm:$0xff]
    %v66 = vld [vmem:[#allocation2 + $0x40] sm:$0xff]
    %v67 = vld [vmem:[#allocation2 + $0x48] sm:$0xff]
    %v68 = vld [vmem:[#allocation2 + $0x50] sm:$0xf]
    %v69 = vld [vmem:[#allocation2 + $0x54] sm:$0xff]
    %v70 = vld [vmem:[#allocation2 + $0x5c] sm:$0xff]
    %v71 = vld [vmem:[#allocation2 + $0x64] sm:$0xff]
    %v72 = vld [vmem:[#allocation2 + $0x6c] sm:$0xf]
    %v73 = vld [vmem:[#allocation2 + $0x70] sm:$0xff]
    %v74 = vld [vmem:[#allocation2 + $0x78] sm:$0xff]
    %v75 = vld [vmem:[#allocation2 + $0x80] sm:$0xff]
    %v76 = vld [vmem:[#allocation2 + $0x88] sm:$0xf]
    %v77 = vld [vmem:[#allocation2 + $0x8c] sm:$0xff]
    %v78 = vld [vmem:[#allocation2 + $0x94] sm:$0xff]
    %v79 = vld [vmem:[#allocation2 + $0x9c] sm:$0xff]
    %v80 = vld [vmem:[#allocation2 + $0xa4] sm:$0xf]
    %v81 = vld [vmem:[#allocation2 + $0xa8] sm:$0xff]
    %v82 = vld [vmem:[#allocation2 + $0xb0] sm:$0xff]
    %v83 = vld [vmem:[#allocation2 + $0xb8] sm:$0xff]
    %v84 = vld [vmem:[#allocation2 + $0xc0] sm:$0xf]
    %v85 = vld [vmem:[#allocation2 + $0xc4] sm:$0xff]
    %v86 = vld [vmem:[#allocation2 + $0xcc] sm:$0xff]
    %v87 = vld [vmem:[#allocation2 + $0xd4] sm:$0xff]
    %v88 = vld [vmem:[#allocation2 + $0xdc] sm:$0xf]
    %v89 = vld [vmem:[#allocation2 + $0xe0] sm:$0xff]
    %v90 = vld [vmem:[#allocation2 + $0xe8] sm:$0xff]
    %v91 = vld [vmem:[#allocation2 + $0xf0] sm:$0xff]
    %v92 = vld [vmem:[#allocation2 + $0xf8] sm:$0xf]
    %v93 = vld [vmem:[#allocation2 + $0xfc] sm:$0xff]
    %v94 = vld [vmem:[#allocation2 + $0x104] sm:$0xff]
    %v95 = vld [vmem:[#allocation2 + $0x10c] sm:$0xff]
    %v96 = vld [vmem:[#allocation2 + $0x114] sm:$0xf]
    %v97 = vld [vmem:[#allocation2 + $0x118] sm:$0xff]
    %v98 = vld [vmem:[#allocation2 + $0x120] sm:$0xff]
    %v99 = vld [vmem:[#allocation2 + $0x128] sm:$0xff]
    %v100 = vld [vmem:[#allocation2 + $0x130] sm:$0xf]
    %v101 = vld [vmem:[#allocation2 + $0x134] sm:$0xff]
    %v102 = vld [vmem:[#allocation2 + $0x13c] sm:$0xff]
    %v103 = vld [vmem:[#allocation2 + $0x144] sm:$0xff]
    %v104 = vld [vmem:[#allocation2 + $0x14c] sm:$0xf]
    %v105 = vld [vmem:[#allocation2 + $0x150] sm:$0xff]
    %v106 = vld [vmem:[#allocation2 + $0x158] sm:$0xff]
    %v107 = vld [vmem:[#allocation2 + $0x160] sm:$0xff]
    %v108 = vld [vmem:[#allocation2 + $0x168] sm:$0xf]
    %v109 = vld [vmem:[#allocation2 + $0x16c] sm:$0xff]
    %v110 = vld [vmem:[#allocation2 + $0x174] sm:$0xff]
    %v111 = vld [vmem:[#allocation2 + $0x17c] sm:$0xff]
    %v112 = vld [vmem:[#allocation2 + $0x184] sm:$0xf]
    %v113 = vld [vmem:[#allocation2 + $0x188] sm:$0xff]
    %v114 = vld [vmem:[#allocation2 + $0x190] sm:$0xff]
    %v115 = vld [vmem:[#allocation2 + $0x198] sm:$0xff]
    %v116 = vld [vmem:[#allocation2 + $0x1a0] sm:$0xf]
    %v117 = vld [vmem:[#allocation2 + $0x1a4] sm:$0xff]
    %v118 = vld [vmem:[#allocation2 + $0x1ac] sm:$0xff]
    %v119 = vld [vmem:[#allocation2 + $0x1b4] sm:$0xff]
    %v120 = vld [vmem:[#allocation2 + $0x1bc] sm:$0xf]
    %v121 = vld [vmem:[#allocation2 + $0x1c0] sm:$0xff]
    %v122 = vld [vmem:[#allocation2 + $0x1c8] sm:$0xff]
    %v123 = vld [vmem:[#allocation2 + $0x1d0] sm:$0xff]
    %v124 = vld [vmem:[#allocation2 + $0x1d8] sm:$0xf]
    %v125 = vld [vmem:[#allocation2 + $0x1dc] sm:$0xff]
    %v126 = vld [vmem:[#allocation2 + $0x1e4] sm:$0xff]
    %v127 = vld [vmem:[#allocation2 + $0x1ec] sm:$0xff]
    %v128 = vld [vmem:[#allocation2 + $0x1f4] sm:$0xf]
    %v129 = vld [vmem:[#allocation2 + $0x1f8] sm:$0xff]
    %v130 = vld [vmem:[#allocation2 + $0x200] sm:$0xff]
    %v131 = vld [vmem:[#allocation2 + $0x208] sm:$0xff]
    %v132 = vld [vmem:[#allocation2 + $0x210] sm:$0xf]
    %v133 = vld [vmem:[#allocation2 + $0x214] sm:$0xff]
    %v134 = vld [vmem:[#allocation2 + $0x21c] sm:$0xff]
    %v135 = vld [vmem:[#allocation2 + $0x224] sm:$0xff]
    %v136 = vld [vmem:[#allocation2 + $0x22c] sm:$0xf]
    %v137 = vld [vmem:[#allocation2 + $0x230] sm:$0xff]
    %v138 = vld [vmem:[#allocation2 + $0x238] sm:$0xff]
    %v139 = vld [vmem:[#allocation2 + $0x240] sm:$0xff]
    %v140 = vld [vmem:[#allocation2 + $0x248] sm:$0xf]
    %v141 = vld [vmem:[#allocation2 + $0x24c] sm:$0xff]
    %v142 = vld [vmem:[#allocation2 + $0x254] sm:$0xff]
    %v143 = vld [vmem:[#allocation2 + $0x25c] sm:$0xff]
    %v144 = vld [vmem:[#allocation2 + $0x264] sm:$0xf]
    %v145 = vld [vmem:[#allocation2 + $0x268] sm:$0xff]
    %v146 = vld [vmem:[#allocation2 + $0x270] sm:$0xff]
    %v147 = vld [vmem:[#allocation2 + $0x278] sm:$0xff]
    %v148 = vld [vmem:[#allocation2 + $0x280] sm:$0xf]
    %v149 = vld [vmem:[#allocation2 + $0x284] sm:$0xff]
    %v150 = vld [vmem:[#allocation2 + $0x28c] sm:$0xff]
    %v151 = vld [vmem:[#allocation2 + $0x294] sm:$0xff]
    %v152 = vld [vmem:[#allocation2 + $0x29c] sm:$0xf]
    %v153 = vld [vmem:[#allocation2 + $0x2a0] sm:$0xff]
    %v154 = vld [vmem:[#allocation2 + $0x2a8] sm:$0xff]
    %v155 = vld [vmem:[#allocation2 + $0x2b0] sm:$0xff]
    %v156 = vld [vmem:[#allocation2 + $0x2b8] sm:$0xf]
    %v157 = vld [vmem:[#allocation2 + $0x2bc] sm:$0xff]
    %v158 = vld [vmem:[#allocation2 + $0x2c4] sm:$0xff]
    %v159 = vld [vmem:[#allocation2 + $0x2cc] sm:$0xff]
    %v160 = vld [vmem:[#allocation2 + $0x2d4] sm:$0xf]
    %v161 = vld [vmem:[#allocation2 + $0x2d8] sm:$0xff]
    %v162 = vld [vmem:[#allocation2 + $0x2e0] sm:$0xff]
    %v163 = vld [vmem:[#allocation2 + $0x2e8] sm:$0xff]
    %v164 = vld [vmem:[#allocation2 + $0x2f0] sm:$0xf]
    %v165 = vld [vmem:[#allocation2 + $0x2f4] sm:$0xff]
    %v166 = vld [vmem:[#allocation2 + $0x2fc] sm:$0xff]
    %v167 = vld [vmem:[#allocation2 + $0x304] sm:$0xff]
    %v168 = vld [vmem:[#allocation2 + $0x30c] sm:$0xf]
    %v169 = vld [vmem:[#allocation2 + $0x310] sm:$0xff]
    %v170 = vld [vmem:[#allocation2 + $0x318] sm:$0xff]
    %v171 = vld [vmem:[#allocation2 + $0x320] sm:$0xff]
    %v172 = vld [vmem:[#allocation2 + $0x328] sm:$0xf]
    %v173 = vld [vmem:[#allocation2 + $0x32c] sm:$0xff]
    %v174 = vld [vmem:[#allocation2 + $0x334] sm:$0xff]
    %v175 = vld [vmem:[#allocation2 + $0x33c] sm:$0xff]
    %v176 = vld [vmem:[#allocation2 + $0x344] sm:$0xf]
    %v177 = vld [vmem:[#allocation2 + $0x348] sm:$0xff]
    %v178 = vld [vmem:[#allocation2 + $0x350] sm:$0xff]
    %v179 = vld [vmem:[#allocation2 + $0x358] sm:$0xff]
    %v180 = vld [vmem:[#allocation2 + $0x360] sm:$0xf]
    %v181 = vld [vmem:[#allocation2 + $0x364] sm:$0xff]
    %v182 = vld [vmem:[#allocation2 + $0x36c] sm:$0xff]
    %v183 = vld [vmem:[#allocation2 + $0x374] sm:$0xff]
    %v184 = vld [vmem:[#allocation2 + $0x37c] sm:$0xf]
    %v185 = vld [vmem:[#allocation2 + $0x380] sm:$0xff]
    %v186 = vld [vmem:[#allocation2 + $0x388] sm:$0xff]
    %v187 = vld [vmem:[#allocation2 + $0x390] sm:$0xff]
    %v188 = vld [vmem:[#allocation2 + $0x398] sm:$0xf]
    %v189 = vld [vmem:[#allocation2 + $0x39c] sm:$0xff]
    %v190 = vld [vmem:[#allocation2 + $0x3a4] sm:$0xff]
    %v191 = vld [vmem:[#allocation2 + $0x3ac] sm:$0xff]
    %v192 = vld [vmem:[#allocation2 + $0x3b4] sm:$0xf]
    %v193 = vld [vmem:[#allocation2 + $0x3b8] sm:$0xff]
    %v194 = vld [vmem:[#allocation2 + $0x3c0] sm:$0xff]
    %v195 = vld [vmem:[#allocation2 + $0x3c8] sm:$0xff]
    %v196 = vld [vmem:[#allocation2 + $0x3d0] sm:$0xf]
    %v197 = vld [vmem:[#allocation2 + $0x3d4] sm:$0xff]
    %v198 = vld [vmem:[#allocation2 + $0x3dc] sm:$0xff]
    %v199 = vld [vmem:[#allocation2 + $0x3e4] sm:$0xff]
    %v200 = vld [vmem:[#allocation2 + $0x3ec] sm:$0xf]
    %v201 = vld [vmem:[#allocation2 + $0x3f0] sm:$0xff]
    %v202 = vld [vmem:[#allocation2 + $0x3f8] sm:$0xff]
    %v203 = vld [vmem:[#allocation2 + $0x400] sm:$0xff]
    %v204 = vld [vmem:[#allocation2 + $0x408] sm:$0xf]
    %v205 = vld [vmem:[#allocation2 + $0x40c] sm:$0xff]
    %v206 = vld [vmem:[#allocation2 + $0x414] sm:$0xff]
    %v207 = vld [vmem:[#allocation2 + $0x41c] sm:$0xff]
    %v208 = vld [vmem:[#allocation2 + $0x424] sm:$0xf]
    %v209 = vld [vmem:[#allocation2 + $0x428] sm:$0xff]
    %v210 = vld [vmem:[#allocation2 + $0x430] sm:$0xff]
    %v211 = vld [vmem:[#allocation2 + $0x438] sm:$0xff]
    %v212 = vld [vmem:[#allocation2 + $0x440] sm:$0xf]
    %v213 = vld [vmem:[#allocation2 + $0x444] sm:$0xff]
    %v214 = vld [vmem:[#allocation2 + $0x44c] sm:$0xff]
    %v215 = vld [vmem:[#allocation2 + $0x454] sm:$0xff]
    %v216 = vld [vmem:[#allocation2 + $0x45c] sm:$0xf]
    %v217 = vld [vmem:[#allocation2 + $0x460] sm:$0xff]
    %v218 = vld [vmem:[#allocation2 + $0x468] sm:$0xff]
    %v219 = vld [vmem:[#allocation2 + $0x470] sm:$0xff]
    %v220 = vld [vmem:[#allocation2 + $0x478] sm:$0xf]
    %v221 = vld [vmem:[#allocation2 + $0x47c] sm:$0xff]
    %v222 = vld [vmem:[#allocation2 + $0x484] sm:$0xff]
    %v223 = vld [vmem:[#allocation2 + $0x48c] sm:$0xff]
    %v224 = vld [vmem:[#allocation2 + $0x494] sm:$0xf]
    %v225 = vld [vmem:[#allocation2 + $0x498] sm:$0xff]
    %v226 = vld [vmem:[#allocation2 + $0x4a0] sm:$0xff]
    %v227 = vld [vmem:[#allocation2 + $0x4a8] sm:$0xff]
    %v228 = vld [vmem:[#allocation2 + $0x4b0] sm:$0xf]
    %v229 = vld [vmem:[#allocation2 + $0x4b4] sm:$0xff]
    %v230 = vld [vmem:[#allocation2 + $0x4bc] sm:$0xff]
    %v231 = vld [vmem:[#allocation2 + $0x4c4] sm:$0xff]
    %v232 = vld [vmem:[#allocation2 + $0x4cc] sm:$0xf]
    %v233 = vld [vmem:[#allocation2 + $0x4d0] sm:$0xff]
    %v234 = vld [vmem:[#allocation2 + $0x4d8] sm:$0xff]
    %v235 = vld [vmem:[#allocation2 + $0x4e0] sm:$0xff]
    %v236 = vld [vmem:[#allocation2 + $0x4e8] sm:$0xf]
    %v237 = vld [vmem:[#allocation2 + $0x4ec] sm:$0xff]
    %v238 = vld [vmem:[#allocation2 + $0x4f4] sm:$0xff]
    %v239 = vld [vmem:[#allocation2 + $0x4fc] sm:$0xff]
    %v240 = vld [vmem:[#allocation2 + $0x504] sm:$0xf]
    %v241 = vld [vmem:[#allocation2 + $0x508] sm:$0xff]
    %v242 = vld [vmem:[#allocation2 + $0x510] sm:$0xff]
    %v243 = vld [vmem:[#allocation2 + $0x518] sm:$0xff]
    %v244 = vld [vmem:[#allocation2 + $0x520] sm:$0xf]
    %v245 = vld [vmem:[#allocation2 + $0x524] sm:$0xff]
    %v246 = vld [vmem:[#allocation2 + $0x52c] sm:$0xff]
    %v247 = vld [vmem:[#allocation2 + $0x534] sm:$0xff]
    %v248 = vld [vmem:[#allocation2 + $0x53c] sm:$0xf]
    %v249 = vld [vmem:[#allocation2 + $0x540] sm:$0xff]
    %v250 = vld [vmem:[#allocation2 + $0x548] sm:$0xff]
    %v251 = vld [vmem:[#allocation2 + $0x550] sm:$0xff]
    %v252 = vld [vmem:[#allocation2 + $0x558] sm:$0xf]
    %v253 = vld [vmem:[#allocation2 + $0x55c] sm:$0xff]
    %v254 = vld [vmem:[#allocation2 + $0x564] sm:$0xff]
    %v255 = vld [vmem:[#allocation2 + $0x56c] sm:$0xff]
    %v256 = vld [vmem:[#allocation2 + $0x574] sm:$0xf]
    %v257 = vld [vmem:[#allocation2 + $0x578] sm:$0xff]
    %v258 = vld [vmem:[#allocation2 + $0x580] sm:$0xff]
    %v259 = vld [vmem:[#allocation2 + $0x588] sm:$0xff]
    %v260 = vld [vmem:[#allocation2 + $0x590] sm:$0xf]
    %v261 = vld [vmem:[#allocation2 + $0x594] sm:$0xff]
    %v262 = vld [vmem:[#allocation2 + $0x59c] sm:$0xff]
    %v263 = vld [vmem:[#allocation2 + $0x5a4] sm:$0xff]
    %v264 = vld [vmem:[#allocation2 + $0x5ac] sm:$0xf]
    %v265 = vld [vmem:[#allocation2 + $0x5b0] sm:$0xff]
    %v266 = vld [vmem:[#allocation2 + $0x5b8] sm:$0xff]
    %v267 = vld [vmem:[#allocation2 + $0x5c0] sm:$0xff]
    %v268 = vld [vmem:[#allocation2 + $0x5c8] sm:$0xf]
    %v269 = vld [vmem:[#allocation2 + $0x5cc] sm:$0xff]
    %v270 = vld [vmem:[#allocation2 + $0x5d4] sm:$0xff]
    %v271 = vld [vmem:[#allocation2 + $0x5dc] sm:$0xff]
    %v272 = vld [vmem:[#allocation2 + $0x5e4] sm:$0xf]
    %v273 = vld [vmem:[#allocation2 + $0x5e8] sm:$0xff]
    %v274 = vld [vmem:[#allocation2 + $0x5f0] sm:$0xff]
    %v275 = vld [vmem:[#allocation2 + $0x5f8] sm:$0xff]
    %v276 = vld [vmem:[#allocation2 + $0x600] sm:$0xf]
    %v277 = vld [vmem:[#allocation2 + $0x604] sm:$0xff]
    %v278 = vld [vmem:[#allocation2 + $0x60c] sm:$0xff]
    %v279 = vld [vmem:[#allocation2 + $0x614] sm:$0xff]
    %v280 = vld [vmem:[#allocation2 + $0x61c] sm:$0xf]
    %v281 = vld [vmem:[#allocation2 + $0x620] sm:$0xff]
    %v282 = vld [vmem:[#allocation2 + $0x628] sm:$0xff]
    %v283 = vld [vmem:[#allocation2 + $0x630] sm:$0xff]
    %v284 = vld [vmem:[#allocation2 + $0x638] sm:$0xf]
    %v285 = vld [vmem:[#allocation2 + $0x63c] sm:$0xff]
    %v286 = vld [vmem:[#allocation2 + $0x644] sm:$0xff]
    %v287 = vld [vmem:[#allocation2 + $0x64c] sm:$0xff]
    %v288 = vld [vmem:[#allocation2 + $0x654] sm:$0xf]
    %v289 = vld [vmem:[#allocation2 + $0x658] sm:$0xff]
    %v290 = vld [vmem:[#allocation2 + $0x660] sm:$0xff]
    %v291 = vld [vmem:[#allocation2 + $0x668] sm:$0xff]
    %v292 = vld [vmem:[#allocation2 + $0x670] sm:$0xf]
    %v293 = vld [vmem:[#allocation2 + $0x674] sm:$0xff]
    %v294 = vld [vmem:[#allocation2 + $0x67c] sm:$0xff]
    %v295 = vld [vmem:[#allocation2 + $0x684] sm:$0xff]
    %v296 = vld [vmem:[#allocation2 + $0x68c] sm:$0xf]
    %v297 = vld [vmem:[#allocation2 + $0x690] sm:$0xff]
    %v298 = vld [vmem:[#allocation2 + $0x698] sm:$0xff]
    %v299 = vld [vmem:[#allocation2 + $0x6a0] sm:$0xff]
    %v300 = vld [vmem:[#allocation2 + $0x6a8] sm:$0xf]
    %v301 = vld [vmem:[#allocation2 + $0x6ac] sm:$0xff]
    %v302 = vld [vmem:[#allocation2 + $0x6b4] sm:$0xff]
    %v303 = vld [vmem:[#allocation2 + $0x6bc] sm:$0xff]
    %v304 = vld [vmem:[#allocation2 + $0x6c4] sm:$0xf]
    %v305 = vld [vmem:[#allocation2 + $0x6c8] sm:$0xff]
    %v306 = vld [vmem:[#allocation2 + $0x6d0] sm:$0xff]
    %v307 = vld [vmem:[#allocation2 + $0x6d8] sm:$0xff]
    %v308 = vld [vmem:[#allocation2 + $0x6e0] sm:$0xf]
    %v309 = vld [vmem:[#allocation2 + $0x6e4] sm:$0xff]
    %v310 = vld [vmem:[#allocation2 + $0x6ec] sm:$0xff]
    %v311 = vld [vmem:[#allocation2 + $0x6f4] sm:$0xff]
    %v312 = vld [vmem:[#allocation2 + $0x6fc] sm:$0xf]
    %v313 = vld [vmem:[#allocation2 + $0x700] sm:$0xff]
    %v314 = vld [vmem:[#allocation2 + $0x708] sm:$0xff]
    %v315 = vld [vmem:[#allocation2 + $0x710] sm:$0xff]
    %v316 = vld [vmem:[#allocation2 + $0x718] sm:$0xf]
    %v317 = vld [vmem:[#allocation2 + $0x71c] sm:$0xff]
    %v318 = vld [vmem:[#allocation2 + $0x724] sm:$0xff]
    %v319 = vld [vmem:[#allocation2 + $0x72c] sm:$0xff]
    %v320 = vld [vmem:[#allocation2 + $0x734] sm:$0xf]
    %v321 = vld [vmem:[#allocation2 + $0x738] sm:$0xff]
    %v322 = vld [vmem:[#allocation2 + $0x740] sm:$0xff]
    %v323 = vld [vmem:[#allocation2 + $0x748] sm:$0xff]
    %v324 = vld [vmem:[#allocation2 + $0x750] sm:$0xf]
    %v325 = vld [vmem:[#allocation2 + $0x754] sm:$0xff]
    %v326 = vld [vmem:[#allocation2 + $0x75c] sm:$0xff]
    %v327 = vld [vmem:[#allocation2 + $0x764] sm:$0xff]
    %v328 = vld [vmem:[#allocation2 + $0x76c] sm:$0xf]
    %v329 = vld [vmem:[#allocation2 + $0x770] sm:$0xff]
    %v330 = vld [vmem:[#allocation2 + $0x778] sm:$0xff]
    %v331 = vld [vmem:[#allocation2 + $0x780] sm:$0xff]
    %v332 = vld [vmem:[#allocation2 + $0x788] sm:$0xf]
    %v333 = vld [vmem:[#allocation2 + $0x78c] sm:$0xff]
    %v334 = vld [vmem:[#allocation2 + $0x794] sm:$0xff]
    %v335 = vld [vmem:[#allocation2 + $0x79c] sm:$0xff]
    %v336 = vld [vmem:[#allocation2 + $0x7a4] sm:$0xf]
    %v337 = vld [vmem:[#allocation2 + $0x7a8] sm:$0xff]
    %v338 = vld [vmem:[#allocation2 + $0x7b0] sm:$0xff]
    %v339 = vld [vmem:[#allocation2 + $0x7b8] sm:$0xff]
    %v340 = vld [vmem:[#allocation2 + $0x7c0] sm:$0xf]
    %v341 = vld [vmem:[#allocation2 + $0x7c4] sm:$0xff]
    %v342 = vld [vmem:[#allocation2 + $0x7cc] sm:$0xff]
    %v343 = vld [vmem:[#allocation2 + $0x7d4] sm:$0xff]
    %v344 = vld [vmem:[#allocation2 + $0x7dc] sm:$0xf]
    %v345 = vld [vmem:[#allocation2 + $0x7e0] sm:$0xff]
    %v346 = vld [vmem:[#allocation2 + $0x7e8] sm:$0xff]
    %v347 = vld [vmem:[#allocation2 + $0x7f0] sm:$0xff]
    %v348 = vld [vmem:[#allocation2 + $0x7f8] sm:$0xf]
    %v349 = vld [vmem:[#allocation2 + $0x7fc] sm:$0xff]
    %v350 = vld [vmem:[#allocation2 + $0x804] sm:$0xff]
    %v351 = vld [vmem:[#allocation2 + $0x80c] sm:$0xff]
    %v352 = vld [vmem:[#allocation2 + $0x814] sm:$0xf]
    %v353 = vld [vmem:[#allocation2 + $0x818] sm:$0xff]
    %v354 = vld [vmem:[#allocation2 + $0x820] sm:$0xff]
    %v355 = vld [vmem:[#allocation2 + $0x828] sm:$0xff]
    %v356 = vld [vmem:[#allocation2 + $0x830] sm:$0xf]
    %v357 = vld [vmem:[#allocation2 + $0x834] sm:$0xff]
    %v358 = vld [vmem:[#allocation2 + $0x83c] sm:$0xff]
    %v359 = vld [vmem:[#allocation2 + $0x844] sm:$0xff]
    %v360 = vld [vmem:[#allocation2 + $0x84c] sm:$0xf]
    %v361 = vld [vmem:[#allocation2 + $0x850] sm:$0xff]
    %v362 = vld [vmem:[#allocation2 + $0x858] sm:$0xff]
    %v363 = vld [vmem:[#allocation2 + $0x860] sm:$0xff]
    %v364 = vld [vmem:[#allocation2 + $0x868] sm:$0xf]
    %v365 = vld [vmem:[#allocation2 + $0x86c] sm:$0xff]
    %v366 = vld [vmem:[#allocation2 + $0x874] sm:$0xff]
    %v367 = vld [vmem:[#allocation2 + $0x87c] sm:$0xff]
    %v368 = vld [vmem:[#allocation2 + $0x884] sm:$0xf]
    %v369 = vld [vmem:[#allocation2 + $0x888] sm:$0xff]
    %v370 = vld [vmem:[#allocation2 + $0x890] sm:$0xff]
    %v371 = vld [vmem:[#allocation2 + $0x898] sm:$0xff]
    %v372 = vld [vmem:[#allocation2 + $0x8a0] sm:$0xf]
    %v373 = vld [vmem:[#allocation2 + $0x8a4] sm:$0xff]
    %v374 = vld [vmem:[#allocation2 + $0x8ac] sm:$0xff]
    %v375 = vld [vmem:[#allocation2 + $0x8b4] sm:$0xff]
    %v376 = vld [vmem:[#allocation2 + $0x8bc] sm:$0xf]
    %v377 = vld [vmem:[#allocation2 + $0x8c0] sm:$0xff]
    %v378 = vld [vmem:[#allocation2 + $0x8c8] sm:$0xff]
    %v379 = vld [vmem:[#allocation2 + $0x8d0] sm:$0xff]
    %v380 = vld [vmem:[#allocation2 + $0x8d8] sm:$0xf]
    %v381 = vld [vmem:[#allocation2 + $0x8dc] sm:$0xff]
    %v382 = vld [vmem:[#allocation2 + $0x8e4] sm:$0xff]
    %v383 = vld [vmem:[#allocation2 + $0x8ec] sm:$0xff]
    %v384 = vld [vmem:[#allocation2 + $0x8f4] sm:$0xf]
    %v385 = vld [vmem:[#allocation2 + $0x8f8] sm:$0xff]
    %v386 = vld [vmem:[#allocation2 + $0x900] sm:$0xff]
    %v387 = vld [vmem:[#allocation2 + $0x908] sm:$0xff]
    %v388 = vld [vmem:[#allocation2 + $0x910] sm:$0xf]
    %v389 = vld [vmem:[#allocation2 + $0x914] sm:$0xff]
    %v390 = vld [vmem:[#allocation2 + $0x91c] sm:$0xff]
    %v391 = vld [vmem:[#allocation2 + $0x924] sm:$0xff]
    %v392 = vld [vmem:[#allocation2 + $0x92c] sm:$0xf]
    %v393 = vld [vmem:[#allocation2 + $0x930] sm:$0xff]
    %v394 = vld [vmem:[#allocation2 + $0x938] sm:$0xff]
    %v395 = vld [vmem:[#allocation2 + $0x940] sm:$0xff]
    %v396 = vld [vmem:[#allocation2 + $0x948] sm:$0xf]
    %v397 = vld [vmem:[#allocation2 + $0x94c] sm:$0xff]
    %v398 = vld [vmem:[#allocation2 + $0x954] sm:$0xff]
    %v399 = vld [vmem:[#allocation2 + $0x95c] sm:$0xff]
    %v400 = vld [vmem:[#allocation2 + $0x964] sm:$0xf]
    %v401 = vld [vmem:[#allocation2 + $0x968] sm:$0xff]
    %v402 = vld [vmem:[#allocation2 + $0x970] sm:$0xff]
    %v403 = vld [vmem:[#allocation2 + $0x978] sm:$0xff]
    %v404 = vld [vmem:[#allocation2 + $0x980] sm:$0xf]
    %v405 = vld [vmem:[#allocation2 + $0x984] sm:$0xff]
    %v406 = vld [vmem:[#allocation2 + $0x98c] sm:$0xff]
    %v407 = vld [vmem:[#allocation2 + $0x994] sm:$0xff]
    %v408 = vld [vmem:[#allocation2 + $0x99c] sm:$0xf]
    %v409 = vld [vmem:[#allocation2 + $0x9a0] sm:$0xff]
    %v410 = vld [vmem:[#allocation2 + $0x9a8] sm:$0xff]
    %v411 = vld [vmem:[#allocation2 + $0x9b0] sm:$0xff]
    %v412 = vld [vmem:[#allocation2 + $0x9b8] sm:$0xf]
    %v413 = vld [vmem:[#allocation2 + $0x9bc] sm:$0xff]
    %v414 = vld [vmem:[#allocation2 + $0x9c4] sm:$0xff]
    %v415 = vld [vmem:[#allocation2 + $0x9cc] sm:$0xff]
    %v416 = vld [vmem:[#allocation2 + $0x9d4] sm:$0xf]
    %v417 = vld [vmem:[#allocation2 + $0x9d8] sm:$0xff]
    %v418 = vld [vmem:[#allocation2 + $0x9e0] sm:$0xff]
    %v419 = vld [vmem:[#allocation2 + $0x9e8] sm:$0xff]
    %v420 = vld [vmem:[#allocation2 + $0x9f0] sm:$0xf]
    %v421 = vld [vmem:[#allocation2 + $0x9f4] sm:$0xff]
    %v422 = vld [vmem:[#allocation2 + $0x9fc] sm:$0xff]
    %v423 = vld [vmem:[#allocation2 + $0xa04] sm:$0xff]
    %v424 = vld [vmem:[#allocation2 + $0xa0c] sm:$0xf]
    %v425 = vld [vmem:[#allocation2 + $0xa10] sm:$0xff]
    %v426 = vld [vmem:[#allocation2 + $0xa18] sm:$0xff]
    %v427 = vld [vmem:[#allocation2 + $0xa20] sm:$0xff]
    %v428 = vld [vmem:[#allocation2 + $0xa28] sm:$0xf]
    %v429 = vld [vmem:[#allocation2 + $0xa2c] sm:$0xff]
    %v430 = vld [vmem:[#allocation2 + $0xa34] sm:$0xff]
    %v431 = vld [vmem:[#allocation2 + $0xa3c] sm:$0xff]
    %v432 = vld [vmem:[#allocation2 + $0xa44] sm:$0xf]
    %v433 = vld [vmem:[#allocation2 + $0xa48] sm:$0xff]
    %v434 = vld [vmem:[#allocation2 + $0xa50] sm:$0xff]
    %v435 = vld [vmem:[#allocation2 + $0xa58] sm:$0xff]
    %v436 = vld [vmem:[#allocation2 + $0xa60] sm:$0xf]
    %v437 = vld [vmem:[#allocation2 + $0xa64] sm:$0xff]
    %v438 = vld [vmem:[#allocation2 + $0xa6c] sm:$0xff]
    %v439 = vld [vmem:[#allocation2 + $0xa74] sm:$0xff]
    %v440 = vld [vmem:[#allocation2 + $0xa7c] sm:$0xf]
    %v441 = vld [vmem:[#allocation2 + $0xa80] sm:$0xff]
    %v442 = vld [vmem:[#allocation2 + $0xa88] sm:$0xff]
    %v443 = vld [vmem:[#allocation2 + $0xa90] sm:$0xff]
    %v444 = vld [vmem:[#allocation2 + $0xa98] sm:$0xf]
    %v445 = vld [vmem:[#allocation2 + $0xa9c] sm:$0xff]
    %v446 = vld [vmem:[#allocation2 + $0xaa4] sm:$0xff]
    %v447 = vld [vmem:[#allocation2 + $0xaac] sm:$0xff]
    %v448 = vld [vmem:[#allocation2 + $0xab4] sm:$0xf]
    %v453 = vunpack.c.l.b16 %v53
    %v454 = vunpack.c.h.b16 %v53
    %v455 = vunpack.c.l.b16 %v54
    %v456 = vunpack.c.h.b16 %v54
    %v457 = vunpack.c.l.b16 %v55
    %v458 = vunpack.c.h.b16 %v55
    %v459 = vunpack.c.l.b16 %v56
    %v460 = vpack.c.b16 %v453, %v453
    %v461 = vpack.c.b16 %v454, %v454
    %v462 = vpack.c.b16 %v455, %v455
    %v463 = vpack.c.b16 %v456, %v456
    %v464 = vpack.c.b16 %v457, %v457
    %v465 = vpack.c.b16 %v458, %v458
    %v466 = vpack.c.b16 %v459, %v459
    %v865 = vunpack.c.l.b16 %v57
    %v866 = vunpack.c.h.b16 %v57
    %v867 = vunpack.c.l.b16 %v58
    %v868 = vunpack.c.h.b16 %v58
    %v869 = vunpack.c.l.b16 %v59
    %v870 = vunpack.c.h.b16 %v59
    %v871 = vunpack.c.l.b16 %v60
    %v872 = vunpack.c.l.b16 %v61
    %v873 = vunpack.c.h.b16 %v61
    %v874 = vunpack.c.l.b16 %v62
    %v875 = vunpack.c.h.b16 %v62
    %v876 = vunpack.c.l.b16 %v63
    %v877 = vunpack.c.h.b16 %v63
    %v878 = vunpack.c.l.b16 %v64
    %v879 = vunpack.c.l.b16 %v65
    %v880 = vunpack.c.h.b16 %v65
    %v881 = vunpack.c.l.b16 %v66
    %v882 = vunpack.c.h.b16 %v66
    %v883 = vunpack.c.l.b16 %v67
    %v884 = vunpack.c.h.b16 %v67
    %v885 = vunpack.c.l.b16 %v68
    %v886 = vunpack.c.l.b16 %v69
    %v887 = vunpack.c.h.b16 %v69
    %v888 = vunpack.c.l.b16 %v70
    %v889 = vunpack.c.h.b16 %v70
    %v890 = vunpack.c.l.b16 %v71
    %v891 = vunpack.c.h.b16 %v71
    %v892 = vunpack.c.l.b16 %v72
    %v893 = vunpack.c.l.b16 %v73
    %v894 = vunpack.c.h.b16 %v73
    %v895 = vunpack.c.l.b16 %v74
    %v896 = vunpack.c.h.b16 %v74
    %v897 = vunpack.c.l.b16 %v75
    %v898 = vunpack.c.h.b16 %v75
    %v899 = vunpack.c.l.b16 %v76
    %v900 = vunpack.c.l.b16 %v77
    %v901 = vunpack.c.h.b16 %v77
    %v902 = vunpack.c.l.b16 %v78
    %v903 = vunpack.c.h.b16 %v78
    %v904 = vunpack.c.l.b16 %v79
    %v905 = vunpack.c.h.b16 %v79
    %v906 = vunpack.c.l.b16 %v80
    %v907 = vunpack.c.l.b16 %v81
    %v908 = vunpack.c.h.b16 %v81
    %v909 = vunpack.c.l.b16 %v82
    %v910 = vunpack.c.h.b16 %v82
    %v911 = vunpack.c.l.b16 %v83
    %v912 = vunpack.c.h.b16 %v83
    %v913 = vunpack.c.l.b16 %v84
    %v914 = vunpack.c.l.b16 %v85
    %v915 = vunpack.c.h.b16 %v85
    %v916 = vunpack.c.l.b16 %v86
    %v917 = vunpack.c.h.b16 %v86
    %v918 = vunpack.c.l.b16 %v87
    %v919 = vunpack.c.h.b16 %v87
    %v920 = vunpack.c.l.b16 %v88
    %v921 = vunpack.c.l.b16 %v89
    %v922 = vunpack.c.h.b16 %v89
    %v923 = vunpack.c.l.b16 %v90
    %v924 = vunpack.c.h.b16 %v90
    %v925 = vunpack.c.l.b16 %v91
    %v926 = vunpack.c.h.b16 %v91
    %v927 = vunpack.c.l.b16 %v92
    %v928 = vunpack.c.l.b16 %v93
    %v929 = vunpack.c.h.b16 %v93
    %v930 = vunpack.c.l.b16 %v94
    %v931 = vunpack.c.h.b16 %v94
    %v932 = vunpack.c.l.b16 %v95
    %v933 = vunpack.c.h.b16 %v95
    %v934 = vunpack.c.l.b16 %v96
    %v935 = vunpack.c.l.b16 %v97
    %v936 = vunpack.c.h.b16 %v97
    %v937 = vunpack.c.l.b16 %v98
    %v938 = vunpack.c.h.b16 %v98
    %v939 = vunpack.c.l.b16 %v99
    %v940 = vunpack.c.h.b16 %v99
    %v941 = vunpack.c.l.b16 %v100
    %v942 = vunpack.c.l.b16 %v101
    %v943 = vunpack.c.h.b16 %v101
    %v944 = vunpack.c.l.b16 %v102
    %v945 = vunpack.c.h.b16 %v102
    %v946 = vunpack.c.l.b16 %v103
    %v947 = vunpack.c.h.b16 %v103
    %v948 = vunpack.c.l.b16 %v104
    %v949 = vunpack.c.l.b16 %v105
    %v950 = vunpack.c.h.b16 %v105
    %v951 = vunpack.c.l.b16 %v106
    %v952 = vunpack.c.h.b16 %v106
    %v953 = vunpack.c.l.b16 %v107
    %v954 = vunpack.c.h.b16 %v107
    %v955 = vunpack.c.l.b16 %v108
    %v956 = vunpack.c.l.b16 %v109
    %v957 = vunpack.c.h.b16 %v109
    %v958 = vunpack.c.l.b16 %v110
    %v959 = vunpack.c.h.b16 %v110
    %v960 = vunpack.c.l.b16 %v111
    %v961 = vunpack.c.h.b16 %v111
    %v962 = vunpack.c.l.b16 %v112
    %v963 = vunpack.c.l.b16 %v113
    %v964 = vunpack.c.h.b16 %v113
    %v965 = vunpack.c.l.b16 %v114
    %v966 = vunpack.c.h.b16 %v114
    %v967 = vunpack.c.l.b16 %v115
    %v968 = vunpack.c.h.b16 %v115
    %v969 = vunpack.c.l.b16 %v116
    %v970 = vunpack.c.l.b16 %v117
    %v971 = vunpack.c.h.b16 %v117
    %v972 = vunpack.c.l.b16 %v118
    %v973 = vunpack.c.h.b16 %v118
    %v974 = vunpack.c.l.b16 %v119
    %v975 = vunpack.c.h.b16 %v119
    %v976 = vunpack.c.l.b16 %v120
    %v977 = vunpack.c.l.b16 %v121
    %v978 = vunpack.c.h.b16 %v121
    %v979 = vunpack.c.l.b16 %v122
    %v980 = vunpack.c.h.b16 %v122
    %v981 = vunpack.c.l.b16 %v123
    %v982 = vunpack.c.h.b16 %v123
    %v983 = vunpack.c.l.b16 %v124
    %v984 = vunpack.c.l.b16 %v125
    %v985 = vunpack.c.h.b16 %v125
    %v986 = vunpack.c.l.b16 %v126
    %v987 = vunpack.c.h.b16 %v126
    %v988 = vunpack.c.l.b16 %v127
    %v989 = vunpack.c.h.b16 %v127
    %v990 = vunpack.c.l.b16 %v128
    %v991 = vunpack.c.l.b16 %v129
    %v992 = vunpack.c.h.b16 %v129
    %v993 = vunpack.c.l.b16 %v130
    %v994 = vunpack.c.h.b16 %v130
    %v995 = vunpack.c.l.b16 %v131
    %v996 = vunpack.c.h.b16 %v131
    %v997 = vunpack.c.l.b16 %v132
    %v998 = vunpack.c.l.b16 %v133
    %v999 = vunpack.c.h.b16 %v133
    %v1000 = vunpack.c.l.b16 %v134
    %v1001 = vunpack.c.h.b16 %v134
    %v1002 = vunpack.c.l.b16 %v135
    %v1003 = vunpack.c.h.b16 %v135
    %v1004 = vunpack.c.l.b16 %v136
    %v1005 = vunpack.c.l.b16 %v137
    %v1006 = vunpack.c.h.b16 %v137
    %v1007 = vunpack.c.l.b16 %v138
    %v1008 = vunpack.c.h.b16 %v138
    %v1009 = vunpack.c.l.b16 %v139
    %v1010 = vunpack.c.h.b16 %v139
    %v1011 = vunpack.c.l.b16 %v140
    %v1012 = vunpack.c.l.b16 %v141
    %v1013 = vunpack.c.h.b16 %v141
    %v1014 = vunpack.c.l.b16 %v142
    %v1015 = vunpack.c.h.b16 %v142
    %v1016 = vunpack.c.l.b16 %v143
    %v1017 = vunpack.c.h.b16 %v143
    %v1018 = vunpack.c.l.b16 %v144
    %v1019 = vunpack.c.l.b16 %v145
    %v1020 = vunpack.c.h.b16 %v145
    %v1021 = vunpack.c.l.b16 %v146
    %v1022 = vunpack.c.h.b16 %v146
    %v1023 = vunpack.c.l.b16 %v147
    %v1024 = vunpack.c.h.b16 %v147
    %v1025 = vunpack.c.l.b16 %v148
    %v1026 = vunpack.c.l.b16 %v149
    %v1027 = vunpack.c.h.b16 %v149
    %v1028 = vunpack.c.l.b16 %v150
    %v1029 = vunpack.c.h.b16 %v150
    %v1030 = vunpack.c.l.b16 %v151
    %v1031 = vunpack.c.h.b16 %v151
    %v1032 = vunpack.c.l.b16 %v152
    %v1033 = vunpack.c.l.b16 %v153
    %v1034 = vunpack.c.h.b16 %v153
    %v1035 = vunpack.c.l.b16 %v154
    %v1036 = vunpack.c.h.b16 %v154
    %v1037 = vunpack.c.l.b16 %v155
    %v1038 = vunpack.c.h.b16 %v155
    %v1039 = vunpack.c.l.b16 %v156
    %v1040 = vunpack.c.l.b16 %v157
    %v1041 = vunpack.c.h.b16 %v157
    %v1042 = vunpack.c.l.b16 %v158
    %v1043 = vunpack.c.h.b16 %v158
    %v1044 = vunpack.c.l.b16 %v159
    %v1045 = vunpack.c.h.b16 %v159
    %v1046 = vunpack.c.l.b16 %v160
    %v1047 = vunpack.c.l.b16 %v161
    %v1048 = vunpack.c.h.b16 %v161
    %v1049 = vunpack.c.l.b16 %v162
    %v1050 = vunpack.c.h.b16 %v162
    %v1051 = vunpack.c.l.b16 %v163
    %v1052 = vunpack.c.h.b16 %v163
    %v1053 = vunpack.c.l.b16 %v164
    %v1054 = vunpack.c.l.b16 %v165
    %v1055 = vunpack.c.h.b16 %v165
    %v1056 = vunpack.c.l.b16 %v166
    %v1057 = vunpack.c.h.b16 %v166
    %v1058 = vunpack.c.l.b16 %v167
    %v1059 = vunpack.c.h.b16 %v167
    %v1060 = vunpack.c.l.b16 %v168
    %v1061 = vunpack.c.l.b16 %v169
    %v1062 = vunpack.c.h.b16 %v169
    %v1063 = vunpack.c.l.b16 %v170
    %v1064 = vunpack.c.h.b16 %v170
    %v1065 = vunpack.c.l.b16 %v171
    %v1066 = vunpack.c.h.b16 %v171
    %v1067 = vunpack.c.l.b16 %v172
    %v1068 = vunpack.c.l.b16 %v173
    %v1069 = vunpack.c.h.b16 %v173
    %v1070 = vunpack.c.l.b16 %v174
    %v1071 = vunpack.c.h.b16 %v174
    %v1072 = vunpack.c.l.b16 %v175
    %v1073 = vunpack.c.h.b16 %v175
    %v1074 = vunpack.c.l.b16 %v176
    %v1075 = vunpack.c.l.b16 %v177
    %v1076 = vunpack.c.h.b16 %v177
    %v1077 = vunpack.c.l.b16 %v178
    %v1078 = vunpack.c.h.b16 %v178
    %v1079 = vunpack.c.l.b16 %v179
    %v1080 = vunpack.c.h.b16 %v179
    %v1081 = vunpack.c.l.b16 %v180
    %v1082 = vunpack.c.l.b16 %v181
    %v1083 = vunpack.c.h.b16 %v181
    %v1084 = vunpack.c.l.b16 %v182
    %v1085 = vunpack.c.h.b16 %v182
    %v1086 = vunpack.c.l.b16 %v183
    %v1087 = vunpack.c.h.b16 %v183
    %v1088 = vunpack.c.l.b16 %v184
    %v1089 = vunpack.c.l.b16 %v185
    %v1090 = vunpack.c.h.b16 %v185
    %v1091 = vunpack.c.l.b16 %v186
    %v1092 = vunpack.c.h.b16 %v186
    %v1093 = vunpack.c.l.b16 %v187
    %v1094 = vunpack.c.h.b16 %v187
    %v1095 = vunpack.c.l.b16 %v188
    %v1096 = vunpack.c.l.b16 %v189
    %v1097 = vunpack.c.h.b16 %v189
    %v1098 = vunpack.c.l.b16 %v190
    %v1099 = vunpack.c.h.b16 %v190
    %v1100 = vunpack.c.l.b16 %v191
    %v1101 = vunpack.c.h.b16 %v191
    %v1102 = vunpack.c.l.b16 %v192
    %v1103 = vunpack.c.l.b16 %v193
    %v1104 = vunpack.c.h.b16 %v193
    %v1105 = vunpack.c.l.b16 %v194
    %v1106 = vunpack.c.h.b16 %v194
    %v1107 = vunpack.c.l.b16 %v195
    %v1108 = vunpack.c.h.b16 %v195
    %v1109 = vunpack.c.l.b16 %v196
    %v1110 = vunpack.c.l.b16 %v197
    %v1111 = vunpack.c.h.b16 %v197
    %v1112 = vunpack.c.l.b16 %v198
    %v1113 = vunpack.c.h.b16 %v198
    %v1114 = vunpack.c.l.b16 %v199
    %v1115 = vunpack.c.h.b16 %v199
    %v1116 = vunpack.c.l.b16 %v200
    %v1117 = vunpack.c.l.b16 %v201
    %v1118 = vunpack.c.h.b16 %v201
    %v1119 = vunpack.c.l.b16 %v202
    %v1120 = vunpack.c.h.b16 %v202
    %v1121 = vunpack.c.l.b16 %v203
    %v1122 = vunpack.c.h.b16 %v203
    %v1123 = vunpack.c.l.b16 %v204
    %v1124 = vunpack.c.l.b16 %v205
    %v1125 = vunpack.c.h.b16 %v205
    %v1126 = vunpack.c.l.b16 %v206
    %v1127 = vunpack.c.h.b16 %v206
    %v1128 = vunpack.c.l.b16 %v207
    %v1129 = vunpack.c.h.b16 %v207
    %v1130 = vunpack.c.l.b16 %v208
    %v1131 = vunpack.c.l.b16 %v209
    %v1132 = vunpack.c.h.b16 %v209
    %v1133 = vunpack.c.l.b16 %v210
    %v1134 = vunpack.c.h.b16 %v210
    %v1135 = vunpack.c.l.b16 %v211
    %v1136 = vunpack.c.h.b16 %v211
    %v1137 = vunpack.c.l.b16 %v212
    %v1138 = vunpack.c.l.b16 %v213
    %v1139 = vunpack.c.h.b16 %v213
    %v1140 = vunpack.c.l.b16 %v214
    %v1141 = vunpack.c.h.b16 %v214
    %v1142 = vunpack.c.l.b16 %v215
    %v1143 = vunpack.c.h.b16 %v215
    %v1144 = vunpack.c.l.b16 %v216
    %v1145 = vunpack.c.l.b16 %v217
    %v1146 = vunpack.c.h.b16 %v217
    %v1147 = vunpack.c.l.b16 %v218
    %v1148 = vunpack.c.h.b16 %v218
    %v1149 = vunpack.c.l.b16 %v219
    %v1150 = vunpack.c.h.b16 %v219
    %v1151 = vunpack.c.l.b16 %v220
    %v1152 = vunpack.c.l.b16 %v221
    %v1153 = vunpack.c.h.b16 %v221
    %v1154 = vunpack.c.l.b16 %v222
    %v1155 = vunpack.c.h.b16 %v222
    %v1156 = vunpack.c.l.b16 %v223
    %v1157 = vunpack.c.h.b16 %v223
    %v1158 = vunpack.c.l.b16 %v224
    %v1159 = vunpack.c.l.b16 %v225
    %v1160 = vunpack.c.h.b16 %v225
    %v1161 = vunpack.c.l.b16 %v226
    %v1162 = vunpack.c.h.b16 %v226
    %v1163 = vunpack.c.l.b16 %v227
    %v1164 = vunpack.c.h.b16 %v227
    %v1165 = vunpack.c.l.b16 %v228
    %v1166 = vunpack.c.l.b16 %v229
    %v1167 = vunpack.c.h.b16 %v229
    %v1168 = vunpack.c.l.b16 %v230
    %v1169 = vunpack.c.h.b16 %v230
    %v1170 = vunpack.c.l.b16 %v231
    %v1171 = vunpack.c.h.b16 %v231
    %v1172 = vunpack.c.l.b16 %v232
    %v1173 = vunpack.c.l.b16 %v233
    %v1174 = vunpack.c.h.b16 %v233
    %v1175 = vunpack.c.l.b16 %v234
    %v1176 = vunpack.c.h.b16 %v234
    %v1177 = vunpack.c.l.b16 %v235
    %v1178 = vunpack.c.h.b16 %v235
    %v1179 = vunpack.c.l.b16 %v236
    %v1180 = vunpack.c.l.b16 %v237
    %v1181 = vunpack.c.h.b16 %v237
    %v1182 = vunpack.c.l.b16 %v238
    %v1183 = vunpack.c.h.b16 %v238
    %v1184 = vunpack.c.l.b16 %v239
    %v1185 = vunpack.c.h.b16 %v239
    %v1186 = vunpack.c.l.b16 %v240
    %v1187 = vunpack.c.l.b16 %v241
    %v1188 = vunpack.c.h.b16 %v241
    %v1189 = vunpack.c.l.b16 %v242
    %v1190 = vunpack.c.h.b16 %v242
    %v1191 = vunpack.c.l.b16 %v243
    %v1192 = vunpack.c.h.b16 %v243
    %v1193 = vunpack.c.l.b16 %v244
    %v1194 = vunpack.c.l.b16 %v245
    %v1195 = vunpack.c.h.b16 %v245
    %v1196 = vunpack.c.l.b16 %v246
    %v1197 = vunpack.c.h.b16 %v246
    %v1198 = vunpack.c.l.b16 %v247
    %v1199 = vunpack.c.h.b16 %v247
    %v1200 = vunpack.c.l.b16 %v248
    %v1201 = vunpack.c.l.b16 %v249
    %v1202 = vunpack.c.h.b16 %v249
    %v1203 = vunpack.c.l.b16 %v250
    %v1204 = vunpack.c.h.b16 %v250
    %v1205 = vunpack.c.l.b16 %v251
    %v1206 = vunpack.c.h.b16 %v251
    %v1207 = vunpack.c.l.b16 %v252
    %v1208 = vunpack.c.l.b16 %v253
    %v1209 = vunpack.c.h.b16 %v253
    %v1210 = vunpack.c.l.b16 %v254
    %v1211 = vunpack.c.h.b16 %v254
    %v1212 = vunpack.c.l.b16 %v255
    %v1213 = vunpack.c.h.b16 %v255
    %v1214 = vunpack.c.l.b16 %v256
    %v1215 = vunpack.c.l.b16 %v257
    %v1216 = vunpack.c.h.b16 %v257
    %v1217 = vunpack.c.l.b16 %v258
    %v1218 = vunpack.c.h.b16 %v258
    %v1219 = vunpack.c.l.b16 %v259
    %v1220 = vunpack.c.h.b16 %v259
    %v1221 = vunpack.c.l.b16 %v260
    %v1222 = vunpack.c.l.b16 %v261
    %v1223 = vunpack.c.h.b16 %v261
    %v1224 = vunpack.c.l.b16 %v262
    %v1225 = vunpack.c.h.b16 %v262
    %v1226 = vunpack.c.l.b16 %v263
    %v1227 = vunpack.c.h.b16 %v263
    %v1228 = vunpack.c.l.b16 %v264
    %v1229 = vunpack.c.l.b16 %v265
    %v1230 = vunpack.c.h.b16 %v265
    %v1231 = vunpack.c.l.b16 %v266
    %v1232 = vunpack.c.h.b16 %v266
    %v1233 = vunpack.c.l.b16 %v267
    %v1234 = vunpack.c.h.b16 %v267
    %v1235 = vunpack.c.l.b16 %v268
    %v1236 = vunpack.c.l.b16 %v269
    %v1237 = vunpack.c.h.b16 %v269
    %v1238 = vunpack.c.l.b16 %v270
    %v1239 = vunpack.c.h.b16 %v270
    %v1240 = vunpack.c.l.b16 %v271
    %v1241 = vunpack.c.h.b16 %v271
    %v1242 = vunpack.c.l.b16 %v272
    %v1243 = vunpack.c.l.b16 %v273
    %v1244 = vunpack.c.h.b16 %v273
    %v1245 = vunpack.c.l.b16 %v274
    %v1246 = vunpack.c.h.b16 %v274
    %v1247 = vunpack.c.l.b16 %v275
    %v1248 = vunpack.c.h.b16 %v275
    %v1249 = vunpack.c.l.b16 %v276
    %v1250 = vunpack.c.l.b16 %v277
    %v1251 = vunpack.c.h.b16 %v277
    %v1252 = vunpack.c.l.b16 %v278
    %v1253 = vunpack.c.h.b16 %v278
    %v1254 = vunpack.c.l.b16 %v279
    %v1255 = vunpack.c.h.b16 %v279
    %v1256 = vunpack.c.l.b16 %v280
    %v1257 = vunpack.c.l.b16 %v281
    %v1258 = vunpack.c.h.b16 %v281
    %v1259 = vunpack.c.l.b16 %v282
    %v1260 = vunpack.c.h.b16 %v282
    %v1261 = vunpack.c.l.b16 %v283
    %v1262 = vunpack.c.h.b16 %v283
    %v1263 = vunpack.c.l.b16 %v284
    %v1264 = vunpack.c.l.b16 %v285
    %v1265 = vunpack.c.h.b16 %v285
    %v1266 = vunpack.c.l.b16 %v286
    %v1267 = vunpack.c.h.b16 %v286
    %v1268 = vunpack.c.l.b16 %v287
    %v1269 = vunpack.c.h.b16 %v287
    %v1270 = vunpack.c.l.b16 %v288
    %v1271 = vunpack.c.l.b16 %v289
    %v1272 = vunpack.c.h.b16 %v289
    %v1273 = vunpack.c.l.b16 %v290
    %v1274 = vunpack.c.h.b16 %v290
    %v1275 = vunpack.c.l.b16 %v291
    %v1276 = vunpack.c.h.b16 %v291
    %v1277 = vunpack.c.l.b16 %v292
    %v1278 = vunpack.c.l.b16 %v293
    %v1279 = vunpack.c.h.b16 %v293
    %v1280 = vunpack.c.l.b16 %v294
    %v1281 = vunpack.c.h.b16 %v294
    %v1282 = vunpack.c.l.b16 %v295
    %v1283 = vunpack.c.h.b16 %v295
    %v1284 = vunpack.c.l.b16 %v296
    %v1285 = vunpack.c.l.b16 %v297
    %v1286 = vunpack.c.h.b16 %v297
    %v1287 = vunpack.c.l.b16 %v298
    %v1288 = vunpack.c.h.b16 %v298
    %v1289 = vunpack.c.l.b16 %v299
    %v1290 = vunpack.c.h.b16 %v299
    %v1291 = vunpack.c.l.b16 %v300
    %v1292 = vunpack.c.l.b16 %v301
    %v1293 = vunpack.c.h.b16 %v301
    %v1294 = vunpack.c.l.b16 %v302
    %v1295 = vunpack.c.h.b16 %v302
    %v1296 = vunpack.c.l.b16 %v303
    %v1297 = vunpack.c.h.b16 %v303
    %v1298 = vunpack.c.l.b16 %v304
    %v1299 = vunpack.c.l.b16 %v305
    %v1300 = vunpack.c.h.b16 %v305
    %v1301 = vunpack.c.l.b16 %v306
    %v1302 = vunpack.c.h.b16 %v306
    %v1303 = vunpack.c.l.b16 %v307
    %v1304 = vunpack.c.h.b16 %v307
    %v1305 = vunpack.c.l.b16 %v308
    %v1306 = vunpack.c.l.b16 %v309
    %v1307 = vunpack.c.h.b16 %v309
    %v1308 = vunpack.c.l.b16 %v310
    %v1309 = vunpack.c.h.b16 %v310
    %v1310 = vunpack.c.l.b16 %v311
    %v1311 = vunpack.c.h.b16 %v311
    %v1312 = vunpack.c.l.b16 %v312
    %v1313 = vunpack.c.l.b16 %v313
    %v1314 = vunpack.c.h.b16 %v313
    %v1315 = vunpack.c.l.b16 %v314
    %v1316 = vunpack.c.h.b16 %v314
    %v1317 = vunpack.c.l.b16 %v315
    %v1318 = vunpack.c.h.b16 %v315
    %v1319 = vunpack.c.l.b16 %v316
    %v1320 = vunpack.c.l.b16 %v317
    %v1321 = vunpack.c.h.b16 %v317
    %v1322 = vunpack.c.l.b16 %v318
    %v1323 = vunpack.c.h.b16 %v318
    %v1324 = vunpack.c.l.b16 %v319
    %v1325 = vunpack.c.h.b16 %v319
    %v1326 = vunpack.c.l.b16 %v320
    %v1327 = vunpack.c.l.b16 %v321
    %v1328 = vunpack.c.h.b16 %v321
    %v1329 = vunpack.c.l.b16 %v322
    %v1330 = vunpack.c.h.b16 %v322
    %v1331 = vunpack.c.l.b16 %v323
    %v1332 = vunpack.c.h.b16 %v323
    %v1333 = vunpack.c.l.b16 %v324
    %v1334 = vunpack.c.l.b16 %v325
    %v1335 = vunpack.c.h.b16 %v325
    %v1336 = vunpack.c.l.b16 %v326
    %v1337 = vunpack.c.h.b16 %v326
    %v1338 = vunpack.c.l.b16 %v327
    %v1339 = vunpack.c.h.b16 %v327
    %v1340 = vunpack.c.l.b16 %v328
    %v1341 = vunpack.c.l.b16 %v329
    %v1342 = vunpack.c.h.b16 %v329
    %v1343 = vunpack.c.l.b16 %v330
    %v1344 = vunpack.c.h.b16 %v330
    %v1345 = vunpack.c.l.b16 %v331
    %v1346 = vunpack.c.h.b16 %v331
    %v1347 = vunpack.c.l.b16 %v332
    %v1348 = vunpack.c.l.b16 %v333
    %v1349 = vunpack.c.h.b16 %v333
    %v1350 = vunpack.c.l.b16 %v334
    %v1351 = vunpack.c.h.b16 %v334
    %v1352 = vunpack.c.l.b16 %v335
    %v1353 = vunpack.c.h.b16 %v335
    %v1354 = vunpack.c.l.b16 %v336
    %v1355 = vunpack.c.l.b16 %v337
    %v1356 = vunpack.c.h.b16 %v337
    %v1357 = vunpack.c.l.b16 %v338
    %v1358 = vunpack.c.h.b16 %v338
    %v1359 = vunpack.c.l.b16 %v339
    %v1360 = vunpack.c.h.b16 %v339
    %v1361 = vunpack.c.l.b16 %v340
    %v1362 = vunpack.c.l.b16 %v341
    %v1363 = vunpack.c.h.b16 %v341
    %v1364 = vunpack.c.l.b16 %v342
    %v1365 = vunpack.c.h.b16 %v342
    %v1366 = vunpack.c.l.b16 %v343
    %v1367 = vunpack.c.h.b16 %v343
    %v1368 = vunpack.c.l.b16 %v344
    %v1369 = vunpack.c.l.b16 %v345
    %v1370 = vunpack.c.h.b16 %v345
    %v1371 = vunpack.c.l.b16 %v346
    %v1372 = vunpack.c.h.b16 %v346
    %v1373 = vunpack.c.l.b16 %v347
    %v1374 = vunpack.c.h.b16 %v347
    %v1375 = vunpack.c.l.b16 %v348
    %v1376 = vunpack.c.l.b16 %v349
    %v1377 = vunpack.c.h.b16 %v349
    %v1378 = vunpack.c.l.b16 %v350
    %v1379 = vunpack.c.h.b16 %v350
    %v1380 = vunpack.c.l.b16 %v351
    %v1381 = vunpack.c.h.b16 %v351
    %v1382 = vunpack.c.l.b16 %v352
    %v1383 = vunpack.c.l.b16 %v353
    %v1384 = vunpack.c.h.b16 %v353
    %v1385 = vunpack.c.l.b16 %v354
    %v1386 = vunpack.c.h.b16 %v354
    %v1387 = vunpack.c.l.b16 %v355
    %v1388 = vunpack.c.h.b16 %v355
    %v1389 = vunpack.c.l.b16 %v356
    %v1390 = vunpack.c.l.b16 %v357
    %v1391 = vunpack.c.h.b16 %v357
    %v1392 = vunpack.c.l.b16 %v358
    %v1393 = vunpack.c.h.b16 %v358
    %v1394 = vunpack.c.l.b16 %v359
    %v1395 = vunpack.c.h.b16 %v359
    %v1396 = vunpack.c.l.b16 %v360
    %v1397 = vunpack.c.l.b16 %v361
    %v1398 = vunpack.c.h.b16 %v361
    %v1399 = vunpack.c.l.b16 %v362
    %v1400 = vunpack.c.h.b16 %v362
    %v1401 = vunpack.c.l.b16 %v363
    %v1402 = vunpack.c.h.b16 %v363
    %v1403 = vunpack.c.l.b16 %v364
    %v1404 = vunpack.c.l.b16 %v365
    %v1405 = vunpack.c.h.b16 %v365
    %v1406 = vunpack.c.l.b16 %v366
    %v1407 = vunpack.c.h.b16 %v366
    %v1408 = vunpack.c.l.b16 %v367
    %v1409 = vunpack.c.h.b16 %v367
    %v1410 = vunpack.c.l.b16 %v368
    %v1411 = vunpack.c.l.b16 %v369
    %v1412 = vunpack.c.h.b16 %v369
    %v1413 = vunpack.c.l.b16 %v370
    %v1414 = vunpack.c.h.b16 %v370
    %v1415 = vunpack.c.l.b16 %v371
    %v1416 = vunpack.c.h.b16 %v371
    %v1417 = vunpack.c.l.b16 %v372
    %v1418 = vunpack.c.l.b16 %v373
    %v1419 = vunpack.c.h.b16 %v373
    %v1420 = vunpack.c.l.b16 %v374
    %v1421 = vunpack.c.h.b16 %v374
    %v1422 = vunpack.c.l.b16 %v375
    %v1423 = vunpack.c.h.b16 %v375
    %v1424 = vunpack.c.l.b16 %v376
    %v1425 = vunpack.c.l.b16 %v377
    %v1426 = vunpack.c.h.b16 %v377
    %v1427 = vunpack.c.l.b16 %v378
    %v1428 = vunpack.c.h.b16 %v378
    %v1429 = vunpack.c.l.b16 %v379
    %v1430 = vunpack.c.h.b16 %v379
    %v1431 = vunpack.c.l.b16 %v380
    %v1432 = vunpack.c.l.b16 %v381
    %v1433 = vunpack.c.h.b16 %v381
    %v1434 = vunpack.c.l.b16 %v382
    %v1435 = vunpack.c.h.b16 %v382
    %v1436 = vunpack.c.l.b16 %v383
    %v1437 = vunpack.c.h.b16 %v383
    %v1438 = vunpack.c.l.b16 %v384
    %v1439 = vunpack.c.l.b16 %v385
    %v1440 = vunpack.c.h.b16 %v385
    %v1441 = vunpack.c.l.b16 %v386
    %v1442 = vunpack.c.h.b16 %v386
    %v1443 = vunpack.c.l.b16 %v387
    %v1444 = vunpack.c.h.b16 %v387
    %v1445 = vunpack.c.l.b16 %v388
    %v1446 = vunpack.c.l.b16 %v389
    %v1447 = vunpack.c.h.b16 %v389
    %v1448 = vunpack.c.l.b16 %v390
    %v1449 = vunpack.c.h.b16 %v390
    %v1450 = vunpack.c.l.b16 %v391
    %v1451 = vunpack.c.h.b16 %v391
    %v1452 = vunpack.c.l.b16 %v392
    %v1453 = vunpack.c.l.b16 %v393
    %v1454 = vunpack.c.h.b16 %v393
    %v1455 = vunpack.c.l.b16 %v394
    %v1456 = vunpack.c.h.b16 %v394
    %v1457 = vunpack.c.l.b16 %v395
    %v1458 = vunpack.c.h.b16 %v395
    %v1459 = vunpack.c.l.b16 %v396
    %v1460 = vunpack.c.l.b16 %v397
    %v1461 = vunpack.c.h.b16 %v397
    %v1462 = vunpack.c.l.b16 %v398
    %v1463 = vunpack.c.h.b16 %v398
    %v1464 = vunpack.c.l.b16 %v399
    %v1465 = vunpack.c.h.b16 %v399
    %v1466 = vunpack.c.l.b16 %v400
    %v1467 = vunpack.c.l.b16 %v401
    %v1468 = vunpack.c.h.b16 %v401
    %v1469 = vunpack.c.l.b16 %v402
    %v1470 = vunpack.c.h.b16 %v402
    %v1471 = vunpack.c.l.b16 %v403
    %v1472 = vunpack.c.h.b16 %v403
    %v1473 = vunpack.c.l.b16 %v404
    %v1474 = vunpack.c.l.b16 %v405
    %v1475 = vunpack.c.h.b16 %v405
    %v1476 = vunpack.c.l.b16 %v406
    %v1477 = vunpack.c.h.b16 %v406
    %v1478 = vunpack.c.l.b16 %v407
    %v1479 = vunpack.c.h.b16 %v407
    %v1480 = vunpack.c.l.b16 %v408
    %v1481 = vunpack.c.l.b16 %v409
    %v1482 = vunpack.c.h.b16 %v409
    %v1483 = vunpack.c.l.b16 %v410
    %v1484 = vunpack.c.h.b16 %v410
    %v1485 = vunpack.c.l.b16 %v411
    %v1486 = vunpack.c.h.b16 %v411
    %v1487 = vunpack.c.l.b16 %v412
    %v1488 = vunpack.c.l.b16 %v413
    %v1489 = vunpack.c.h.b16 %v413
    %v1490 = vunpack.c.l.b16 %v414
    %v1491 = vunpack.c.h.b16 %v414
    %v1492 = vunpack.c.l.b16 %v415
    %v1493 = vunpack.c.h.b16 %v415
    %v1494 = vunpack.c.l.b16 %v416
    %v1495 = vunpack.c.l.b16 %v417
    %v1496 = vunpack.c.h.b16 %v417
    %v1497 = vunpack.c.l.b16 %v418
    %v1498 = vunpack.c.h.b16 %v418
    %v1499 = vunpack.c.l.b16 %v419
    %v1500 = vunpack.c.h.b16 %v419
    %v1501 = vunpack.c.l.b16 %v420
    %v1502 = vunpack.c.l.b16 %v421
    %v1503 = vunpack.c.h.b16 %v421
    %v1504 = vunpack.c.l.b16 %v422
    %v1505 = vunpack.c.h.b16 %v422
    %v1506 = vunpack.c.l.b16 %v423
    %v1507 = vunpack.c.h.b16 %v423
    %v1508 = vunpack.c.l.b16 %v424
    %v1509 = vunpack.c.l.b16 %v425
    %v1510 = vunpack.c.h.b16 %v425
    %v1511 = vunpack.c.l.b16 %v426
    %v1512 = vunpack.c.h.b16 %v426
    %v1513 = vunpack.c.l.b16 %v427
    %v1514 = vunpack.c.h.b16 %v427
    %v1515 = vunpack.c.l.b16 %v428
    %v1516 = vunpack.c.l.b16 %v429
    %v1517 = vunpack.c.h.b16 %v429
    %v1518 = vunpack.c.l.b16 %v430
    %v1519 = vunpack.c.h.b16 %v430
    %v1520 = vunpack.c.l.b16 %v431
    %v1521 = vunpack.c.h.b16 %v431
    %v1522 = vunpack.c.l.b16 %v432
    %v1523 = vunpack.c.l.b16 %v433
    %v1524 = vunpack.c.h.b16 %v433
    %v1525 = vunpack.c.l.b16 %v434
    %v1526 = vunpack.c.h.b16 %v434
    %v1527 = vunpack.c.l.b16 %v435
    %v1528 = vunpack.c.h.b16 %v435
    %v1529 = vunpack.c.l.b16 %v436
    %v1530 = vunpack.c.l.b16 %v437
    %v1531 = vunpack.c.h.b16 %v437
    %v1532 = vunpack.c.l.b16 %v438
    %v1533 = vunpack.c.h.b16 %v438
    %v1534 = vunpack.c.l.b16 %v439
    %v1535 = vunpack.c.h.b16 %v439
    %v1536 = vunpack.c.l.b16 %v440
    %v1537 = vunpack.c.l.b16 %v441
    %v1538 = vunpack.c.h.b16 %v441
    %v1539 = vunpack.c.l.b16 %v442
    %v1540 = vunpack.c.h.b16 %v442
    %v1541 = vunpack.c.l.b16 %v443
    %v1542 = vunpack.c.h.b16 %v443
    %v1543 = vunpack.c.l.b16 %v444
    %v1544 = vunpack.c.l.b16 %v445
    %v1545 = vunpack.c.h.b16 %v445
    %v1546 = vunpack.c.l.b16 %v446
    %v1547 = vunpack.c.h.b16 %v446
    %v1548 = vunpack.c.l.b16 %v447
    %v1549 = vunpack.c.h.b16 %v447
    %v1550 = vunpack.c.l.b16 %v448
    %v1551 = vpack.c.b16 %v872, %v865
    %v1552 = vpack.c.b16 %v873, %v866
    %v1553 = vpack.c.b16 %v874, %v867
    %v1554 = vpack.c.b16 %v875, %v868
    %v1555 = vpack.c.b16 %v876, %v869
    %v1556 = vpack.c.b16 %v877, %v870
    %v1557 = vpack.c.b16 %v878, %v871
    %v1558 = vpack.c.b16 %v886, %v879
    %v1559 = vpack.c.b16 %v887, %v880
    %v1560 = vpack.c.b16 %v888, %v881
    %v1561 = vpack.c.b16 %v889, %v882
    %v1562 = vpack.c.b16 %v890, %v883
    %v1563 = vpack.c.b16 %v891, %v884
    %v1564 = vpack.c.b16 %v892, %v885
    %v1565 = vpack.c.b16 %v900, %v893
    %v1566 = vpack.c.b16 %v901, %v894
    %v1567 = vpack.c.b16 %v902, %v895
    %v1568 = vpack.c.b16 %v903, %v896
    %v1569 = vpack.c.b16 %v904, %v897
    %v1570 = vpack.c.b16 %v905, %v898
    %v1571 = vpack.c.b16 %v906, %v899
    %v1572 = vpack.c.b16 %v914, %v907
    %v1573 = vpack.c.b16 %v915, %v908
    %v1574 = vpack.c.b16 %v916, %v909
    %v1575 = vpack.c.b16 %v917, %v910
    %v1576 = vpack.c.b16 %v918, %v911
    %v1577 = vpack.c.b16 %v919, %v912
    %v1578 = vpack.c.b16 %v920, %v913
    %v1579 = vpack.c.b16 %v928, %v921
    %v1580 = vpack.c.b16 %v929, %v922
    %v1581 = vpack.c.b16 %v930, %v923
    %v1582 = vpack.c.b16 %v931, %v924
    %v1583 = vpack.c.b16 %v932, %v925
    %v1584 = vpack.c.b16 %v933, %v926
    %v1585 = vpack.c.b16 %v934, %v927
    %v1586 = vpack.c.b16 %v942, %v935
    %v1587 = vpack.c.b16 %v943, %v936
    %v1588 = vpack.c.b16 %v944, %v937
    %v1589 = vpack.c.b16 %v945, %v938
    %v1590 = vpack.c.b16 %v946, %v939
    %v1591 = vpack.c.b16 %v947, %v940
    %v1592 = vpack.c.b16 %v948, %v941
    %v1593 = vpack.c.b16 %v956, %v949
    %v1594 = vpack.c.b16 %v957, %v950
    %v1595 = vpack.c.b16 %v958, %v951
    %v1596 = vpack.c.b16 %v959, %v952
    %v1597 = vpack.c.b16 %v960, %v953
    %v1598 = vpack.c.b16 %v961, %v954
    %v1599 = vpack.c.b16 %v962, %v955
    %v1600 = vpack.c.b16 %v970, %v963
    %v1601 = vpack.c.b16 %v971, %v964
    %v1602 = vpack.c.b16 %v972, %v965
    %v1603 = vpack.c.b16 %v973, %v966
    %v1604 = vpack.c.b16 %v974, %v967
    %v1605 = vpack.c.b16 %v975, %v968
    %v1606 = vpack.c.b16 %v976, %v969
    %v1607 = vpack.c.b16 %v984, %v977
    %v1608 = vpack.c.b16 %v985, %v978
    %v1609 = vpack.c.b16 %v986, %v979
    %v1610 = vpack.c.b16 %v987, %v980
    %v1611 = vpack.c.b16 %v988, %v981
    %v1612 = vpack.c.b16 %v989, %v982
    %v1613 = vpack.c.b16 %v990, %v983
    %v1614 = vpack.c.b16 %v998, %v991
    %v1615 = vpack.c.b16 %v999, %v992
    %v1616 = vpack.c.b16 %v1000, %v993
    %v1617 = vpack.c.b16 %v1001, %v994
    %v1618 = vpack.c.b16 %v1002, %v995
    %v1619 = vpack.c.b16 %v1003, %v996
    %v1620 = vpack.c.b16 %v1004, %v997
    %v1621 = vpack.c.b16 %v1012, %v1005
    %v1622 = vpack.c.b16 %v1013, %v1006
    %v1623 = vpack.c.b16 %v1014, %v1007
    %v1624 = vpack.c.b16 %v1015, %v1008
    %v1625 = vpack.c.b16 %v1016, %v1009
    %v1626 = vpack.c.b16 %v1017, %v1010
    %v1627 = vpack.c.b16 %v1018, %v1011
    %v1628 = vpack.c.b16 %v1026, %v1019
    %v1629 = vpack.c.b16 %v1027, %v1020
    %v1630 = vpack.c.b16 %v1028, %v1021
    %v1631 = vpack.c.b16 %v1029, %v1022
    %v1632 = vpack.c.b16 %v1030, %v1023
    %v1633 = vpack.c.b16 %v1031, %v1024
    %v1634 = vpack.c.b16 %v1032, %v1025
    %v1635 = vpack.c.b16 %v1040, %v1033
    %v1636 = vpack.c.b16 %v1041, %v1034
    %v1637 = vpack.c.b16 %v1042, %v1035
    %v1638 = vpack.c.b16 %v1043, %v1036
    %v1639 = vpack.c.b16 %v1044, %v1037
    %v1640 = vpack.c.b16 %v1045, %v1038
    %v1641 = vpack.c.b16 %v1046, %v1039
    %v1642 = vpack.c.b16 %v1054, %v1047
    %v1643 = vpack.c.b16 %v1055, %v1048
    %v1644 = vpack.c.b16 %v1056, %v1049
    %v1645 = vpack.c.b16 %v1057, %v1050
    %v1646 = vpack.c.b16 %v1058, %v1051
    %v1647 = vpack.c.b16 %v1059, %v1052
    %v1648 = vpack.c.b16 %v1060, %v1053
    %v1649 = vpack.c.b16 %v1068, %v1061
    %v1650 = vpack.c.b16 %v1069, %v1062
    %v1651 = vpack.c.b16 %v1070, %v1063
    %v1652 = vpack.c.b16 %v1071, %v1064
    %v1653 = vpack.c.b16 %v1072, %v1065
    %v1654 = vpack.c.b16 %v1073, %v1066
    %v1655 = vpack.c.b16 %v1074, %v1067
    %v1656 = vpack.c.b16 %v1082, %v1075
    %v1657 = vpack.c.b16 %v1083, %v1076
    %v1658 = vpack.c.b16 %v1084, %v1077
    %v1659 = vpack.c.b16 %v1085, %v1078
    %v1660 = vpack.c.b16 %v1086, %v1079
    %v1661 = vpack.c.b16 %v1087, %v1080
    %v1662 = vpack.c.b16 %v1088, %v1081
    %v1663 = vpack.c.b16 %v1096, %v1089
    %v1664 = vpack.c.b16 %v1097, %v1090
    %v1665 = vpack.c.b16 %v1098, %v1091
    %v1666 = vpack.c.b16 %v1099, %v1092
    %v1667 = vpack.c.b16 %v1100, %v1093
    %v1668 = vpack.c.b16 %v1101, %v1094
    %v1669 = vpack.c.b16 %v1102, %v1095
    %v1670 = vpack.c.b16 %v1110, %v1103
    %v1671 = vpack.c.b16 %v1111, %v1104
    %v1672 = vpack.c.b16 %v1112, %v1105
    %v1673 = vpack.c.b16 %v1113, %v1106
    %v1674 = vpack.c.b16 %v1114, %v1107
    %v1675 = vpack.c.b16 %v1115, %v1108
    %v1676 = vpack.c.b16 %v1116, %v1109
    %v1677 = vpack.c.b16 %v1124, %v1117
    %v1678 = vpack.c.b16 %v1125, %v1118
    %v1679 = vpack.c.b16 %v1126, %v1119
    %v1680 = vpack.c.b16 %v1127, %v1120
    %v1681 = vpack.c.b16 %v1128, %v1121
    %v1682 = vpack.c.b16 %v1129, %v1122
    %v1683 = vpack.c.b16 %v1130, %v1123
    %v1684 = vpack.c.b16 %v1138, %v1131
    %v1685 = vpack.c.b16 %v1139, %v1132
    %v1686 = vpack.c.b16 %v1140, %v1133
    %v1687 = vpack.c.b16 %v1141, %v1134
    %v1688 = vpack.c.b16 %v1142, %v1135
    %v1689 = vpack.c.b16 %v1143, %v1136
    %v1690 = vpack.c.b16 %v1144, %v1137
    %v1691 = vpack.c.b16 %v1152, %v1145
    %v1692 = vpack.c.b16 %v1153, %v1146
    %v1693 = vpack.c.b16 %v1154, %v1147
    %v1694 = vpack.c.b16 %v1155, %v1148
    %v1695 = vpack.c.b16 %v1156, %v1149
    %v1696 = vpack.c.b16 %v1157, %v1150
    %v1697 = vpack.c.b16 %v1158, %v1151
    %v1698 = vpack.c.b16 %v1166, %v1159
    %v1699 = vpack.c.b16 %v1167, %v1160
    %v1700 = vpack.c.b16 %v1168, %v1161
    %v1701 = vpack.c.b16 %v1169, %v1162
    %v1702 = vpack.c.b16 %v1170, %v1163
    %v1703 = vpack.c.b16 %v1171, %v1164
    %v1704 = vpack.c.b16 %v1172, %v1165
    %v1705 = vpack.c.b16 %v1180, %v1173
    %v1706 = vpack.c.b16 %v1181, %v1174
    %v1707 = vpack.c.b16 %v1182, %v1175
    %v1708 = vpack.c.b16 %v1183, %v1176
    %v1709 = vpack.c.b16 %v1184, %v1177
    %v1710 = vpack.c.b16 %v1185, %v1178
    %v1711 = vpack.c.b16 %v1186, %v1179
    %v1712 = vpack.c.b16 %v1194, %v1187
    %v1713 = vpack.c.b16 %v1195, %v1188
    %v1714 = vpack.c.b16 %v1196, %v1189
    %v1715 = vpack.c.b16 %v1197, %v1190
    %v1716 = vpack.c.b16 %v1198, %v1191
    %v1717 = vpack.c.b16 %v1199, %v1192
    %v1718 = vpack.c.b16 %v1200, %v1193
    %v1719 = vpack.c.b16 %v1208, %v1201
    %v1720 = vpack.c.b16 %v1209, %v1202
    %v1721 = vpack.c.b16 %v1210, %v1203
    %v1722 = vpack.c.b16 %v1211, %v1204
    %v1723 = vpack.c.b16 %v1212, %v1205
    %v1724 = vpack.c.b16 %v1213, %v1206
    %v1725 = vpack.c.b16 %v1214, %v1207
    %v1726 = vpack.c.b16 %v1222, %v1215
    %v1727 = vpack.c.b16 %v1223, %v1216
    %v1728 = vpack.c.b16 %v1224, %v1217
    %v1729 = vpack.c.b16 %v1225, %v1218
    %v1730 = vpack.c.b16 %v1226, %v1219
    %v1731 = vpack.c.b16 %v1227, %v1220
    %v1732 = vpack.c.b16 %v1228, %v1221
    %v1733 = vpack.c.b16 %v1236, %v1229
    %v1734 = vpack.c.b16 %v1237, %v1230
    %v1735 = vpack.c.b16 %v1238, %v1231
    %v1736 = vpack.c.b16 %v1239, %v1232
    %v1737 = vpack.c.b16 %v1240, %v1233
    %v1738 = vpack.c.b16 %v1241, %v1234
    %v1739 = vpack.c.b16 %v1242, %v1235
    %v1740 = vpack.c.b16 %v1250, %v1243
    %v1741 = vpack.c.b16 %v1251, %v1244
    %v1742 = vpack.c.b16 %v1252, %v1245
    %v1743 = vpack.c.b16 %v1253, %v1246
    %v1744 = vpack.c.b16 %v1254, %v1247
    %v1745 = vpack.c.b16 %v1255, %v1248
    %v1746 = vpack.c.b16 %v1256, %v1249
    %v1747 = vpack.c.b16 %v1264, %v1257
    %v1748 = vpack.c.b16 %v1265, %v1258
    %v1749 = vpack.c.b16 %v1266, %v1259
    %v1750 = vpack.c.b16 %v1267, %v1260
    %v1751 = vpack.c.b16 %v1268, %v1261
    %v1752 = vpack.c.b16 %v1269, %v1262
    %v1753 = vpack.c.b16 %v1270, %v1263
    %v1754 = vpack.c.b16 %v1278, %v1271
    %v1755 = vpack.c.b16 %v1279, %v1272
    %v1756 = vpack.c.b16 %v1280, %v1273
    %v1757 = vpack.c.b16 %v1281, %v1274
    %v1758 = vpack.c.b16 %v1282, %v1275
    %v1759 = vpack.c.b16 %v1283, %v1276
    %v1760 = vpack.c.b16 %v1284, %v1277
    %v1761 = vpack.c.b16 %v1292, %v1285
    %v1762 = vpack.c.b16 %v1293, %v1286
    %v1763 = vpack.c.b16 %v1294, %v1287
    %v1764 = vpack.c.b16 %v1295, %v1288
    %v1765 = vpack.c.b16 %v1296, %v1289
    %v1766 = vpack.c.b16 %v1297, %v1290
    %v1767 = vpack.c.b16 %v1298, %v1291
    %v1768 = vpack.c.b16 %v1306, %v1299
    %v1769 = vpack.c.b16 %v1307, %v1300
    %v1770 = vpack.c.b16 %v1308, %v1301
    %v1771 = vpack.c.b16 %v1309, %v1302
    %v1772 = vpack.c.b16 %v1310, %v1303
    %v1773 = vpack.c.b16 %v1311, %v1304
    %v1774 = vpack.c.b16 %v1312, %v1305
    %v1775 = vpack.c.b16 %v1320, %v1313
    %v1776 = vpack.c.b16 %v1321, %v1314
    %v1777 = vpack.c.b16 %v1322, %v1315
    %v1778 = vpack.c.b16 %v1323, %v1316
    %v1779 = vpack.c.b16 %v1324, %v1317
    %v1780 = vpack.c.b16 %v1325, %v1318
    %v1781 = vpack.c.b16 %v1326, %v1319
    %v1782 = vpack.c.b16 %v1334, %v1327
    %v1783 = vpack.c.b16 %v1335, %v1328
    %v1784 = vpack.c.b16 %v1336, %v1329
    %v1785 = vpack.c.b16 %v1337, %v1330
    %v1786 = vpack.c.b16 %v1338, %v1331
    %v1787 = vpack.c.b16 %v1339, %v1332
    %v1788 = vpack.c.b16 %v1340, %v1333
    %v1789 = vpack.c.b16 %v1348, %v1341
    %v1790 = vpack.c.b16 %v1349, %v1342
    %v1791 = vpack.c.b16 %v1350, %v1343
    %v1792 = vpack.c.b16 %v1351, %v1344
    %v1793 = vpack.c.b16 %v1352, %v1345
    %v1794 = vpack.c.b16 %v1353, %v1346
    %v1795 = vpack.c.b16 %v1354, %v1347
    %v1796 = vpack.c.b16 %v1362, %v1355
    %v1797 = vpack.c.b16 %v1363, %v1356
    %v1798 = vpack.c.b16 %v1364, %v1357
    %v1799 = vpack.c.b16 %v1365, %v1358
    %v1800 = vpack.c.b16 %v1366, %v1359
    %v1801 = vpack.c.b16 %v1367, %v1360
    %v1802 = vpack.c.b16 %v1368, %v1361
    %v1803 = vpack.c.b16 %v1376, %v1369
    %v1804 = vpack.c.b16 %v1377, %v1370
    %v1805 = vpack.c.b16 %v1378, %v1371
    %v1806 = vpack.c.b16 %v1379, %v1372
    %v1807 = vpack.c.b16 %v1380, %v1373
    %v1808 = vpack.c.b16 %v1381, %v1374
    %v1809 = vpack.c.b16 %v1382, %v1375
    %v1810 = vpack.c.b16 %v1390, %v1383
    %v1811 = vpack.c.b16 %v1391, %v1384
    %v1812 = vpack.c.b16 %v1392, %v1385
    %v1813 = vpack.c.b16 %v1393, %v1386
    %v1814 = vpack.c.b16 %v1394, %v1387
    %v1815 = vpack.c.b16 %v1395, %v1388
    %v1816 = vpack.c.b16 %v1396, %v1389
    %v1817 = vpack.c.b16 %v1404, %v1397
    %v1818 = vpack.c.b16 %v1405, %v1398
    %v1819 = vpack.c.b16 %v1406, %v1399
    %v1820 = vpack.c.b16 %v1407, %v1400
    %v1821 = vpack.c.b16 %v1408, %v1401
    %v1822 = vpack.c.b16 %v1409, %v1402
    %v1823 = vpack.c.b16 %v1410, %v1403
    %v1824 = vpack.c.b16 %v1418, %v1411
    %v1825 = vpack.c.b16 %v1419, %v1412
    %v1826 = vpack.c.b16 %v1420, %v1413
    %v1827 = vpack.c.b16 %v1421, %v1414
    %v1828 = vpack.c.b16 %v1422, %v1415
    %v1829 = vpack.c.b16 %v1423, %v1416
    %v1830 = vpack.c.b16 %v1424, %v1417
    %v1831 = vpack.c.b16 %v1432, %v1425
    %v1832 = vpack.c.b16 %v1433, %v1426
    %v1833 = vpack.c.b16 %v1434, %v1427
    %v1834 = vpack.c.b16 %v1435, %v1428
    %v1835 = vpack.c.b16 %v1436, %v1429
    %v1836 = vpack.c.b16 %v1437, %v1430
    %v1837 = vpack.c.b16 %v1438, %v1431
    %v1838 = vpack.c.b16 %v1446, %v1439
    %v1839 = vpack.c.b16 %v1447, %v1440
    %v1840 = vpack.c.b16 %v1448, %v1441
    %v1841 = vpack.c.b16 %v1449, %v1442
    %v1842 = vpack.c.b16 %v1450, %v1443
    %v1843 = vpack.c.b16 %v1451, %v1444
    %v1844 = vpack.c.b16 %v1452, %v1445
    %v1845 = vpack.c.b16 %v1460, %v1453
    %v1846 = vpack.c.b16 %v1461, %v1454
    %v1847 = vpack.c.b16 %v1462, %v1455
    %v1848 = vpack.c.b16 %v1463, %v1456
    %v1849 = vpack.c.b16 %v1464, %v1457
    %v1850 = vpack.c.b16 %v1465, %v1458
    %v1851 = vpack.c.b16 %v1466, %v1459
    %v1852 = vpack.c.b16 %v1474, %v1467
    %v1853 = vpack.c.b16 %v1475, %v1468
    %v1854 = vpack.c.b16 %v1476, %v1469
    %v1855 = vpack.c.b16 %v1477, %v1470
    %v1856 = vpack.c.b16 %v1478, %v1471
    %v1857 = vpack.c.b16 %v1479, %v1472
    %v1858 = vpack.c.b16 %v1480, %v1473
    %v1859 = vpack.c.b16 %v1488, %v1481
    %v1860 = vpack.c.b16 %v1489, %v1482
    %v1861 = vpack.c.b16 %v1490, %v1483
    %v1862 = vpack.c.b16 %v1491, %v1484
    %v1863 = vpack.c.b16 %v1492, %v1485
    %v1864 = vpack.c.b16 %v1493, %v1486
    %v1865 = vpack.c.b16 %v1494, %v1487
    %v1866 = vpack.c.b16 %v1502, %v1495
    %v1867 = vpack.c.b16 %v1503, %v1496
    %v1868 = vpack.c.b16 %v1504, %v1497
    %v1869 = vpack.c.b16 %v1505, %v1498
    %v1870 = vpack.c.b16 %v1506, %v1499
    %v1871 = vpack.c.b16 %v1507, %v1500
    %v1872 = vpack.c.b16 %v1508, %v1501
    %v1873 = vpack.c.b16 %v1516, %v1509
    %v1874 = vpack.c.b16 %v1517, %v1510
    %v1875 = vpack.c.b16 %v1518, %v1511
    %v1876 = vpack.c.b16 %v1519, %v1512
    %v1877 = vpack.c.b16 %v1520, %v1513
    %v1878 = vpack.c.b16 %v1521, %v1514
    %v1879 = vpack.c.b16 %v1522, %v1515
    %v1880 = vpack.c.b16 %v1530, %v1523
    %v1881 = vpack.c.b16 %v1531, %v1524
    %v1882 = vpack.c.b16 %v1532, %v1525
    %v1883 = vpack.c.b16 %v1533, %v1526
    %v1884 = vpack.c.b16 %v1534, %v1527
    %v1885 = vpack.c.b16 %v1535, %v1528
    %v1886 = vpack.c.b16 %v1536, %v1529
    %v1887 = vpack.c.b16 %v1544, %v1537
    %v1888 = vpack.c.b16 %v1545, %v1538
    %v1889 = vpack.c.b16 %v1546, %v1539
    %v1890 = vpack.c.b16 %v1547, %v1540
    %v1891 = vpack.c.b16 %v1548, %v1541
    %v1892 = vpack.c.b16 %v1549, %v1542
    %v1893 = vpack.c.b16 %v1550, %v1543
    %vm2237 = vcmask 130048
    %v2239 = vsel %vm2237, %v466, 0
    %2241 = vmatprep.subr.bf16.mxu0 %v1601
    %2242 = vmatpush1.bf16.msra.mxu0 %v1600
    %2243 = vmatprep.subr.bf16.mxu0 %v1594
    %2244 = vmatpush1.bf16.msra.mxu0 %v1593
    %2245 = vmatprep.subr.bf16.mxu0 %v1587
    %2246 = vmatpush1.bf16.msra.mxu0 %v1586
    %2247 = vmatprep.subr.bf16.mxu0 %v1580
    %2248 = vmatpush1.bf16.msra.mxu0 %v1579
    %2249 = vmatprep.subr.bf16.mxu0 %v1573
    %2250 = vmatpush1.bf16.msra.mxu0 %v1572
    %2251 = vmatprep.subr.bf16.mxu0 %v1566
    %2252 = vmatpush1.bf16.msra.mxu0 %v1565
    %2253 = vmatprep.subr.bf16.mxu0 %v1559
    %2254 = vmatpush1.bf16.msra.mxu0 %v1558
    %2255 = vmatprep.subr.bf16.mxu0 %v1552
    %2256 = vmatpush1.bf16.msra.mxu0 %v1551
    %2257 = vmatprep.subr.bf16.mxu0 %v1657
    %2258 = vmatpush2.bf16.msra.mxu0 %v1656
    %2259 = vmatprep.subr.bf16.mxu0 %v1650
    %2260 = vmatpush2.bf16.msra.mxu0 %v1649
    %2261 = vmatprep.subr.bf16.mxu0 %v1643
    %2262 = vmatpush2.bf16.msra.mxu0 %v1642
    %2263 = vmatprep.subr.bf16.mxu0 %v1636
    %2264 = vmatpush2.bf16.msra.mxu0 %v1635
    %2265 = vmatprep.subr.bf16.mxu0 %v1629
    %2266 = vmatpush2.bf16.msra.mxu0 %v1628
    %2267 = vmatprep.subr.bf16.mxu0 %v1622
    %2268 = vmatpush2.bf16.msra.mxu0 %v1621
    %2269 = vmatprep.subr.bf16.mxu0 %v1615
    %2270 = vmatpush2.bf16.msra.mxu0 %v1614
    %2271 = vmatprep.subr.bf16.mxu0 %v1608
    %2272 = vmatpush2.bf16.msra.mxu0 %v1607
    %2273 = vmatprep.mubr.bf16.mxu0 %v461
    %2274 = vmatmul.mubr.bf16.gmra.mxu0 %v460
    %v2275 = vpop.f32.mrf.mxu0
    %v2276 = vadd.f32 0.0, %v2275
    %v2277 = vpop.f32.mrf.mxu0
    %v2278 = vadd.f32 0.0, %v2277
    %v2279 = vpop.f32.mrf.mxu0
    %v2280 = vpop.f32.mrf.mxu0
    %2281 = vdwg.mxu0
    %2282 = vmatprep.subr.bf16.mxu0 %v1713
    %2283 = vmatpush1.bf16.msra.mxu0 %v1712
    %2284 = vmatprep.subr.bf16.mxu0 %v1706
    %2285 = vmatpush1.bf16.msra.mxu0 %v1705
    %2286 = vmatprep.subr.bf16.mxu0 %v1699
    %2287 = vmatpush1.bf16.msra.mxu0 %v1698
    %2288 = vmatprep.subr.bf16.mxu0 %v1692
    %2289 = vmatpush1.bf16.msra.mxu0 %v1691
    %2290 = vmatprep.subr.bf16.mxu0 %v1685
    %2291 = vmatpush1.bf16.msra.mxu0 %v1684
    %2292 = vmatprep.subr.bf16.mxu0 %v1678
    %2293 = vmatpush1.bf16.msra.mxu0 %v1677
    %2294 = vmatprep.subr.bf16.mxu0 %v1671
    %2295 = vmatpush1.bf16.msra.mxu0 %v1670
    %2296 = vmatprep.subr.bf16.mxu0 %v1664
    %2297 = vmatpush1.bf16.msra.mxu0 %v1663
    %2298 = vmatprep.subr.bf16.mxu0 %v1769
    %2299 = vmatpush2.bf16.msra.mxu0 %v1768
    %2300 = vmatprep.subr.bf16.mxu0 %v1762
    %2301 = vmatpush2.bf16.msra.mxu0 %v1761
    %2302 = vmatprep.subr.bf16.mxu0 %v1755
    %2303 = vmatpush2.bf16.msra.mxu0 %v1754
    %2304 = vmatprep.subr.bf16.mxu0 %v1748
    %2305 = vmatpush2.bf16.msra.mxu0 %v1747
    %2306 = vmatprep.subr.bf16.mxu0 %v1741
    %2307 = vmatpush2.bf16.msra.mxu0 %v1740
    %2308 = vmatprep.subr.bf16.mxu0 %v1734
    %2309 = vmatpush2.bf16.msra.mxu0 %v1733
    %2310 = vmatprep.subr.bf16.mxu0 %v1727
    %2311 = vmatpush2.bf16.msra.mxu0 %v1726
    %2312 = vmatprep.subr.bf16.mxu0 %v1720
    %2313 = vmatpush2.bf16.msra.mxu0 %v1719
    %2314 = vmatprep.mubr.bf16.mxu0 %v463
    %2315 = vmatmul.mubr.bf16.gmra.mxu0 %v462
    %v2316 = vpop.f32.mrf.mxu0
    %v2317 = vadd.f32 %v2276, %v2316
    %v2318 = vpop.f32.mrf.mxu0
    %v2319 = vadd.f32 %v2278, %v2318
    %v2320 = vpop.f32.mrf.mxu0
    %v2321 = vpop.f32.mrf.mxu0
    %2322 = vdwg.mxu0
    %2323 = vmatprep.subr.bf16.mxu0 %v1825
    %2324 = vmatpush1.bf16.msra.mxu0 %v1824
    %2325 = vmatprep.subr.bf16.mxu0 %v1818
    %2326 = vmatpush1.bf16.msra.mxu0 %v1817
    %2327 = vmatprep.subr.bf16.mxu0 %v1811
    %2328 = vmatpush1.bf16.msra.mxu0 %v1810
    %2329 = vmatprep.subr.bf16.mxu0 %v1804
    %2330 = vmatpush1.bf16.msra.mxu0 %v1803
    %2331 = vmatprep.subr.bf16.mxu0 %v1797
    %2332 = vmatpush1.bf16.msra.mxu0 %v1796
    %2333 = vmatprep.subr.bf16.mxu0 %v1790
    %2334 = vmatpush1.bf16.msra.mxu0 %v1789
    %2335 = vmatprep.subr.bf16.mxu0 %v1783
    %2336 = vmatpush1.bf16.msra.mxu0 %v1782
    %2337 = vmatprep.subr.bf16.mxu0 %v1776
    %2338 = vmatpush1.bf16.msra.mxu0 %v1775
    %2339 = vmatprep.subr.bf16.mxu0 %v1881
    %2340 = vmatpush2.bf16.msra.mxu0 %v1880
    %2341 = vmatprep.subr.bf16.mxu0 %v1874
    %2342 = vmatpush2.bf16.msra.mxu0 %v1873
    %2343 = vmatprep.subr.bf16.mxu0 %v1867
    %2344 = vmatpush2.bf16.msra.mxu0 %v1866
    %2345 = vmatprep.subr.bf16.mxu0 %v1860
    %2346 = vmatpush2.bf16.msra.mxu0 %v1859
    %2347 = vmatprep.subr.bf16.mxu0 %v1853
    %2348 = vmatpush2.bf16.msra.mxu0 %v1852
    %2349 = vmatprep.subr.bf16.mxu0 %v1846
    %2350 = vmatpush2.bf16.msra.mxu0 %v1845
    %2351 = vmatprep.subr.bf16.mxu0 %v1839
    %2352 = vmatpush2.bf16.msra.mxu0 %v1838
    %2353 = vmatprep.subr.bf16.mxu0 %v1832
    %2354 = vmatpush2.bf16.msra.mxu0 %v1831
    %2355 = vmatprep.mubr.bf16.mxu0 %v465
    %2356 = vmatmul.mubr.bf16.gmra.mxu0 %v464
    %v2357 = vpop.f32.mrf.mxu0
    %v2358 = vadd.f32 %v2317, %v2357
    %v2359 = vpop.f32.mrf.mxu0
    %v2360 = vadd.f32 %v2319, %v2359
    %v2361 = vpop.f32.mrf.mxu0
    %v2362 = vpop.f32.mrf.mxu0
    %2363 = vdwg.mxu0
    %2364 = vmatprep.subr.bf16.mxu0 0
    %2365 = vmatpush1.bf16.msra.mxu0 0
    %2366 = vmatprep.subr.bf16.mxu0 0
    %2367 = vmatpush1.bf16.msra.mxu0 0
    %2368 = vmatprep.subr.bf16.mxu0 0
    %2369 = vmatpush1.bf16.msra.mxu0 0
    %2370 = vmatprep.subr.bf16.mxu0 0
    %2371 = vmatpush1.bf16.msra.mxu0 0
    %2372 = vmatprep.subr.bf16.mxu0 0
    %2373 = vmatpush1.bf16.msra.mxu0 0
    %2374 = vmatprep.subr.bf16.mxu0 0
    %2375 = vmatpush1.bf16.msra.mxu0 0
    %2376 = vmatprep.subr.bf16.mxu0 0
    %2377 = vmatpush1.bf16.msra.mxu0 0
    %2378 = vmatprep.subr.bf16.mxu0 %v1888
    %2379 = vmatpush1.bf16.msra.mxu0 %v1887
    %2380 = vmatprep.subr.bf16.mxu0 0
    %2381 = vmatpush2.bf16.msra.mxu0 0
    %2382 = vmatprep.subr.bf16.mxu0 0
    %2383 = vmatpush2.bf16.msra.mxu0 0
    %2384 = vmatprep.subr.bf16.mxu0 0
    %2385 = vmatpush2.bf16.msra.mxu0 0
    %2386 = vmatprep.subr.bf16.mxu0 0
    %2387 = vmatpush2.bf16.msra.mxu0 0
    %2388 = vmatprep.subr.bf16.mxu0 0
    %2389 = vmatpush2.bf16.msra.mxu0 0
    %2390 = vmatprep.subr.bf16.mxu0 0
    %2391 = vmatpush2.bf16.msra.mxu0 0
    %2392 = vmatprep.subr.bf16.mxu0 0
    %2393 = vmatpush2.bf16.msra.mxu0 0
    %2394 = vmatprep.subr.bf16.mxu0 0
    %2395 = vmatpush2.bf16.msra.mxu0 0
    %2396 = vmatprep.mubr.bf16.mxu0 0
    %2397 = vmatmul.mubr.bf16.gmra.mxu0 %v2239
    %v2398 = vpop.f32.mrf.mxu0
    %v2399 = vadd.f32 %v2358, %v2398
    %v2400 = vpop.f32.mrf.mxu0
    %v2401 = vadd.f32 %v2360, %v2400
    %v2402 = vpop.f32.mrf.mxu0
    %v2403 = vpop.f32.mrf.mxu0
    %2404 = vdwg.mxu0
    %2405 = vmatprep.subr.bf16.mxu0 %v1603
    %2406 = vmatpush1.bf16.msra.mxu0 %v1602
    %2407 = vmatprep.subr.bf16.mxu0 %v1596
    %2408 = vmatpush1.bf16.msra.mxu0 %v1595
    %2409 = vmatprep.subr.bf16.mxu0 %v1589
    %2410 = vmatpush1.bf16.msra.mxu0 %v1588
    %2411 = vmatprep.subr.bf16.mxu0 %v1582
    %2412 = vmatpush1.bf16.msra.mxu0 %v1581
    %2413 = vmatprep.subr.bf16.mxu0 %v1575
    %2414 = vmatpush1.bf16.msra.mxu0 %v1574
    %2415 = vmatprep.subr.bf16.mxu0 %v1568
    %2416 = vmatpush1.bf16.msra.mxu0 %v1567
    %2417 = vmatprep.subr.bf16.mxu0 %v1561
    %2418 = vmatpush1.bf16.msra.mxu0 %v1560
    %2419 = vmatprep.subr.bf16.mxu0 %v1554
    %2420 = vmatpush1.bf16.msra.mxu0 %v1553
    %2421 = vmatprep.subr.bf16.mxu0 %v1659
    %2422 = vmatpush2.bf16.msra.mxu0 %v1658
    %2423 = vmatprep.subr.bf16.mxu0 %v1652
    %2424 = vmatpush2.bf16.msra.mxu0 %v1651
    %2425 = vmatprep.subr.bf16.mxu0 %v1645
    %2426 = vmatpush2.bf16.msra.mxu0 %v1644
    %2427 = vmatprep.subr.bf16.mxu0 %v1638
    %2428 = vmatpush2.bf16.msra.mxu0 %v1637
    %2429 = vmatprep.subr.bf16.mxu0 %v1631
    %2430 = vmatpush2.bf16.msra.mxu0 %v1630
    %2431 = vmatprep.subr.bf16.mxu0 %v1624
    %2432 = vmatpush2.bf16.msra.mxu0 %v1623
    %2433 = vmatprep.subr.bf16.mxu0 %v1617
    %2434 = vmatpush2.bf16.msra.mxu0 %v1616
    %2435 = vmatprep.subr.bf16.mxu0 %v1610
    %2436 = vmatpush2.bf16.msra.mxu0 %v1609
    %2437 = vmatprep.mubr.bf16.mxu0 %v461
    %2438 = vmatmul.mubr.bf16.gmra.mxu0 %v460
    %v2439 = vpop.f32.mrf.mxu0
    %v2440 = vadd.f32 0.0, %v2439
    %v2441 = vpop.f32.mrf.mxu0
    %v2442 = vadd.f32 0.0, %v2441
    %v2443 = vpop.f32.mrf.mxu0
    %v2444 = vpop.f32.mrf.mxu0
    %2445 = vdwg.mxu0
    %2446 = vmatprep.subr.bf16.mxu0 %v1715
    %2447 = vmatpush1.bf16.msra.mxu0 %v1714
    %2448 = vmatprep.subr.bf16.mxu0 %v1708
    %2449 = vmatpush1.bf16.msra.mxu0 %v1707
    %2450 = vmatprep.subr.bf16.mxu0 %v1701
    %2451 = vmatpush1.bf16.msra.mxu0 %v1700
    %2452 = vmatprep.subr.bf16.mxu0 %v1694
    %2453 = vmatpush1.bf16.msra.mxu0 %v1693
    %2454 = vmatprep.subr.bf16.mxu0 %v1687
    %2455 = vmatpush1.bf16.msra.mxu0 %v1686
    %2456 = vmatprep.subr.bf16.mxu0 %v1680
    %2457 = vmatpush1.bf16.msra.mxu0 %v1679
    %2458 = vmatprep.subr.bf16.mxu0 %v1673
    %2459 = vmatpush1.bf16.msra.mxu0 %v1672
    %2460 = vmatprep.subr.bf16.mxu0 %v1666
    %2461 = vmatpush1.bf16.msra.mxu0 %v1665
    %2462 = vmatprep.subr.bf16.mxu0 %v1771
    %2463 = vmatpush2.bf16.msra.mxu0 %v1770
    %2464 = vmatprep.subr.bf16.mxu0 %v1764
    %2465 = vmatpush2.bf16.msra.mxu0 %v1763
    %2466 = vmatprep.subr.bf16.mxu0 %v1757
    %2467 = vmatpush2.bf16.msra.mxu0 %v1756
    %2468 = vmatprep.subr.bf16.mxu0 %v1750
    %2469 = vmatpush2.bf16.msra.mxu0 %v1749
    %2470 = vmatprep.subr.bf16.mxu0 %v1743
    %2471 = vmatpush2.bf16.msra.mxu0 %v1742
    %2472 = vmatprep.subr.bf16.mxu0 %v1736
    %2473 = vmatpush2.bf16.msra.mxu0 %v1735
    %2474 = vmatprep.subr.bf16.mxu0 %v1729
    %2475 = vmatpush2.bf16.msra.mxu0 %v1728
    %2476 = vmatprep.subr.bf16.mxu0 %v1722
    %2477 = vmatpush2.bf16.msra.mxu0 %v1721
    %2478 = vmatprep.mubr.bf16.mxu0 %v463
    %2479 = vmatmul.mubr.bf16.gmra.mxu0 %v462
    %v2480 = vpop.f32.mrf.mxu0
    %v2481 = vadd.f32 %v2440, %v2480
    %v2482 = vpop.f32.mrf.mxu0
    %v2483 = vadd.f32 %v2442, %v2482
    %v2484 = vpop.f32.mrf.mxu0
    %v2485 = vpop.f32.mrf.mxu0
    %2486 = vdwg.mxu0
    %2487 = vmatprep.subr.bf16.mxu0 %v1827
    %2488 = vmatpush1.bf16.msra.mxu0 %v1826
    %2489 = vmatprep.subr.bf16.mxu0 %v1820
    %2490 = vmatpush1.bf16.msra.mxu0 %v1819
    %2491 = vmatprep.subr.bf16.mxu0 %v1813
    %2492 = vmatpush1.bf16.msra.mxu0 %v1812
    %2493 = vmatprep.subr.bf16.mxu0 %v1806
    %2494 = vmatpush1.bf16.msra.mxu0 %v1805
    %2495 = vmatprep.subr.bf16.mxu0 %v1799
    %2496 = vmatpush1.bf16.msra.mxu0 %v1798
    %2497 = vmatprep.subr.bf16.mxu0 %v1792
    %2498 = vmatpush1.bf16.msra.mxu0 %v1791
    %2499 = vmatprep.subr.bf16.mxu0 %v1785
    %2500 = vmatpush1.bf16.msra.mxu0 %v1784
    %2501 = vmatprep.subr.bf16.mxu0 %v1778
    %2502 = vmatpush1.bf16.msra.mxu0 %v1777
    %2503 = vmatprep.subr.bf16.mxu0 %v1883
    %2504 = vmatpush2.bf16.msra.mxu0 %v1882
    %2505 = vmatprep.subr.bf16.mxu0 %v1876
    %2506 = vmatpush2.bf16.msra.mxu0 %v1875
    %2507 = vmatprep.subr.bf16.mxu0 %v1869
    %2508 = vmatpush2.bf16.msra.mxu0 %v1868
    %2509 = vmatprep.subr.bf16.mxu0 %v1862
    %2510 = vmatpush2.bf16.msra.mxu0 %v1861
    %2511 = vmatprep.subr.bf16.mxu0 %v1855
    %2512 = vmatpush2.bf16.msra.mxu0 %v1854
    %2513 = vmatprep.subr.bf16.mxu0 %v1848
    %2514 = vmatpush2.bf16.msra.mxu0 %v1847
    %2515 = vmatprep.subr.bf16.mxu0 %v1841
    %2516 = vmatpush2.bf16.msra.mxu0 %v1840
    %2517 = vmatprep.subr.bf16.mxu0 %v1834
    %2518 = vmatpush2.bf16.msra.mxu0 %v1833
    %2519 = vmatprep.mubr.bf16.mxu0 %v465
    %2520 = vmatmul.mubr.bf16.gmra.mxu0 %v464
    %v2521 = vpop.f32.mrf.mxu0
    %v2522 = vadd.f32 %v2481, %v2521
    %v2523 = vpop.f32.mrf.mxu0
    %v2524 = vadd.f32 %v2483, %v2523
    %v2525 = vpop.f32.mrf.mxu0
    %v2526 = vpop.f32.mrf.mxu0
    %2527 = vdwg.mxu0
    %2528 = vmatprep.subr.bf16.mxu0 0
    %2529 = vmatpush1.bf16.msra.mxu0 0
    %2530 = vmatprep.subr.bf16.mxu0 0
    %2531 = vmatpush1.bf16.msra.mxu0 0
    %2532 = vmatprep.subr.bf16.mxu0 0
    %2533 = vmatpush1.bf16.msra.mxu0 0
    %2534 = vmatprep.subr.bf16.mxu0 0
    %2535 = vmatpush1.bf16.msra.mxu0 0
    %2536 = vmatprep.subr.bf16.mxu0 0
    %2537 = vmatpush1.bf16.msra.mxu0 0
    %2538 = vmatprep.subr.bf16.mxu0 0
    %2539 = vmatpush1.bf16.msra.mxu0 0
    %2540 = vmatprep.subr.bf16.mxu0 0
    %2541 = vmatpush1.bf16.msra.mxu0 0
    %2542 = vmatprep.subr.bf16.mxu0 %v1890
    %2543 = vmatpush1.bf16.msra.mxu0 %v1889
    %2544 = vmatprep.subr.bf16.mxu0 0
    %2545 = vmatpush2.bf16.msra.mxu0 0
    %2546 = vmatprep.subr.bf16.mxu0 0
    %2547 = vmatpush2.bf16.msra.mxu0 0
    %2548 = vmatprep.subr.bf16.mxu0 0
    %2549 = vmatpush2.bf16.msra.mxu0 0
    %2550 = vmatprep.subr.bf16.mxu0 0
    %2551 = vmatpush2.bf16.msra.mxu0 0
    %2552 = vmatprep.subr.bf16.mxu0 0
    %2553 = vmatpush2.bf16.msra.mxu0 0
    %2554 = vmatprep.subr.bf16.mxu0 0
    %2555 = vmatpush2.bf16.msra.mxu0 0
    %2556 = vmatprep.subr.bf16.mxu0 0
    %2557 = vmatpush2.bf16.msra.mxu0 0
    %2558 = vmatprep.subr.bf16.mxu0 0
    %2559 = vmatpush2.bf16.msra.mxu0 0
    %2560 = vmatprep.mubr.bf16.mxu0 0
    %2561 = vmatmul.mubr.bf16.gmra.mxu0 %v2239
    %v2562 = vpop.f32.mrf.mxu0
    %v2563 = vadd.f32 %v2522, %v2562
    %v2564 = vpop.f32.mrf.mxu0
    %v2565 = vadd.f32 %v2524, %v2564
    %v2566 = vpop.f32.mrf.mxu0
    %v2567 = vpop.f32.mrf.mxu0
    %2568 = vdwg.mxu0
    %2569 = vmatprep.subr.bf16.mxu0 %v1605
    %2570 = vmatpush1.bf16.msra.mxu0 %v1604
    %2571 = vmatprep.subr.bf16.mxu0 %v1598
    %2572 = vmatpush1.bf16.msra.mxu0 %v1597
    %2573 = vmatprep.subr.bf16.mxu0 %v1591
    %2574 = vmatpush1.bf16.msra.mxu0 %v1590
    %2575 = vmatprep.subr.bf16.mxu0 %v1584
    %2576 = vmatpush1.bf16.msra.mxu0 %v1583
    %2577 = vmatprep.subr.bf16.mxu0 %v1577
    %2578 = vmatpush1.bf16.msra.mxu0 %v1576
    %2579 = vmatprep.subr.bf16.mxu0 %v1570
    %2580 = vmatpush1.bf16.msra.mxu0 %v1569
    %2581 = vmatprep.subr.bf16.mxu0 %v1563
    %2582 = vmatpush1.bf16.msra.mxu0 %v1562
    %2583 = vmatprep.subr.bf16.mxu0 %v1556
    %2584 = vmatpush1.bf16.msra.mxu0 %v1555
    %2585 = vmatprep.subr.bf16.mxu0 %v1661
    %2586 = vmatpush2.bf16.msra.mxu0 %v1660
    %2587 = vmatprep.subr.bf16.mxu0 %v1654
    %2588 = vmatpush2.bf16.msra.mxu0 %v1653
    %2589 = vmatprep.subr.bf16.mxu0 %v1647
    %2590 = vmatpush2.bf16.msra.mxu0 %v1646
    %2591 = vmatprep.subr.bf16.mxu0 %v1640
    %2592 = vmatpush2.bf16.msra.mxu0 %v1639
    %2593 = vmatprep.subr.bf16.mxu0 %v1633
    %2594 = vmatpush2.bf16.msra.mxu0 %v1632
    %2595 = vmatprep.subr.bf16.mxu0 %v1626
    %2596 = vmatpush2.bf16.msra.mxu0 %v1625
    %2597 = vmatprep.subr.bf16.mxu0 %v1619
    %2598 = vmatpush2.bf16.msra.mxu0 %v1618
    %2599 = vmatprep.subr.bf16.mxu0 %v1612
    %2600 = vmatpush2.bf16.msra.mxu0 %v1611
    %2601 = vmatprep.mubr.bf16.mxu0 %v461
    %2602 = vmatmul.mubr.bf16.gmra.mxu0 %v460
    %v2603 = vpop.f32.mrf.mxu0
    %v2604 = vadd.f32 0.0, %v2603
    %v2605 = vpop.f32.mrf.mxu0
    %v2606 = vadd.f32 0.0, %v2605
    %v2607 = vpop.f32.mrf.mxu0
    %v2608 = vpop.f32.mrf.mxu0
    %2609 = vdwg.mxu0
    %2610 = vmatprep.subr.bf16.mxu0 %v1717
    %2611 = vmatpush1.bf16.msra.mxu0 %v1716
    %2612 = vmatprep.subr.bf16.mxu0 %v1710
    %2613 = vmatpush1.bf16.msra.mxu0 %v1709
    %2614 = vmatprep.subr.bf16.mxu0 %v1703
    %2615 = vmatpush1.bf16.msra.mxu0 %v1702
    %2616 = vmatprep.subr.bf16.mxu0 %v1696
    %2617 = vmatpush1.bf16.msra.mxu0 %v1695
    %2618 = vmatprep.subr.bf16.mxu0 %v1689
    %2619 = vmatpush1.bf16.msra.mxu0 %v1688
    %2620 = vmatprep.subr.bf16.mxu0 %v1682
    %2621 = vmatpush1.bf16.msra.mxu0 %v1681
    %2622 = vmatprep.subr.bf16.mxu0 %v1675
    %2623 = vmatpush1.bf16.msra.mxu0 %v1674
    %2624 = vmatprep.subr.bf16.mxu0 %v1668
    %2625 = vmatpush1.bf16.msra.mxu0 %v1667
    %2626 = vmatprep.subr.bf16.mxu0 %v1773
    %2627 = vmatpush2.bf16.msra.mxu0 %v1772
    %2628 = vmatprep.subr.bf16.mxu0 %v1766
    %2629 = vmatpush2.bf16.msra.mxu0 %v1765
    %2630 = vmatprep.subr.bf16.mxu0 %v1759
    %2631 = vmatpush2.bf16.msra.mxu0 %v1758
    %2632 = vmatprep.subr.bf16.mxu0 %v1752
    %2633 = vmatpush2.bf16.msra.mxu0 %v1751
    %2634 = vmatprep.subr.bf16.mxu0 %v1745
    %2635 = vmatpush2.bf16.msra.mxu0 %v1744
    %2636 = vmatprep.subr.bf16.mxu0 %v1738
    %2637 = vmatpush2.bf16.msra.mxu0 %v1737
    %2638 = vmatprep.subr.bf16.mxu0 %v1731
    %2639 = vmatpush2.bf16.msra.mxu0 %v1730
    %2640 = vmatprep.subr.bf16.mxu0 %v1724
    %2641 = vmatpush2.bf16.msra.mxu0 %v1723
    %2642 = vmatprep.mubr.bf16.mxu0 %v463
    %2643 = vmatmul.mubr.bf16.gmra.mxu0 %v462
    %v2644 = vpop.f32.mrf.mxu0
    %v2645 = vadd.f32 %v2604, %v2644
    %v2646 = vpop.f32.mrf.mxu0
    %v2647 = vadd.f32 %v2606, %v2646
    %v2648 = vpop.f32.mrf.mxu0
    %v2649 = vpop.f32.mrf.mxu0
    %2650 = vdwg.mxu0
    %2651 = vmatprep.subr.bf16.mxu0 %v1829
    %2652 = vmatpush1.bf16.msra.mxu0 %v1828
    %2653 = vmatprep.subr.bf16.mxu0 %v1822
    %2654 = vmatpush1.bf16.msra.mxu0 %v1821
    %2655 = vmatprep.subr.bf16.mxu0 %v1815
    %2656 = vmatpush1.bf16.msra.mxu0 %v1814
    %2657 = vmatprep.subr.bf16.mxu0 %v1808
    %2658 = vmatpush1.bf16.msra.mxu0 %v1807
    %2659 = vmatprep.subr.bf16.mxu0 %v1801
    %2660 = vmatpush1.bf16.msra.mxu0 %v1800
    %2661 = vmatprep.subr.bf16.mxu0 %v1794
    %2662 = vmatpush1.bf16.msra.mxu0 %v1793
    %2663 = vmatprep.subr.bf16.mxu0 %v1787
    %2664 = vmatpush1.bf16.msra.mxu0 %v1786
    %2665 = vmatprep.subr.bf16.mxu0 %v1780
    %2666 = vmatpush1.bf16.msra.mxu0 %v1779
    %2667 = vmatprep.subr.bf16.mxu0 %v1885
    %2668 = vmatpush2.bf16.msra.mxu0 %v1884
    %2669 = vmatprep.subr.bf16.mxu0 %v1878
    %2670 = vmatpush2.bf16.msra.mxu0 %v1877
    %2671 = vmatprep.subr.bf16.mxu0 %v1871
    %2672 = vmatpush2.bf16.msra.mxu0 %v1870
    %2673 = vmatprep.subr.bf16.mxu0 %v1864
    %2674 = vmatpush2.bf16.msra.mxu0 %v1863
    %2675 = vmatprep.subr.bf16.mxu0 %v1857
    %2676 = vmatpush2.bf16.msra.mxu0 %v1856
    %2677 = vmatprep.subr.bf16.mxu0 %v1850
    %2678 = vmatpush2.bf16.msra.mxu0 %v1849
    %2679 = vmatprep.subr.bf16.mxu0 %v1843
    %2680 = vmatpush2.bf16.msra.mxu0 %v1842
    %2681 = vmatprep.subr.bf16.mxu0 %v1836
    %2682 = vmatpush2.bf16.msra.mxu0 %v1835
    %2683 = vmatprep.mubr.bf16.mxu0 %v465
    %2684 = vmatmul.mubr.bf16.gmra.mxu0 %v464
    %v2685 = vpop.f32.mrf.mxu0
    %v2686 = vadd.f32 %v2645, %v2685
    %v2687 = vpop.f32.mrf.mxu0
    %v2688 = vadd.f32 %v2647, %v2687
    %v2689 = vpop.f32.mrf.mxu0
    %v2690 = vpop.f32.mrf.mxu0
    %2691 = vdwg.mxu0
    %2692 = vmatprep.subr.bf16.mxu0 0
    %2693 = vmatpush1.bf16.msra.mxu0 0
    %2694 = vmatprep.subr.bf16.mxu0 0
    %2695 = vmatpush1.bf16.msra.mxu0 0
    %2696 = vmatprep.subr.bf16.mxu0 0
    %2697 = vmatpush1.bf16.msra.mxu0 0
    %2698 = vmatprep.subr.bf16.mxu0 0
    %2699 = vmatpush1.bf16.msra.mxu0 0
    %2700 = vmatprep.subr.bf16.mxu0 0
    %2701 = vmatpush1.bf16.msra.mxu0 0
    %2702 = vmatprep.subr.bf16.mxu0 0
    %2703 = vmatpush1.bf16.msra.mxu0 0
    %2704 = vmatprep.subr.bf16.mxu0 0
    %2705 = vmatpush1.bf16.msra.mxu0 0
    %2706 = vmatprep.subr.bf16.mxu0 %v1892
    %2707 = vmatpush1.bf16.msra.mxu0 %v1891
    %2708 = vmatprep.subr.bf16.mxu0 0
    %2709 = vmatpush2.bf16.msra.mxu0 0
    %2710 = vmatprep.subr.bf16.mxu0 0
    %2711 = vmatpush2.bf16.msra.mxu0 0
    %2712 = vmatprep.subr.bf16.mxu0 0
    %2713 = vmatpush2.bf16.msra.mxu0 0
    %2714 = vmatprep.subr.bf16.mxu0 0
    %2715 = vmatpush2.bf16.msra.mxu0 0
    %2716 = vmatprep.subr.bf16.mxu0 0
    %2717 = vmatpush2.bf16.msra.mxu0 0
    %2718 = vmatprep.subr.bf16.mxu0 0
    %2719 = vmatpush2.bf16.msra.mxu0 0
    %2720 = vmatprep.subr.bf16.mxu0 0
    %2721 = vmatpush2.bf16.msra.mxu0 0
    %2722 = vmatprep.subr.bf16.mxu0 0
    %2723 = vmatpush2.bf16.msra.mxu0 0
    %2724 = vmatprep.mubr.bf16.mxu0 0
    %2725 = vmatmul.mubr.bf16.gmra.mxu0 %v2239
    %v2726 = vpop.f32.mrf.mxu0
    %v2727 = vadd.f32 %v2686, %v2726
    %v2728 = vpop.f32.mrf.mxu0
    %v2729 = vadd.f32 %v2688, %v2728
    %v2730 = vpop.f32.mrf.mxu0
    %v2731 = vpop.f32.mrf.mxu0
    %2732 = vdwg.mxu0
    %2733 = vmatprep.subr.bf16.mxu0 0
    %2734 = vmatpush1.bf16.msra.mxu0 %v1606
    %2735 = vmatprep.subr.bf16.mxu0 0
    %2736 = vmatpush1.bf16.msra.mxu0 %v1599
    %2737 = vmatprep.subr.bf16.mxu0 0
    %2738 = vmatpush1.bf16.msra.mxu0 %v1592
    %2739 = vmatprep.subr.bf16.mxu0 0
    %2740 = vmatpush1.bf16.msra.mxu0 %v1585
    %2741 = vmatprep.subr.bf16.mxu0 0
    %2742 = vmatpush1.bf16.msra.mxu0 %v1578
    %2743 = vmatprep.subr.bf16.mxu0 0
    %2744 = vmatpush1.bf16.msra.mxu0 %v1571
    %2745 = vmatprep.subr.bf16.mxu0 0
    %2746 = vmatpush1.bf16.msra.mxu0 %v1564
    %2747 = vmatprep.subr.bf16.mxu0 0
    %2748 = vmatpush1.bf16.msra.mxu0 %v1557
    %2749 = vmatprep.subr.bf16.mxu0 0
    %2750 = vmatpush2.bf16.msra.mxu0 %v1662
    %2751 = vmatprep.subr.bf16.mxu0 0
    %2752 = vmatpush2.bf16.msra.mxu0 %v1655
    %2753 = vmatprep.subr.bf16.mxu0 0
    %2754 = vmatpush2.bf16.msra.mxu0 %v1648
    %2755 = vmatprep.subr.bf16.mxu0 0
    %2756 = vmatpush2.bf16.msra.mxu0 %v1641
    %2757 = vmatprep.subr.bf16.mxu0 0
    %2758 = vmatpush2.bf16.msra.mxu0 %v1634
    %2759 = vmatprep.subr.bf16.mxu0 0
    %2760 = vmatpush2.bf16.msra.mxu0 %v1627
    %2761 = vmatprep.subr.bf16.mxu0 0
    %2762 = vmatpush2.bf16.msra.mxu0 %v1620
    %2763 = vmatprep.subr.bf16.mxu0 0
    %2764 = vmatpush2.bf16.msra.mxu0 %v1613
    %2765 = vmatprep.mubr.bf16.mxu0 %v461
    %2766 = vmatmul.mubr.bf16.gmra.mxu0 %v460
    %v2767 = vpop.f32.mrf.mxu0
    %v2768 = vadd.f32 0.0, %v2767
    %v2769 = vpop.f32.mrf.mxu0
    %v2770 = vpop.f32.mrf.mxu0
    %v2771 = vpop.f32.mrf.mxu0
    %2772 = vdwg.mxu0
    %2773 = vmatprep.subr.bf16.mxu0 0
    %2774 = vmatpush1.bf16.msra.mxu0 %v1718
    %2775 = vmatprep.subr.bf16.mxu0 0
    %2776 = vmatpush1.bf16.msra.mxu0 %v1711
    %2777 = vmatprep.subr.bf16.mxu0 0
    %2778 = vmatpush1.bf16.msra.mxu0 %v1704
    %2779 = vmatprep.subr.bf16.mxu0 0
    %2780 = vmatpush1.bf16.msra.mxu0 %v1697
    %2781 = vmatprep.subr.bf16.mxu0 0
    %2782 = vmatpush1.bf16.msra.mxu0 %v1690
    %2783 = vmatprep.subr.bf16.mxu0 0
    %2784 = vmatpush1.bf16.msra.mxu0 %v1683
    %2785 = vmatprep.subr.bf16.mxu0 0
    %2786 = vmatpush1.bf16.msra.mxu0 %v1676
    %2787 = vmatprep.subr.bf16.mxu0 0
    %2788 = vmatpush1.bf16.msra.mxu0 %v1669
    %2789 = vmatprep.subr.bf16.mxu0 0
    %2790 = vmatpush2.bf16.msra.mxu0 %v1774
    %2791 = vmatprep.subr.bf16.mxu0 0
    %2792 = vmatpush2.bf16.msra.mxu0 %v1767
    %2793 = vmatprep.subr.bf16.mxu0 0
    %2794 = vmatpush2.bf16.msra.mxu0 %v1760
    %2795 = vmatprep.subr.bf16.mxu0 0
    %2796 = vmatpush2.bf16.msra.mxu0 %v1753
    %2797 = vmatprep.subr.bf16.mxu0 0
    %2798 = vmatpush2.bf16.msra.mxu0 %v1746
    %2799 = vmatprep.subr.bf16.mxu0 0
    %2800 = vmatpush2.bf16.msra.mxu0 %v1739
    %2801 = vmatprep.subr.bf16.mxu0 0
    %2802 = vmatpush2.bf16.msra.mxu0 %v1732
    %2803 = vmatprep.subr.bf16.mxu0 0
    %2804 = vmatpush2.bf16.msra.mxu0 %v1725
    %2805 = vmatprep.mubr.bf16.mxu0 %v463
    %2806 = vmatmul.mubr.bf16.gmra.mxu0 %v462
    %v2807 = vpop.f32.mrf.mxu0
    %v2808 = vadd.f32 %v2768, %v2807
    %v2809 = vpop.f32.mrf.mxu0
    %v2810 = vpop.f32.mrf.mxu0
    %v2811 = vpop.f32.mrf.mxu0
    %2812 = vdwg.mxu0
    %2813 = vmatprep.subr.bf16.mxu0 0
    %2814 = vmatpush1.bf16.msra.mxu0 %v1830
    %2815 = vmatprep.subr.bf16.mxu0 0
    %2816 = vmatpush1.bf16.msra.mxu0 %v1823
    %2817 = vmatprep.subr.bf16.mxu0 0
    %2818 = vmatpush1.bf16.msra.mxu0 %v1816
    %2819 = vmatprep.subr.bf16.mxu0 0
    %2820 = vmatpush1.bf16.msra.mxu0 %v1809
    %2821 = vmatprep.subr.bf16.mxu0 0
    %2822 = vmatpush1.bf16.msra.mxu0 %v1802
    %2823 = vmatprep.subr.bf16.mxu0 0
    %2824 = vmatpush1.bf16.msra.mxu0 %v1795
    %2825 = vmatprep.subr.bf16.mxu0 0
    %2826 = vmatpush1.bf16.msra.mxu0 %v1788
    %2827 = vmatprep.subr.bf16.mxu0 0
    %2828 = vmatpush1.bf16.msra.mxu0 %v1781
    %2829 = vmatprep.subr.bf16.mxu0 0
    %2830 = vmatpush2.bf16.msra.mxu0 %v1886
    %2831 = vmatprep.subr.bf16.mxu0 0
    %2832 = vmatpush2.bf16.msra.mxu0 %v1879
    %2833 = vmatprep.subr.bf16.mxu0 0
    %2834 = vmatpush2.bf16.msra.mxu0 %v1872
    %2835 = vmatprep.subr.bf16.mxu0 0
    %2836 = vmatpush2.bf16.msra.mxu0 %v1865
    %2837 = vmatprep.subr.bf16.mxu0 0
    %2838 = vmatpush2.bf16.msra.mxu0 %v1858
    %2839 = vmatprep.subr.bf16.mxu0 0
    %2840 = vmatpush2.bf16.msra.mxu0 %v1851
    %2841 = vmatprep.subr.bf16.mxu0 0
    %2842 = vmatpush2.bf16.msra.mxu0 %v1844
    %2843 = vmatprep.subr.bf16.mxu0 0
    %2844 = vmatpush2.bf16.msra.mxu0 %v1837
    %2845 = vmatprep.mubr.bf16.mxu0 %v465
    %2846 = vmatmul.mubr.bf16.gmra.mxu0 %v464
    %v2847 = vpop.f32.mrf.mxu0
    %v2848 = vadd.f32 %v2808, %v2847
    %v2849 = vpop.f32.mrf.mxu0
    %v2850 = vpop.f32.mrf.mxu0
    %v2851 = vpop.f32.mrf.mxu0
    %2852 = vdwg.mxu0
    %2853 = vmatprep.subr.bf16.mxu0 0
    %2854 = vmatpush1.bf16.msra.mxu0 0
    %2855 = vmatprep.subr.bf16.mxu0 0
    %2856 = vmatpush1.bf16.msra.mxu0 0
    %2857 = vmatprep.subr.bf16.mxu0 0
    %2858 = vmatpush1.bf16.msra.mxu0 0
    %2859 = vmatprep.subr.bf16.mxu0 0
    %2860 = vmatpush1.bf16.msra.mxu0 0
    %2861 = vmatprep.subr.bf16.mxu0 0
    %2862 = vmatpush1.bf16.msra.mxu0 0
    %2863 = vmatprep.subr.bf16.mxu0 0
    %2864 = vmatpush1.bf16.msra.mxu0 0
    %2865 = vmatprep.subr.bf16.mxu0 0
    %2866 = vmatpush1.bf16.msra.mxu0 0
    %2867 = vmatprep.subr.bf16.mxu0 0
    %2868 = vmatpush1.bf16.msra.mxu0 %v1893
    %2869 = vmatprep.subr.bf16.mxu0 0
    %2870 = vmatpush2.bf16.msra.mxu0 0
    %2871 = vmatprep.subr.bf16.mxu0 0
    %2872 = vmatpush2.bf16.msra.mxu0 0
    %2873 = vmatprep.subr.bf16.mxu0 0
    %2874 = vmatpush2.bf16.msra.mxu0 0
    %2875 = vmatprep.subr.bf16.mxu0 0
    %2876 = vmatpush2.bf16.msra.mxu0 0
    %2877 = vmatprep.subr.bf16.mxu0 0
    %2878 = vmatpush2.bf16.msra.mxu0 0
    %2879 = vmatprep.subr.bf16.mxu0 0
    %2880 = vmatpush2.bf16.msra.mxu0 0
    %2881 = vmatprep.subr.bf16.mxu0 0
    %2882 = vmatpush2.bf16.msra.mxu0 0
    %2883 = vmatprep.subr.bf16.mxu0 0
    %2884 = vmatpush2.bf16.msra.mxu0 0
    %2885 = vmatprep.mubr.bf16.mxu0 0
    %2886 = vmatmul.mubr.bf16.gmra.mxu0 %v2239
    %v2887 = vpop.f32.mrf.mxu0
    %v2888 = vadd.f32 %v2848, %v2887
    %v2889 = vpop.f32.mrf.mxu0
    %v2890 = vpop.f32.mrf.mxu0
    %v2891 = vpop.f32.mrf.mxu0
    %2892 = vdwg.mxu0
    %s2893 = scalar_lea.vmem [#allocation2], 2744
    %v2894 = vld [vmem:[%s2893] sm:$0xff]
    %v2895 = vld [vmem:[%s2893 + $0x8] sm:$0xff]
    %v2896 = vld [vmem:[%s2893 + $0x10] sm:$0xff]
    %v2897 = vld [vmem:[%s2893 + $0x18] sm:$0xf]
    %v2898 = vld [vmem:[%s2893 + $0x1c] sm:$0xff]
    %v2899 = vld [vmem:[%s2893 + $0x24] sm:$0xff]
    %v2900 = vld [vmem:[%s2893 + $0x2c] sm:$0xff]
    %v2901 = vld [vmem:[%s2893 + $0x34] sm:$0xf]
    %v2902 = vld [vmem:[%s2893 + $0x38] sm:$0xff]
    %v2903 = vld [vmem:[%s2893 + $0x40] sm:$0xff]
    %v2904 = vld [vmem:[%s2893 + $0x48] sm:$0xff]
    %v2905 = vld [vmem:[%s2893 + $0x50] sm:$0xf]
    %v2906 = vld [vmem:[%s2893 + $0x54] sm:$0xff]
    %v2907 = vld [vmem:[%s2893 + $0x5c] sm:$0xff]
    %v2908 = vld [vmem:[%s2893 + $0x64] sm:$0xff]
    %v2909 = vld [vmem:[%s2893 + $0x6c] sm:$0xf]
    %v2910 = vld [vmem:[%s2893 + $0x70] sm:$0xff]
    %v2911 = vld [vmem:[%s2893 + $0x78] sm:$0xff]
    %v2912 = vld [vmem:[%s2893 + $0x80] sm:$0xff]
    %v2913 = vld [vmem:[%s2893 + $0x88] sm:$0xf]
    %v2914 = vld [vmem:[%s2893 + $0x8c] sm:$0xff]
    %v2915 = vld [vmem:[%s2893 + $0x94] sm:$0xff]
    %v2916 = vld [vmem:[%s2893 + $0x9c] sm:$0xff]
    %v2917 = vld [vmem:[%s2893 + $0xa4] sm:$0xf]
    %v2918 = vld [vmem:[%s2893 + $0xa8] sm:$0xff]
    %v2919 = vld [vmem:[%s2893 + $0xb0] sm:$0xff]
    %v2920 = vld [vmem:[%s2893 + $0xb8] sm:$0xff]
    %v2921 = vld [vmem:[%s2893 + $0xc0] sm:$0xf]
    %v2922 = vld [vmem:[%s2893 + $0xc4] sm:$0xff]
    %v2923 = vld [vmem:[%s2893 + $0xcc] sm:$0xff]
    %v2924 = vld [vmem:[%s2893 + $0xd4] sm:$0xff]
    %v2925 = vld [vmem:[%s2893 + $0xdc] sm:$0xf]
    %v2926 = vld [vmem:[%s2893 + $0xe0] sm:$0xff]
    %v2927 = vld [vmem:[%s2893 + $0xe8] sm:$0xff]
    %v2928 = vld [vmem:[%s2893 + $0xf0] sm:$0xff]
    %v2929 = vld [vmem:[%s2893 + $0xf8] sm:$0xf]
    %v2930 = vld [vmem:[%s2893 + $0xfc] sm:$0xff]
    %v2931 = vld [vmem:[%s2893 + $0x104] sm:$0xff]
    %v2932 = vld [vmem:[%s2893 + $0x10c] sm:$0xff]
    %v2933 = vld [vmem:[%s2893 + $0x114] sm:$0xf]
    %v2934 = vld [vmem:[%s2893 + $0x118] sm:$0xff]
    %v2935 = vld [vmem:[%s2893 + $0x120] sm:$0xff]
    %v2936 = vld [vmem:[%s2893 + $0x128] sm:$0xff]
    %v2937 = vld [vmem:[%s2893 + $0x130] sm:$0xf]
    %v2938 = vld [vmem:[%s2893 + $0x134] sm:$0xff]
    %v2939 = vld [vmem:[%s2893 + $0x13c] sm:$0xff]
    %v2940 = vld [vmem:[%s2893 + $0x144] sm:$0xff]
    %v2941 = vld [vmem:[%s2893 + $0x14c] sm:$0xf]
    %v2942 = vld [vmem:[%s2893 + $0x150] sm:$0xff]
    %v2943 = vld [vmem:[%s2893 + $0x158] sm:$0xff]
    %v2944 = vld [vmem:[%s2893 + $0x160] sm:$0xff]
    %v2945 = vld [vmem:[%s2893 + $0x168] sm:$0xf]
    %v2946 = vld [vmem:[%s2893 + $0x16c] sm:$0xff]
    %v2947 = vld [vmem:[%s2893 + $0x174] sm:$0xff]
    %v2948 = vld [vmem:[%s2893 + $0x17c] sm:$0xff]
    %v2949 = vld [vmem:[%s2893 + $0x184] sm:$0xf]
    %v2950 = vld [vmem:[%s2893 + $0x188] sm:$0xff]
    %v2951 = vld [vmem:[%s2893 + $0x190] sm:$0xff]
    %v2952 = vld [vmem:[%s2893 + $0x198] sm:$0xff]
    %v2953 = vld [vmem:[%s2893 + $0x1a0] sm:$0xf]
    %v2954 = vld [vmem:[%s2893 + $0x1a4] sm:$0xff]
    %v2955 = vld [vmem:[%s2893 + $0x1ac] sm:$0xff]
    %v2956 = vld [vmem:[%s2893 + $0x1b4] sm:$0xff]
    %v2957 = vld [vmem:[%s2893 + $0x1bc] sm:$0xf]
    %v2958 = vld [vmem:[%s2893 + $0x1c0] sm:$0xff]
    %v2959 = vld [vmem:[%s2893 + $0x1c8] sm:$0xff]
    %v2960 = vld [vmem:[%s2893 + $0x1d0] sm:$0xff]
    %v2961 = vld [vmem:[%s2893 + $0x1d8] sm:$0xf]
    %v2962 = vld [vmem:[%s2893 + $0x1dc] sm:$0xff]
    %v2963 = vld [vmem:[%s2893 + $0x1e4] sm:$0xff]
    %v2964 = vld [vmem:[%s2893 + $0x1ec] sm:$0xff]
    %v2965 = vld [vmem:[%s2893 + $0x1f4] sm:$0xf]
    %v2966 = vld [vmem:[%s2893 + $0x1f8] sm:$0xff]
    %v2967 = vld [vmem:[%s2893 + $0x200] sm:$0xff]
    %v2968 = vld [vmem:[%s2893 + $0x208] sm:$0xff]
    %v2969 = vld [vmem:[%s2893 + $0x210] sm:$0xf]
    %v2970 = vld [vmem:[%s2893 + $0x214] sm:$0xff]
    %v2971 = vld [vmem:[%s2893 + $0x21c] sm:$0xff]
    %v2972 = vld [vmem:[%s2893 + $0x224] sm:$0xff]
    %v2973 = vld [vmem:[%s2893 + $0x22c] sm:$0xf]
    %v2974 = vld [vmem:[%s2893 + $0x230] sm:$0xff]
    %v2975 = vld [vmem:[%s2893 + $0x238] sm:$0xff]
    %v2976 = vld [vmem:[%s2893 + $0x240] sm:$0xff]
    %v2977 = vld [vmem:[%s2893 + $0x248] sm:$0xf]
    %v2978 = vld [vmem:[%s2893 + $0x24c] sm:$0xff]
    %v2979 = vld [vmem:[%s2893 + $0x254] sm:$0xff]
    %v2980 = vld [vmem:[%s2893 + $0x25c] sm:$0xff]
    %v2981 = vld [vmem:[%s2893 + $0x264] sm:$0xf]
    %v2982 = vld [vmem:[%s2893 + $0x268] sm:$0xff]
    %v2983 = vld [vmem:[%s2893 + $0x270] sm:$0xff]
    %v2984 = vld [vmem:[%s2893 + $0x278] sm:$0xff]
    %v2985 = vld [vmem:[%s2893 + $0x280] sm:$0xf]
    %v2986 = vld [vmem:[%s2893 + $0x284] sm:$0xff]
    %v2987 = vld [vmem:[%s2893 + $0x28c] sm:$0xff]
    %v2988 = vld [vmem:[%s2893 + $0x294] sm:$0xff]
    %v2989 = vld [vmem:[%s2893 + $0x29c] sm:$0xf]
    %v2990 = vld [vmem:[%s2893 + $0x2a0] sm:$0xff]
    %v2991 = vld [vmem:[%s2893 + $0x2a8] sm:$0xff]
    %v2992 = vld [vmem:[%s2893 + $0x2b0] sm:$0xff]
    %v2993 = vld [vmem:[%s2893 + $0x2b8] sm:$0xf]
    %v2994 = vld [vmem:[%s2893 + $0x2bc] sm:$0xff]
    %v2995 = vld [vmem:[%s2893 + $0x2c4] sm:$0xff]
    %v2996 = vld [vmem:[%s2893 + $0x2cc] sm:$0xff]
    %v2997 = vld [vmem:[%s2893 + $0x2d4] sm:$0xf]
    %v2998 = vld [vmem:[%s2893 + $0x2d8] sm:$0xff]
    %v2999 = vld [vmem:[%s2893 + $0x2e0] sm:$0xff]
    %v3000 = vld [vmem:[%s2893 + $0x2e8] sm:$0xff]
    %v3001 = vld [vmem:[%s2893 + $0x2f0] sm:$0xf]
    %v3002 = vld [vmem:[%s2893 + $0x2f4] sm:$0xff]
    %v3003 = vld [vmem:[%s2893 + $0x2fc] sm:$0xff]
    %v3004 = vld [vmem:[%s2893 + $0x304] sm:$0xff]
    %v3005 = vld [vmem:[%s2893 + $0x30c] sm:$0xf]
    %v3006 = vld [vmem:[%s2893 + $0x310] sm:$0xff]
    %v3007 = vld [vmem:[%s2893 + $0x318] sm:$0xff]
    %v3008 = vld [vmem:[%s2893 + $0x320] sm:$0xff]
    %v3009 = vld [vmem:[%s2893 + $0x328] sm:$0xf]
    %v3010 = vld [vmem:[%s2893 + $0x32c] sm:$0xff]
    %v3011 = vld [vmem:[%s2893 + $0x334] sm:$0xff]
    %v3012 = vld [vmem:[%s2893 + $0x33c] sm:$0xff]
    %v3013 = vld [vmem:[%s2893 + $0x344] sm:$0xf]
    %v3014 = vld [vmem:[%s2893 + $0x348] sm:$0xff]
    %v3015 = vld [vmem:[%s2893 + $0x350] sm:$0xff]
    %v3016 = vld [vmem:[%s2893 + $0x358] sm:$0xff]
    %v3017 = vld [vmem:[%s2893 + $0x360] sm:$0xf]
    %v3018 = vld [vmem:[%s2893 + $0x364] sm:$0xff]
    %v3019 = vld [vmem:[%s2893 + $0x36c] sm:$0xff]
    %v3020 = vld [vmem:[%s2893 + $0x374] sm:$0xff]
    %v3021 = vld [vmem:[%s2893 + $0x37c] sm:$0xf]
    %v3022 = vld [vmem:[%s2893 + $0x380] sm:$0xff]
    %v3023 = vld [vmem:[%s2893 + $0x388] sm:$0xff]
    %v3024 = vld [vmem:[%s2893 + $0x390] sm:$0xff]
    %v3025 = vld [vmem:[%s2893 + $0x398] sm:$0xf]
    %v3026 = vld [vmem:[%s2893 + $0x39c] sm:$0xff]
    %v3027 = vld [vmem:[%s2893 + $0x3a4] sm:$0xff]
    %v3028 = vld [vmem:[%s2893 + $0x3ac] sm:$0xff]
    %v3029 = vld [vmem:[%s2893 + $0x3b4] sm:$0xf]
    %v3030 = vld [vmem:[%s2893 + $0x3b8] sm:$0xff]
    %v3031 = vld [vmem:[%s2893 + $0x3c0] sm:$0xff]
    %v3032 = vld [vmem:[%s2893 + $0x3c8] sm:$0xff]
    %v3033 = vld [vmem:[%s2893 + $0x3d0] sm:$0xf]
    %v3034 = vld [vmem:[%s2893 + $0x3d4] sm:$0xff]
    %v3035 = vld [vmem:[%s2893 + $0x3dc] sm:$0xff]
    %v3036 = vld [vmem:[%s2893 + $0x3e4] sm:$0xff]
    %v3037 = vld [vmem:[%s2893 + $0x3ec] sm:$0xf]
    %v3038 = vld [vmem:[%s2893 + $0x3f0] sm:$0xff]
    %v3039 = vld [vmem:[%s2893 + $0x3f8] sm:$0xff]
    %v3040 = vld [vmem:[%s2893 + $0x400] sm:$0xff]
    %v3041 = vld [vmem:[%s2893 + $0x408] sm:$0xf]
    %v3042 = vld [vmem:[%s2893 + $0x40c] sm:$0xff]
    %v3043 = vld [vmem:[%s2893 + $0x414] sm:$0xff]
    %v3044 = vld [vmem:[%s2893 + $0x41c] sm:$0xff]
    %v3045 = vld [vmem:[%s2893 + $0x424] sm:$0xf]
    %v3046 = vld [vmem:[%s2893 + $0x428] sm:$0xff]
    %v3047 = vld [vmem:[%s2893 + $0x430] sm:$0xff]
    %v3048 = vld [vmem:[%s2893 + $0x438] sm:$0xff]
    %v3049 = vld [vmem:[%s2893 + $0x440] sm:$0xf]
    %v3050 = vld [vmem:[%s2893 + $0x444] sm:$0xff]
    %v3051 = vld [vmem:[%s2893 + $0x44c] sm:$0xff]
    %v3052 = vld [vmem:[%s2893 + $0x454] sm:$0xff]
    %v3053 = vld [vmem:[%s2893 + $0x45c] sm:$0xf]
    %v3054 = vld [vmem:[%s2893 + $0x460] sm:$0xff]
    %v3055 = vld [vmem:[%s2893 + $0x468] sm:$0xff]
    %v3056 = vld [vmem:[%s2893 + $0x470] sm:$0xff]
    %v3057 = vld [vmem:[%s2893 + $0x478] sm:$0xf]
    %v3058 = vld [vmem:[%s2893 + $0x47c] sm:$0xff]
    %v3059 = vld [vmem:[%s2893 + $0x484] sm:$0xff]
    %v3060 = vld [vmem:[%s2893 + $0x48c] sm:$0xff]
    %v3061 = vld [vmem:[%s2893 + $0x494] sm:$0xf]
    %v3062 = vld [vmem:[%s2893 + $0x498] sm:$0xff]
    %v3063 = vld [vmem:[%s2893 + $0x4a0] sm:$0xff]
    %v3064 = vld [vmem:[%s2893 + $0x4a8] sm:$0xff]
    %v3065 = vld [vmem:[%s2893 + $0x4b0] sm:$0xf]
    %v3066 = vld [vmem:[%s2893 + $0x4b4] sm:$0xff]
    %v3067 = vld [vmem:[%s2893 + $0x4bc] sm:$0xff]
    %v3068 = vld [vmem:[%s2893 + $0x4c4] sm:$0xff]
    %v3069 = vld [vmem:[%s2893 + $0x4cc] sm:$0xf]
    %v3070 = vld [vmem:[%s2893 + $0x4d0] sm:$0xff]
    %v3071 = vld [vmem:[%s2893 + $0x4d8] sm:$0xff]
    %v3072 = vld [vmem:[%s2893 + $0x4e0] sm:$0xff]
    %v3073 = vld [vmem:[%s2893 + $0x4e8] sm:$0xf]
    %v3074 = vld [vmem:[%s2893 + $0x4ec] sm:$0xff]
    %v3075 = vld [vmem:[%s2893 + $0x4f4] sm:$0xff]
    %v3076 = vld [vmem:[%s2893 + $0x4fc] sm:$0xff]
    %v3077 = vld [vmem:[%s2893 + $0x504] sm:$0xf]
    %v3078 = vld [vmem:[%s2893 + $0x508] sm:$0xff]
    %v3079 = vld [vmem:[%s2893 + $0x510] sm:$0xff]
    %v3080 = vld [vmem:[%s2893 + $0x518] sm:$0xff]
    %v3081 = vld [vmem:[%s2893 + $0x520] sm:$0xf]
    %v3082 = vld [vmem:[%s2893 + $0x524] sm:$0xff]
    %v3083 = vld [vmem:[%s2893 + $0x52c] sm:$0xff]
    %v3084 = vld [vmem:[%s2893 + $0x534] sm:$0xff]
    %v3085 = vld [vmem:[%s2893 + $0x53c] sm:$0xf]
    %v3086 = vld [vmem:[%s2893 + $0x540] sm:$0xff]
    %v3087 = vld [vmem:[%s2893 + $0x548] sm:$0xff]
    %v3088 = vld [vmem:[%s2893 + $0x550] sm:$0xff]
    %v3089 = vld [vmem:[%s2893 + $0x558] sm:$0xf]
    %v3090 = vld [vmem:[%s2893 + $0x55c] sm:$0xff]
    %v3091 = vld [vmem:[%s2893 + $0x564] sm:$0xff]
    %v3092 = vld [vmem:[%s2893 + $0x56c] sm:$0xff]
    %v3093 = vld [vmem:[%s2893 + $0x574] sm:$0xf]
    %v3094 = vld [vmem:[%s2893 + $0x578] sm:$0xff]
    %v3095 = vld [vmem:[%s2893 + $0x580] sm:$0xff]
    %v3096 = vld [vmem:[%s2893 + $0x588] sm:$0xff]
    %v3097 = vld [vmem:[%s2893 + $0x590] sm:$0xf]
    %v3098 = vld [vmem:[%s2893 + $0x594] sm:$0xff]
    %v3099 = vld [vmem:[%s2893 + $0x59c] sm:$0xff]
    %v3100 = vld [vmem:[%s2893 + $0x5a4] sm:$0xff]
    %v3101 = vld [vmem:[%s2893 + $0x5ac] sm:$0xf]
    %v3102 = vld [vmem:[%s2893 + $0x5b0] sm:$0xff]
    %v3103 = vld [vmem:[%s2893 + $0x5b8] sm:$0xff]
    %v3104 = vld [vmem:[%s2893 + $0x5c0] sm:$0xff]
    %v3105 = vld [vmem:[%s2893 + $0x5c8] sm:$0xf]
    %v3106 = vld [vmem:[%s2893 + $0x5cc] sm:$0xff]
    %v3107 = vld [vmem:[%s2893 + $0x5d4] sm:$0xff]
    %v3108 = vld [vmem:[%s2893 + $0x5dc] sm:$0xff]
    %v3109 = vld [vmem:[%s2893 + $0x5e4] sm:$0xf]
    %v3110 = vld [vmem:[%s2893 + $0x5e8] sm:$0xff]
    %v3111 = vld [vmem:[%s2893 + $0x5f0] sm:$0xff]
    %v3112 = vld [vmem:[%s2893 + $0x5f8] sm:$0xff]
    %v3113 = vld [vmem:[%s2893 + $0x600] sm:$0xf]
    %v3114 = vld [vmem:[%s2893 + $0x604] sm:$0xff]
    %v3115 = vld [vmem:[%s2893 + $0x60c] sm:$0xff]
    %v3116 = vld [vmem:[%s2893 + $0x614] sm:$0xff]
    %v3117 = vld [vmem:[%s2893 + $0x61c] sm:$0xf]
    %v3118 = vld [vmem:[%s2893 + $0x620] sm:$0xff]
    %v3119 = vld [vmem:[%s2893 + $0x628] sm:$0xff]
    %v3120 = vld [vmem:[%s2893 + $0x630] sm:$0xff]
    %v3121 = vld [vmem:[%s2893 + $0x638] sm:$0xf]
    %v3122 = vld [vmem:[%s2893 + $0x63c] sm:$0xff]
    %v3123 = vld [vmem:[%s2893 + $0x644] sm:$0xff]
    %v3124 = vld [vmem:[%s2893 + $0x64c] sm:$0xff]
    %v3125 = vld [vmem:[%s2893 + $0x654] sm:$0xf]
    %v3126 = vld [vmem:[%s2893 + $0x658] sm:$0xff]
    %v3127 = vld [vmem:[%s2893 + $0x660] sm:$0xff]
    %v3128 = vld [vmem:[%s2893 + $0x668] sm:$0xff]
    %v3129 = vld [vmem:[%s2893 + $0x670] sm:$0xf]
    %v3130 = vld [vmem:[%s2893 + $0x674] sm:$0xff]
    %v3131 = vld [vmem:[%s2893 + $0x67c] sm:$0xff]
    %v3132 = vld [vmem:[%s2893 + $0x684] sm:$0xff]
    %v3133 = vld [vmem:[%s2893 + $0x68c] sm:$0xf]
    %v3134 = vld [vmem:[%s2893 + $0x690] sm:$0xff]
    %v3135 = vld [vmem:[%s2893 + $0x698] sm:$0xff]
    %v3136 = vld [vmem:[%s2893 + $0x6a0] sm:$0xff]
    %v3137 = vld [vmem:[%s2893 + $0x6a8] sm:$0xf]
    %v3138 = vld [vmem:[%s2893 + $0x6ac] sm:$0xff]
    %v3139 = vld [vmem:[%s2893 + $0x6b4] sm:$0xff]
    %v3140 = vld [vmem:[%s2893 + $0x6bc] sm:$0xff]
    %v3141 = vld [vmem:[%s2893 + $0x6c4] sm:$0xf]
    %v3142 = vld [vmem:[%s2893 + $0x6c8] sm:$0xff]
    %v3143 = vld [vmem:[%s2893 + $0x6d0] sm:$0xff]
    %v3144 = vld [vmem:[%s2893 + $0x6d8] sm:$0xff]
    %v3145 = vld [vmem:[%s2893 + $0x6e0] sm:$0xf]
    %v3146 = vld [vmem:[%s2893 + $0x6e4] sm:$0xff]
    %v3147 = vld [vmem:[%s2893 + $0x6ec] sm:$0xff]
    %v3148 = vld [vmem:[%s2893 + $0x6f4] sm:$0xff]
    %v3149 = vld [vmem:[%s2893 + $0x6fc] sm:$0xf]
    %v3150 = vld [vmem:[%s2893 + $0x700] sm:$0xff]
    %v3151 = vld [vmem:[%s2893 + $0x708] sm:$0xff]
    %v3152 = vld [vmem:[%s2893 + $0x710] sm:$0xff]
    %v3153 = vld [vmem:[%s2893 + $0x718] sm:$0xf]
    %v3154 = vld [vmem:[%s2893 + $0x71c] sm:$0xff]
    %v3155 = vld [vmem:[%s2893 + $0x724] sm:$0xff]
    %v3156 = vld [vmem:[%s2893 + $0x72c] sm:$0xff]
    %v3157 = vld [vmem:[%s2893 + $0x734] sm:$0xf]
    %v3158 = vld [vmem:[%s2893 + $0x738] sm:$0xff]
    %v3159 = vld [vmem:[%s2893 + $0x740] sm:$0xff]
    %v3160 = vld [vmem:[%s2893 + $0x748] sm:$0xff]
    %v3161 = vld [vmem:[%s2893 + $0x750] sm:$0xf]
    %v3162 = vld [vmem:[%s2893 + $0x754] sm:$0xff]
    %v3163 = vld [vmem:[%s2893 + $0x75c] sm:$0xff]
    %v3164 = vld [vmem:[%s2893 + $0x764] sm:$0xff]
    %v3165 = vld [vmem:[%s2893 + $0x76c] sm:$0xf]
    %v3166 = vld [vmem:[%s2893 + $0x770] sm:$0xff]
    %v3167 = vld [vmem:[%s2893 + $0x778] sm:$0xff]
    %v3168 = vld [vmem:[%s2893 + $0x780] sm:$0xff]
    %v3169 = vld [vmem:[%s2893 + $0x788] sm:$0xf]
    %v3170 = vld [vmem:[%s2893 + $0x78c] sm:$0xff]
    %v3171 = vld [vmem:[%s2893 + $0x794] sm:$0xff]
    %v3172 = vld [vmem:[%s2893 + $0x79c] sm:$0xff]
    %v3173 = vld [vmem:[%s2893 + $0x7a4] sm:$0xf]
    %v3174 = vld [vmem:[%s2893 + $0x7a8] sm:$0xff]
    %v3175 = vld [vmem:[%s2893 + $0x7b0] sm:$0xff]
    %v3176 = vld [vmem:[%s2893 + $0x7b8] sm:$0xff]
    %v3177 = vld [vmem:[%s2893 + $0x7c0] sm:$0xf]
    %v3178 = vld [vmem:[%s2893 + $0x7c4] sm:$0xff]
    %v3179 = vld [vmem:[%s2893 + $0x7cc] sm:$0xff]
    %v3180 = vld [vmem:[%s2893 + $0x7d4] sm:$0xff]
    %v3181 = vld [vmem:[%s2893 + $0x7dc] sm:$0xf]
    %v3182 = vld [vmem:[%s2893 + $0x7e0] sm:$0xff]
    %v3183 = vld [vmem:[%s2893 + $0x7e8] sm:$0xff]
    %v3184 = vld [vmem:[%s2893 + $0x7f0] sm:$0xff]
    %v3185 = vld [vmem:[%s2893 + $0x7f8] sm:$0xf]
    %v3186 = vld [vmem:[%s2893 + $0x7fc] sm:$0xff]
    %v3187 = vld [vmem:[%s2893 + $0x804] sm:$0xff]
    %v3188 = vld [vmem:[%s2893 + $0x80c] sm:$0xff]
    %v3189 = vld [vmem:[%s2893 + $0x814] sm:$0xf]
    %v3190 = vld [vmem:[%s2893 + $0x818] sm:$0xff]
    %v3191 = vld [vmem:[%s2893 + $0x820] sm:$0xff]
    %v3192 = vld [vmem:[%s2893 + $0x828] sm:$0xff]
    %v3193 = vld [vmem:[%s2893 + $0x830] sm:$0xf]
    %v3194 = vld [vmem:[%s2893 + $0x834] sm:$0xff]
    %v3195 = vld [vmem:[%s2893 + $0x83c] sm:$0xff]
    %v3196 = vld [vmem:[%s2893 + $0x844] sm:$0xff]
    %v3197 = vld [vmem:[%s2893 + $0x84c] sm:$0xf]
    %v3198 = vld [vmem:[%s2893 + $0x850] sm:$0xff]
    %v3199 = vld [vmem:[%s2893 + $0x858] sm:$0xff]
    %v3200 = vld [vmem:[%s2893 + $0x860] sm:$0xff]
    %v3201 = vld [vmem:[%s2893 + $0x868] sm:$0xf]
    %v3202 = vld [vmem:[%s2893 + $0x86c] sm:$0xff]
    %v3203 = vld [vmem:[%s2893 + $0x874] sm:$0xff]
    %v3204 = vld [vmem:[%s2893 + $0x87c] sm:$0xff]
    %v3205 = vld [vmem:[%s2893 + $0x884] sm:$0xf]
    %v3206 = vld [vmem:[%s2893 + $0x888] sm:$0xff]
    %v3207 = vld [vmem:[%s2893 + $0x890] sm:$0xff]
    %v3208 = vld [vmem:[%s2893 + $0x898] sm:$0xff]
    %v3209 = vld [vmem:[%s2893 + $0x8a0] sm:$0xf]
    %v3210 = vld [vmem:[%s2893 + $0x8a4] sm:$0xff]
    %v3211 = vld [vmem:[%s2893 + $0x8ac] sm:$0xff]
    %v3212 = vld [vmem:[%s2893 + $0x8b4] sm:$0xff]
    %v3213 = vld [vmem:[%s2893 + $0x8bc] sm:$0xf]
    %v3214 = vld [vmem:[%s2893 + $0x8c0] sm:$0xff]
    %v3215 = vld [vmem:[%s2893 + $0x8c8] sm:$0xff]
    %v3216 = vld [vmem:[%s2893 + $0x8d0] sm:$0xff]
    %v3217 = vld [vmem:[%s2893 + $0x8d8] sm:$0xf]
    %v3218 = vld [vmem:[%s2893 + $0x8dc] sm:$0xff]
    %v3219 = vld [vmem:[%s2893 + $0x8e4] sm:$0xff]
    %v3220 = vld [vmem:[%s2893 + $0x8ec] sm:$0xff]
    %v3221 = vld [vmem:[%s2893 + $0x8f4] sm:$0xf]
    %v3222 = vld [vmem:[%s2893 + $0x8f8] sm:$0xff]
    %v3223 = vld [vmem:[%s2893 + $0x900] sm:$0xff]
    %v3224 = vld [vmem:[%s2893 + $0x908] sm:$0xff]
    %v3225 = vld [vmem:[%s2893 + $0x910] sm:$0xf]
    %v3226 = vld [vmem:[%s2893 + $0x914] sm:$0xff]
    %v3227 = vld [vmem:[%s2893 + $0x91c] sm:$0xff]
    %v3228 = vld [vmem:[%s2893 + $0x924] sm:$0xff]
    %v3229 = vld [vmem:[%s2893 + $0x92c] sm:$0xf]
    %v3230 = vld [vmem:[%s2893 + $0x930] sm:$0xff]
    %v3231 = vld [vmem:[%s2893 + $0x938] sm:$0xff]
    %v3232 = vld [vmem:[%s2893 + $0x940] sm:$0xff]
    %v3233 = vld [vmem:[%s2893 + $0x948] sm:$0xf]
    %v3234 = vld [vmem:[%s2893 + $0x94c] sm:$0xff]
    %v3235 = vld [vmem:[%s2893 + $0x954] sm:$0xff]
    %v3236 = vld [vmem:[%s2893 + $0x95c] sm:$0xff]
    %v3237 = vld [vmem:[%s2893 + $0x964] sm:$0xf]
    %v3238 = vld [vmem:[%s2893 + $0x968] sm:$0xff]
    %v3239 = vld [vmem:[%s2893 + $0x970] sm:$0xff]
    %v3240 = vld [vmem:[%s2893 + $0x978] sm:$0xff]
    %v3241 = vld [vmem:[%s2893 + $0x980] sm:$0xf]
    %v3242 = vld [vmem:[%s2893 + $0x984] sm:$0xff]
    %v3243 = vld [vmem:[%s2893 + $0x98c] sm:$0xff]
    %v3244 = vld [vmem:[%s2893 + $0x994] sm:$0xff]
    %v3245 = vld [vmem:[%s2893 + $0x99c] sm:$0xf]
    %v3246 = vld [vmem:[%s2893 + $0x9a0] sm:$0xff]
    %v3247 = vld [vmem:[%s2893 + $0x9a8] sm:$0xff]
    %v3248 = vld [vmem:[%s2893 + $0x9b0] sm:$0xff]
    %v3249 = vld [vmem:[%s2893 + $0x9b8] sm:$0xf]
    %v3250 = vld [vmem:[%s2893 + $0x9bc] sm:$0xff]
    %v3251 = vld [vmem:[%s2893 + $0x9c4] sm:$0xff]
    %v3252 = vld [vmem:[%s2893 + $0x9cc] sm:$0xff]
    %v3253 = vld [vmem:[%s2893 + $0x9d4] sm:$0xf]
    %v3254 = vld [vmem:[%s2893 + $0x9d8] sm:$0xff]
    %v3255 = vld [vmem:[%s2893 + $0x9e0] sm:$0xff]
    %v3256 = vld [vmem:[%s2893 + $0x9e8] sm:$0xff]
    %v3257 = vld [vmem:[%s2893 + $0x9f0] sm:$0xf]
    %v3258 = vld [vmem:[%s2893 + $0x9f4] sm:$0xff]
    %v3259 = vld [vmem:[%s2893 + $0x9fc] sm:$0xff]
    %v3260 = vld [vmem:[%s2893 + $0xa04] sm:$0xff]
    %v3261 = vld [vmem:[%s2893 + $0xa0c] sm:$0xf]
    %v3262 = vld [vmem:[%s2893 + $0xa10] sm:$0xff]
    %v3263 = vld [vmem:[%s2893 + $0xa18] sm:$0xff]
    %v3264 = vld [vmem:[%s2893 + $0xa20] sm:$0xff]
    %v3265 = vld [vmem:[%s2893 + $0xa28] sm:$0xf]
    %v3266 = vld [vmem:[%s2893 + $0xa2c] sm:$0xff]
    %v3267 = vld [vmem:[%s2893 + $0xa34] sm:$0xff]
    %v3268 = vld [vmem:[%s2893 + $0xa3c] sm:$0xff]
    %v3269 = vld [vmem:[%s2893 + $0xa44] sm:$0xf]
    %v3270 = vld [vmem:[%s2893 + $0xa48] sm:$0xff]
    %v3271 = vld [vmem:[%s2893 + $0xa50] sm:$0xff]
    %v3272 = vld [vmem:[%s2893 + $0xa58] sm:$0xff]
    %v3273 = vld [vmem:[%s2893 + $0xa60] sm:$0xf]
    %v3274 = vld [vmem:[%s2893 + $0xa64] sm:$0xff]
    %v3275 = vld [vmem:[%s2893 + $0xa6c] sm:$0xff]
    %v3276 = vld [vmem:[%s2893 + $0xa74] sm:$0xff]
    %v3277 = vld [vmem:[%s2893 + $0xa7c] sm:$0xf]
    %v3278 = vld [vmem:[%s2893 + $0xa80] sm:$0xff]
    %v3279 = vld [vmem:[%s2893 + $0xa88] sm:$0xff]
    %v3280 = vld [vmem:[%s2893 + $0xa90] sm:$0xff]
    %v3281 = vld [vmem:[%s2893 + $0xa98] sm:$0xf]
    %v3282 = vld [vmem:[%s2893 + $0xa9c] sm:$0xff]
    %v3283 = vld [vmem:[%s2893 + $0xaa4] sm:$0xff]
    %v3284 = vld [vmem:[%s2893 + $0xaac] sm:$0xff]
    %v3285 = vld [vmem:[%s2893 + $0xab4] sm:$0xf]
    %v3678 = vunpack.c.l.b16 %v2894
    %v3679 = vunpack.c.h.b16 %v2894
    %v3680 = vunpack.c.l.b16 %v2895
    %v3681 = vunpack.c.h.b16 %v2895
    %v3682 = vunpack.c.l.b16 %v2896
    %v3683 = vunpack.c.h.b16 %v2896
    %v3684 = vunpack.c.l.b16 %v2897
    %v3685 = vunpack.c.l.b16 %v2898
    %v3686 = vunpack.c.h.b16 %v2898
    %v3687 = vunpack.c.l.b16 %v2899
    %v3688 = vunpack.c.h.b16 %v2899
    %v3689 = vunpack.c.l.b16 %v2900
    %v3690 = vunpack.c.h.b16 %v2900
    %v3691 = vunpack.c.l.b16 %v2901
    %v3692 = vunpack.c.l.b16 %v2902
    %v3693 = vunpack.c.h.b16 %v2902
    %v3694 = vunpack.c.l.b16 %v2903
    %v3695 = vunpack.c.h.b16 %v2903
    %v3696 = vunpack.c.l.b16 %v2904
    %v3697 = vunpack.c.h.b16 %v2904
    %v3698 = vunpack.c.l.b16 %v2905
    %v3699 = vunpack.c.l.b16 %v2906
    %v3700 = vunpack.c.h.b16 %v2906
    %v3701 = vunpack.c.l.b16 %v2907
    %v3702 = vunpack.c.h.b16 %v2907
    %v3703 = vunpack.c.l.b16 %v2908
    %v3704 = vunpack.c.h.b16 %v2908
    %v3705 = vunpack.c.l.b16 %v2909
    %v3706 = vunpack.c.l.b16 %v2910
    %v3707 = vunpack.c.h.b16 %v2910
    %v3708 = vunpack.c.l.b16 %v2911
    %v3709 = vunpack.c.h.b16 %v2911
    %v3710 = vunpack.c.l.b16 %v2912
    %v3711 = vunpack.c.h.b16 %v2912
    %v3712 = vunpack.c.l.b16 %v2913
    %v3713 = vunpack.c.l.b16 %v2914
    %v3714 = vunpack.c.h.b16 %v2914
    %v3715 = vunpack.c.l.b16 %v2915
    %v3716 = vunpack.c.h.b16 %v2915
    %v3717 = vunpack.c.l.b16 %v2916
    %v3718 = vunpack.c.h.b16 %v2916
    %v3719 = vunpack.c.l.b16 %v2917
    %v3720 = vunpack.c.l.b16 %v2918
    %v3721 = vunpack.c.h.b16 %v2918
    %v3722 = vunpack.c.l.b16 %v2919
    %v3723 = vunpack.c.h.b16 %v2919
    %v3724 = vunpack.c.l.b16 %v2920
    %v3725 = vunpack.c.h.b16 %v2920
    %v3726 = vunpack.c.l.b16 %v2921
    %v3727 = vunpack.c.l.b16 %v2922
    %v3728 = vunpack.c.h.b16 %v2922
    %v3729 = vunpack.c.l.b16 %v2923
    %v3730 = vunpack.c.h.b16 %v2923
    %v3731 = vunpack.c.l.b16 %v2924
    %v3732 = vunpack.c.h.b16 %v2924
    %v3733 = vunpack.c.l.b16 %v2925
    %v3734 = vunpack.c.l.b16 %v2926
    %v3735 = vunpack.c.h.b16 %v2926
    %v3736 = vunpack.c.l.b16 %v2927
    %v3737 = vunpack.c.h.b16 %v2927
    %v3738 = vunpack.c.l.b16 %v2928
    %v3739 = vunpack.c.h.b16 %v2928
    %v3740 = vunpack.c.l.b16 %v2929
    %v3741 = vunpack.c.l.b16 %v2930
    %v3742 = vunpack.c.h.b16 %v2930
    %v3743 = vunpack.c.l.b16 %v2931
    %v3744 = vunpack.c.h.b16 %v2931
    %v3745 = vunpack.c.l.b16 %v2932
    %v3746 = vunpack.c.h.b16 %v2932
    %v3747 = vunpack.c.l.b16 %v2933
    %v3748 = vunpack.c.l.b16 %v2934
    %v3749 = vunpack.c.h.b16 %v2934
    %v3750 = vunpack.c.l.b16 %v2935
    %v3751 = vunpack.c.h.b16 %v2935
    %v3752 = vunpack.c.l.b16 %v2936
    %v3753 = vunpack.c.h.b16 %v2936
    %v3754 = vunpack.c.l.b16 %v2937
    %v3755 = vunpack.c.l.b16 %v2938
    %v3756 = vunpack.c.h.b16 %v2938
    %v3757 = vunpack.c.l.b16 %v2939
    %v3758 = vunpack.c.h.b16 %v2939
    %v3759 = vunpack.c.l.b16 %v2940
    %v3760 = vunpack.c.h.b16 %v2940
    %v3761 = vunpack.c.l.b16 %v2941
    %v3762 = vunpack.c.l.b16 %v2942
    %v3763 = vunpack.c.h.b16 %v2942
    %v3764 = vunpack.c.l.b16 %v2943
    %v3765 = vunpack.c.h.b16 %v2943
    %v3766 = vunpack.c.l.b16 %v2944
    %v3767 = vunpack.c.h.b16 %v2944
    %v3768 = vunpack.c.l.b16 %v2945
    %v3769 = vunpack.c.l.b16 %v2946
    %v3770 = vunpack.c.h.b16 %v2946
    %v3771 = vunpack.c.l.b16 %v2947
    %v3772 = vunpack.c.h.b16 %v2947
    %v3773 = vunpack.c.l.b16 %v2948
    %v3774 = vunpack.c.h.b16 %v2948
    %v3775 = vunpack.c.l.b16 %v2949
    %v3776 = vunpack.c.l.b16 %v2950
    %v3777 = vunpack.c.h.b16 %v2950
    %v3778 = vunpack.c.l.b16 %v2951
    %v3779 = vunpack.c.h.b16 %v2951
    %v3780 = vunpack.c.l.b16 %v2952
    %v3781 = vunpack.c.h.b16 %v2952
    %v3782 = vunpack.c.l.b16 %v2953
    %v3783 = vunpack.c.l.b16 %v2954
    %v3784 = vunpack.c.h.b16 %v2954
    %v3785 = vunpack.c.l.b16 %v2955
    %v3786 = vunpack.c.h.b16 %v2955
    %v3787 = vunpack.c.l.b16 %v2956
    %v3788 = vunpack.c.h.b16 %v2956
    %v3789 = vunpack.c.l.b16 %v2957
    %v3790 = vunpack.c.l.b16 %v2958
    %v3791 = vunpack.c.h.b16 %v2958
    %v3792 = vunpack.c.l.b16 %v2959
    %v3793 = vunpack.c.h.b16 %v2959
    %v3794 = vunpack.c.l.b16 %v2960
    %v3795 = vunpack.c.h.b16 %v2960
    %v3796 = vunpack.c.l.b16 %v2961
    %v3797 = vunpack.c.l.b16 %v2962
    %v3798 = vunpack.c.h.b16 %v2962
    %v3799 = vunpack.c.l.b16 %v2963
    %v3800 = vunpack.c.h.b16 %v2963
    %v3801 = vunpack.c.l.b16 %v2964
    %v3802 = vunpack.c.h.b16 %v2964
    %v3803 = vunpack.c.l.b16 %v2965
    %v3804 = vunpack.c.l.b16 %v2966
    %v3805 = vunpack.c.h.b16 %v2966
    %v3806 = vunpack.c.l.b16 %v2967
    %v3807 = vunpack.c.h.b16 %v2967
    %v3808 = vunpack.c.l.b16 %v2968
    %v3809 = vunpack.c.h.b16 %v2968
    %v3810 = vunpack.c.l.b16 %v2969
    %v3811 = vunpack.c.l.b16 %v2970
    %v3812 = vunpack.c.h.b16 %v2970
    %v3813 = vunpack.c.l.b16 %v2971
    %v3814 = vunpack.c.h.b16 %v2971
    %v3815 = vunpack.c.l.b16 %v2972
    %v3816 = vunpack.c.h.b16 %v2972
    %v3817 = vunpack.c.l.b16 %v2973
    %v3818 = vunpack.c.l.b16 %v2974
    %v3819 = vunpack.c.h.b16 %v2974
    %v3820 = vunpack.c.l.b16 %v2975
    %v3821 = vunpack.c.h.b16 %v2975
    %v3822 = vunpack.c.l.b16 %v2976
    %v3823 = vunpack.c.h.b16 %v2976
    %v3824 = vunpack.c.l.b16 %v2977
    %v3825 = vunpack.c.l.b16 %v2978
    %v3826 = vunpack.c.h.b16 %v2978
    %v3827 = vunpack.c.l.b16 %v2979
    %v3828 = vunpack.c.h.b16 %v2979
    %v3829 = vunpack.c.l.b16 %v2980
    %v3830 = vunpack.c.h.b16 %v2980
    %v3831 = vunpack.c.l.b16 %v2981
    %v3832 = vunpack.c.l.b16 %v2982
    %v3833 = vunpack.c.h.b16 %v2982
    %v3834 = vunpack.c.l.b16 %v2983
    %v3835 = vunpack.c.h.b16 %v2983
    %v3836 = vunpack.c.l.b16 %v2984
    %v3837 = vunpack.c.h.b16 %v2984
    %v3838 = vunpack.c.l.b16 %v2985
    %v3839 = vunpack.c.l.b16 %v2986
    %v3840 = vunpack.c.h.b16 %v2986
    %v3841 = vunpack.c.l.b16 %v2987
    %v3842 = vunpack.c.h.b16 %v2987
    %v3843 = vunpack.c.l.b16 %v2988
    %v3844 = vunpack.c.h.b16 %v2988
    %v3845 = vunpack.c.l.b16 %v2989
    %v3846 = vunpack.c.l.b16 %v2990
    %v3847 = vunpack.c.h.b16 %v2990
    %v3848 = vunpack.c.l.b16 %v2991
    %v3849 = vunpack.c.h.b16 %v2991
    %v3850 = vunpack.c.l.b16 %v2992
    %v3851 = vunpack.c.h.b16 %v2992
    %v3852 = vunpack.c.l.b16 %v2993
    %v3853 = vunpack.c.l.b16 %v2994
    %v3854 = vunpack.c.h.b16 %v2994
    %v3855 = vunpack.c.l.b16 %v2995
    %v3856 = vunpack.c.h.b16 %v2995
    %v3857 = vunpack.c.l.b16 %v2996
    %v3858 = vunpack.c.h.b16 %v2996
    %v3859 = vunpack.c.l.b16 %v2997
    %v3860 = vunpack.c.l.b16 %v2998
    %v3861 = vunpack.c.h.b16 %v2998
    %v3862 = vunpack.c.l.b16 %v2999
    %v3863 = vunpack.c.h.b16 %v2999
    %v3864 = vunpack.c.l.b16 %v3000
    %v3865 = vunpack.c.h.b16 %v3000
    %v3866 = vunpack.c.l.b16 %v3001
    %v3867 = vunpack.c.l.b16 %v3002
    %v3868 = vunpack.c.h.b16 %v3002
    %v3869 = vunpack.c.l.b16 %v3003
    %v3870 = vunpack.c.h.b16 %v3003
    %v3871 = vunpack.c.l.b16 %v3004
    %v3872 = vunpack.c.h.b16 %v3004
    %v3873 = vunpack.c.l.b16 %v3005
    %v3874 = vunpack.c.l.b16 %v3006
    %v3875 = vunpack.c.h.b16 %v3006
    %v3876 = vunpack.c.l.b16 %v3007
    %v3877 = vunpack.c.h.b16 %v3007
    %v3878 = vunpack.c.l.b16 %v3008
    %v3879 = vunpack.c.h.b16 %v3008
    %v3880 = vunpack.c.l.b16 %v3009
    %v3881 = vunpack.c.l.b16 %v3010
    %v3882 = vunpack.c.h.b16 %v3010
    %v3883 = vunpack.c.l.b16 %v3011
    %v3884 = vunpack.c.h.b16 %v3011
    %v3885 = vunpack.c.l.b16 %v3012
    %v3886 = vunpack.c.h.b16 %v3012
    %v3887 = vunpack.c.l.b16 %v3013
    %v3888 = vunpack.c.l.b16 %v3014
    %v3889 = vunpack.c.h.b16 %v3014
    %v3890 = vunpack.c.l.b16 %v3015
    %v3891 = vunpack.c.h.b16 %v3015
    %v3892 = vunpack.c.l.b16 %v3016
    %v3893 = vunpack.c.h.b16 %v3016
    %v3894 = vunpack.c.l.b16 %v3017
    %v3895 = vunpack.c.l.b16 %v3018
    %v3896 = vunpack.c.h.b16 %v3018
    %v3897 = vunpack.c.l.b16 %v3019
    %v3898 = vunpack.c.h.b16 %v3019
    %v3899 = vunpack.c.l.b16 %v3020
    %v3900 = vunpack.c.h.b16 %v3020
    %v3901 = vunpack.c.l.b16 %v3021
    %v3902 = vunpack.c.l.b16 %v3022
    %v3903 = vunpack.c.h.b16 %v3022
    %v3904 = vunpack.c.l.b16 %v3023
    %v3905 = vunpack.c.h.b16 %v3023
    %v3906 = vunpack.c.l.b16 %v3024
    %v3907 = vunpack.c.h.b16 %v3024
    %v3908 = vunpack.c.l.b16 %v3025
    %v3909 = vunpack.c.l.b16 %v3026
    %v3910 = vunpack.c.h.b16 %v3026
    %v3911 = vunpack.c.l.b16 %v3027
    %v3912 = vunpack.c.h.b16 %v3027
    %v3913 = vunpack.c.l.b16 %v3028
    %v3914 = vunpack.c.h.b16 %v3028
    %v3915 = vunpack.c.l.b16 %v3029
    %v3916 = vunpack.c.l.b16 %v3030
    %v3917 = vunpack.c.h.b16 %v3030
    %v3918 = vunpack.c.l.b16 %v3031
    %v3919 = vunpack.c.h.b16 %v3031
    %v3920 = vunpack.c.l.b16 %v3032
    %v3921 = vunpack.c.h.b16 %v3032
    %v3922 = vunpack.c.l.b16 %v3033
    %v3923 = vunpack.c.l.b16 %v3034
    %v3924 = vunpack.c.h.b16 %v3034
    %v3925 = vunpack.c.l.b16 %v3035
    %v3926 = vunpack.c.h.b16 %v3035
    %v3927 = vunpack.c.l.b16 %v3036
    %v3928 = vunpack.c.h.b16 %v3036
    %v3929 = vunpack.c.l.b16 %v3037
    %v3930 = vunpack.c.l.b16 %v3038
    %v3931 = vunpack.c.h.b16 %v3038
    %v3932 = vunpack.c.l.b16 %v3039
    %v3933 = vunpack.c.h.b16 %v3039
    %v3934 = vunpack.c.l.b16 %v3040
    %v3935 = vunpack.c.h.b16 %v3040
    %v3936 = vunpack.c.l.b16 %v3041
    %v3937 = vunpack.c.l.b16 %v3042
    %v3938 = vunpack.c.h.b16 %v3042
    %v3939 = vunpack.c.l.b16 %v3043
    %v3940 = vunpack.c.h.b16 %v3043
    %v3941 = vunpack.c.l.b16 %v3044
    %v3942 = vunpack.c.h.b16 %v3044
    %v3943 = vunpack.c.l.b16 %v3045
    %v3944 = vunpack.c.l.b16 %v3046
    %v3945 = vunpack.c.h.b16 %v3046
    %v3946 = vunpack.c.l.b16 %v3047
    %v3947 = vunpack.c.h.b16 %v3047
    %v3948 = vunpack.c.l.b16 %v3048
    %v3949 = vunpack.c.h.b16 %v3048
    %v3950 = vunpack.c.l.b16 %v3049
    %v3951 = vunpack.c.l.b16 %v3050
    %v3952 = vunpack.c.h.b16 %v3050
    %v3953 = vunpack.c.l.b16 %v3051
    %v3954 = vunpack.c.h.b16 %v3051
    %v3955 = vunpack.c.l.b16 %v3052
    %v3956 = vunpack.c.h.b16 %v3052
    %v3957 = vunpack.c.l.b16 %v3053
    %v3958 = vunpack.c.l.b16 %v3054
    %v3959 = vunpack.c.h.b16 %v3054
    %v3960 = vunpack.c.l.b16 %v3055
    %v3961 = vunpack.c.h.b16 %v3055
    %v3962 = vunpack.c.l.b16 %v3056
    %v3963 = vunpack.c.h.b16 %v3056
    %v3964 = vunpack.c.l.b16 %v3057
    %v3965 = vunpack.c.l.b16 %v3058
    %v3966 = vunpack.c.h.b16 %v3058
    %v3967 = vunpack.c.l.b16 %v3059
    %v3968 = vunpack.c.h.b16 %v3059
    %v3969 = vunpack.c.l.b16 %v3060
    %v3970 = vunpack.c.h.b16 %v3060
    %v3971 = vunpack.c.l.b16 %v3061
    %v3972 = vunpack.c.l.b16 %v3062
    %v3973 = vunpack.c.h.b16 %v3062
    %v3974 = vunpack.c.l.b16 %v3063
    %v3975 = vunpack.c.h.b16 %v3063
    %v3976 = vunpack.c.l.b16 %v3064
    %v3977 = vunpack.c.h.b16 %v3064
    %v3978 = vunpack.c.l.b16 %v3065
    %v3979 = vunpack.c.l.b16 %v3066
    %v3980 = vunpack.c.h.b16 %v3066
    %v3981 = vunpack.c.l.b16 %v3067
    %v3982 = vunpack.c.h.b16 %v3067
    %v3983 = vunpack.c.l.b16 %v3068
    %v3984 = vunpack.c.h.b16 %v3068
    %v3985 = vunpack.c.l.b16 %v3069
    %v3986 = vunpack.c.l.b16 %v3070
    %v3987 = vunpack.c.h.b16 %v3070
    %v3988 = vunpack.c.l.b16 %v3071
    %v3989 = vunpack.c.h.b16 %v3071
    %v3990 = vunpack.c.l.b16 %v3072
    %v3991 = vunpack.c.h.b16 %v3072
    %v3992 = vunpack.c.l.b16 %v3073
    %v3993 = vunpack.c.l.b16 %v3074
    %v3994 = vunpack.c.h.b16 %v3074
    %v3995 = vunpack.c.l.b16 %v3075
    %v3996 = vunpack.c.h.b16 %v3075
    %v3997 = vunpack.c.l.b16 %v3076
    %v3998 = vunpack.c.h.b16 %v3076
    %v3999 = vunpack.c.l.b16 %v3077
    %v4000 = vunpack.c.l.b16 %v3078
    %v4001 = vunpack.c.h.b16 %v3078
    %v4002 = vunpack.c.l.b16 %v3079
    %v4003 = vunpack.c.h.b16 %v3079
    %v4004 = vunpack.c.l.b16 %v3080
    %v4005 = vunpack.c.h.b16 %v3080
    %v4006 = vunpack.c.l.b16 %v3081
    %v4007 = vunpack.c.l.b16 %v3082
    %v4008 = vunpack.c.h.b16 %v3082
    %v4009 = vunpack.c.l.b16 %v3083
    %v4010 = vunpack.c.h.b16 %v3083
    %v4011 = vunpack.c.l.b16 %v3084
    %v4012 = vunpack.c.h.b16 %v3084
    %v4013 = vunpack.c.l.b16 %v3085
    %v4014 = vunpack.c.l.b16 %v3086
    %v4015 = vunpack.c.h.b16 %v3086
    %v4016 = vunpack.c.l.b16 %v3087
    %v4017 = vunpack.c.h.b16 %v3087
    %v4018 = vunpack.c.l.b16 %v3088
    %v4019 = vunpack.c.h.b16 %v3088
    %v4020 = vunpack.c.l.b16 %v3089
    %v4021 = vunpack.c.l.b16 %v3090
    %v4022 = vunpack.c.h.b16 %v3090
    %v4023 = vunpack.c.l.b16 %v3091
    %v4024 = vunpack.c.h.b16 %v3091
    %v4025 = vunpack.c.l.b16 %v3092
    %v4026 = vunpack.c.h.b16 %v3092
    %v4027 = vunpack.c.l.b16 %v3093
    %v4028 = vunpack.c.l.b16 %v3094
    %v4029 = vunpack.c.h.b16 %v3094
    %v4030 = vunpack.c.l.b16 %v3095
    %v4031 = vunpack.c.h.b16 %v3095
    %v4032 = vunpack.c.l.b16 %v3096
    %v4033 = vunpack.c.h.b16 %v3096
    %v4034 = vunpack.c.l.b16 %v3097
    %v4035 = vunpack.c.l.b16 %v3098
    %v4036 = vunpack.c.h.b16 %v3098
    %v4037 = vunpack.c.l.b16 %v3099
    %v4038 = vunpack.c.h.b16 %v3099
    %v4039 = vunpack.c.l.b16 %v3100
    %v4040 = vunpack.c.h.b16 %v3100
    %v4041 = vunpack.c.l.b16 %v3101
    %v4042 = vunpack.c.l.b16 %v3102
    %v4043 = vunpack.c.h.b16 %v3102
    %v4044 = vunpack.c.l.b16 %v3103
    %v4045 = vunpack.c.h.b16 %v3103
    %v4046 = vunpack.c.l.b16 %v3104
    %v4047 = vunpack.c.h.b16 %v3104
    %v4048 = vunpack.c.l.b16 %v3105
    %v4049 = vunpack.c.l.b16 %v3106
    %v4050 = vunpack.c.h.b16 %v3106
    %v4051 = vunpack.c.l.b16 %v3107
    %v4052 = vunpack.c.h.b16 %v3107
    %v4053 = vunpack.c.l.b16 %v3108
    %v4054 = vunpack.c.h.b16 %v3108
    %v4055 = vunpack.c.l.b16 %v3109
    %v4056 = vunpack.c.l.b16 %v3110
    %v4057 = vunpack.c.h.b16 %v3110
    %v4058 = vunpack.c.l.b16 %v3111
    %v4059 = vunpack.c.h.b16 %v3111
    %v4060 = vunpack.c.l.b16 %v3112
    %v4061 = vunpack.c.h.b16 %v3112
    %v4062 = vunpack.c.l.b16 %v3113
    %v4063 = vunpack.c.l.b16 %v3114
    %v4064 = vunpack.c.h.b16 %v3114
    %v4065 = vunpack.c.l.b16 %v3115
    %v4066 = vunpack.c.h.b16 %v3115
    %v4067 = vunpack.c.l.b16 %v3116
    %v4068 = vunpack.c.h.b16 %v3116
    %v4069 = vunpack.c.l.b16 %v3117
    %v4070 = vunpack.c.l.b16 %v3118
    %v4071 = vunpack.c.h.b16 %v3118
    %v4072 = vunpack.c.l.b16 %v3119
    %v4073 = vunpack.c.h.b16 %v3119
    %v4074 = vunpack.c.l.b16 %v3120
    %v4075 = vunpack.c.h.b16 %v3120
    %v4076 = vunpack.c.l.b16 %v3121
    %v4077 = vunpack.c.l.b16 %v3122
    %v4078 = vunpack.c.h.b16 %v3122
    %v4079 = vunpack.c.l.b16 %v3123
    %v4080 = vunpack.c.h.b16 %v3123
    %v4081 = vunpack.c.l.b16 %v3124
    %v4082 = vunpack.c.h.b16 %v3124
    %v4083 = vunpack.c.l.b16 %v3125
    %v4084 = vunpack.c.l.b16 %v3126
    %v4085 = vunpack.c.h.b16 %v3126
    %v4086 = vunpack.c.l.b16 %v3127
    %v4087 = vunpack.c.h.b16 %v3127
    %v4088 = vunpack.c.l.b16 %v3128
    %v4089 = vunpack.c.h.b16 %v3128
    %v4090 = vunpack.c.l.b16 %v3129
    %v4091 = vunpack.c.l.b16 %v3130
    %v4092 = vunpack.c.h.b16 %v3130
    %v4093 = vunpack.c.l.b16 %v3131
    %v4094 = vunpack.c.h.b16 %v3131
    %v4095 = vunpack.c.l.b16 %v3132
    %v4096 = vunpack.c.h.b16 %v3132
    %v4097 = vunpack.c.l.b16 %v3133
    %v4098 = vunpack.c.l.b16 %v3134
    %v4099 = vunpack.c.h.b16 %v3134
    %v4100 = vunpack.c.l.b16 %v3135
    %v4101 = vunpack.c.h.b16 %v3135
    %v4102 = vunpack.c.l.b16 %v3136
    %v4103 = vunpack.c.h.b16 %v3136
    %v4104 = vunpack.c.l.b16 %v3137
    %v4105 = vunpack.c.l.b16 %v3138
    %v4106 = vunpack.c.h.b16 %v3138
    %v4107 = vunpack.c.l.b16 %v3139
    %v4108 = vunpack.c.h.b16 %v3139
    %v4109 = vunpack.c.l.b16 %v3140
    %v4110 = vunpack.c.h.b16 %v3140
    %v4111 = vunpack.c.l.b16 %v3141
    %v4112 = vunpack.c.l.b16 %v3142
    %v4113 = vunpack.c.h.b16 %v3142
    %v4114 = vunpack.c.l.b16 %v3143
    %v4115 = vunpack.c.h.b16 %v3143
    %v4116 = vunpack.c.l.b16 %v3144
    %v4117 = vunpack.c.h.b16 %v3144
    %v4118 = vunpack.c.l.b16 %v3145
    %v4119 = vunpack.c.l.b16 %v3146
    %v4120 = vunpack.c.h.b16 %v3146
    %v4121 = vunpack.c.l.b16 %v3147
    %v4122 = vunpack.c.h.b16 %v3147
    %v4123 = vunpack.c.l.b16 %v3148
    %v4124 = vunpack.c.h.b16 %v3148
    %v4125 = vunpack.c.l.b16 %v3149
    %v4126 = vunpack.c.l.b16 %v3150
    %v4127 = vunpack.c.h.b16 %v3150
    %v4128 = vunpack.c.l.b16 %v3151
    %v4129 = vunpack.c.h.b16 %v3151
    %v4130 = vunpack.c.l.b16 %v3152
    %v4131 = vunpack.c.h.b16 %v3152
    %v4132 = vunpack.c.l.b16 %v3153
    %v4133 = vunpack.c.l.b16 %v3154
    %v4134 = vunpack.c.h.b16 %v3154
    %v4135 = vunpack.c.l.b16 %v3155
    %v4136 = vunpack.c.h.b16 %v3155
    %v4137 = vunpack.c.l.b16 %v3156
    %v4138 = vunpack.c.h.b16 %v3156
    %v4139 = vunpack.c.l.b16 %v3157
    %v4140 = vunpack.c.l.b16 %v3158
    %v4141 = vunpack.c.h.b16 %v3158
    %v4142 = vunpack.c.l.b16 %v3159
    %v4143 = vunpack.c.h.b16 %v3159
    %v4144 = vunpack.c.l.b16 %v3160
    %v4145 = vunpack.c.h.b16 %v3160
    %v4146 = vunpack.c.l.b16 %v3161
    %v4147 = vunpack.c.l.b16 %v3162
    %v4148 = vunpack.c.h.b16 %v3162
    %v4149 = vunpack.c.l.b16 %v3163
    %v4150 = vunpack.c.h.b16 %v3163
    %v4151 = vunpack.c.l.b16 %v3164
    %v4152 = vunpack.c.h.b16 %v3164
    %v4153 = vunpack.c.l.b16 %v3165
    %v4154 = vunpack.c.l.b16 %v3166
    %v4155 = vunpack.c.h.b16 %v3166
    %v4156 = vunpack.c.l.b16 %v3167
    %v4157 = vunpack.c.h.b16 %v3167
    %v4158 = vunpack.c.l.b16 %v3168
    %v4159 = vunpack.c.h.b16 %v3168
    %v4160 = vunpack.c.l.b16 %v3169
    %v4161 = vunpack.c.l.b16 %v3170
    %v4162 = vunpack.c.h.b16 %v3170
    %v4163 = vunpack.c.l.b16 %v3171
    %v4164 = vunpack.c.h.b16 %v3171
    %v4165 = vunpack.c.l.b16 %v3172
    %v4166 = vunpack.c.h.b16 %v3172
    %v4167 = vunpack.c.l.b16 %v3173
    %v4168 = vunpack.c.l.b16 %v3174
    %v4169 = vunpack.c.h.b16 %v3174
    %v4170 = vunpack.c.l.b16 %v3175
    %v4171 = vunpack.c.h.b16 %v3175
    %v4172 = vunpack.c.l.b16 %v3176
    %v4173 = vunpack.c.h.b16 %v3176
    %v4174 = vunpack.c.l.b16 %v3177
    %v4175 = vunpack.c.l.b16 %v3178
    %v4176 = vunpack.c.h.b16 %v3178
    %v4177 = vunpack.c.l.b16 %v3179
    %v4178 = vunpack.c.h.b16 %v3179
    %v4179 = vunpack.c.l.b16 %v3180
    %v4180 = vunpack.c.h.b16 %v3180
    %v4181 = vunpack.c.l.b16 %v3181
    %v4182 = vunpack.c.l.b16 %v3182
    %v4183 = vunpack.c.h.b16 %v3182
    %v4184 = vunpack.c.l.b16 %v3183
    %v4185 = vunpack.c.h.b16 %v3183
    %v4186 = vunpack.c.l.b16 %v3184
    %v4187 = vunpack.c.h.b16 %v3184
    %v4188 = vunpack.c.l.b16 %v3185
    %v4189 = vunpack.c.l.b16 %v3186
    %v4190 = vunpack.c.h.b16 %v3186
    %v4191 = vunpack.c.l.b16 %v3187
    %v4192 = vunpack.c.h.b16 %v3187
    %v4193 = vunpack.c.l.b16 %v3188
    %v4194 = vunpack.c.h.b16 %v3188
    %v4195 = vunpack.c.l.b16 %v3189
    %v4196 = vunpack.c.l.b16 %v3190
    %v4197 = vunpack.c.h.b16 %v3190
    %v4198 = vunpack.c.l.b16 %v3191
    %v4199 = vunpack.c.h.b16 %v3191
    %v4200 = vunpack.c.l.b16 %v3192
    %v4201 = vunpack.c.h.b16 %v3192
    %v4202 = vunpack.c.l.b16 %v3193
    %v4203 = vunpack.c.l.b16 %v3194
    %v4204 = vunpack.c.h.b16 %v3194
    %v4205 = vunpack.c.l.b16 %v3195
    %v4206 = vunpack.c.h.b16 %v3195
    %v4207 = vunpack.c.l.b16 %v3196
    %v4208 = vunpack.c.h.b16 %v3196
    %v4209 = vunpack.c.l.b16 %v3197
    %v4210 = vunpack.c.l.b16 %v3198
    %v4211 = vunpack.c.h.b16 %v3198
    %v4212 = vunpack.c.l.b16 %v3199
    %v4213 = vunpack.c.h.b16 %v3199
    %v4214 = vunpack.c.l.b16 %v3200
    %v4215 = vunpack.c.h.b16 %v3200
    %v4216 = vunpack.c.l.b16 %v3201
    %v4217 = vunpack.c.l.b16 %v3202
    %v4218 = vunpack.c.h.b16 %v3202
    %v4219 = vunpack.c.l.b16 %v3203
    %v4220 = vunpack.c.h.b16 %v3203
    %v4221 = vunpack.c.l.b16 %v3204
    %v4222 = vunpack.c.h.b16 %v3204
    %v4223 = vunpack.c.l.b16 %v3205
    %v4224 = vunpack.c.l.b16 %v3206
    %v4225 = vunpack.c.h.b16 %v3206
    %v4226 = vunpack.c.l.b16 %v3207
    %v4227 = vunpack.c.h.b16 %v3207
    %v4228 = vunpack.c.l.b16 %v3208
    %v4229 = vunpack.c.h.b16 %v3208
    %v4230 = vunpack.c.l.b16 %v3209
    %v4231 = vunpack.c.l.b16 %v3210
    %v4232 = vunpack.c.h.b16 %v3210
    %v4233 = vunpack.c.l.b16 %v3211
    %v4234 = vunpack.c.h.b16 %v3211
    %v4235 = vunpack.c.l.b16 %v3212
    %v4236 = vunpack.c.h.b16 %v3212
    %v4237 = vunpack.c.l.b16 %v3213
    %v4238 = vunpack.c.l.b16 %v3214
    %v4239 = vunpack.c.h.b16 %v3214
    %v4240 = vunpack.c.l.b16 %v3215
    %v4241 = vunpack.c.h.b16 %v3215
    %v4242 = vunpack.c.l.b16 %v3216
    %v4243 = vunpack.c.h.b16 %v3216
    %v4244 = vunpack.c.l.b16 %v3217
    %v4245 = vunpack.c.l.b16 %v3218
    %v4246 = vunpack.c.h.b16 %v3218
    %v4247 = vunpack.c.l.b16 %v3219
    %v4248 = vunpack.c.h.b16 %v3219
    %v4249 = vunpack.c.l.b16 %v3220
    %v4250 = vunpack.c.h.b16 %v3220
    %v4251 = vunpack.c.l.b16 %v3221
    %v4252 = vunpack.c.l.b16 %v3222
    %v4253 = vunpack.c.h.b16 %v3222
    %v4254 = vunpack.c.l.b16 %v3223
    %v4255 = vunpack.c.h.b16 %v3223
    %v4256 = vunpack.c.l.b16 %v3224
    %v4257 = vunpack.c.h.b16 %v3224
    %v4258 = vunpack.c.l.b16 %v3225
    %v4259 = vunpack.c.l.b16 %v3226
    %v4260 = vunpack.c.h.b16 %v3226
    %v4261 = vunpack.c.l.b16 %v3227
    %v4262 = vunpack.c.h.b16 %v3227
    %v4263 = vunpack.c.l.b16 %v3228
    %v4264 = vunpack.c.h.b16 %v3228
    %v4265 = vunpack.c.l.b16 %v3229
    %v4266 = vunpack.c.l.b16 %v3230
    %v4267 = vunpack.c.h.b16 %v3230
    %v4268 = vunpack.c.l.b16 %v3231
    %v4269 = vunpack.c.h.b16 %v3231
    %v4270 = vunpack.c.l.b16 %v3232
    %v4271 = vunpack.c.h.b16 %v3232
    %v4272 = vunpack.c.l.b16 %v3233
    %v4273 = vunpack.c.l.b16 %v3234
    %v4274 = vunpack.c.h.b16 %v3234
    %v4275 = vunpack.c.l.b16 %v3235
    %v4276 = vunpack.c.h.b16 %v3235
    %v4277 = vunpack.c.l.b16 %v3236
    %v4278 = vunpack.c.h.b16 %v3236
    %v4279 = vunpack.c.l.b16 %v3237
    %v4280 = vunpack.c.l.b16 %v3238
    %v4281 = vunpack.c.h.b16 %v3238
    %v4282 = vunpack.c.l.b16 %v3239
    %v4283 = vunpack.c.h.b16 %v3239
    %v4284 = vunpack.c.l.b16 %v3240
    %v4285 = vunpack.c.h.b16 %v3240
    %v4286 = vunpack.c.l.b16 %v3241
    %v4287 = vunpack.c.l.b16 %v3242
    %v4288 = vunpack.c.h.b16 %v3242
    %v4289 = vunpack.c.l.b16 %v3243
    %v4290 = vunpack.c.h.b16 %v3243
    %v4291 = vunpack.c.l.b16 %v3244
    %v4292 = vunpack.c.h.b16 %v3244
    %v4293 = vunpack.c.l.b16 %v3245
    %v4294 = vunpack.c.l.b16 %v3246
    %v4295 = vunpack.c.h.b16 %v3246
    %v4296 = vunpack.c.l.b16 %v3247
    %v4297 = vunpack.c.h.b16 %v3247
    %v4298 = vunpack.c.l.b16 %v3248
    %v4299 = vunpack.c.h.b16 %v3248
    %v4300 = vunpack.c.l.b16 %v3249
    %v4301 = vunpack.c.l.b16 %v3250
    %v4302 = vunpack.c.h.b16 %v3250
    %v4303 = vunpack.c.l.b16 %v3251
    %v4304 = vunpack.c.h.b16 %v3251
    %v4305 = vunpack.c.l.b16 %v3252
    %v4306 = vunpack.c.h.b16 %v3252
    %v4307 = vunpack.c.l.b16 %v3253
    %v4308 = vunpack.c.l.b16 %v3254
    %v4309 = vunpack.c.h.b16 %v3254
    %v4310 = vunpack.c.l.b16 %v3255
    %v4311 = vunpack.c.h.b16 %v3255
    %v4312 = vunpack.c.l.b16 %v3256
    %v4313 = vunpack.c.h.b16 %v3256
    %v4314 = vunpack.c.l.b16 %v3257
    %v4315 = vunpack.c.l.b16 %v3258
    %v4316 = vunpack.c.h.b16 %v3258
    %v4317 = vunpack.c.l.b16 %v3259
    %v4318 = vunpack.c.h.b16 %v3259
    %v4319 = vunpack.c.l.b16 %v3260
    %v4320 = vunpack.c.h.b16 %v3260
    %v4321 = vunpack.c.l.b16 %v3261
    %v4322 = vunpack.c.l.b16 %v3262
    %v4323 = vunpack.c.h.b16 %v3262
    %v4324 = vunpack.c.l.b16 %v3263
    %v4325 = vunpack.c.h.b16 %v3263
    %v4326 = vunpack.c.l.b16 %v3264
    %v4327 = vunpack.c.h.b16 %v3264
    %v4328 = vunpack.c.l.b16 %v3265
    %v4329 = vunpack.c.l.b16 %v3266
    %v4330 = vunpack.c.h.b16 %v3266
    %v4331 = vunpack.c.l.b16 %v3267
    %v4332 = vunpack.c.h.b16 %v3267
    %v4333 = vunpack.c.l.b16 %v3268
    %v4334 = vunpack.c.h.b16 %v3268
    %v4335 = vunpack.c.l.b16 %v3269
    %v4336 = vunpack.c.l.b16 %v3270
    %v4337 = vunpack.c.h.b16 %v3270
    %v4338 = vunpack.c.l.b16 %v3271
    %v4339 = vunpack.c.h.b16 %v3271
    %v4340 = vunpack.c.l.b16 %v3272
    %v4341 = vunpack.c.h.b16 %v3272
    %v4342 = vunpack.c.l.b16 %v3273
    %v4343 = vunpack.c.l.b16 %v3274
    %v4344 = vunpack.c.h.b16 %v3274
    %v4345 = vunpack.c.l.b16 %v3275
    %v4346 = vunpack.c.h.b16 %v3275
    %v4347 = vunpack.c.l.b16 %v3276
    %v4348 = vunpack.c.h.b16 %v3276
    %v4349 = vunpack.c.l.b16 %v3277
    %v4350 = vunpack.c.l.b16 %v3278
    %v4351 = vunpack.c.h.b16 %v3278
    %v4352 = vunpack.c.l.b16 %v3279
    %v4353 = vunpack.c.h.b16 %v3279
    %v4354 = vunpack.c.l.b16 %v3280
    %v4355 = vunpack.c.h.b16 %v3280
    %v4356 = vunpack.c.l.b16 %v3281
    %v4357 = vunpack.c.l.b16 %v3282
    %v4358 = vunpack.c.h.b16 %v3282
    %v4359 = vunpack.c.l.b16 %v3283
    %v4360 = vunpack.c.h.b16 %v3283
    %v4361 = vunpack.c.l.b16 %v3284
    %v4362 = vunpack.c.h.b16 %v3284
    %v4363 = vunpack.c.l.b16 %v3285
    %v4364 = vpack.c.b16 %v3685, %v3678
    %v4365 = vpack.c.b16 %v3686, %v3679
    %v4366 = vpack.c.b16 %v3687, %v3680
    %v4367 = vpack.c.b16 %v3688, %v3681
    %v4368 = vpack.c.b16 %v3689, %v3682
    %v4369 = vpack.c.b16 %v3690, %v3683
    %v4370 = vpack.c.b16 %v3691, %v3684
    %v4371 = vpack.c.b16 %v3699, %v3692
    %v4372 = vpack.c.b16 %v3700, %v3693
    %v4373 = vpack.c.b16 %v3701, %v3694
    %v4374 = vpack.c.b16 %v3702, %v3695
    %v4375 = vpack.c.b16 %v3703, %v3696
    %v4376 = vpack.c.b16 %v3704, %v3697
    %v4377 = vpack.c.b16 %v3705, %v3698
    %v4378 = vpack.c.b16 %v3713, %v3706
    %v4379 = vpack.c.b16 %v3714, %v3707
    %v4380 = vpack.c.b16 %v3715, %v3708
    %v4381 = vpack.c.b16 %v3716, %v3709
    %v4382 = vpack.c.b16 %v3717, %v3710
    %v4383 = vpack.c.b16 %v3718, %v3711
    %v4384 = vpack.c.b16 %v3719, %v3712
    %v4385 = vpack.c.b16 %v3727, %v3720
    %v4386 = vpack.c.b16 %v3728, %v3721
    %v4387 = vpack.c.b16 %v3729, %v3722
    %v4388 = vpack.c.b16 %v3730, %v3723
    %v4389 = vpack.c.b16 %v3731, %v3724
    %v4390 = vpack.c.b16 %v3732, %v3725
    %v4391 = vpack.c.b16 %v3733, %v3726
    %v4392 = vpack.c.b16 %v3741, %v3734
    %v4393 = vpack.c.b16 %v3742, %v3735
    %v4394 = vpack.c.b16 %v3743, %v3736
    %v4395 = vpack.c.b16 %v3744, %v3737
    %v4396 = vpack.c.b16 %v3745, %v3738
    %v4397 = vpack.c.b16 %v3746, %v3739
    %v4398 = vpack.c.b16 %v3747, %v3740
    %v4399 = vpack.c.b16 %v3755, %v3748
    %v4400 = vpack.c.b16 %v3756, %v3749
    %v4401 = vpack.c.b16 %v3757, %v3750
    %v4402 = vpack.c.b16 %v3758, %v3751
    %v4403 = vpack.c.b16 %v3759, %v3752
    %v4404 = vpack.c.b16 %v3760, %v3753
    %v4405 = vpack.c.b16 %v3761, %v3754
    %v4406 = vpack.c.b16 %v3769, %v3762
    %v4407 = vpack.c.b16 %v3770, %v3763
    %v4408 = vpack.c.b16 %v3771, %v3764
    %v4409 = vpack.c.b16 %v3772, %v3765
    %v4410 = vpack.c.b16 %v3773, %v3766
    %v4411 = vpack.c.b16 %v3774, %v3767
    %v4412 = vpack.c.b16 %v3775, %v3768
    %v4413 = vpack.c.b16 %v3783, %v3776
    %v4414 = vpack.c.b16 %v3784, %v3777
    %v4415 = vpack.c.b16 %v3785, %v3778
    %v4416 = vpack.c.b16 %v3786, %v3779
    %v4417 = vpack.c.b16 %v3787, %v3780
    %v4418 = vpack.c.b16 %v3788, %v3781
    %v4419 = vpack.c.b16 %v3789, %v3782
    %v4420 = vpack.c.b16 %v3797, %v3790
    %v4421 = vpack.c.b16 %v3798, %v3791
    %v4422 = vpack.c.b16 %v3799, %v3792
    %v4423 = vpack.c.b16 %v3800, %v3793
    %v4424 = vpack.c.b16 %v3801, %v3794
    %v4425 = vpack.c.b16 %v3802, %v3795
    %v4426 = vpack.c.b16 %v3803, %v3796
    %v4427 = vpack.c.b16 %v3811, %v3804
    %v4428 = vpack.c.b16 %v3812, %v3805
    %v4429 = vpack.c.b16 %v3813, %v3806
    %v4430 = vpack.c.b16 %v3814, %v3807
    %v4431 = vpack.c.b16 %v3815, %v3808
    %v4432 = vpack.c.b16 %v3816, %v3809
    %v4433 = vpack.c.b16 %v3817, %v3810
    %v4434 = vpack.c.b16 %v3825, %v3818
    %v4435 = vpack.c.b16 %v3826, %v3819
    %v4436 = vpack.c.b16 %v3827, %v3820
    %v4437 = vpack.c.b16 %v3828, %v3821
    %v4438 = vpack.c.b16 %v3829, %v3822
    %v4439 = vpack.c.b16 %v3830, %v3823
    %v4440 = vpack.c.b16 %v3831, %v3824
    %v4441 = vpack.c.b16 %v3839, %v3832
    %v4442 = vpack.c.b16 %v3840, %v3833
    %v4443 = vpack.c.b16 %v3841, %v3834
    %v4444 = vpack.c.b16 %v3842, %v3835
    %v4445 = vpack.c.b16 %v3843, %v3836
    %v4446 = vpack.c.b16 %v3844, %v3837
    %v4447 = vpack.c.b16 %v3845, %v3838
    %v4448 = vpack.c.b16 %v3853, %v3846
    %v4449 = vpack.c.b16 %v3854, %v3847
    %v4450 = vpack.c.b16 %v3855, %v3848
    %v4451 = vpack.c.b16 %v3856, %v3849
    %v4452 = vpack.c.b16 %v3857, %v3850
    %v4453 = vpack.c.b16 %v3858, %v3851
    %v4454 = vpack.c.b16 %v3859, %v3852
    %v4455 = vpack.c.b16 %v3867, %v3860
    %v4456 = vpack.c.b16 %v3868, %v3861
    %v4457 = vpack.c.b16 %v3869, %v3862
    %v4458 = vpack.c.b16 %v3870, %v3863
    %v4459 = vpack.c.b16 %v3871, %v3864
    %v4460 = vpack.c.b16 %v3872, %v3865
    %v4461 = vpack.c.b16 %v3873, %v3866
    %v4462 = vpack.c.b16 %v3881, %v3874
    %v4463 = vpack.c.b16 %v3882, %v3875
    %v4464 = vpack.c.b16 %v3883, %v3876
    %v4465 = vpack.c.b16 %v3884, %v3877
    %v4466 = vpack.c.b16 %v3885, %v3878
    %v4467 = vpack.c.b16 %v3886, %v3879
    %v4468 = vpack.c.b16 %v3887, %v3880
    %v4469 = vpack.c.b16 %v3895, %v3888
    %v4470 = vpack.c.b16 %v3896, %v3889
    %v4471 = vpack.c.b16 %v3897, %v3890
    %v4472 = vpack.c.b16 %v3898, %v3891
    %v4473 = vpack.c.b16 %v3899, %v3892
    %v4474 = vpack.c.b16 %v3900, %v3893
    %v4475 = vpack.c.b16 %v3901, %v3894
    %v4476 = vpack.c.b16 %v3909, %v3902
    %v4477 = vpack.c.b16 %v3910, %v3903
    %v4478 = vpack.c.b16 %v3911, %v3904
    %v4479 = vpack.c.b16 %v3912, %v3905
    %v4480 = vpack.c.b16 %v3913, %v3906
    %v4481 = vpack.c.b16 %v3914, %v3907
    %v4482 = vpack.c.b16 %v3915, %v3908
    %v4483 = vpack.c.b16 %v3923, %v3916
    %v4484 = vpack.c.b16 %v3924, %v3917
    %v4485 = vpack.c.b16 %v3925, %v3918
    %v4486 = vpack.c.b16 %v3926, %v3919
    %v4487 = vpack.c.b16 %v3927, %v3920
    %v4488 = vpack.c.b16 %v3928, %v3921
    %v4489 = vpack.c.b16 %v3929, %v3922
    %v4490 = vpack.c.b16 %v3937, %v3930
    %v4491 = vpack.c.b16 %v3938, %v3931
    %v4492 = vpack.c.b16 %v3939, %v3932
    %v4493 = vpack.c.b16 %v3940, %v3933
    %v4494 = vpack.c.b16 %v3941, %v3934
    %v4495 = vpack.c.b16 %v3942, %v3935
    %v4496 = vpack.c.b16 %v3943, %v3936
    %v4497 = vpack.c.b16 %v3951, %v3944
    %v4498 = vpack.c.b16 %v3952, %v3945
    %v4499 = vpack.c.b16 %v3953, %v3946
    %v4500 = vpack.c.b16 %v3954, %v3947
    %v4501 = vpack.c.b16 %v3955, %v3948
    %v4502 = vpack.c.b16 %v3956, %v3949
    %v4503 = vpack.c.b16 %v3957, %v3950
    %v4504 = vpack.c.b16 %v3965, %v3958
    %v4505 = vpack.c.b16 %v3966, %v3959
    %v4506 = vpack.c.b16 %v3967, %v3960
    %v4507 = vpack.c.b16 %v3968, %v3961
    %v4508 = vpack.c.b16 %v3969, %v3962
    %v4509 = vpack.c.b16 %v3970, %v3963
    %v4510 = vpack.c.b16 %v3971, %v3964
    %v4511 = vpack.c.b16 %v3979, %v3972
    %v4512 = vpack.c.b16 %v3980, %v3973
    %v4513 = vpack.c.b16 %v3981, %v3974
    %v4514 = vpack.c.b16 %v3982, %v3975
    %v4515 = vpack.c.b16 %v3983, %v3976
    %v4516 = vpack.c.b16 %v3984, %v3977
    %v4517 = vpack.c.b16 %v3985, %v3978
    %v4518 = vpack.c.b16 %v3993, %v3986
    %v4519 = vpack.c.b16 %v3994, %v3987
    %v4520 = vpack.c.b16 %v3995, %v3988
    %v4521 = vpack.c.b16 %v3996, %v3989
    %v4522 = vpack.c.b16 %v3997, %v3990
    %v4523 = vpack.c.b16 %v3998, %v3991
    %v4524 = vpack.c.b16 %v3999, %v3992
    %v4525 = vpack.c.b16 %v4007, %v4000
    %v4526 = vpack.c.b16 %v4008, %v4001
    %v4527 = vpack.c.b16 %v4009, %v4002
    %v4528 = vpack.c.b16 %v4010, %v4003
    %v4529 = vpack.c.b16 %v4011, %v4004
    %v4530 = vpack.c.b16 %v4012, %v4005
    %v4531 = vpack.c.b16 %v4013, %v4006
    %v4532 = vpack.c.b16 %v4021, %v4014
    %v4533 = vpack.c.b16 %v4022, %v4015
    %v4534 = vpack.c.b16 %v4023, %v4016
    %v4535 = vpack.c.b16 %v4024, %v4017
    %v4536 = vpack.c.b16 %v4025, %v4018
    %v4537 = vpack.c.b16 %v4026, %v4019
    %v4538 = vpack.c.b16 %v4027, %v4020
    %v4539 = vpack.c.b16 %v4035, %v4028
    %v4540 = vpack.c.b16 %v4036, %v4029
    %v4541 = vpack.c.b16 %v4037, %v4030
    %v4542 = vpack.c.b16 %v4038, %v4031
    %v4543 = vpack.c.b16 %v4039, %v4032
    %v4544 = vpack.c.b16 %v4040, %v4033
    %v4545 = vpack.c.b16 %v4041, %v4034
    %v4546 = vpack.c.b16 %v4049, %v4042
    %v4547 = vpack.c.b16 %v4050, %v4043
    %v4548 = vpack.c.b16 %v4051, %v4044
    %v4549 = vpack.c.b16 %v4052, %v4045
    %v4550 = vpack.c.b16 %v4053, %v4046
    %v4551 = vpack.c.b16 %v4054, %v4047
    %v4552 = vpack.c.b16 %v4055, %v4048
    %v4553 = vpack.c.b16 %v4063, %v4056
    %v4554 = vpack.c.b16 %v4064, %v4057
    %v4555 = vpack.c.b16 %v4065, %v4058
    %v4556 = vpack.c.b16 %v4066, %v4059
    %v4557 = vpack.c.b16 %v4067, %v4060
    %v4558 = vpack.c.b16 %v4068, %v4061
    %v4559 = vpack.c.b16 %v4069, %v4062
    %v4560 = vpack.c.b16 %v4077, %v4070
    %v4561 = vpack.c.b16 %v4078, %v4071
    %v4562 = vpack.c.b16 %v4079, %v4072
    %v4563 = vpack.c.b16 %v4080, %v4073
    %v4564 = vpack.c.b16 %v4081, %v4074
    %v4565 = vpack.c.b16 %v4082, %v4075
    %v4566 = vpack.c.b16 %v4083, %v4076
    %v4567 = vpack.c.b16 %v4091, %v4084
    %v4568 = vpack.c.b16 %v4092, %v4085
    %v4569 = vpack.c.b16 %v4093, %v4086
    %v4570 = vpack.c.b16 %v4094, %v4087
    %v4571 = vpack.c.b16 %v4095, %v4088
    %v4572 = vpack.c.b16 %v4096, %v4089
    %v4573 = vpack.c.b16 %v4097, %v4090
    %v4574 = vpack.c.b16 %v4105, %v4098
    %v4575 = vpack.c.b16 %v4106, %v4099
    %v4576 = vpack.c.b16 %v4107, %v4100
    %v4577 = vpack.c.b16 %v4108, %v4101
    %v4578 = vpack.c.b16 %v4109, %v4102
    %v4579 = vpack.c.b16 %v4110, %v4103
    %v4580 = vpack.c.b16 %v4111, %v4104
    %v4581 = vpack.c.b16 %v4119, %v4112
    %v4582 = vpack.c.b16 %v4120, %v4113
    %v4583 = vpack.c.b16 %v4121, %v4114
    %v4584 = vpack.c.b16 %v4122, %v4115
    %v4585 = vpack.c.b16 %v4123, %v4116
    %v4586 = vpack.c.b16 %v4124, %v4117
    %v4587 = vpack.c.b16 %v4125, %v4118
    %v4588 = vpack.c.b16 %v4133, %v4126
    %v4589 = vpack.c.b16 %v4134, %v4127
    %v4590 = vpack.c.b16 %v4135, %v4128
    %v4591 = vpack.c.b16 %v4136, %v4129
    %v4592 = vpack.c.b16 %v4137, %v4130
    %v4593 = vpack.c.b16 %v4138, %v4131
    %v4594 = vpack.c.b16 %v4139, %v4132
    %v4595 = vpack.c.b16 %v4147, %v4140
    %v4596 = vpack.c.b16 %v4148, %v4141
    %v4597 = vpack.c.b16 %v4149, %v4142
    %v4598 = vpack.c.b16 %v4150, %v4143
    %v4599 = vpack.c.b16 %v4151, %v4144
    %v4600 = vpack.c.b16 %v4152, %v4145
    %v4601 = vpack.c.b16 %v4153, %v4146
    %v4602 = vpack.c.b16 %v4161, %v4154
    %v4603 = vpack.c.b16 %v4162, %v4155
    %v4604 = vpack.c.b16 %v4163, %v4156
    %v4605 = vpack.c.b16 %v4164, %v4157
    %v4606 = vpack.c.b16 %v4165, %v4158
    %v4607 = vpack.c.b16 %v4166, %v4159
    %v4608 = vpack.c.b16 %v4167, %v4160
    %v4609 = vpack.c.b16 %v4175, %v4168
    %v4610 = vpack.c.b16 %v4176, %v4169
    %v4611 = vpack.c.b16 %v4177, %v4170
    %v4612 = vpack.c.b16 %v4178, %v4171
    %v4613 = vpack.c.b16 %v4179, %v4172
    %v4614 = vpack.c.b16 %v4180, %v4173
    %v4615 = vpack.c.b16 %v4181, %v4174
    %v4616 = vpack.c.b16 %v4189, %v4182
    %v4617 = vpack.c.b16 %v4190, %v4183
    %v4618 = vpack.c.b16 %v4191, %v4184
    %v4619 = vpack.c.b16 %v4192, %v4185
    %v4620 = vpack.c.b16 %v4193, %v4186
    %v4621 = vpack.c.b16 %v4194, %v4187
    %v4622 = vpack.c.b16 %v4195, %v4188
    %v4623 = vpack.c.b16 %v4203, %v4196
    %v4624 = vpack.c.b16 %v4204, %v4197
    %v4625 = vpack.c.b16 %v4205, %v4198
    %v4626 = vpack.c.b16 %v4206, %v4199
    %v4627 = vpack.c.b16 %v4207, %v4200
    %v4628 = vpack.c.b16 %v4208, %v4201
    %v4629 = vpack.c.b16 %v4209, %v4202
    %v4630 = vpack.c.b16 %v4217, %v4210
    %v4631 = vpack.c.b16 %v4218, %v4211
    %v4632 = vpack.c.b16 %v4219, %v4212
    %v4633 = vpack.c.b16 %v4220, %v4213
    %v4634 = vpack.c.b16 %v4221, %v4214
    %v4635 = vpack.c.b16 %v4222, %v4215
    %v4636 = vpack.c.b16 %v4223, %v4216
    %v4637 = vpack.c.b16 %v4231, %v4224
    %v4638 = vpack.c.b16 %v4232, %v4225
    %v4639 = vpack.c.b16 %v4233, %v4226
    %v4640 = vpack.c.b16 %v4234, %v4227
    %v4641 = vpack.c.b16 %v4235, %v4228
    %v4642 = vpack.c.b16 %v4236, %v4229
    %v4643 = vpack.c.b16 %v4237, %v4230
    %v4644 = vpack.c.b16 %v4245, %v4238
    %v4645 = vpack.c.b16 %v4246, %v4239
    %v4646 = vpack.c.b16 %v4247, %v4240
    %v4647 = vpack.c.b16 %v4248, %v4241
    %v4648 = vpack.c.b16 %v4249, %v4242
    %v4649 = vpack.c.b16 %v4250, %v4243
    %v4650 = vpack.c.b16 %v4251, %v4244
    %v4651 = vpack.c.b16 %v4259, %v4252
    %v4652 = vpack.c.b16 %v4260, %v4253
    %v4653 = vpack.c.b16 %v4261, %v4254
    %v4654 = vpack.c.b16 %v4262, %v4255
    %v4655 = vpack.c.b16 %v4263, %v4256
    %v4656 = vpack.c.b16 %v4264, %v4257
    %v4657 = vpack.c.b16 %v4265, %v4258
    %v4658 = vpack.c.b16 %v4273, %v4266
    %v4659 = vpack.c.b16 %v4274, %v4267
    %v4660 = vpack.c.b16 %v4275, %v4268
    %v4661 = vpack.c.b16 %v4276, %v4269
    %v4662 = vpack.c.b16 %v4277, %v4270
    %v4663 = vpack.c.b16 %v4278, %v4271
    %v4664 = vpack.c.b16 %v4279, %v4272
    %v4665 = vpack.c.b16 %v4287, %v4280
    %v4666 = vpack.c.b16 %v4288, %v4281
    %v4667 = vpack.c.b16 %v4289, %v4282
    %v4668 = vpack.c.b16 %v4290, %v4283
    %v4669 = vpack.c.b16 %v4291, %v4284
    %v4670 = vpack.c.b16 %v4292, %v4285
    %v4671 = vpack.c.b16 %v4293, %v4286
    %v4672 = vpack.c.b16 %v4301, %v4294
    %v4673 = vpack.c.b16 %v4302, %v4295
    %v4674 = vpack.c.b16 %v4303, %v4296
    %v4675 = vpack.c.b16 %v4304, %v4297
    %v4676 = vpack.c.b16 %v4305, %v4298
    %v4677 = vpack.c.b16 %v4306, %v4299
    %v4678 = vpack.c.b16 %v4307, %v4300
    %v4679 = vpack.c.b16 %v4315, %v4308
    %v4680 = vpack.c.b16 %v4316, %v4309
    %v4681 = vpack.c.b16 %v4317, %v4310
    %v4682 = vpack.c.b16 %v4318, %v4311
    %v4683 = vpack.c.b16 %v4319, %v4312
    %v4684 = vpack.c.b16 %v4320, %v4313
    %v4685 = vpack.c.b16 %v4321, %v4314
    %v4686 = vpack.c.b16 %v4329, %v4322
    %v4687 = vpack.c.b16 %v4330, %v4323
    %v4688 = vpack.c.b16 %v4331, %v4324
    %v4689 = vpack.c.b16 %v4332, %v4325
    %v4690 = vpack.c.b16 %v4333, %v4326
    %v4691 = vpack.c.b16 %v4334, %v4327
    %v4692 = vpack.c.b16 %v4335, %v4328
    %v4693 = vpack.c.b16 %v4343, %v4336
    %v4694 = vpack.c.b16 %v4344, %v4337
    %v4695 = vpack.c.b16 %v4345, %v4338
    %v4696 = vpack.c.b16 %v4346, %v4339
    %v4697 = vpack.c.b16 %v4347, %v4340
    %v4698 = vpack.c.b16 %v4348, %v4341
    %v4699 = vpack.c.b16 %v4349, %v4342
    %v4700 = vpack.c.b16 %v4357, %v4350
    %v4701 = vpack.c.b16 %v4358, %v4351
    %v4702 = vpack.c.b16 %v4359, %v4352
    %v4703 = vpack.c.b16 %v4360, %v4353
    %v4704 = vpack.c.b16 %v4361, %v4354
    %v4705 = vpack.c.b16 %v4362, %v4355
    %v4706 = vpack.c.b16 %v4363, %v4356
    %5050 = vmatprep.subr.bf16.mxu0 %v4414
    %5051 = vmatpush1.bf16.msra.mxu0 %v4413
    %5052 = vmatprep.subr.bf16.mxu0 %v4407
    %5053 = vmatpush1.bf16.msra.mxu0 %v4406
    %5054 = vmatprep.subr.bf16.mxu0 %v4400
    %5055 = vmatpush1.bf16.msra.mxu0 %v4399
    %5056 = vmatprep.subr.bf16.mxu0 %v4393
    %5057 = vmatpush1.bf16.msra.mxu0 %v4392
    %5058 = vmatprep.subr.bf16.mxu0 %v4386
    %5059 = vmatpush1.bf16.msra.mxu0 %v4385
    %5060 = vmatprep.subr.bf16.mxu0 %v4379
    %5061 = vmatpush1.bf16.msra.mxu0 %v4378
    %5062 = vmatprep.subr.bf16.mxu0 %v4372
    %5063 = vmatpush1.bf16.msra.mxu0 %v4371
    %5064 = vmatprep.subr.bf16.mxu0 %v4365
    %5065 = vmatpush1.bf16.msra.mxu0 %v4364
    %5066 = vmatprep.subr.bf16.mxu0 %v4470
    %5067 = vmatpush2.bf16.msra.mxu0 %v4469
    %5068 = vmatprep.subr.bf16.mxu0 %v4463
    %5069 = vmatpush2.bf16.msra.mxu0 %v4462
    %5070 = vmatprep.subr.bf16.mxu0 %v4456
    %5071 = vmatpush2.bf16.msra.mxu0 %v4455
    %5072 = vmatprep.subr.bf16.mxu0 %v4449
    %5073 = vmatpush2.bf16.msra.mxu0 %v4448
    %5074 = vmatprep.subr.bf16.mxu0 %v4442
    %5075 = vmatpush2.bf16.msra.mxu0 %v4441
    %5076 = vmatprep.subr.bf16.mxu0 %v4435
    %5077 = vmatpush2.bf16.msra.mxu0 %v4434
    %5078 = vmatprep.subr.bf16.mxu0 %v4428
    %5079 = vmatpush2.bf16.msra.mxu0 %v4427
    %5080 = vmatprep.subr.bf16.mxu0 %v4421
    %5081 = vmatpush2.bf16.msra.mxu0 %v4420
    %5082 = vmatprep.mubr.bf16.mxu0 %v461
    %5083 = vmatmul.mubr.bf16.gmra.mxu0 %v460
    %v5084 = vpop.f32.mrf.mxu0
    %v5085 = vadd.f32 0.0, %v5084
    %v5086 = vpop.f32.mrf.mxu0
    %v5087 = vadd.f32 0.0, %v5086
    %v5088 = vpop.f32.mrf.mxu0
    %v5089 = vpop.f32.mrf.mxu0
    %5090 = vdwg.mxu0
    %5091 = vmatprep.subr.bf16.mxu0 %v4526
    %5092 = vmatpush1.bf16.msra.mxu0 %v4525
    %5093 = vmatprep.subr.bf16.mxu0 %v4519
    %5094 = vmatpush1.bf16.msra.mxu0 %v4518
    %5095 = vmatprep.subr.bf16.mxu0 %v4512
    %5096 = vmatpush1.bf16.msra.mxu0 %v4511
    %5097 = vmatprep.subr.bf16.mxu0 %v4505
    %5098 = vmatpush1.bf16.msra.mxu0 %v4504
    %5099 = vmatprep.subr.bf16.mxu0 %v4498
    %5100 = vmatpush1.bf16.msra.mxu0 %v4497
    %5101 = vmatprep.subr.bf16.mxu0 %v4491
    %5102 = vmatpush1.bf16.msra.mxu0 %v4490
    %5103 = vmatprep.subr.bf16.mxu0 %v4484
    %5104 = vmatpush1.bf16.msra.mxu0 %v4483
    %5105 = vmatprep.subr.bf16.mxu0 %v4477
    %5106 = vmatpush1.bf16.msra.mxu0 %v4476
    %5107 = vmatprep.subr.bf16.mxu0 %v4582
    %5108 = vmatpush2.bf16.msra.mxu0 %v4581
    %5109 = vmatprep.subr.bf16.mxu0 %v4575
    %5110 = vmatpush2.bf16.msra.mxu0 %v4574
    %5111 = vmatprep.subr.bf16.mxu0 %v4568
    %5112 = vmatpush2.bf16.msra.mxu0 %v4567
    %5113 = vmatprep.subr.bf16.mxu0 %v4561
    %5114 = vmatpush2.bf16.msra.mxu0 %v4560
    %5115 = vmatprep.subr.bf16.mxu0 %v4554
    %5116 = vmatpush2.bf16.msra.mxu0 %v4553
    %5117 = vmatprep.subr.bf16.mxu0 %v4547
    %5118 = vmatpush2.bf16.msra.mxu0 %v4546
    %5119 = vmatprep.subr.bf16.mxu0 %v4540
    %5120 = vmatpush2.bf16.msra.mxu0 %v4539
    %5121 = vmatprep.subr.bf16.mxu0 %v4533
    %5122 = vmatpush2.bf16.msra.mxu0 %v4532
    %5123 = vmatprep.mubr.bf16.mxu0 %v463
    %5124 = vmatmul.mubr.bf16.gmra.mxu0 %v462
    %v5125 = vpop.f32.mrf.mxu0
    %v5126 = vadd.f32 %v5085, %v5125
    %v5127 = vpop.f32.mrf.mxu0
    %v5128 = vadd.f32 %v5087, %v5127
    %v5129 = vpop.f32.mrf.mxu0
    %v5130 = vpop.f32.mrf.mxu0
    %5131 = vdwg.mxu0
    %5132 = vmatprep.subr.bf16.mxu0 %v4638
    %5133 = vmatpush1.bf16.msra.mxu0 %v4637
    %5134 = vmatprep.subr.bf16.mxu0 %v4631
    %5135 = vmatpush1.bf16.msra.mxu0 %v4630
    %5136 = vmatprep.subr.bf16.mxu0 %v4624
    %5137 = vmatpush1.bf16.msra.mxu0 %v4623
    %5138 = vmatprep.subr.bf16.mxu0 %v4617
    %5139 = vmatpush1.bf16.msra.mxu0 %v4616
    %5140 = vmatprep.subr.bf16.mxu0 %v4610
    %5141 = vmatpush1.bf16.msra.mxu0 %v4609
    %5142 = vmatprep.subr.bf16.mxu0 %v4603
    %5143 = vmatpush1.bf16.msra.mxu0 %v4602
    %5144 = vmatprep.subr.bf16.mxu0 %v4596
    %5145 = vmatpush1.bf16.msra.mxu0 %v4595
    %5146 = vmatprep.subr.bf16.mxu0 %v4589
    %5147 = vmatpush1.bf16.msra.mxu0 %v4588
    %5148 = vmatprep.subr.bf16.mxu0 %v4694
    %5149 = vmatpush2.bf16.msra.mxu0 %v4693
    %5150 = vmatprep.subr.bf16.mxu0 %v4687
    %5151 = vmatpush2.bf16.msra.mxu0 %v4686
    %5152 = vmatprep.subr.bf16.mxu0 %v4680
    %5153 = vmatpush2.bf16.msra.mxu0 %v4679
    %5154 = vmatprep.subr.bf16.mxu0 %v4673
    %5155 = vmatpush2.bf16.msra.mxu0 %v4672
    %5156 = vmatprep.subr.bf16.mxu0 %v4666
    %5157 = vmatpush2.bf16.msra.mxu0 %v4665
    %5158 = vmatprep.subr.bf16.mxu0 %v4659
    %5159 = vmatpush2.bf16.msra.mxu0 %v4658
    %5160 = vmatprep.subr.bf16.mxu0 %v4652
    %5161 = vmatpush2.bf16.msra.mxu0 %v4651
    %5162 = vmatprep.subr.bf16.mxu0 %v4645
    %5163 = vmatpush2.bf16.msra.mxu0 %v4644
    %5164 = vmatprep.mubr.bf16.mxu0 %v465
    %5165 = vmatmul.mubr.bf16.gmra.mxu0 %v464
    %v5166 = vpop.f32.mrf.mxu0
    %v5167 = vadd.f32 %v5126, %v5166
    %v5168 = vpop.f32.mrf.mxu0
    %v5169 = vadd.f32 %v5128, %v5168
    %v5170 = vpop.f32.mrf.mxu0
    %v5171 = vpop.f32.mrf.mxu0
    %5172 = vdwg.mxu0
    %5173 = vmatprep.subr.bf16.mxu0 0
    %5174 = vmatpush1.bf16.msra.mxu0 0
    %5175 = vmatprep.subr.bf16.mxu0 0
    %5176 = vmatpush1.bf16.msra.mxu0 0
    %5177 = vmatprep.subr.bf16.mxu0 0
    %5178 = vmatpush1.bf16.msra.mxu0 0
    %5179 = vmatprep.subr.bf16.mxu0 0
    %5180 = vmatpush1.bf16.msra.mxu0 0
    %5181 = vmatprep.subr.bf16.mxu0 0
    %5182 = vmatpush1.bf16.msra.mxu0 0
    %5183 = vmatprep.subr.bf16.mxu0 0
    %5184 = vmatpush1.bf16.msra.mxu0 0
    %5185 = vmatprep.subr.bf16.mxu0 0
    %5186 = vmatpush1.bf16.msra.mxu0 0
    %5187 = vmatprep.subr.bf16.mxu0 %v4701
    %5188 = vmatpush1.bf16.msra.mxu0 %v4700
    %5189 = vmatprep.subr.bf16.mxu0 0
    %5190 = vmatpush2.bf16.msra.mxu0 0
    %5191 = vmatprep.subr.bf16.mxu0 0
    %5192 = vmatpush2.bf16.msra.mxu0 0
    %5193 = vmatprep.subr.bf16.mxu0 0
    %5194 = vmatpush2.bf16.msra.mxu0 0
    %5195 = vmatprep.subr.bf16.mxu0 0
    %5196 = vmatpush2.bf16.msra.mxu0 0
    %5197 = vmatprep.subr.bf16.mxu0 0
    %5198 = vmatpush2.bf16.msra.mxu0 0
    %5199 = vmatprep.subr.bf16.mxu0 0
    %5200 = vmatpush2.bf16.msra.mxu0 0
    %5201 = vmatprep.subr.bf16.mxu0 0
    %5202 = vmatpush2.bf16.msra.mxu0 0
    %5203 = vmatprep.subr.bf16.mxu0 0
    %5204 = vmatpush2.bf16.msra.mxu0 0
    %5205 = vmatprep.mubr.bf16.mxu0 0
    %5206 = vmatmul.mubr.bf16.gmra.mxu0 %v2239
    %v5207 = vpop.f32.mrf.mxu0
    %v5208 = vadd.f32 %v5167, %v5207
    %v5209 = vpop.f32.mrf.mxu0
    %v5210 = vadd.f32 %v5169, %v5209
    %v5211 = vpop.f32.mrf.mxu0
    %v5212 = vpop.f32.mrf.mxu0
    %5213 = vdwg.mxu0
    %5214 = vmatprep.subr.bf16.mxu0 %v4416
    %5215 = vmatpush1.bf16.msra.mxu0 %v4415
    %5216 = vmatprep.subr.bf16.mxu0 %v4409
    %5217 = vmatpush1.bf16.msra.mxu0 %v4408
    %5218 = vmatprep.subr.bf16.mxu0 %v4402
    %5219 = vmatpush1.bf16.msra.mxu0 %v4401
    %5220 = vmatprep.subr.bf16.mxu0 %v4395
    %5221 = vmatpush1.bf16.msra.mxu0 %v4394
    %5222 = vmatprep.subr.bf16.mxu0 %v4388
    %5223 = vmatpush1.bf16.msra.mxu0 %v4387
    %5224 = vmatprep.subr.bf16.mxu0 %v4381
    %5225 = vmatpush1.bf16.msra.mxu0 %v4380
    %5226 = vmatprep.subr.bf16.mxu0 %v4374
    %5227 = vmatpush1.bf16.msra.mxu0 %v4373
    %5228 = vmatprep.subr.bf16.mxu0 %v4367
    %5229 = vmatpush1.bf16.msra.mxu0 %v4366
    %5230 = vmatprep.subr.bf16.mxu0 %v4472
    %5231 = vmatpush2.bf16.msra.mxu0 %v4471
    %5232 = vmatprep.subr.bf16.mxu0 %v4465
    %5233 = vmatpush2.bf16.msra.mxu0 %v4464
    %5234 = vmatprep.subr.bf16.mxu0 %v4458
    %5235 = vmatpush2.bf16.msra.mxu0 %v4457
    %5236 = vmatprep.subr.bf16.mxu0 %v4451
    %5237 = vmatpush2.bf16.msra.mxu0 %v4450
    %5238 = vmatprep.subr.bf16.mxu0 %v4444
    %5239 = vmatpush2.bf16.msra.mxu0 %v4443
    %5240 = vmatprep.subr.bf16.mxu0 %v4437
    %5241 = vmatpush2.bf16.msra.mxu0 %v4436
    %5242 = vmatprep.subr.bf16.mxu0 %v4430
    %5243 = vmatpush2.bf16.msra.mxu0 %v4429
    %5244 = vmatprep.subr.bf16.mxu0 %v4423
    %5245 = vmatpush2.bf16.msra.mxu0 %v4422
    %5246 = vmatprep.mubr.bf16.mxu0 %v461
    %5247 = vmatmul.mubr.bf16.gmra.mxu0 %v460
    %v5248 = vpop.f32.mrf.mxu0
    %v5249 = vadd.f32 0.0, %v5248
    %v5250 = vpop.f32.mrf.mxu0
    %v5251 = vadd.f32 0.0, %v5250
    %v5252 = vpop.f32.mrf.mxu0
    %v5253 = vpop.f32.mrf.mxu0
    %5254 = vdwg.mxu0
    %5255 = vmatprep.subr.bf16.mxu0 %v4528
    %5256 = vmatpush1.bf16.msra.mxu0 %v4527
    %5257 = vmatprep.subr.bf16.mxu0 %v4521
    %5258 = vmatpush1.bf16.msra.mxu0 %v4520
    %5259 = vmatprep.subr.bf16.mxu0 %v4514
    %5260 = vmatpush1.bf16.msra.mxu0 %v4513
    %5261 = vmatprep.subr.bf16.mxu0 %v4507
    %5262 = vmatpush1.bf16.msra.mxu0 %v4506
    %5263 = vmatprep.subr.bf16.mxu0 %v4500
    %5264 = vmatpush1.bf16.msra.mxu0 %v4499
    %5265 = vmatprep.subr.bf16.mxu0 %v4493
    %5266 = vmatpush1.bf16.msra.mxu0 %v4492
    %5267 = vmatprep.subr.bf16.mxu0 %v4486
    %5268 = vmatpush1.bf16.msra.mxu0 %v4485
    %5269 = vmatprep.subr.bf16.mxu0 %v4479
    %5270 = vmatpush1.bf16.msra.mxu0 %v4478
    %5271 = vmatprep.subr.bf16.mxu0 %v4584
    %5272 = vmatpush2.bf16.msra.mxu0 %v4583
    %5273 = vmatprep.subr.bf16.mxu0 %v4577
    %5274 = vmatpush2.bf16.msra.mxu0 %v4576
    %5275 = vmatprep.subr.bf16.mxu0 %v4570
    %5276 = vmatpush2.bf16.msra.mxu0 %v4569
    %5277 = vmatprep.subr.bf16.mxu0 %v4563
    %5278 = vmatpush2.bf16.msra.mxu0 %v4562
    %5279 = vmatprep.subr.bf16.mxu0 %v4556
    %5280 = vmatpush2.bf16.msra.mxu0 %v4555
    %5281 = vmatprep.subr.bf16.mxu0 %v4549
    %5282 = vmatpush2.bf16.msra.mxu0 %v4548
    %5283 = vmatprep.subr.bf16.mxu0 %v4542
    %5284 = vmatpush2.bf16.msra.mxu0 %v4541
    %5285 = vmatprep.subr.bf16.mxu0 %v4535
    %5286 = vmatpush2.bf16.msra.mxu0 %v4534
    %5287 = vmatprep.mubr.bf16.mxu0 %v463
    %5288 = vmatmul.mubr.bf16.gmra.mxu0 %v462
    %v5289 = vpop.f32.mrf.mxu0
    %v5290 = vadd.f32 %v5249, %v5289
    %v5291 = vpop.f32.mrf.mxu0
    %v5292 = vadd.f32 %v5251, %v5291
    %v5293 = vpop.f32.mrf.mxu0
    %v5294 = vpop.f32.mrf.mxu0
    %5295 = vdwg.mxu0
    %5296 = vmatprep.subr.bf16.mxu0 %v4640
    %5297 = vmatpush1.bf16.msra.mxu0 %v4639
    %5298 = vmatprep.subr.bf16.mxu0 %v4633
    %5299 = vmatpush1.bf16.msra.mxu0 %v4632
    %5300 = vmatprep.subr.bf16.mxu0 %v4626
    %5301 = vmatpush1.bf16.msra.mxu0 %v4625
    %5302 = vmatprep.subr.bf16.mxu0 %v4619
    %5303 = vmatpush1.bf16.msra.mxu0 %v4618
    %5304 = vmatprep.subr.bf16.mxu0 %v4612
    %5305 = vmatpush1.bf16.msra.mxu0 %v4611
    %5306 = vmatprep.subr.bf16.mxu0 %v4605
    %5307 = vmatpush1.bf16.msra.mxu0 %v4604
    %5308 = vmatprep.subr.bf16.mxu0 %v4598
    %5309 = vmatpush1.bf16.msra.mxu0 %v4597
    %5310 = vmatprep.subr.bf16.mxu0 %v4591
    %5311 = vmatpush1.bf16.msra.mxu0 %v4590
    %5312 = vmatprep.subr.bf16.mxu0 %v4696
    %5313 = vmatpush2.bf16.msra.mxu0 %v4695
    %5314 = vmatprep.subr.bf16.mxu0 %v4689
    %5315 = vmatpush2.bf16.msra.mxu0 %v4688
    %5316 = vmatprep.subr.bf16.mxu0 %v4682
    %5317 = vmatpush2.bf16.msra.mxu0 %v4681
    %5318 = vmatprep.subr.bf16.mxu0 %v4675
    %5319 = vmatpush2.bf16.msra.mxu0 %v4674
    %5320 = vmatprep.subr.bf16.mxu0 %v4668
    %5321 = vmatpush2.bf16.msra.mxu0 %v4667
    %5322 = vmatprep.subr.bf16.mxu0 %v4661
    %5323 = vmatpush2.bf16.msra.mxu0 %v4660
    %5324 = vmatprep.subr.bf16.mxu0 %v4654
    %5325 = vmatpush2.bf16.msra.mxu0 %v4653
    %5326 = vmatprep.subr.bf16.mxu0 %v4647
    %5327 = vmatpush2.bf16.msra.mxu0 %v4646
    %5328 = vmatprep.mubr.bf16.mxu0 %v465
    %5329 = vmatmul.mubr.bf16.gmra.mxu0 %v464
    %v5330 = vpop.f32.mrf.mxu0
    %v5331 = vadd.f32 %v5290, %v5330
    %v5332 = vpop.f32.mrf.mxu0
    %v5333 = vadd.f32 %v5292, %v5332
    %v5334 = vpop.f32.mrf.mxu0
    %v5335 = vpop.f32.mrf.mxu0
    %5336 = vdwg.mxu0
    %5337 = vmatprep.subr.bf16.mxu0 0
    %5338 = vmatpush1.bf16.msra.mxu0 0
    %5339 = vmatprep.subr.bf16.mxu0 0
    %5340 = vmatpush1.bf16.msra.mxu0 0
    %5341 = vmatprep.subr.bf16.mxu0 0
    %5342 = vmatpush1.bf16.msra.mxu0 0
    %5343 = vmatprep.subr.bf16.mxu0 0
    %5344 = vmatpush1.bf16.msra.mxu0 0
    %5345 = vmatprep.subr.bf16.mxu0 0
    %5346 = vmatpush1.bf16.msra.mxu0 0
    %5347 = vmatprep.subr.bf16.mxu0 0
    %5348 = vmatpush1.bf16.msra.mxu0 0
    %5349 = vmatprep.subr.bf16.mxu0 0
    %5350 = vmatpush1.bf16.msra.mxu0 0
    %5351 = vmatprep.subr.bf16.mxu0 %v4703
    %5352 = vmatpush1.bf16.msra.mxu0 %v4702
    %5353 = vmatprep.subr.bf16.mxu0 0
    %5354 = vmatpush2.bf16.msra.mxu0 0
    %5355 = vmatprep.subr.bf16.mxu0 0
    %5356 = vmatpush2.bf16.msra.mxu0 0
    %5357 = vmatprep.subr.bf16.mxu0 0
    %5358 = vmatpush2.bf16.msra.mxu0 0
    %5359 = vmatprep.subr.bf16.mxu0 0
    %5360 = vmatpush2.bf16.msra.mxu0 0
    %5361 = vmatprep.subr.bf16.mxu0 0
    %5362 = vmatpush2.bf16.msra.mxu0 0
    %5363 = vmatprep.subr.bf16.mxu0 0
    %5364 = vmatpush2.bf16.msra.mxu0 0
    %5365 = vmatprep.subr.bf16.mxu0 0
    %5366 = vmatpush2.bf16.msra.mxu0 0
    %5367 = vmatprep.subr.bf16.mxu0 0
    %5368 = vmatpush2.bf16.msra.mxu0 0
    %5369 = vmatprep.mubr.bf16.mxu0 0
    %5370 = vmatmul.mubr.bf16.gmra.mxu0 %v2239
    %v5371 = vpop.f32.mrf.mxu0
    %v5372 = vadd.f32 %v5331, %v5371
    %v5373 = vpop.f32.mrf.mxu0
    %v5374 = vadd.f32 %v5333, %v5373
    %v5375 = vpop.f32.mrf.mxu0
    %v5376 = vpop.f32.mrf.mxu0
    %5377 = vdwg.mxu0
    %5378 = vmatprep.subr.bf16.mxu0 %v4418
    %5379 = vmatpush1.bf16.msra.mxu0 %v4417
    %5380 = vmatprep.subr.bf16.mxu0 %v4411
    %5381 = vmatpush1.bf16.msra.mxu0 %v4410
    %5382 = vmatprep.subr.bf16.mxu0 %v4404
    %5383 = vmatpush1.bf16.msra.mxu0 %v4403
    %5384 = vmatprep.subr.bf16.mxu0 %v4397
    %5385 = vmatpush1.bf16.msra.mxu0 %v4396
    %5386 = vmatprep.subr.bf16.mxu0 %v4390
    %5387 = vmatpush1.bf16.msra.mxu0 %v4389
    %5388 = vmatprep.subr.bf16.mxu0 %v4383
    %5389 = vmatpush1.bf16.msra.mxu0 %v4382
    %5390 = vmatprep.subr.bf16.mxu0 %v4376
    %5391 = vmatpush1.bf16.msra.mxu0 %v4375
    %5392 = vmatprep.subr.bf16.mxu0 %v4369
    %5393 = vmatpush1.bf16.msra.mxu0 %v4368
    %5394 = vmatprep.subr.bf16.mxu0 %v4474
    %5395 = vmatpush2.bf16.msra.mxu0 %v4473
    %5396 = vmatprep.subr.bf16.mxu0 %v4467
    %5397 = vmatpush2.bf16.msra.mxu0 %v4466
    %5398 = vmatprep.subr.bf16.mxu0 %v4460
    %5399 = vmatpush2.bf16.msra.mxu0 %v4459
    %5400 = vmatprep.subr.bf16.mxu0 %v4453
    %5401 = vmatpush2.bf16.msra.mxu0 %v4452
    %5402 = vmatprep.subr.bf16.mxu0 %v4446
    %5403 = vmatpush2.bf16.msra.mxu0 %v4445
    %5404 = vmatprep.subr.bf16.mxu0 %v4439
    %5405 = vmatpush2.bf16.msra.mxu0 %v4438
    %5406 = vmatprep.subr.bf16.mxu0 %v4432
    %5407 = vmatpush2.bf16.msra.mxu0 %v4431
    %5408 = vmatprep.subr.bf16.mxu0 %v4425
    %5409 = vmatpush2.bf16.msra.mxu0 %v4424
    %5410 = vmatprep.mubr.bf16.mxu0 %v461
    %5411 = vmatmul.mubr.bf16.gmra.mxu0 %v460
    %v5412 = vpop.f32.mrf.mxu0
    %v5413 = vadd.f32 0.0, %v5412
    %v5414 = vpop.f32.mrf.mxu0
    %v5415 = vadd.f32 0.0, %v5414
    %v5416 = vpop.f32.mrf.mxu0
    %v5417 = vpop.f32.mrf.mxu0
    %5418 = vdwg.mxu0
    %5419 = vmatprep.subr.bf16.mxu0 %v4530
    %5420 = vmatpush1.bf16.msra.mxu0 %v4529
    %5421 = vmatprep.subr.bf16.mxu0 %v4523
    %5422 = vmatpush1.bf16.msra.mxu0 %v4522
    %5423 = vmatprep.subr.bf16.mxu0 %v4516
    %5424 = vmatpush1.bf16.msra.mxu0 %v4515
    %5425 = vmatprep.subr.bf16.mxu0 %v4509
    %5426 = vmatpush1.bf16.msra.mxu0 %v4508
    %5427 = vmatprep.subr.bf16.mxu0 %v4502
    %5428 = vmatpush1.bf16.msra.mxu0 %v4501
    %5429 = vmatprep.subr.bf16.mxu0 %v4495
    %5430 = vmatpush1.bf16.msra.mxu0 %v4494
    %5431 = vmatprep.subr.bf16.mxu0 %v4488
    %5432 = vmatpush1.bf16.msra.mxu0 %v4487
    %5433 = vmatprep.subr.bf16.mxu0 %v4481
    %5434 = vmatpush1.bf16.msra.mxu0 %v4480
    %5435 = vmatprep.subr.bf16.mxu0 %v4586
    %5436 = vmatpush2.bf16.msra.mxu0 %v4585
    %5437 = vmatprep.subr.bf16.mxu0 %v4579
    %5438 = vmatpush2.bf16.msra.mxu0 %v4578
    %5439 = vmatprep.subr.bf16.mxu0 %v4572
    %5440 = vmatpush2.bf16.msra.mxu0 %v4571
    %5441 = vmatprep.subr.bf16.mxu0 %v4565
    %5442 = vmatpush2.bf16.msra.mxu0 %v4564
    %5443 = vmatprep.subr.bf16.mxu0 %v4558
    %5444 = vmatpush2.bf16.msra.mxu0 %v4557
    %5445 = vmatprep.subr.bf16.mxu0 %v4551
    %5446 = vmatpush2.bf16.msra.mxu0 %v4550
    %5447 = vmatprep.subr.bf16.mxu0 %v4544
    %5448 = vmatpush2.bf16.msra.mxu0 %v4543
    %5449 = vmatprep.subr.bf16.mxu0 %v4537
    %5450 = vmatpush2.bf16.msra.mxu0 %v4536
    %5451 = vmatprep.mubr.bf16.mxu0 %v463
    %5452 = vmatmul.mubr.bf16.gmra.mxu0 %v462
    %v5453 = vpop.f32.mrf.mxu0
    %v5454 = vadd.f32 %v5413, %v5453
    %v5455 = vpop.f32.mrf.mxu0
    %v5456 = vadd.f32 %v5415, %v5455
    %v5457 = vpop.f32.mrf.mxu0
    %v5458 = vpop.f32.mrf.mxu0
    %5459 = vdwg.mxu0
    %5460 = vmatprep.subr.bf16.mxu0 %v4642
    %5461 = vmatpush1.bf16.msra.mxu0 %v4641
    %5462 = vmatprep.subr.bf16.mxu0 %v4635
    %5463 = vmatpush1.bf16.msra.mxu0 %v4634
    %5464 = vmatprep.subr.bf16.mxu0 %v4628
    %5465 = vmatpush1.bf16.msra.mxu0 %v4627
    %5466 = vmatprep.subr.bf16.mxu0 %v4621
    %5467 = vmatpush1.bf16.msra.mxu0 %v4620
    %5468 = vmatprep.subr.bf16.mxu0 %v4614
    %5469 = vmatpush1.bf16.msra.mxu0 %v4613
    %5470 = vmatprep.subr.bf16.mxu0 %v4607
    %5471 = vmatpush1.bf16.msra.mxu0 %v4606
    %5472 = vmatprep.subr.bf16.mxu0 %v4600
    %5473 = vmatpush1.bf16.msra.mxu0 %v4599
    %5474 = vmatprep.subr.bf16.mxu0 %v4593
    %5475 = vmatpush1.bf16.msra.mxu0 %v4592
    %5476 = vmatprep.subr.bf16.mxu0 %v4698
    %5477 = vmatpush2.bf16.msra.mxu0 %v4697
    %5478 = vmatprep.subr.bf16.mxu0 %v4691
    %5479 = vmatpush2.bf16.msra.mxu0 %v4690
    %5480 = vmatprep.subr.bf16.mxu0 %v4684
    %5481 = vmatpush2.bf16.msra.mxu0 %v4683
    %5482 = vmatprep.subr.bf16.mxu0 %v4677
    %5483 = vmatpush2.bf16.msra.mxu0 %v4676
    %5484 = vmatprep.subr.bf16.mxu0 %v4670
    %5485 = vmatpush2.bf16.msra.mxu0 %v4669
    %5486 = vmatprep.subr.bf16.mxu0 %v4663
    %5487 = vmatpush2.bf16.msra.mxu0 %v4662
    %5488 = vmatprep.subr.bf16.mxu0 %v4656
    %5489 = vmatpush2.bf16.msra.mxu0 %v4655
    %5490 = vmatprep.subr.bf16.mxu0 %v4649
    %5491 = vmatpush2.bf16.msra.mxu0 %v4648
    %5492 = vmatprep.mubr.bf16.mxu0 %v465
    %5493 = vmatmul.mubr.bf16.gmra.mxu0 %v464
    %v5494 = vpop.f32.mrf.mxu0
    %v5495 = vadd.f32 %v5454, %v5494
    %v5496 = vpop.f32.mrf.mxu0
    %v5497 = vadd.f32 %v5456, %v5496
    %v5498 = vpop.f32.mrf.mxu0
    %v5499 = vpop.f32.mrf.mxu0
    %5500 = vdwg.mxu0
    %5501 = vmatprep.subr.bf16.mxu0 0
    %5502 = vmatpush1.bf16.msra.mxu0 0
    %5503 = vmatprep.subr.bf16.mxu0 0
    %5504 = vmatpush1.bf16.msra.mxu0 0
    %5505 = vmatprep.subr.bf16.mxu0 0
    %5506 = vmatpush1.bf16.msra.mxu0 0
    %5507 = vmatprep.subr.bf16.mxu0 0
    %5508 = vmatpush1.bf16.msra.mxu0 0
    %5509 = vmatprep.subr.bf16.mxu0 0
    %5510 = vmatpush1.bf16.msra.mxu0 0
    %5511 = vmatprep.subr.bf16.mxu0 0
    %5512 = vmatpush1.bf16.msra.mxu0 0
    %5513 = vmatprep.subr.bf16.mxu0 0
    %5514 = vmatpush1.bf16.msra.mxu0 0
    %5515 = vmatprep.subr.bf16.mxu0 %v4705
    %5516 = vmatpush1.bf16.msra.mxu0 %v4704
    %5517 = vmatprep.subr.bf16.mxu0 0
    %5518 = vmatpush2.bf16.msra.mxu0 0
    %5519 = vmatprep.subr.bf16.mxu0 0
    %5520 = vmatpush2.bf16.msra.mxu0 0
    %5521 = vmatprep.subr.bf16.mxu0 0
    %5522 = vmatpush2.bf16.msra.mxu0 0
    %5523 = vmatprep.subr.bf16.mxu0 0
    %5524 = vmatpush2.bf16.msra.mxu0 0
    %5525 = vmatprep.subr.bf16.mxu0 0
    %5526 = vmatpush2.bf16.msra.mxu0 0
    %5527 = vmatprep.subr.bf16.mxu0 0
    %5528 = vmatpush2.bf16.msra.mxu0 0
    %5529 = vmatprep.subr.bf16.mxu0 0
    %5530 = vmatpush2.bf16.msra.mxu0 0
    %5531 = vmatprep.subr.bf16.mxu0 0
    %5532 = vmatpush2.bf16.msra.mxu0 0
    %5533 = vmatprep.mubr.bf16.mxu0 0
    %5534 = vmatmul.mubr.bf16.gmra.mxu0 %v2239
    %v5535 = vpop.f32.mrf.mxu0
    %v5536 = vadd.f32 %v5495, %v5535
    %v5537 = vpop.f32.mrf.mxu0
    %v5538 = vadd.f32 %v5497, %v5537
    %v5539 = vpop.f32.mrf.mxu0
    %v5540 = vpop.f32.mrf.mxu0
    %5541 = vdwg.mxu0
    %5542 = vmatprep.subr.bf16.mxu0 0
    %5543 = vmatpush1.bf16.msra.mxu0 %v4419
    %5544 = vmatprep.subr.bf16.mxu0 0
    %5545 = vmatpush1.bf16.msra.mxu0 %v4412
    %5546 = vmatprep.subr.bf16.mxu0 0
    %5547 = vmatpush1.bf16.msra.mxu0 %v4405
    %5548 = vmatprep.subr.bf16.mxu0 0
    %5549 = vmatpush1.bf16.msra.mxu0 %v4398
    %5550 = vmatprep.subr.bf16.mxu0 0
    %5551 = vmatpush1.bf16.msra.mxu0 %v4391
    %5552 = vmatprep.subr.bf16.mxu0 0
    %5553 = vmatpush1.bf16.msra.mxu0 %v4384
    %5554 = vmatprep.subr.bf16.mxu0 0
    %5555 = vmatpush1.bf16.msra.mxu0 %v4377
    %5556 = vmatprep.subr.bf16.mxu0 0
    %5557 = vmatpush1.bf16.msra.mxu0 %v4370
    %5558 = vmatprep.subr.bf16.mxu0 0
    %5559 = vmatpush2.bf16.msra.mxu0 %v4475
    %5560 = vmatprep.subr.bf16.mxu0 0
    %5561 = vmatpush2.bf16.msra.mxu0 %v4468
    %5562 = vmatprep.subr.bf16.mxu0 0
    %5563 = vmatpush2.bf16.msra.mxu0 %v4461
    %5564 = vmatprep.subr.bf16.mxu0 0
    %5565 = vmatpush2.bf16.msra.mxu0 %v4454
    %5566 = vmatprep.subr.bf16.mxu0 0
    %5567 = vmatpush2.bf16.msra.mxu0 %v4447
    %5568 = vmatprep.subr.bf16.mxu0 0
    %5569 = vmatpush2.bf16.msra.mxu0 %v4440
    %5570 = vmatprep.subr.bf16.mxu0 0
    %5571 = vmatpush2.bf16.msra.mxu0 %v4433
    %5572 = vmatprep.subr.bf16.mxu0 0
    %5573 = vmatpush2.bf16.msra.mxu0 %v4426
    %5574 = vmatprep.mubr.bf16.mxu0 %v461
    %5575 = vmatmul.mubr.bf16.gmra.mxu0 %v460
    %v5576 = vpop.f32.mrf.mxu0
    %v5577 = vadd.f32 0.0, %v5576
    %v5578 = vpop.f32.mrf.mxu0
    %v5579 = vpop.f32.mrf.mxu0
    %v5580 = vpop.f32.mrf.mxu0
    %5581 = vdwg.mxu0
    %5582 = vmatprep.subr.bf16.mxu0 0
    %5583 = vmatpush1.bf16.msra.mxu0 %v4531
    %5584 = vmatprep.subr.bf16.mxu0 0
    %5585 = vmatpush1.bf16.msra.mxu0 %v4524
    %5586 = vmatprep.subr.bf16.mxu0 0
    %5587 = vmatpush1.bf16.msra.mxu0 %v4517
    %5588 = vmatprep.subr.bf16.mxu0 0
    %5589 = vmatpush1.bf16.msra.mxu0 %v4510
    %5590 = vmatprep.subr.bf16.mxu0 0
    %5591 = vmatpush1.bf16.msra.mxu0 %v4503
    %5592 = vmatprep.subr.bf16.mxu0 0
    %5593 = vmatpush1.bf16.msra.mxu0 %v4496
    %5594 = vmatprep.subr.bf16.mxu0 0
    %5595 = vmatpush1.bf16.msra.mxu0 %v4489
    %5596 = vmatprep.subr.bf16.mxu0 0
    %5597 = vmatpush1.bf16.msra.mxu0 %v4482
    %5598 = vmatprep.subr.bf16.mxu0 0
    %5599 = vmatpush2.bf16.msra.mxu0 %v4587
    %5600 = vmatprep.subr.bf16.mxu0 0
    %5601 = vmatpush2.bf16.msra.mxu0 %v4580
    %5602 = vmatprep.subr.bf16.mxu0 0
    %5603 = vmatpush2.bf16.msra.mxu0 %v4573
    %5604 = vmatprep.subr.bf16.mxu0 0
    %5605 = vmatpush2.bf16.msra.mxu0 %v4566
    %5606 = vmatprep.subr.bf16.mxu0 0
    %5607 = vmatpush2.bf16.msra.mxu0 %v4559
    %5608 = vmatprep.subr.bf16.mxu0 0
    %5609 = vmatpush2.bf16.msra.mxu0 %v4552
    %5610 = vmatprep.subr.bf16.mxu0 0
    %5611 = vmatpush2.bf16.msra.mxu0 %v4545
    %5612 = vmatprep.subr.bf16.mxu0 0
    %5613 = vmatpush2.bf16.msra.mxu0 %v4538
    %5614 = vmatprep.mubr.bf16.mxu0 %v463
    %5615 = vmatmul.mubr.bf16.gmra.mxu0 %v462
    %v5616 = vpop.f32.mrf.mxu0
    %v5617 = vadd.f32 %v5577, %v5616
    %v5618 = vpop.f32.mrf.mxu0
    %v5619 = vpop.f32.mrf.mxu0
    %v5620 = vpop.f32.mrf.mxu0
    %5621 = vdwg.mxu0
    %5622 = vmatprep.subr.bf16.mxu0 0
    %5623 = vmatpush1.bf16.msra.mxu0 %v4643
    %5624 = vmatprep.subr.bf16.mxu0 0
    %5625 = vmatpush1.bf16.msra.mxu0 %v4636
    %5626 = vmatprep.subr.bf16.mxu0 0
    %5627 = vmatpush1.bf16.msra.mxu0 %v4629
    %5628 = vmatprep.subr.bf16.mxu0 0
    %5629 = vmatpush1.bf16.msra.mxu0 %v4622
    %5630 = vmatprep.subr.bf16.mxu0 0
    %5631 = vmatpush1.bf16.msra.mxu0 %v4615
    %5632 = vmatprep.subr.bf16.mxu0 0
    %5633 = vmatpush1.bf16.msra.mxu0 %v4608
    %5634 = vmatprep.subr.bf16.mxu0 0
    %5635 = vmatpush1.bf16.msra.mxu0 %v4601
    %5636 = vmatprep.subr.bf16.mxu0 0
    %5637 = vmatpush1.bf16.msra.mxu0 %v4594
    %5638 = vmatprep.subr.bf16.mxu0 0
    %5639 = vmatpush2.bf16.msra.mxu0 %v4699
    %5640 = vmatprep.subr.bf16.mxu0 0
    %5641 = vmatpush2.bf16.msra.mxu0 %v4692
    %5642 = vmatprep.subr.bf16.mxu0 0
    %5643 = vmatpush2.bf16.msra.mxu0 %v4685
    %5644 = vmatprep.subr.bf16.mxu0 0
    %5645 = vmatpush2.bf16.msra.mxu0 %v4678
    %5646 = vmatprep.subr.bf16.mxu0 0
    %5647 = vmatpush2.bf16.msra.mxu0 %v4671
    %5648 = vmatprep.subr.bf16.mxu0 0
    %5649 = vmatpush2.bf16.msra.mxu0 %v4664
    %5650 = vmatprep.subr.bf16.mxu0 0
    %5651 = vmatpush2.bf16.msra.mxu0 %v4657
    %5652 = vmatprep.subr.bf16.mxu0 0
    %5653 = vmatpush2.bf16.msra.mxu0 %v4650
    %5654 = vmatprep.mubr.bf16.mxu0 %v465
    %5655 = vmatmul.mubr.bf16.gmra.mxu0 %v464
    %v5656 = vpop.f32.mrf.mxu0
    %v5657 = vadd.f32 %v5617, %v5656
    %v5658 = vpop.f32.mrf.mxu0
    %v5659 = vpop.f32.mrf.mxu0
    %v5660 = vpop.f32.mrf.mxu0
    %5661 = vdwg.mxu0
    %5662 = vmatprep.subr.bf16.mxu0 0
    %5663 = vmatpush1.bf16.msra.mxu0 0
    %5664 = vmatprep.subr.bf16.mxu0 0
    %5665 = vmatpush1.bf16.msra.mxu0 0
    %5666 = vmatprep.subr.bf16.mxu0 0
    %5667 = vmatpush1.bf16.msra.mxu0 0
    %5668 = vmatprep.subr.bf16.mxu0 0
    %5669 = vmatpush1.bf16.msra.mxu0 0
    %5670 = vmatprep.subr.bf16.mxu0 0
    %5671 = vmatpush1.bf16.msra.mxu0 0
    %5672 = vmatprep.subr.bf16.mxu0 0
    %5673 = vmatpush1.bf16.msra.mxu0 0
    %5674 = vmatprep.subr.bf16.mxu0 0
    %5675 = vmatpush1.bf16.msra.mxu0 0
    %5676 = vmatprep.subr.bf16.mxu0 0
    %5677 = vmatpush1.bf16.msra.mxu0 %v4706
    %5678 = vmatprep.subr.bf16.mxu0 0
    %5679 = vmatpush2.bf16.msra.mxu0 0
    %5680 = vmatprep.subr.bf16.mxu0 0
    %5681 = vmatpush2.bf16.msra.mxu0 0
    %5682 = vmatprep.subr.bf16.mxu0 0
    %5683 = vmatpush2.bf16.msra.mxu0 0
    %5684 = vmatprep.subr.bf16.mxu0 0
    %5685 = vmatpush2.bf16.msra.mxu0 0
    %5686 = vmatprep.subr.bf16.mxu0 0
    %5687 = vmatpush2.bf16.msra.mxu0 0
    %5688 = vmatprep.subr.bf16.mxu0 0
    %5689 = vmatpush2.bf16.msra.mxu0 0
    %5690 = vmatprep.subr.bf16.mxu0 0
    %5691 = vmatpush2.bf16.msra.mxu0 0
    %5692 = vmatprep.subr.bf16.mxu0 0
    %5693 = vmatpush2.bf16.msra.mxu0 0
    %5694 = vmatprep.mubr.bf16.mxu0 0
    %5695 = vmatmul.mubr.bf16.gmra.mxu0 %v2239
    %v5696 = vpop.f32.mrf.mxu0
    %v5697 = vadd.f32 %v5657, %v5696
    %v5698 = vpop.f32.mrf.mxu0
    %v5699 = vpop.f32.mrf.mxu0
    %v5700 = vpop.f32.mrf.mxu0
    %5701 = vdwg.mxu0
    %v5702 = vmax.f32 %v2399, %v5208
    %v5703 = vmax.f32 %v2401, %v5210
    %v5704 = vmax.f32 %v2563, %v5372
    %v5705 = vmax.f32 %v2565, %v5374
    %v5706 = vmax.f32 %v2727, %v5536
    %v5707 = vmax.f32 %v2729, %v5538
    %v5708 = vmax.f32 %v2888, %v5697
    %s5709 = scalar_lea.vmem [#allocation2], 5488
    %v5710 = vld [vmem:[%s5709] sm:$0xff]
    %v5711 = vld [vmem:[%s5709 + $0x8] sm:$0xff]
    %v5712 = vld [vmem:[%s5709 + $0x10] sm:$0xff]
    %v5713 = vld [vmem:[%s5709 + $0x18] sm:$0xf]
    %v5714 = vld [vmem:[%s5709 + $0x1c] sm:$0xff]
    %v5715 = vld [vmem:[%s5709 + $0x24] sm:$0xff]
    %v5716 = vld [vmem:[%s5709 + $0x2c] sm:$0xff]
    %v5717 = vld [vmem:[%s5709 + $0x34] sm:$0xf]
    %v5718 = vld [vmem:[%s5709 + $0x38] sm:$0xff]
    %v5719 = vld [vmem:[%s5709 + $0x40] sm:$0xff]
    %v5720 = vld [vmem:[%s5709 + $0x48] sm:$0xff]
    %v5721 = vld [vmem:[%s5709 + $0x50] sm:$0xf]
    %v5722 = vld [vmem:[%s5709 + $0x54] sm:$0xff]
    %v5723 = vld [vmem:[%s5709 + $0x5c] sm:$0xff]
    %v5724 = vld [vmem:[%s5709 + $0x64] sm:$0xff]
    %v5725 = vld [vmem:[%s5709 + $0x6c] sm:$0xf]
    %v5726 = vld [vmem:[%s5709 + $0x70] sm:$0xff]
    %v5727 = vld [vmem:[%s5709 + $0x78] sm:$0xff]
    %v5728 = vld [vmem:[%s5709 + $0x80] sm:$0xff]
    %v5729 = vld [vmem:[%s5709 + $0x88] sm:$0xf]
    %v5730 = vld [vmem:[%s5709 + $0x8c] sm:$0xff]
    %v5731 = vld [vmem:[%s5709 + $0x94] sm:$0xff]
    %v5732 = vld [vmem:[%s5709 + $0x9c] sm:$0xff]
    %v5733 = vld [vmem:[%s5709 + $0xa4] sm:$0xf]
    %v5734 = vld [vmem:[%s5709 + $0xa8] sm:$0xff]
    %v5735 = vld [vmem:[%s5709 + $0xb0] sm:$0xff]
    %v5736 = vld [vmem:[%s5709 + $0xb8] sm:$0xff]
    %v5737 = vld [vmem:[%s5709 + $0xc0] sm:$0xf]
    %v5738 = vld [vmem:[%s5709 + $0xc4] sm:$0xff]
    %v5739 = vld [vmem:[%s5709 + $0xcc] sm:$0xff]
    %v5740 = vld [vmem:[%s5709 + $0xd4] sm:$0xff]
    %v5741 = vld [vmem:[%s5709 + $0xdc] sm:$0xf]
    %v5742 = vld [vmem:[%s5709 + $0xe0] sm:$0xff]
    %v5743 = vld [vmem:[%s5709 + $0xe8] sm:$0xff]
    %v5744 = vld [vmem:[%s5709 + $0xf0] sm:$0xff]
    %v5745 = vld [vmem:[%s5709 + $0xf8] sm:$0xf]
    %v5746 = vld [vmem:[%s5709 + $0xfc] sm:$0xff]
    %v5747 = vld [vmem:[%s5709 + $0x104] sm:$0xff]
    %v5748 = vld [vmem:[%s5709 + $0x10c] sm:$0xff]
    %v5749 = vld [vmem:[%s5709 + $0x114] sm:$0xf]
    %v5750 = vld [vmem:[%s5709 + $0x118] sm:$0xff]
    %v5751 = vld [vmem:[%s5709 + $0x120] sm:$0xff]
    %v5752 = vld [vmem:[%s5709 + $0x128] sm:$0xff]
    %v5753 = vld [vmem:[%s5709 + $0x130] sm:$0xf]
    %v5754 = vld [vmem:[%s5709 + $0x134] sm:$0xff]
    %v5755 = vld [vmem:[%s5709 + $0x13c] sm:$0xff]
    %v5756 = vld [vmem:[%s5709 + $0x144] sm:$0xff]
    %v5757 = vld [vmem:[%s5709 + $0x14c] sm:$0xf]
    %v5758 = vld [vmem:[%s5709 + $0x150] sm:$0xff]
    %v5759 = vld [vmem:[%s5709 + $0x158] sm:$0xff]
    %v5760 = vld [vmem:[%s5709 + $0x160] sm:$0xff]
    %v5761 = vld [vmem:[%s5709 + $0x168] sm:$0xf]
    %v5762 = vld [vmem:[%s5709 + $0x16c] sm:$0xff]
    %v5763 = vld [vmem:[%s5709 + $0x174] sm:$0xff]
    %v5764 = vld [vmem:[%s5709 + $0x17c] sm:$0xff]
    %v5765 = vld [vmem:[%s5709 + $0x184] sm:$0xf]
    %v5766 = vld [vmem:[%s5709 + $0x188] sm:$0xff]
    %v5767 = vld [vmem:[%s5709 + $0x190] sm:$0xff]
    %v5768 = vld [vmem:[%s5709 + $0x198] sm:$0xff]
    %v5769 = vld [vmem:[%s5709 + $0x1a0] sm:$0xf]
    %v5770 = vld [vmem:[%s5709 + $0x1a4] sm:$0xff]
    %v5771 = vld [vmem:[%s5709 + $0x1ac] sm:$0xff]
    %v5772 = vld [vmem:[%s5709 + $0x1b4] sm:$0xff]
    %v5773 = vld [vmem:[%s5709 + $0x1bc] sm:$0xf]
    %v5774 = vld [vmem:[%s5709 + $0x1c0] sm:$0xff]
    %v5775 = vld [vmem:[%s5709 + $0x1c8] sm:$0xff]
    %v5776 = vld [vmem:[%s5709 + $0x1d0] sm:$0xff]
    %v5777 = vld [vmem:[%s5709 + $0x1d8] sm:$0xf]
    %v5778 = vld [vmem:[%s5709 + $0x1dc] sm:$0xff]
    %v5779 = vld [vmem:[%s5709 + $0x1e4] sm:$0xff]
    %v5780 = vld [vmem:[%s5709 + $0x1ec] sm:$0xff]
    %v5781 = vld [vmem:[%s5709 + $0x1f4] sm:$0xf]
    %v5782 = vld [vmem:[%s5709 + $0x1f8] sm:$0xff]
    %v5783 = vld [vmem:[%s5709 + $0x200] sm:$0xff]
    %v5784 = vld [vmem:[%s5709 + $0x208] sm:$0xff]
    %v5785 = vld [vmem:[%s5709 + $0x210] sm:$0xf]
    %v5786 = vld [vmem:[%s5709 + $0x214] sm:$0xff]
    %v5787 = vld [vmem:[%s5709 + $0x21c] sm:$0xff]
    %v5788 = vld [vmem:[%s5709 + $0x224] sm:$0xff]
    %v5789 = vld [vmem:[%s5709 + $0x22c] sm:$0xf]
    %v5790 = vld [vmem:[%s5709 + $0x230] sm:$0xff]
    %v5791 = vld [vmem:[%s5709 + $0x238] sm:$0xff]
    %v5792 = vld [vmem:[%s5709 + $0x240] sm:$0xff]
    %v5793 = vld [vmem:[%s5709 + $0x248] sm:$0xf]
    %v5794 = vld [vmem:[%s5709 + $0x24c] sm:$0xff]
    %v5795 = vld [vmem:[%s5709 + $0x254] sm:$0xff]
    %v5796 = vld [vmem:[%s5709 + $0x25c] sm:$0xff]
    %v5797 = vld [vmem:[%s5709 + $0x264] sm:$0xf]
    %v5798 = vld [vmem:[%s5709 + $0x268] sm:$0xff]
    %v5799 = vld [vmem:[%s5709 + $0x270] sm:$0xff]
    %v5800 = vld [vmem:[%s5709 + $0x278] sm:$0xff]
    %v5801 = vld [vmem:[%s5709 + $0x280] sm:$0xf]
    %v5802 = vld [vmem:[%s5709 + $0x284] sm:$0xff]
    %v5803 = vld [vmem:[%s5709 + $0x28c] sm:$0xff]
    %v5804 = vld [vmem:[%s5709 + $0x294] sm:$0xff]
    %v5805 = vld [vmem:[%s5709 + $0x29c] sm:$0xf]
    %v5806 = vld [vmem:[%s5709 + $0x2a0] sm:$0xff]
    %v5807 = vld [vmem:[%s5709 + $0x2a8] sm:$0xff]
    %v5808 = vld [vmem:[%s5709 + $0x2b0] sm:$0xff]
    %v5809 = vld [vmem:[%s5709 + $0x2b8] sm:$0xf]
    %v5810 = vld [vmem:[%s5709 + $0x2bc] sm:$0xff]
    %v5811 = vld [vmem:[%s5709 + $0x2c4] sm:$0xff]
    %v5812 = vld [vmem:[%s5709 + $0x2cc] sm:$0xff]
    %v5813 = vld [vmem:[%s5709 + $0x2d4] sm:$0xf]
    %v5814 = vld [vmem:[%s5709 + $0x2d8] sm:$0xff]
    %v5815 = vld [vmem:[%s5709 + $0x2e0] sm:$0xff]
    %v5816 = vld [vmem:[%s5709 + $0x2e8] sm:$0xff]
    %v5817 = vld [vmem:[%s5709 + $0x2f0] sm:$0xf]
    %v5818 = vld [vmem:[%s5709 + $0x2f4] sm:$0xff]
    %v5819 = vld [vmem:[%s5709 + $0x2fc] sm:$0xff]
    %v5820 = vld [vmem:[%s5709 + $0x304] sm:$0xff]
    %v5821 = vld [vmem:[%s5709 + $0x30c] sm:$0xf]
    %v5822 = vld [vmem:[%s5709 + $0x310] sm:$0xff]
    %v5823 = vld [vmem:[%s5709 + $0x318] sm:$0xff]
    %v5824 = vld [vmem:[%s5709 + $0x320] sm:$0xff]
    %v5825 = vld [vmem:[%s5709 + $0x328] sm:$0xf]
    %v5826 = vld [vmem:[%s5709 + $0x32c] sm:$0xff]
    %v5827 = vld [vmem:[%s5709 + $0x334] sm:$0xff]
    %v5828 = vld [vmem:[%s5709 + $0x33c] sm:$0xff]
    %v5829 = vld [vmem:[%s5709 + $0x344] sm:$0xf]
    %v5830 = vld [vmem:[%s5709 + $0x348] sm:$0xff]
    %v5831 = vld [vmem:[%s5709 + $0x350] sm:$0xff]
    %v5832 = vld [vmem:[%s5709 + $0x358] sm:$0xff]
    %v5833 = vld [vmem:[%s5709 + $0x360] sm:$0xf]
    %v5834 = vld [vmem:[%s5709 + $0x364] sm:$0xff]
    %v5835 = vld [vmem:[%s5709 + $0x36c] sm:$0xff]
    %v5836 = vld [vmem:[%s5709 + $0x374] sm:$0xff]
    %v5837 = vld [vmem:[%s5709 + $0x37c] sm:$0xf]
    %v5838 = vld [vmem:[%s5709 + $0x380] sm:$0xff]
    %v5839 = vld [vmem:[%s5709 + $0x388] sm:$0xff]
    %v5840 = vld [vmem:[%s5709 + $0x390] sm:$0xff]
    %v5841 = vld [vmem:[%s5709 + $0x398] sm:$0xf]
    %v5842 = vld [vmem:[%s5709 + $0x39c] sm:$0xff]
    %v5843 = vld [vmem:[%s5709 + $0x3a4] sm:$0xff]
    %v5844 = vld [vmem:[%s5709 + $0x3ac] sm:$0xff]
    %v5845 = vld [vmem:[%s5709 + $0x3b4] sm:$0xf]
    %v5846 = vld [vmem:[%s5709 + $0x3b8] sm:$0xff]
    %v5847 = vld [vmem:[%s5709 + $0x3c0] sm:$0xff]
    %v5848 = vld [vmem:[%s5709 + $0x3c8] sm:$0xff]
    %v5849 = vld [vmem:[%s5709 + $0x3d0] sm:$0xf]
    %v5850 = vld [vmem:[%s5709 + $0x3d4] sm:$0xff]
    %v5851 = vld [vmem:[%s5709 + $0x3dc] sm:$0xff]
    %v5852 = vld [vmem:[%s5709 + $0x3e4] sm:$0xff]
    %v5853 = vld [vmem:[%s5709 + $0x3ec] sm:$0xf]
    %v5854 = vld [vmem:[%s5709 + $0x3f0] sm:$0xff]
    %v5855 = vld [vmem:[%s5709 + $0x3f8] sm:$0xff]
    %v5856 = vld [vmem:[%s5709 + $0x400] sm:$0xff]
    %v5857 = vld [vmem:[%s5709 + $0x408] sm:$0xf]
    %v5858 = vld [vmem:[%s5709 + $0x40c] sm:$0xff]
    %v5859 = vld [vmem:[%s5709 + $0x414] sm:$0xff]
    %v5860 = vld [vmem:[%s5709 + $0x41c] sm:$0xff]
    %v5861 = vld [vmem:[%s5709 + $0x424] sm:$0xf]
    %v5862 = vld [vmem:[%s5709 + $0x428] sm:$0xff]
    %v5863 = vld [vmem:[%s5709 + $0x430] sm:$0xff]
    %v5864 = vld [vmem:[%s5709 + $0x438] sm:$0xff]
    %v5865 = vld [vmem:[%s5709 + $0x440] sm:$0xf]
    %v5866 = vld [vmem:[%s5709 + $0x444] sm:$0xff]
    %v5867 = vld [vmem:[%s5709 + $0x44c] sm:$0xff]
    %v5868 = vld [vmem:[%s5709 + $0x454] sm:$0xff]
    %v5869 = vld [vmem:[%s5709 + $0x45c] sm:$0xf]
    %v5870 = vld [vmem:[%s5709 + $0x460] sm:$0xff]
    %v5871 = vld [vmem:[%s5709 + $0x468] sm:$0xff]
    %v5872 = vld [vmem:[%s5709 + $0x470] sm:$0xff]
    %v5873 = vld [vmem:[%s5709 + $0x478] sm:$0xf]
    %v5874 = vld [vmem:[%s5709 + $0x47c] sm:$0xff]
    %v5875 = vld [vmem:[%s5709 + $0x484] sm:$0xff]
    %v5876 = vld [vmem:[%s5709 + $0x48c] sm:$0xff]
    %v5877 = vld [vmem:[%s5709 + $0x494] sm:$0xf]
    %v5878 = vld [vmem:[%s5709 + $0x498] sm:$0xff]
    %v5879 = vld [vmem:[%s5709 + $0x4a0] sm:$0xff]
    %v5880 = vld [vmem:[%s5709 + $0x4a8] sm:$0xff]
    %v5881 = vld [vmem:[%s5709 + $0x4b0] sm:$0xf]
    %v5882 = vld [vmem:[%s5709 + $0x4b4] sm:$0xff]
    %v5883 = vld [vmem:[%s5709 + $0x4bc] sm:$0xff]
    %v5884 = vld [vmem:[%s5709 + $0x4c4] sm:$0xff]
    %v5885 = vld [vmem:[%s5709 + $0x4cc] sm:$0xf]
    %v5886 = vld [vmem:[%s5709 + $0x4d0] sm:$0xff]
    %v5887 = vld [vmem:[%s5709 + $0x4d8] sm:$0xff]
    %v5888 = vld [vmem:[%s5709 + $0x4e0] sm:$0xff]
    %v5889 = vld [vmem:[%s5709 + $0x4e8] sm:$0xf]
    %v5890 = vld [vmem:[%s5709 + $0x4ec] sm:$0xff]
    %v5891 = vld [vmem:[%s5709 + $0x4f4] sm:$0xff]
    %v5892 = vld [vmem:[%s5709 + $0x4fc] sm:$0xff]
    %v5893 = vld [vmem:[%s5709 + $0x504] sm:$0xf]
    %v5894 = vld [vmem:[%s5709 + $0x508] sm:$0xff]
    %v5895 = vld [vmem:[%s5709 + $0x510] sm:$0xff]
    %v5896 = vld [vmem:[%s5709 + $0x518] sm:$0xff]
    %v5897 = vld [vmem:[%s5709 + $0x520] sm:$0xf]
    %v5898 = vld [vmem:[%s5709 + $0x524] sm:$0xff]
    %v5899 = vld [vmem:[%s5709 + $0x52c] sm:$0xff]
    %v5900 = vld [vmem:[%s5709 + $0x534] sm:$0xff]
    %v5901 = vld [vmem:[%s5709 + $0x53c] sm:$0xf]
    %v5902 = vld [vmem:[%s5709 + $0x540] sm:$0xff]
    %v5903 = vld [vmem:[%s5709 + $0x548] sm:$0xff]
    %v5904 = vld [vmem:[%s5709 + $0x550] sm:$0xff]
    %v5905 = vld [vmem:[%s5709 + $0x558] sm:$0xf]
    %v5906 = vld [vmem:[%s5709 + $0x55c] sm:$0xff]
    %v5907 = vld [vmem:[%s5709 + $0x564] sm:$0xff]
    %v5908 = vld [vmem:[%s5709 + $0x56c] sm:$0xff]
    %v5909 = vld [vmem:[%s5709 + $0x574] sm:$0xf]
    %v5910 = vld [vmem:[%s5709 + $0x578] sm:$0xff]
    %v5911 = vld [vmem:[%s5709 + $0x580] sm:$0xff]
    %v5912 = vld [vmem:[%s5709 + $0x588] sm:$0xff]
    %v5913 = vld [vmem:[%s5709 + $0x590] sm:$0xf]
    %v5914 = vld [vmem:[%s5709 + $0x594] sm:$0xff]
    %v5915 = vld [vmem:[%s5709 + $0x59c] sm:$0xff]
    %v5916 = vld [vmem:[%s5709 + $0x5a4] sm:$0xff]
    %v5917 = vld [vmem:[%s5709 + $0x5ac] sm:$0xf]
    %v5918 = vld [vmem:[%s5709 + $0x5b0] sm:$0xff]
    %v5919 = vld [vmem:[%s5709 + $0x5b8] sm:$0xff]
    %v5920 = vld [vmem:[%s5709 + $0x5c0] sm:$0xff]
    %v5921 = vld [vmem:[%s5709 + $0x5c8] sm:$0xf]
    %v5922 = vld [vmem:[%s5709 + $0x5cc] sm:$0xff]
    %v5923 = vld [vmem:[%s5709 + $0x5d4] sm:$0xff]
    %v5924 = vld [vmem:[%s5709 + $0x5dc] sm:$0xff]
    %v5925 = vld [vmem:[%s5709 + $0x5e4] sm:$0xf]
    %v5926 = vld [vmem:[%s5709 + $0x5e8] sm:$0xff]
    %v5927 = vld [vmem:[%s5709 + $0x5f0] sm:$0xff]
    %v5928 = vld [vmem:[%s5709 + $0x5f8] sm:$0xff]
    %v5929 = vld [vmem:[%s5709 + $0x600] sm:$0xf]
    %v5930 = vld [vmem:[%s5709 + $0x604] sm:$0xff]
    %v5931 = vld [vmem:[%s5709 + $0x60c] sm:$0xff]
    %v5932 = vld [vmem:[%s5709 + $0x614] sm:$0xff]
    %v5933 = vld [vmem:[%s5709 + $0x61c] sm:$0xf]
    %v5934 = vld [vmem:[%s5709 + $0x620] sm:$0xff]
    %v5935 = vld [vmem:[%s5709 + $0x628] sm:$0xff]
    %v5936 = vld [vmem:[%s5709 + $0x630] sm:$0xff]
    %v5937 = vld [vmem:[%s5709 + $0x638] sm:$0xf]
    %v5938 = vld [vmem:[%s5709 + $0x63c] sm:$0xff]
    %v5939 = vld [vmem:[%s5709 + $0x644] sm:$0xff]
    %v5940 = vld [vmem:[%s5709 + $0x64c] sm:$0xff]
    %v5941 = vld [vmem:[%s5709 + $0x654] sm:$0xf]
    %v5942 = vld [vmem:[%s5709 + $0x658] sm:$0xff]
    %v5943 = vld [vmem:[%s5709 + $0x660] sm:$0xff]
    %v5944 = vld [vmem:[%s5709 + $0x668] sm:$0xff]
    %v5945 = vld [vmem:[%s5709 + $0x670] sm:$0xf]
    %v5946 = vld [vmem:[%s5709 + $0x674] sm:$0xff]
    %v5947 = vld [vmem:[%s5709 + $0x67c] sm:$0xff]
    %v5948 = vld [vmem:[%s5709 + $0x684] sm:$0xff]
    %v5949 = vld [vmem:[%s5709 + $0x68c] sm:$0xf]
    %v5950 = vld [vmem:[%s5709 + $0x690] sm:$0xff]
    %v5951 = vld [vmem:[%s5709 + $0x698] sm:$0xff]
    %v5952 = vld [vmem:[%s5709 + $0x6a0] sm:$0xff]
    %v5953 = vld [vmem:[%s5709 + $0x6a8] sm:$0xf]
    %v5954 = vld [vmem:[%s5709 + $0x6ac] sm:$0xff]
    %v5955 = vld [vmem:[%s5709 + $0x6b4] sm:$0xff]
    %v5956 = vld [vmem:[%s5709 + $0x6bc] sm:$0xff]
    %v5957 = vld [vmem:[%s5709 + $0x6c4] sm:$0xf]
    %v5958 = vld [vmem:[%s5709 + $0x6c8] sm:$0xff]
    %v5959 = vld [vmem:[%s5709 + $0x6d0] sm:$0xff]
    %v5960 = vld [vmem:[%s5709 + $0x6d8] sm:$0xff]
    %v5961 = vld [vmem:[%s5709 + $0x6e0] sm:$0xf]
    %v5962 = vld [vmem:[%s5709 + $0x6e4] sm:$0xff]
    %v5963 = vld [vmem:[%s5709 + $0x6ec] sm:$0xff]
    %v5964 = vld [vmem:[%s5709 + $0x6f4] sm:$0xff]
    %v5965 = vld [vmem:[%s5709 + $0x6fc] sm:$0xf]
    %v5966 = vld [vmem:[%s5709 + $0x700] sm:$0xff]
    %v5967 = vld [vmem:[%s5709 + $0x708] sm:$0xff]
    %v5968 = vld [vmem:[%s5709 + $0x710] sm:$0xff]
    %v5969 = vld [vmem:[%s5709 + $0x718] sm:$0xf]
    %v5970 = vld [vmem:[%s5709 + $0x71c] sm:$0xff]
    %v5971 = vld [vmem:[%s5709 + $0x724] sm:$0xff]
    %v5972 = vld [vmem:[%s5709 + $0x72c] sm:$0xff]
    %v5973 = vld [vmem:[%s5709 + $0x734] sm:$0xf]
    %v5974 = vld [vmem:[%s5709 + $0x738] sm:$0xff]
    %v5975 = vld [vmem:[%s5709 + $0x740] sm:$0xff]
    %v5976 = vld [vmem:[%s5709 + $0x748] sm:$0xff]
    %v5977 = vld [vmem:[%s5709 + $0x750] sm:$0xf]
    %v5978 = vld [vmem:[%s5709 + $0x754] sm:$0xff]
    %v5979 = vld [vmem:[%s5709 + $0x75c] sm:$0xff]
    %v5980 = vld [vmem:[%s5709 + $0x764] sm:$0xff]
    %v5981 = vld [vmem:[%s5709 + $0x76c] sm:$0xf]
    %v5982 = vld [vmem:[%s5709 + $0x770] sm:$0xff]
    %v5983 = vld [vmem:[%s5709 + $0x778] sm:$0xff]
    %v5984 = vld [vmem:[%s5709 + $0x780] sm:$0xff]
    %v5985 = vld [vmem:[%s5709 + $0x788] sm:$0xf]
    %v5986 = vld [vmem:[%s5709 + $0x78c] sm:$0xff]
    %v5987 = vld [vmem:[%s5709 + $0x794] sm:$0xff]
    %v5988 = vld [vmem:[%s5709 + $0x79c] sm:$0xff]
    %v5989 = vld [vmem:[%s5709 + $0x7a4] sm:$0xf]
    %v5990 = vld [vmem:[%s5709 + $0x7a8] sm:$0xff]
    %v5991 = vld [vmem:[%s5709 + $0x7b0] sm:$0xff]
    %v5992 = vld [vmem:[%s5709 + $0x7b8] sm:$0xff]
    %v5993 = vld [vmem:[%s5709 + $0x7c0] sm:$0xf]
    %v5994 = vld [vmem:[%s5709 + $0x7c4] sm:$0xff]
    %v5995 = vld [vmem:[%s5709 + $0x7cc] sm:$0xff]
    %v5996 = vld [vmem:[%s5709 + $0x7d4] sm:$0xff]
    %v5997 = vld [vmem:[%s5709 + $0x7dc] sm:$0xf]
    %v5998 = vld [vmem:[%s5709 + $0x7e0] sm:$0xff]
    %v5999 = vld [vmem:[%s5709 + $0x7e8] sm:$0xff]
    %v6000 = vld [vmem:[%s5709 + $0x7f0] sm:$0xff]
    %v6001 = vld [vmem:[%s5709 + $0x7f8] sm:$0xf]
    %v6002 = vld [vmem:[%s5709 + $0x7fc] sm:$0xff]
    %v6003 = vld [vmem:[%s5709 + $0x804] sm:$0xff]
    %v6004 = vld [vmem:[%s5709 + $0x80c] sm:$0xff]
    %v6005 = vld [vmem:[%s5709 + $0x814] sm:$0xf]
    %v6006 = vld [vmem:[%s5709 + $0x818] sm:$0xff]
    %v6007 = vld [vmem:[%s5709 + $0x820] sm:$0xff]
    %v6008 = vld [vmem:[%s5709 + $0x828] sm:$0xff]
    %v6009 = vld [vmem:[%s5709 + $0x830] sm:$0xf]
    %v6010 = vld [vmem:[%s5709 + $0x834] sm:$0xff]
    %v6011 = vld [vmem:[%s5709 + $0x83c] sm:$0xff]
    %v6012 = vld [vmem:[%s5709 + $0x844] sm:$0xff]
    %v6013 = vld [vmem:[%s5709 + $0x84c] sm:$0xf]
    %v6014 = vld [vmem:[%s5709 + $0x850] sm:$0xff]
    %v6015 = vld [vmem:[%s5709 + $0x858] sm:$0xff]
    %v6016 = vld [vmem:[%s5709 + $0x860] sm:$0xff]
    %v6017 = vld [vmem:[%s5709 + $0x868] sm:$0xf]
    %v6018 = vld [vmem:[%s5709 + $0x86c] sm:$0xff]
    %v6019 = vld [vmem:[%s5709 + $0x874] sm:$0xff]
    %v6020 = vld [vmem:[%s5709 + $0x87c] sm:$0xff]
    %v6021 = vld [vmem:[%s5709 + $0x884] sm:$0xf]
    %v6022 = vld [vmem:[%s5709 + $0x888] sm:$0xff]
    %v6023 = vld [vmem:[%s5709 + $0x890] sm:$0xff]
    %v6024 = vld [vmem:[%s5709 + $0x898] sm:$0xff]
    %v6025 = vld [vmem:[%s5709 + $0x8a0] sm:$0xf]
    %v6026 = vld [vmem:[%s5709 + $0x8a4] sm:$0xff]
    %v6027 = vld [vmem:[%s5709 + $0x8ac] sm:$0xff]
    %v6028 = vld [vmem:[%s5709 + $0x8b4] sm:$0xff]
    %v6029 = vld [vmem:[%s5709 + $0x8bc] sm:$0xf]
    %v6030 = vld [vmem:[%s5709 + $0x8c0] sm:$0xff]
    %v6031 = vld [vmem:[%s5709 + $0x8c8] sm:$0xff]
    %v6032 = vld [vmem:[%s5709 + $0x8d0] sm:$0xff]
    %v6033 = vld [vmem:[%s5709 + $0x8d8] sm:$0xf]
    %v6034 = vld [vmem:[%s5709 + $0x8dc] sm:$0xff]
    %v6035 = vld [vmem:[%s5709 + $0x8e4] sm:$0xff]
    %v6036 = vld [vmem:[%s5709 + $0x8ec] sm:$0xff]
    %v6037 = vld [vmem:[%s5709 + $0x8f4] sm:$0xf]
    %v6038 = vld [vmem:[%s5709 + $0x8f8] sm:$0xff]
    %v6039 = vld [vmem:[%s5709 + $0x900] sm:$0xff]
    %v6040 = vld [vmem:[%s5709 + $0x908] sm:$0xff]
    %v6041 = vld [vmem:[%s5709 + $0x910] sm:$0xf]
    %v6042 = vld [vmem:[%s5709 + $0x914] sm:$0xff]
    %v6043 = vld [vmem:[%s5709 + $0x91c] sm:$0xff]
    %v6044 = vld [vmem:[%s5709 + $0x924] sm:$0xff]
    %v6045 = vld [vmem:[%s5709 + $0x92c] sm:$0xf]
    %v6046 = vld [vmem:[%s5709 + $0x930] sm:$0xff]
    %v6047 = vld [vmem:[%s5709 + $0x938] sm:$0xff]
    %v6048 = vld [vmem:[%s5709 + $0x940] sm:$0xff]
    %v6049 = vld [vmem:[%s5709 + $0x948] sm:$0xf]
    %v6050 = vld [vmem:[%s5709 + $0x94c] sm:$0xff]
    %v6051 = vld [vmem:[%s5709 + $0x954] sm:$0xff]
    %v6052 = vld [vmem:[%s5709 + $0x95c] sm:$0xff]
    %v6053 = vld [vmem:[%s5709 + $0x964] sm:$0xf]
    %v6054 = vld [vmem:[%s5709 + $0x968] sm:$0xff]
    %v6055 = vld [vmem:[%s5709 + $0x970] sm:$0xff]
    %v6056 = vld [vmem:[%s5709 + $0x978] sm:$0xff]
    %v6057 = vld [vmem:[%s5709 + $0x980] sm:$0xf]
    %v6058 = vld [vmem:[%s5709 + $0x984] sm:$0xff]
    %v6059 = vld [vmem:[%s5709 + $0x98c] sm:$0xff]
    %v6060 = vld [vmem:[%s5709 + $0x994] sm:$0xff]
    %v6061 = vld [vmem:[%s5709 + $0x99c] sm:$0xf]
    %v6062 = vld [vmem:[%s5709 + $0x9a0] sm:$0xff]
    %v6063 = vld [vmem:[%s5709 + $0x9a8] sm:$0xff]
    %v6064 = vld [vmem:[%s5709 + $0x9b0] sm:$0xff]
    %v6065 = vld [vmem:[%s5709 + $0x9b8] sm:$0xf]
    %v6066 = vld [vmem:[%s5709 + $0x9bc] sm:$0xff]
    %v6067 = vld [vmem:[%s5709 + $0x9c4] sm:$0xff]
    %v6068 = vld [vmem:[%s5709 + $0x9cc] sm:$0xff]
    %v6069 = vld [vmem:[%s5709 + $0x9d4] sm:$0xf]
    %v6070 = vld [vmem:[%s5709 + $0x9d8] sm:$0xff]
    %v6071 = vld [vmem:[%s5709 + $0x9e0] sm:$0xff]
    %v6072 = vld [vmem:[%s5709 + $0x9e8] sm:$0xff]
    %v6073 = vld [vmem:[%s5709 + $0x9f0] sm:$0xf]
    %v6074 = vld [vmem:[%s5709 + $0x9f4] sm:$0xff]
    %v6075 = vld [vmem:[%s5709 + $0x9fc] sm:$0xff]
    %v6076 = vld [vmem:[%s5709 + $0xa04] sm:$0xff]
    %v6077 = vld [vmem:[%s5709 + $0xa0c] sm:$0xf]
    %v6078 = vld [vmem:[%s5709 + $0xa10] sm:$0xff]
    %v6079 = vld [vmem:[%s5709 + $0xa18] sm:$0xff]
    %v6080 = vld [vmem:[%s5709 + $0xa20] sm:$0xff]
    %v6081 = vld [vmem:[%s5709 + $0xa28] sm:$0xf]
    %v6082 = vld [vmem:[%s5709 + $0xa2c] sm:$0xff]
    %v6083 = vld [vmem:[%s5709 + $0xa34] sm:$0xff]
    %v6084 = vld [vmem:[%s5709 + $0xa3c] sm:$0xff]
    %v6085 = vld [vmem:[%s5709 + $0xa44] sm:$0xf]
    %v6086 = vld [vmem:[%s5709 + $0xa48] sm:$0xff]
    %v6087 = vld [vmem:[%s5709 + $0xa50] sm:$0xff]
    %v6088 = vld [vmem:[%s5709 + $0xa58] sm:$0xff]
    %v6089 = vld [vmem:[%s5709 + $0xa60] sm:$0xf]
    %v6090 = vld [vmem:[%s5709 + $0xa64] sm:$0xff]
    %v6091 = vld [vmem:[%s5709 + $0xa6c] sm:$0xff]
    %v6092 = vld [vmem:[%s5709 + $0xa74] sm:$0xff]
    %v6093 = vld [vmem:[%s5709 + $0xa7c] sm:$0xf]
    %v6094 = vld [vmem:[%s5709 + $0xa80] sm:$0xff]
    %v6095 = vld [vmem:[%s5709 + $0xa88] sm:$0xff]
    %v6096 = vld [vmem:[%s5709 + $0xa90] sm:$0xff]
    %v6097 = vld [vmem:[%s5709 + $0xa98] sm:$0xf]
    %v6098 = vld [vmem:[%s5709 + $0xa9c] sm:$0xff]
    %v6099 = vld [vmem:[%s5709 + $0xaa4] sm:$0xff]
    %v6100 = vld [vmem:[%s5709 + $0xaac] sm:$0xff]
    %v6101 = vld [vmem:[%s5709 + $0xab4] sm:$0xf]
    %v6494 = vunpack.c.l.b16 %v5710
    %v6495 = vunpack.c.h.b16 %v5710
    %v6496 = vunpack.c.l.b16 %v5711
    %v6497 = vunpack.c.h.b16 %v5711
    %v6498 = vunpack.c.l.b16 %v5712
    %v6499 = vunpack.c.h.b16 %v5712
    %v6500 = vunpack.c.l.b16 %v5713
    %v6501 = vunpack.c.l.b16 %v5714
    %v6502 = vunpack.c.h.b16 %v5714
    %v6503 = vunpack.c.l.b16 %v5715
    %v6504 = vunpack.c.h.b16 %v5715
    %v6505 = vunpack.c.l.b16 %v5716
    %v6506 = vunpack.c.h.b16 %v5716
    %v6507 = vunpack.c.l.b16 %v5717
    %v6508 = vunpack.c.l.b16 %v5718
    %v6509 = vunpack.c.h.b16 %v5718
    %v6510 = vunpack.c.l.b16 %v5719
    %v6511 = vunpack.c.h.b16 %v5719
    %v6512 = vunpack.c.l.b16 %v5720
    %v6513 = vunpack.c.h.b16 %v5720
    %v6514 = vunpack.c.l.b16 %v5721
    %v6515 = vunpack.c.l.b16 %v5722
    %v6516 = vunpack.c.h.b16 %v5722
    %v6517 = vunpack.c.l.b16 %v5723
    %v6518 = vunpack.c.h.b16 %v5723
    %v6519 = vunpack.c.l.b16 %v5724
    %v6520 = vunpack.c.h.b16 %v5724
    %v6521 = vunpack.c.l.b16 %v5725
    %v6522 = vunpack.c.l.b16 %v5726
    %v6523 = vunpack.c.h.b16 %v5726
    %v6524 = vunpack.c.l.b16 %v5727
    %v6525 = vunpack.c.h.b16 %v5727
    %v6526 = vunpack.c.l.b16 %v5728
    %v6527 = vunpack.c.h.b16 %v5728
    %v6528 = vunpack.c.l.b16 %v5729
    %v6529 = vunpack.c.l.b16 %v5730
    %v6530 = vunpack.c.h.b16 %v5730
    %v6531 = vunpack.c.l.b16 %v5731
    %v6532 = vunpack.c.h.b16 %v5731
    %v6533 = vunpack.c.l.b16 %v5732
    %v6534 = vunpack.c.h.b16 %v5732
    %v6535 = vunpack.c.l.b16 %v5733
    %v6536 = vunpack.c.l.b16 %v5734
    %v6537 = vunpack.c.h.b16 %v5734
    %v6538 = vunpack.c.l.b16 %v5735
    %v6539 = vunpack.c.h.b16 %v5735
    %v6540 = vunpack.c.l.b16 %v5736
    %v6541 = vunpack.c.h.b16 %v5736
    %v6542 = vunpack.c.l.b16 %v5737
    %v6543 = vunpack.c.l.b16 %v5738
    %v6544 = vunpack.c.h.b16 %v5738
    %v6545 = vunpack.c.l.b16 %v5739
    %v6546 = vunpack.c.h.b16 %v5739
    %v6547 = vunpack.c.l.b16 %v5740
    %v6548 = vunpack.c.h.b16 %v5740
    %v6549 = vunpack.c.l.b16 %v5741
    %v6550 = vunpack.c.l.b16 %v5742
    %v6551 = vunpack.c.h.b16 %v5742
    %v6552 = vunpack.c.l.b16 %v5743
    %v6553 = vunpack.c.h.b16 %v5743
    %v6554 = vunpack.c.l.b16 %v5744
    %v6555 = vunpack.c.h.b16 %v5744
    %v6556 = vunpack.c.l.b16 %v5745
    %v6557 = vunpack.c.l.b16 %v5746
    %v6558 = vunpack.c.h.b16 %v5746
    %v6559 = vunpack.c.l.b16 %v5747
    %v6560 = vunpack.c.h.b16 %v5747
    %v6561 = vunpack.c.l.b16 %v5748
    %v6562 = vunpack.c.h.b16 %v5748
    %v6563 = vunpack.c.l.b16 %v5749
    %v6564 = vunpack.c.l.b16 %v5750
    %v6565 = vunpack.c.h.b16 %v5750
    %v6566 = vunpack.c.l.b16 %v5751
    %v6567 = vunpack.c.h.b16 %v5751
    %v6568 = vunpack.c.l.b16 %v5752
    %v6569 = vunpack.c.h.b16 %v5752
    %v6570 = vunpack.c.l.b16 %v5753
    %v6571 = vunpack.c.l.b16 %v5754
    %v6572 = vunpack.c.h.b16 %v5754
    %v6573 = vunpack.c.l.b16 %v5755
    %v6574 = vunpack.c.h.b16 %v5755
    %v6575 = vunpack.c.l.b16 %v5756
    %v6576 = vunpack.c.h.b16 %v5756
    %v6577 = vunpack.c.l.b16 %v5757
    %v6578 = vunpack.c.l.b16 %v5758
    %v6579 = vunpack.c.h.b16 %v5758
    %v6580 = vunpack.c.l.b16 %v5759
    %v6581 = vunpack.c.h.b16 %v5759
    %v6582 = vunpack.c.l.b16 %v5760
    %v6583 = vunpack.c.h.b16 %v5760
    %v6584 = vunpack.c.l.b16 %v5761
    %v6585 = vunpack.c.l.b16 %v5762
    %v6586 = vunpack.c.h.b16 %v5762
    %v6587 = vunpack.c.l.b16 %v5763
    %v6588 = vunpack.c.h.b16 %v5763
    %v6589 = vunpack.c.l.b16 %v5764
    %v6590 = vunpack.c.h.b16 %v5764
    %v6591 = vunpack.c.l.b16 %v5765
    %v6592 = vunpack.c.l.b16 %v5766
    %v6593 = vunpack.c.h.b16 %v5766
    %v6594 = vunpack.c.l.b16 %v5767
    %v6595 = vunpack.c.h.b16 %v5767
    %v6596 = vunpack.c.l.b16 %v5768
    %v6597 = vunpack.c.h.b16 %v5768
    %v6598 = vunpack.c.l.b16 %v5769
    %v6599 = vunpack.c.l.b16 %v5770
    %v6600 = vunpack.c.h.b16 %v5770
    %v6601 = vunpack.c.l.b16 %v5771
    %v6602 = vunpack.c.h.b16 %v5771
    %v6603 = vunpack.c.l.b16 %v5772
    %v6604 = vunpack.c.h.b16 %v5772
    %v6605 = vunpack.c.l.b16 %v5773
    %v6606 = vunpack.c.l.b16 %v5774
    %v6607 = vunpack.c.h.b16 %v5774
    %v6608 = vunpack.c.l.b16 %v5775
    %v6609 = vunpack.c.h.b16 %v5775
    %v6610 = vunpack.c.l.b16 %v5776
    %v6611 = vunpack.c.h.b16 %v5776
    %v6612 = vunpack.c.l.b16 %v5777
    %v6613 = vunpack.c.l.b16 %v5778
    %v6614 = vunpack.c.h.b16 %v5778
    %v6615 = vunpack.c.l.b16 %v5779
    %v6616 = vunpack.c.h.b16 %v5779
    %v6617 = vunpack.c.l.b16 %v5780
    %v6618 = vunpack.c.h.b16 %v5780
    %v6619 = vunpack.c.l.b16 %v5781
    %v6620 = vunpack.c.l.b16 %v5782
    %v6621 = vunpack.c.h.b16 %v5782
    %v6622 = vunpack.c.l.b16 %v5783
    %v6623 = vunpack.c.h.b16 %v5783
    %v6624 = vunpack.c.l.b16 %v5784
    %v6625 = vunpack.c.h.b16 %v5784
    %v6626 = vunpack.c.l.b16 %v5785
    %v6627 = vunpack.c.l.b16 %v5786
    %v6628 = vunpack.c.h.b16 %v5786
    %v6629 = vunpack.c.l.b16 %v5787
    %v6630 = vunpack.c.h.b16 %v5787
    %v6631 = vunpack.c.l.b16 %v5788
    %v6632 = vunpack.c.h.b16 %v5788
    %v6633 = vunpack.c.l.b16 %v5789
    %v6634 = vunpack.c.l.b16 %v5790
    %v6635 = vunpack.c.h.b16 %v5790
    %v6636 = vunpack.c.l.b16 %v5791
    %v6637 = vunpack.c.h.b16 %v5791
    %v6638 = vunpack.c.l.b16 %v5792
    %v6639 = vunpack.c.h.b16 %v5792
    %v6640 = vunpack.c.l.b16 %v5793
    %v6641 = vunpack.c.l.b16 %v5794
    %v6642 = vunpack.c.h.b16 %v5794
    %v6643 = vunpack.c.l.b16 %v5795
    %v6644 = vunpack.c.h.b16 %v5795
    %v6645 = vunpack.c.l.b16 %v5796
    %v6646 = vunpack.c.h.b16 %v5796
    %v6647 = vunpack.c.l.b16 %v5797
    %v6648 = vunpack.c.l.b16 %v5798
    %v6649 = vunpack.c.h.b16 %v5798
    %v6650 = vunpack.c.l.b16 %v5799
    %v6651 = vunpack.c.h.b16 %v5799
    %v6652 = vunpack.c.l.b16 %v5800
    %v6653 = vunpack.c.h.b16 %v5800
    %v6654 = vunpack.c.l.b16 %v5801
    %v6655 = vunpack.c.l.b16 %v5802
    %v6656 = vunpack.c.h.b16 %v5802
    %v6657 = vunpack.c.l.b16 %v5803
    %v6658 = vunpack.c.h.b16 %v5803
    %v6659 = vunpack.c.l.b16 %v5804
    %v6660 = vunpack.c.h.b16 %v5804
    %v6661 = vunpack.c.l.b16 %v5805
    %v6662 = vunpack.c.l.b16 %v5806
    %v6663 = vunpack.c.h.b16 %v5806
    %v6664 = vunpack.c.l.b16 %v5807
    %v6665 = vunpack.c.h.b16 %v5807
    %v6666 = vunpack.c.l.b16 %v5808
    %v6667 = vunpack.c.h.b16 %v5808
    %v6668 = vunpack.c.l.b16 %v5809
    %v6669 = vunpack.c.l.b16 %v5810
    %v6670 = vunpack.c.h.b16 %v5810
    %v6671 = vunpack.c.l.b16 %v5811
    %v6672 = vunpack.c.h.b16 %v5811
    %v6673 = vunpack.c.l.b16 %v5812
    %v6674 = vunpack.c.h.b16 %v5812
    %v6675 = vunpack.c.l.b16 %v5813
    %v6676 = vunpack.c.l.b16 %v5814
    %v6677 = vunpack.c.h.b16 %v5814
    %v6678 = vunpack.c.l.b16 %v5815
    %v6679 = vunpack.c.h.b16 %v5815
    %v6680 = vunpack.c.l.b16 %v5816
    %v6681 = vunpack.c.h.b16 %v5816
    %v6682 = vunpack.c.l.b16 %v5817
    %v6683 = vunpack.c.l.b16 %v5818
    %v6684 = vunpack.c.h.b16 %v5818
    %v6685 = vunpack.c.l.b16 %v5819
    %v6686 = vunpack.c.h.b16 %v5819
    %v6687 = vunpack.c.l.b16 %v5820
    %v6688 = vunpack.c.h.b16 %v5820
    %v6689 = vunpack.c.l.b16 %v5821
    %v6690 = vunpack.c.l.b16 %v5822
    %v6691 = vunpack.c.h.b16 %v5822
    %v6692 = vunpack.c.l.b16 %v5823
    %v6693 = vunpack.c.h.b16 %v5823
    %v6694 = vunpack.c.l.b16 %v5824
    %v6695 = vunpack.c.h.b16 %v5824
    %v6696 = vunpack.c.l.b16 %v5825
    %v6697 = vunpack.c.l.b16 %v5826
    %v6698 = vunpack.c.h.b16 %v5826
    %v6699 = vunpack.c.l.b16 %v5827
    %v6700 = vunpack.c.h.b16 %v5827
    %v6701 = vunpack.c.l.b16 %v5828
    %v6702 = vunpack.c.h.b16 %v5828
    %v6703 = vunpack.c.l.b16 %v5829
    %v6704 = vunpack.c.l.b16 %v5830
    %v6705 = vunpack.c.h.b16 %v5830
    %v6706 = vunpack.c.l.b16 %v5831
    %v6707 = vunpack.c.h.b16 %v5831
    %v6708 = vunpack.c.l.b16 %v5832
    %v6709 = vunpack.c.h.b16 %v5832
    %v6710 = vunpack.c.l.b16 %v5833
    %v6711 = vunpack.c.l.b16 %v5834
    %v6712 = vunpack.c.h.b16 %v5834
    %v6713 = vunpack.c.l.b16 %v5835
    %v6714 = vunpack.c.h.b16 %v5835
    %v6715 = vunpack.c.l.b16 %v5836
    %v6716 = vunpack.c.h.b16 %v5836
    %v6717 = vunpack.c.l.b16 %v5837
    %v6718 = vunpack.c.l.b16 %v5838
    %v6719 = vunpack.c.h.b16 %v5838
    %v6720 = vunpack.c.l.b16 %v5839
    %v6721 = vunpack.c.h.b16 %v5839
    %v6722 = vunpack.c.l.b16 %v5840
    %v6723 = vunpack.c.h.b16 %v5840
    %v6724 = vunpack.c.l.b16 %v5841
    %v6725 = vunpack.c.l.b16 %v5842
    %v6726 = vunpack.c.h.b16 %v5842
    %v6727 = vunpack.c.l.b16 %v5843
    %v6728 = vunpack.c.h.b16 %v5843
    %v6729 = vunpack.c.l.b16 %v5844
    %v6730 = vunpack.c.h.b16 %v5844
    %v6731 = vunpack.c.l.b16 %v5845
    %v6732 = vunpack.c.l.b16 %v5846
    %v6733 = vunpack.c.h.b16 %v5846
    %v6734 = vunpack.c.l.b16 %v5847
    %v6735 = vunpack.c.h.b16 %v5847
    %v6736 = vunpack.c.l.b16 %v5848
    %v6737 = vunpack.c.h.b16 %v5848
    %v6738 = vunpack.c.l.b16 %v5849
    %v6739 = vunpack.c.l.b16 %v5850
    %v6740 = vunpack.c.h.b16 %v5850
    %v6741 = vunpack.c.l.b16 %v5851
    %v6742 = vunpack.c.h.b16 %v5851
    %v6743 = vunpack.c.l.b16 %v5852
    %v6744 = vunpack.c.h.b16 %v5852
    %v6745 = vunpack.c.l.b16 %v5853
    %v6746 = vunpack.c.l.b16 %v5854
    %v6747 = vunpack.c.h.b16 %v5854
    %v6748 = vunpack.c.l.b16 %v5855
    %v6749 = vunpack.c.h.b16 %v5855
    %v6750 = vunpack.c.l.b16 %v5856
    %v6751 = vunpack.c.h.b16 %v5856
    %v6752 = vunpack.c.l.b16 %v5857
    %v6753 = vunpack.c.l.b16 %v5858
    %v6754 = vunpack.c.h.b16 %v5858
    %v6755 = vunpack.c.l.b16 %v5859
    %v6756 = vunpack.c.h.b16 %v5859
    %v6757 = vunpack.c.l.b16 %v5860
    %v6758 = vunpack.c.h.b16 %v5860
    %v6759 = vunpack.c.l.b16 %v5861
    %v6760 = vunpack.c.l.b16 %v5862
    %v6761 = vunpack.c.h.b16 %v5862
    %v6762 = vunpack.c.l.b16 %v5863
    %v6763 = vunpack.c.h.b16 %v5863
    %v6764 = vunpack.c.l.b16 %v5864
    %v6765 = vunpack.c.h.b16 %v5864
    %v6766 = vunpack.c.l.b16 %v5865
    %v6767 = vunpack.c.l.b16 %v5866
    %v6768 = vunpack.c.h.b16 %v5866
    %v6769 = vunpack.c.l.b16 %v5867
    %v6770 = vunpack.c.h.b16 %v5867
    %v6771 = vunpack.c.l.b16 %v5868
    %v6772 = vunpack.c.h.b16 %v5868
    %v6773 = vunpack.c.l.b16 %v5869
    %v6774 = vunpack.c.l.b16 %v5870
    %v6775 = vunpack.c.h.b16 %v5870
    %v6776 = vunpack.c.l.b16 %v5871
    %v6777 = vunpack.c.h.b16 %v5871
    %v6778 = vunpack.c.l.b16 %v5872
    %v6779 = vunpack.c.h.b16 %v5872
    %v6780 = vunpack.c.l.b16 %v5873
    %v6781 = vunpack.c.l.b16 %v5874
    %v6782 = vunpack.c.h.b16 %v5874
    %v6783 = vunpack.c.l.b16 %v5875
    %v6784 = vunpack.c.h.b16 %v5875
    %v6785 = vunpack.c.l.b16 %v5876
    %v6786 = vunpack.c.h.b16 %v5876
    %v6787 = vunpack.c.l.b16 %v5877
    %v6788 = vunpack.c.l.b16 %v5878
    %v6789 = vunpack.c.h.b16 %v5878
    %v6790 = vunpack.c.l.b16 %v5879
    %v6791 = vunpack.c.h.b16 %v5879
    %v6792 = vunpack.c.l.b16 %v5880
    %v6793 = vunpack.c.h.b16 %v5880
    %v6794 = vunpack.c.l.b16 %v5881
    %v6795 = vunpack.c.l.b16 %v5882
    %v6796 = vunpack.c.h.b16 %v5882
    %v6797 = vunpack.c.l.b16 %v5883
    %v6798 = vunpack.c.h.b16 %v5883
    %v6799 = vunpack.c.l.b16 %v5884
    %v6800 = vunpack.c.h.b16 %v5884
    %v6801 = vunpack.c.l.b16 %v5885
    %v6802 = vunpack.c.l.b16 %v5886
    %v6803 = vunpack.c.h.b16 %v5886
    %v6804 = vunpack.c.l.b16 %v5887
    %v6805 = vunpack.c.h.b16 %v5887
    %v6806 = vunpack.c.l.b16 %v5888
    %v6807 = vunpack.c.h.b16 %v5888
    %v6808 = vunpack.c.l.b16 %v5889
    %v6809 = vunpack.c.l.b16 %v5890
    %v6810 = vunpack.c.h.b16 %v5890
    %v6811 = vunpack.c.l.b16 %v5891
    %v6812 = vunpack.c.h.b16 %v5891
    %v6813 = vunpack.c.l.b16 %v5892
    %v6814 = vunpack.c.h.b16 %v5892
    %v6815 = vunpack.c.l.b16 %v5893
    %v6816 = vunpack.c.l.b16 %v5894
    %v6817 = vunpack.c.h.b16 %v5894
    %v6818 = vunpack.c.l.b16 %v5895
    %v6819 = vunpack.c.h.b16 %v5895
    %v6820 = vunpack.c.l.b16 %v5896
    %v6821 = vunpack.c.h.b16 %v5896
    %v6822 = vunpack.c.l.b16 %v5897
    %v6823 = vunpack.c.l.b16 %v5898
    %v6824 = vunpack.c.h.b16 %v5898
    %v6825 = vunpack.c.l.b16 %v5899
    %v6826 = vunpack.c.h.b16 %v5899
    %v6827 = vunpack.c.l.b16 %v5900
    %v6828 = vunpack.c.h.b16 %v5900
    %v6829 = vunpack.c.l.b16 %v5901
    %v6830 = vunpack.c.l.b16 %v5902
    %v6831 = vunpack.c.h.b16 %v5902
    %v6832 = vunpack.c.l.b16 %v5903
    %v6833 = vunpack.c.h.b16 %v5903
    %v6834 = vunpack.c.l.b16 %v5904
    %v6835 = vunpack.c.h.b16 %v5904
    %v6836 = vunpack.c.l.b16 %v5905
    %v6837 = vunpack.c.l.b16 %v5906
    %v6838 = vunpack.c.h.b16 %v5906
    %v6839 = vunpack.c.l.b16 %v5907
    %v6840 = vunpack.c.h.b16 %v5907
    %v6841 = vunpack.c.l.b16 %v5908
    %v6842 = vunpack.c.h.b16 %v5908
    %v6843 = vunpack.c.l.b16 %v5909
    %v6844 = vunpack.c.l.b16 %v5910
    %v6845 = vunpack.c.h.b16 %v5910
    %v6846 = vunpack.c.l.b16 %v5911
    %v6847 = vunpack.c.h.b16 %v5911
    %v6848 = vunpack.c.l.b16 %v5912
    %v6849 = vunpack.c.h.b16 %v5912
    %v6850 = vunpack.c.l.b16 %v5913
    %v6851 = vunpack.c.l.b16 %v5914
    %v6852 = vunpack.c.h.b16 %v5914
    %v6853 = vunpack.c.l.b16 %v5915
    %v6854 = vunpack.c.h.b16 %v5915
    %v6855 = vunpack.c.l.b16 %v5916
    %v6856 = vunpack.c.h.b16 %v5916
    %v6857 = vunpack.c.l.b16 %v5917
    %v6858 = vunpack.c.l.b16 %v5918
    %v6859 = vunpack.c.h.b16 %v5918
    %v6860 = vunpack.c.l.b16 %v5919
    %v6861 = vunpack.c.h.b16 %v5919
    %v6862 = vunpack.c.l.b16 %v5920
    %v6863 = vunpack.c.h.b16 %v5920
    %v6864 = vunpack.c.l.b16 %v5921
    %v6865 = vunpack.c.l.b16 %v5922
    %v6866 = vunpack.c.h.b16 %v5922
    %v6867 = vunpack.c.l.b16 %v5923
    %v6868 = vunpack.c.h.b16 %v5923
    %v6869 = vunpack.c.l.b16 %v5924
    %v6870 = vunpack.c.h.b16 %v5924
    %v6871 = vunpack.c.l.b16 %v5925
    %v6872 = vunpack.c.l.b16 %v5926
    %v6873 = vunpack.c.h.b16 %v5926
    %v6874 = vunpack.c.l.b16 %v5927
    %v6875 = vunpack.c.h.b16 %v5927
    %v6876 = vunpack.c.l.b16 %v5928
    %v6877 = vunpack.c.h.b16 %v5928
    %v6878 = vunpack.c.l.b16 %v5929
    %v6879 = vunpack.c.l.b16 %v5930
    %v6880 = vunpack.c.h.b16 %v5930
    %v6881 = vunpack.c.l.b16 %v5931
    %v6882 = vunpack.c.h.b16 %v5931
    %v6883 = vunpack.c.l.b16 %v5932
    %v6884 = vunpack.c.h.b16 %v5932
    %v6885 = vunpack.c.l.b16 %v5933
    %v6886 = vunpack.c.l.b16 %v5934
    %v6887 = vunpack.c.h.b16 %v5934
    %v6888 = vunpack.c.l.b16 %v5935
    %v6889 = vunpack.c.h.b16 %v5935
    %v6890 = vunpack.c.l.b16 %v5936
    %v6891 = vunpack.c.h.b16 %v5936
    %v6892 = vunpack.c.l.b16 %v5937
    %v6893 = vunpack.c.l.b16 %v5938
    %v6894 = vunpack.c.h.b16 %v5938
    %v6895 = vunpack.c.l.b16 %v5939
    %v6896 = vunpack.c.h.b16 %v5939
    %v6897 = vunpack.c.l.b16 %v5940
    %v6898 = vunpack.c.h.b16 %v5940
    %v6899 = vunpack.c.l.b16 %v5941
    %v6900 = vunpack.c.l.b16 %v5942
    %v6901 = vunpack.c.h.b16 %v5942
    %v6902 = vunpack.c.l.b16 %v5943
    %v6903 = vunpack.c.h.b16 %v5943
    %v6904 = vunpack.c.l.b16 %v5944
    %v6905 = vunpack.c.h.b16 %v5944
    %v6906 = vunpack.c.l.b16 %v5945
    %v6907 = vunpack.c.l.b16 %v5946
    %v6908 = vunpack.c.h.b16 %v5946
    %v6909 = vunpack.c.l.b16 %v5947
    %v6910 = vunpack.c.h.b16 %v5947
    %v6911 = vunpack.c.l.b16 %v5948
    %v6912 = vunpack.c.h.b16 %v5948
    %v6913 = vunpack.c.l.b16 %v5949
    %v6914 = vunpack.c.l.b16 %v5950
    %v6915 = vunpack.c.h.b16 %v5950
    %v6916 = vunpack.c.l.b16 %v5951
    %v6917 = vunpack.c.h.b16 %v5951
    %v6918 = vunpack.c.l.b16 %v5952
    %v6919 = vunpack.c.h.b16 %v5952
    %v6920 = vunpack.c.l.b16 %v5953
    %v6921 = vunpack.c.l.b16 %v5954
    %v6922 = vunpack.c.h.b16 %v5954
    %v6923 = vunpack.c.l.b16 %v5955
    %v6924 = vunpack.c.h.b16 %v5955
    %v6925 = vunpack.c.l.b16 %v5956
    %v6926 = vunpack.c.h.b16 %v5956
    %v6927 = vunpack.c.l.b16 %v5957
    %v6928 = vunpack.c.l.b16 %v5958
    %v6929 = vunpack.c.h.b16 %v5958
    %v6930 = vunpack.c.l.b16 %v5959
    %v6931 = vunpack.c.h.b16 %v5959
    %v6932 = vunpack.c.l.b16 %v5960
    %v6933 = vunpack.c.h.b16 %v5960
    %v6934 = vunpack.c.l.b16 %v5961
    %v6935 = vunpack.c.l.b16 %v5962
    %v6936 = vunpack.c.h.b16 %v5962
    %v6937 = vunpack.c.l.b16 %v5963
    %v6938 = vunpack.c.h.b16 %v5963
    %v6939 = vunpack.c.l.b16 %v5964
    %v6940 = vunpack.c.h.b16 %v5964
    %v6941 = vunpack.c.l.b16 %v5965
    %v6942 = vunpack.c.l.b16 %v5966
    %v6943 = vunpack.c.h.b16 %v5966
    %v6944 = vunpack.c.l.b16 %v5967
    %v6945 = vunpack.c.h.b16 %v5967
    %v6946 = vunpack.c.l.b16 %v5968
    %v6947 = vunpack.c.h.b16 %v5968
    %v6948 = vunpack.c.l.b16 %v5969
    %v6949 = vunpack.c.l.b16 %v5970
    %v6950 = vunpack.c.h.b16 %v5970
    %v6951 = vunpack.c.l.b16 %v5971
    %v6952 = vunpack.c.h.b16 %v5971
    %v6953 = vunpack.c.l.b16 %v5972
    %v6954 = vunpack.c.h.b16 %v5972
    %v6955 = vunpack.c.l.b16 %v5973
    %v6956 = vunpack.c.l.b16 %v5974
    %v6957 = vunpack.c.h.b16 %v5974
    %v6958 = vunpack.c.l.b16 %v5975
    %v6959 = vunpack.c.h.b16 %v5975
    %v6960 = vunpack.c.l.b16 %v5976
    %v6961 = vunpack.c.h.b16 %v5976
    %v6962 = vunpack.c.l.b16 %v5977
    %v6963 = vunpack.c.l.b16 %v5978
    %v6964 = vunpack.c.h.b16 %v5978
    %v6965 = vunpack.c.l.b16 %v5979
    %v6966 = vunpack.c.h.b16 %v5979
    %v6967 = vunpack.c.l.b16 %v5980
    %v6968 = vunpack.c.h.b16 %v5980
    %v6969 = vunpack.c.l.b16 %v5981
    %v6970 = vunpack.c.l.b16 %v5982
    %v6971 = vunpack.c.h.b16 %v5982
    %v6972 = vunpack.c.l.b16 %v5983
    %v6973 = vunpack.c.h.b16 %v5983
    %v6974 = vunpack.c.l.b16 %v5984
    %v6975 = vunpack.c.h.b16 %v5984
    %v6976 = vunpack.c.l.b16 %v5985
    %v6977 = vunpack.c.l.b16 %v5986
    %v6978 = vunpack.c.h.b16 %v5986
    %v6979 = vunpack.c.l.b16 %v5987
    %v6980 = vunpack.c.h.b16 %v5987
    %v6981 = vunpack.c.l.b16 %v5988
    %v6982 = vunpack.c.h.b16 %v5988
    %v6983 = vunpack.c.l.b16 %v5989
    %v6984 = vunpack.c.l.b16 %v5990
    %v6985 = vunpack.c.h.b16 %v5990
    %v6986 = vunpack.c.l.b16 %v5991
    %v6987 = vunpack.c.h.b16 %v5991
    %v6988 = vunpack.c.l.b16 %v5992
    %v6989 = vunpack.c.h.b16 %v5992
    %v6990 = vunpack.c.l.b16 %v5993
    %v6991 = vunpack.c.l.b16 %v5994
    %v6992 = vunpack.c.h.b16 %v5994
    %v6993 = vunpack.c.l.b16 %v5995
    %v6994 = vunpack.c.h.b16 %v5995
    %v6995 = vunpack.c.l.b16 %v5996
    %v6996 = vunpack.c.h.b16 %v5996
    %v6997 = vunpack.c.l.b16 %v5997
    %v6998 = vunpack.c.l.b16 %v5998
    %v6999 = vunpack.c.h.b16 %v5998
    %v7000 = vunpack.c.l.b16 %v5999
    %v7001 = vunpack.c.h.b16 %v5999
    %v7002 = vunpack.c.l.b16 %v6000
    %v7003 = vunpack.c.h.b16 %v6000
    %v7004 = vunpack.c.l.b16 %v6001
    %v7005 = vunpack.c.l.b16 %v6002
    %v7006 = vunpack.c.h.b16 %v6002
    %v7007 = vunpack.c.l.b16 %v6003
    %v7008 = vunpack.c.h.b16 %v6003
    %v7009 = vunpack.c.l.b16 %v6004
    %v7010 = vunpack.c.h.b16 %v6004
    %v7011 = vunpack.c.l.b16 %v6005
    %v7012 = vunpack.c.l.b16 %v6006
    %v7013 = vunpack.c.h.b16 %v6006
    %v7014 = vunpack.c.l.b16 %v6007
    %v7015 = vunpack.c.h.b16 %v6007
    %v7016 = vunpack.c.l.b16 %v6008
    %v7017 = vunpack.c.h.b16 %v6008
    %v7018 = vunpack.c.l.b16 %v6009
    %v7019 = vunpack.c.l.b16 %v6010
    %v7020 = vunpack.c.h.b16 %v6010
    %v7021 = vunpack.c.l.b16 %v6011
    %v7022 = vunpack.c.h.b16 %v6011
    %v7023 = vunpack.c.l.b16 %v6012
    %v7024 = vunpack.c.h.b16 %v6012
    %v7025 = vunpack.c.l.b16 %v6013
    %v7026 = vunpack.c.l.b16 %v6014
    %v7027 = vunpack.c.h.b16 %v6014
    %v7028 = vunpack.c.l.b16 %v6015
    %v7029 = vunpack.c.h.b16 %v6015
    %v7030 = vunpack.c.l.b16 %v6016
    %v7031 = vunpack.c.h.b16 %v6016
    %v7032 = vunpack.c.l.b16 %v6017
    %v7033 = vunpack.c.l.b16 %v6018
    %v7034 = vunpack.c.h.b16 %v6018
    %v7035 = vunpack.c.l.b16 %v6019
    %v7036 = vunpack.c.h.b16 %v6019
    %v7037 = vunpack.c.l.b16 %v6020
    %v7038 = vunpack.c.h.b16 %v6020
    %v7039 = vunpack.c.l.b16 %v6021
    %v7040 = vunpack.c.l.b16 %v6022
    %v7041 = vunpack.c.h.b16 %v6022
    %v7042 = vunpack.c.l.b16 %v6023
    %v7043 = vunpack.c.h.b16 %v6023
    %v7044 = vunpack.c.l.b16 %v6024
    %v7045 = vunpack.c.h.b16 %v6024
    %v7046 = vunpack.c.l.b16 %v6025
    %v7047 = vunpack.c.l.b16 %v6026
    %v7048 = vunpack.c.h.b16 %v6026
    %v7049 = vunpack.c.l.b16 %v6027
    %v7050 = vunpack.c.h.b16 %v6027
    %v7051 = vunpack.c.l.b16 %v6028
    %v7052 = vunpack.c.h.b16 %v6028
    %v7053 = vunpack.c.l.b16 %v6029
    %v7054 = vunpack.c.l.b16 %v6030
    %v7055 = vunpack.c.h.b16 %v6030
    %v7056 = vunpack.c.l.b16 %v6031
    %v7057 = vunpack.c.h.b16 %v6031
    %v7058 = vunpack.c.l.b16 %v6032
    %v7059 = vunpack.c.h.b16 %v6032
    %v7060 = vunpack.c.l.b16 %v6033
    %v7061 = vunpack.c.l.b16 %v6034
    %v7062 = vunpack.c.h.b16 %v6034
    %v7063 = vunpack.c.l.b16 %v6035
    %v7064 = vunpack.c.h.b16 %v6035
    %v7065 = vunpack.c.l.b16 %v6036
    %v7066 = vunpack.c.h.b16 %v6036
    %v7067 = vunpack.c.l.b16 %v6037
    %v7068 = vunpack.c.l.b16 %v6038
    %v7069 = vunpack.c.h.b16 %v6038
    %v7070 = vunpack.c.l.b16 %v6039
    %v7071 = vunpack.c.h.b16 %v6039
    %v7072 = vunpack.c.l.b16 %v6040
    %v7073 = vunpack.c.h.b16 %v6040
    %v7074 = vunpack.c.l.b16 %v6041
    %v7075 = vunpack.c.l.b16 %v6042
    %v7076 = vunpack.c.h.b16 %v6042
    %v7077 = vunpack.c.l.b16 %v6043
    %v7078 = vunpack.c.h.b16 %v6043
    %v7079 = vunpack.c.l.b16 %v6044
    %v7080 = vunpack.c.h.b16 %v6044
    %v7081 = vunpack.c.l.b16 %v6045
    %v7082 = vunpack.c.l.b16 %v6046
    %v7083 = vunpack.c.h.b16 %v6046
    %v7084 = vunpack.c.l.b16 %v6047
    %v7085 = vunpack.c.h.b16 %v6047
    %v7086 = vunpack.c.l.b16 %v6048
    %v7087 = vunpack.c.h.b16 %v6048
    %v7088 = vunpack.c.l.b16 %v6049
    %v7089 = vunpack.c.l.b16 %v6050
    %v7090 = vunpack.c.h.b16 %v6050
    %v7091 = vunpack.c.l.b16 %v6051
    %v7092 = vunpack.c.h.b16 %v6051
    %v7093 = vunpack.c.l.b16 %v6052
    %v7094 = vunpack.c.h.b16 %v6052
    %v7095 = vunpack.c.l.b16 %v6053
    %v7096 = vunpack.c.l.b16 %v6054
    %v7097 = vunpack.c.h.b16 %v6054
    %v7098 = vunpack.c.l.b16 %v6055
    %v7099 = vunpack.c.h.b16 %v6055
    %v7100 = vunpack.c.l.b16 %v6056
    %v7101 = vunpack.c.h.b16 %v6056
    %v7102 = vunpack.c.l.b16 %v6057
    %v7103 = vunpack.c.l.b16 %v6058
    %v7104 = vunpack.c.h.b16 %v6058
    %v7105 = vunpack.c.l.b16 %v6059
    %v7106 = vunpack.c.h.b16 %v6059
    %v7107 = vunpack.c.l.b16 %v6060
    %v7108 = vunpack.c.h.b16 %v6060
    %v7109 = vunpack.c.l.b16 %v6061
    %v7110 = vunpack.c.l.b16 %v6062
    %v7111 = vunpack.c.h.b16 %v6062
    %v7112 = vunpack.c.l.b16 %v6063
    %v7113 = vunpack.c.h.b16 %v6063
    %v7114 = vunpack.c.l.b16 %v6064
    %v7115 = vunpack.c.h.b16 %v6064
    %v7116 = vunpack.c.l.b16 %v6065
    %v7117 = vunpack.c.l.b16 %v6066
    %v7118 = vunpack.c.h.b16 %v6066
    %v7119 = vunpack.c.l.b16 %v6067
    %v7120 = vunpack.c.h.b16 %v6067
    %v7121 = vunpack.c.l.b16 %v6068
    %v7122 = vunpack.c.h.b16 %v6068
    %v7123 = vunpack.c.l.b16 %v6069
    %v7124 = vunpack.c.l.b16 %v6070
    %v7125 = vunpack.c.h.b16 %v6070
    %v7126 = vunpack.c.l.b16 %v6071
    %v7127 = vunpack.c.h.b16 %v6071
    %v7128 = vunpack.c.l.b16 %v6072
    %v7129 = vunpack.c.h.b16 %v6072
    %v7130 = vunpack.c.l.b16 %v6073
    %v7131 = vunpack.c.l.b16 %v6074
    %v7132 = vunpack.c.h.b16 %v6074
    %v7133 = vunpack.c.l.b16 %v6075
    %v7134 = vunpack.c.h.b16 %v6075
    %v7135 = vunpack.c.l.b16 %v6076
    %v7136 = vunpack.c.h.b16 %v6076
    %v7137 = vunpack.c.l.b16 %v6077
    %v7138 = vunpack.c.l.b16 %v6078
    %v7139 = vunpack.c.h.b16 %v6078
    %v7140 = vunpack.c.l.b16 %v6079
    %v7141 = vunpack.c.h.b16 %v6079
    %v7142 = vunpack.c.l.b16 %v6080
    %v7143 = vunpack.c.h.b16 %v6080
    %v7144 = vunpack.c.l.b16 %v6081
    %v7145 = vunpack.c.l.b16 %v6082
    %v7146 = vunpack.c.h.b16 %v6082
    %v7147 = vunpack.c.l.b16 %v6083
    %v7148 = vunpack.c.h.b16 %v6083
    %v7149 = vunpack.c.l.b16 %v6084
    %v7150 = vunpack.c.h.b16 %v6084
    %v7151 = vunpack.c.l.b16 %v6085
    %v7152 = vunpack.c.l.b16 %v6086
    %v7153 = vunpack.c.h.b16 %v6086
    %v7154 = vunpack.c.l.b16 %v6087
    %v7155 = vunpack.c.h.b16 %v6087
    %v7156 = vunpack.c.l.b16 %v6088
    %v7157 = vunpack.c.h.b16 %v6088
    %v7158 = vunpack.c.l.b16 %v6089
    %v7159 = vunpack.c.l.b16 %v6090
    %v7160 = vunpack.c.h.b16 %v6090
    %v7161 = vunpack.c.l.b16 %v6091
    %v7162 = vunpack.c.h.b16 %v6091
    %v7163 = vunpack.c.l.b16 %v6092
    %v7164 = vunpack.c.h.b16 %v6092
    %v7165 = vunpack.c.l.b16 %v6093
    %v7166 = vunpack.c.l.b16 %v6094
    %v7167 = vunpack.c.h.b16 %v6094
    %v7168 = vunpack.c.l.b16 %v6095
    %v7169 = vunpack.c.h.b16 %v6095
    %v7170 = vunpack.c.l.b16 %v6096
    %v7171 = vunpack.c.h.b16 %v6096
    %v7172 = vunpack.c.l.b16 %v6097
    %v7173 = vunpack.c.l.b16 %v6098
    %v7174 = vunpack.c.h.b16 %v6098
    %v7175 = vunpack.c.l.b16 %v6099
    %v7176 = vunpack.c.h.b16 %v6099
    %v7177 = vunpack.c.l.b16 %v6100
    %v7178 = vunpack.c.h.b16 %v6100
    %v7179 = vunpack.c.l.b16 %v6101
    %v7180 = vpack.c.b16 %v6501, %v6494
    %v7181 = vpack.c.b16 %v6502, %v6495
    %v7182 = vpack.c.b16 %v6503, %v6496
    %v7183 = vpack.c.b16 %v6504, %v6497
    %v7184 = vpack.c.b16 %v6505, %v6498
    %v7185 = vpack.c.b16 %v6506, %v6499
    %v7186 = vpack.c.b16 %v6507, %v6500
    %v7187 = vpack.c.b16 %v6515, %v6508
    %v7188 = vpack.c.b16 %v6516, %v6509
    %v7189 = vpack.c.b16 %v6517, %v6510
    %v7190 = vpack.c.b16 %v6518, %v6511
    %v7191 = vpack.c.b16 %v6519, %v6512
    %v7192 = vpack.c.b16 %v6520, %v6513
    %v7193 = vpack.c.b16 %v6521, %v6514
    %v7194 = vpack.c.b16 %v6529, %v6522
    %v7195 = vpack.c.b16 %v6530, %v6523
    %v7196 = vpack.c.b16 %v6531, %v6524
    %v7197 = vpack.c.b16 %v6532, %v6525
    %v7198 = vpack.c.b16 %v6533, %v6526
    %v7199 = vpack.c.b16 %v6534, %v6527
    %v7200 = vpack.c.b16 %v6535, %v6528
    %v7201 = vpack.c.b16 %v6543, %v6536
    %v7202 = vpack.c.b16 %v6544, %v6537
    %v7203 = vpack.c.b16 %v6545, %v6538
    %v7204 = vpack.c.b16 %v6546, %v6539
    %v7205 = vpack.c.b16 %v6547, %v6540
    %v7206 = vpack.c.b16 %v6548, %v6541
    %v7207 = vpack.c.b16 %v6549, %v6542
    %v7208 = vpack.c.b16 %v6557, %v6550
    %v7209 = vpack.c.b16 %v6558, %v6551
    %v7210 = vpack.c.b16 %v6559, %v6552
    %v7211 = vpack.c.b16 %v6560, %v6553
    %v7212 = vpack.c.b16 %v6561, %v6554
    %v7213 = vpack.c.b16 %v6562, %v6555
    %v7214 = vpack.c.b16 %v6563, %v6556
    %v7215 = vpack.c.b16 %v6571, %v6564
    %v7216 = vpack.c.b16 %v6572, %v6565
    %v7217 = vpack.c.b16 %v6573, %v6566
    %v7218 = vpack.c.b16 %v6574, %v6567
    %v7219 = vpack.c.b16 %v6575, %v6568
    %v7220 = vpack.c.b16 %v6576, %v6569
    %v7221 = vpack.c.b16 %v6577, %v6570
    %v7222 = vpack.c.b16 %v6585, %v6578
    %v7223 = vpack.c.b16 %v6586, %v6579
    %v7224 = vpack.c.b16 %v6587, %v6580
    %v7225 = vpack.c.b16 %v6588, %v6581
    %v7226 = vpack.c.b16 %v6589, %v6582
    %v7227 = vpack.c.b16 %v6590, %v6583
    %v7228 = vpack.c.b16 %v6591, %v6584
    %v7229 = vpack.c.b16 %v6599, %v6592
    %v7230 = vpack.c.b16 %v6600, %v6593
    %v7231 = vpack.c.b16 %v6601, %v6594
    %v7232 = vpack.c.b16 %v6602, %v6595
    %v7233 = vpack.c.b16 %v6603, %v6596
    %v7234 = vpack.c.b16 %v6604, %v6597
    %v7235 = vpack.c.b16 %v6605, %v6598
    %v7236 = vpack.c.b16 %v6613, %v6606
    %v7237 = vpack.c.b16 %v6614, %v6607
    %v7238 = vpack.c.b16 %v6615, %v6608
    %v7239 = vpack.c.b16 %v6616, %v6609
    %v7240 = vpack.c.b16 %v6617, %v6610
    %v7241 = vpack.c.b16 %v6618, %v6611
    %v7242 = vpack.c.b16 %v6619, %v6612
    %v7243 = vpack.c.b16 %v6627, %v6620
    %v7244 = vpack.c.b16 %v6628, %v6621
    %v7245 = vpack.c.b16 %v6629, %v6622
    %v7246 = vpack.c.b16 %v6630, %v6623
    %v7247 = vpack.c.b16 %v6631, %v6624
    %v7248 = vpack.c.b16 %v6632, %v6625
    %v7249 = vpack.c.b16 %v6633, %v6626
    %v7250 = vpack.c.b16 %v6641, %v6634
    %v7251 = vpack.c.b16 %v6642, %v6635
    %v7252 = vpack.c.b16 %v6643, %v6636
    %v7253 = vpack.c.b16 %v6644, %v6637
    %v7254 = vpack.c.b16 %v6645, %v6638
    %v7255 = vpack.c.b16 %v6646, %v6639
    %v7256 = vpack.c.b16 %v6647, %v6640
    %v7257 = vpack.c.b16 %v6655, %v6648
    %v7258 = vpack.c.b16 %v6656, %v6649
    %v7259 = vpack.c.b16 %v6657, %v6650
    %v7260 = vpack.c.b16 %v6658, %v6651
    %v7261 = vpack.c.b16 %v6659, %v6652
    %v7262 = vpack.c.b16 %v6660, %v6653
    %v7263 = vpack.c.b16 %v6661, %v6654
    %v7264 = vpack.c.b16 %v6669, %v6662
    %v7265 = vpack.c.b16 %v6670, %v6663
    %v7266 = vpack.c.b16 %v6671, %v6664
    %v7267 = vpack.c.b16 %v6672, %v6665
    %v7268 = vpack.c.b16 %v6673, %v6666
    %v7269 = vpack.c.b16 %v6674, %v6667
    %v7270 = vpack.c.b16 %v6675, %v6668
    %v7271 = vpack.c.b16 %v6683, %v6676
    %v7272 = vpack.c.b16 %v6684, %v6677
    %v7273 = vpack.c.b16 %v6685, %v6678
    %v7274 = vpack.c.b16 %v6686, %v6679
    %v7275 = vpack.c.b16 %v6687, %v6680
    %v7276 = vpack.c.b16 %v6688, %v6681
    %v7277 = vpack.c.b16 %v6689, %v6682
    %v7278 = vpack.c.b16 %v6697, %v6690
    %v7279 = vpack.c.b16 %v6698, %v6691
    %v7280 = vpack.c.b16 %v6699, %v6692
    %v7281 = vpack.c.b16 %v6700, %v6693
    %v7282 = vpack.c.b16 %v6701, %v6694
    %v7283 = vpack.c.b16 %v6702, %v6695
    %v7284 = vpack.c.b16 %v6703, %v6696
    %v7285 = vpack.c.b16 %v6711, %v6704
    %v7286 = vpack.c.b16 %v6712, %v6705
    %v7287 = vpack.c.b16 %v6713, %v6706
    %v7288 = vpack.c.b16 %v6714, %v6707
    %v7289 = vpack.c.b16 %v6715, %v6708
    %v7290 = vpack.c.b16 %v6716, %v6709
    %v7291 = vpack.c.b16 %v6717, %v6710
    %v7292 = vpack.c.b16 %v6725, %v6718
    %v7293 = vpack.c.b16 %v6726, %v6719
    %v7294 = vpack.c.b16 %v6727, %v6720
    %v7295 = vpack.c.b16 %v6728, %v6721
    %v7296 = vpack.c.b16 %v6729, %v6722
    %v7297 = vpack.c.b16 %v6730, %v6723
    %v7298 = vpack.c.b16 %v6731, %v6724
    %v7299 = vpack.c.b16 %v6739, %v6732
    %v7300 = vpack.c.b16 %v6740, %v6733
    %v7301 = vpack.c.b16 %v6741, %v6734
    %v7302 = vpack.c.b16 %v6742, %v6735
    %v7303 = vpack.c.b16 %v6743, %v6736
    %v7304 = vpack.c.b16 %v6744, %v6737
    %v7305 = vpack.c.b16 %v6745, %v6738
    %v7306 = vpack.c.b16 %v6753, %v6746
    %v7307 = vpack.c.b16 %v6754, %v6747
    %v7308 = vpack.c.b16 %v6755, %v6748
    %v7309 = vpack.c.b16 %v6756, %v6749
    %v7310 = vpack.c.b16 %v6757, %v6750
    %v7311 = vpack.c.b16 %v6758, %v6751
    %v7312 = vpack.c.b16 %v6759, %v6752
    %v7313 = vpack.c.b16 %v6767, %v6760
    %v7314 = vpack.c.b16 %v6768, %v6761
    %v7315 = vpack.c.b16 %v6769, %v6762
    %v7316 = vpack.c.b16 %v6770, %v6763
    %v7317 = vpack.c.b16 %v6771, %v6764
    %v7318 = vpack.c.b16 %v6772, %v6765
    %v7319 = vpack.c.b16 %v6773, %v6766
    %v7320 = vpack.c.b16 %v6781, %v6774
    %v7321 = vpack.c.b16 %v6782, %v6775
    %v7322 = vpack.c.b16 %v6783, %v6776
    %v7323 = vpack.c.b16 %v6784, %v6777
    %v7324 = vpack.c.b16 %v6785, %v6778
    %v7325 = vpack.c.b16 %v6786, %v6779
    %v7326 = vpack.c.b16 %v6787, %v6780
    %v7327 = vpack.c.b16 %v6795, %v6788
    %v7328 = vpack.c.b16 %v6796, %v6789
    %v7329 = vpack.c.b16 %v6797, %v6790
    %v7330 = vpack.c.b16 %v6798, %v6791
    %v7331 = vpack.c.b16 %v6799, %v6792
    %v7332 = vpack.c.b16 %v6800, %v6793
    %v7333 = vpack.c.b16 %v6801, %v6794
    %v7334 = vpack.c.b16 %v6809, %v6802
    %v7335 = vpack.c.b16 %v6810, %v6803
    %v7336 = vpack.c.b16 %v6811, %v6804
    %v7337 = vpack.c.b16 %v6812, %v6805
    %v7338 = vpack.c.b16 %v6813, %v6806
    %v7339 = vpack.c.b16 %v6814, %v6807
    %v7340 = vpack.c.b16 %v6815, %v6808
    %v7341 = vpack.c.b16 %v6823, %v6816
    %v7342 = vpack.c.b16 %v6824, %v6817
    %v7343 = vpack.c.b16 %v6825, %v6818
    %v7344 = vpack.c.b16 %v6826, %v6819
    %v7345 = vpack.c.b16 %v6827, %v6820
    %v7346 = vpack.c.b16 %v6828, %v6821
    %v7347 = vpack.c.b16 %v6829, %v6822
    %v7348 = vpack.c.b16 %v6837, %v6830
    %v7349 = vpack.c.b16 %v6838, %v6831
    %v7350 = vpack.c.b16 %v6839, %v6832
    %v7351 = vpack.c.b16 %v6840, %v6833
    %v7352 = vpack.c.b16 %v6841, %v6834
    %v7353 = vpack.c.b16 %v6842, %v6835
    %v7354 = vpack.c.b16 %v6843, %v6836
    %v7355 = vpack.c.b16 %v6851, %v6844
    %v7356 = vpack.c.b16 %v6852, %v6845
    %v7357 = vpack.c.b16 %v6853, %v6846
    %v7358 = vpack.c.b16 %v6854, %v6847
    %v7359 = vpack.c.b16 %v6855, %v6848
    %v7360 = vpack.c.b16 %v6856, %v6849
    %v7361 = vpack.c.b16 %v6857, %v6850
    %v7362 = vpack.c.b16 %v6865, %v6858
    %v7363 = vpack.c.b16 %v6866, %v6859
    %v7364 = vpack.c.b16 %v6867, %v6860
    %v7365 = vpack.c.b16 %v6868, %v6861
    %v7366 = vpack.c.b16 %v6869, %v6862
    %v7367 = vpack.c.b16 %v6870, %v6863
    %v7368 = vpack.c.b16 %v6871, %v6864
    %v7369 = vpack.c.b16 %v6879, %v6872
    %v7370 = vpack.c.b16 %v6880, %v6873
    %v7371 = vpack.c.b16 %v6881, %v6874
    %v7372 = vpack.c.b16 %v6882, %v6875
    %v7373 = vpack.c.b16 %v6883, %v6876
    %v7374 = vpack.c.b16 %v6884, %v6877
    %v7375 = vpack.c.b16 %v6885, %v6878
    %v7376 = vpack.c.b16 %v6893, %v6886
    %v7377 = vpack.c.b16 %v6894, %v6887
    %v7378 = vpack.c.b16 %v6895, %v6888
    %v7379 = vpack.c.b16 %v6896, %v6889
    %v7380 = vpack.c.b16 %v6897, %v6890
    %v7381 = vpack.c.b16 %v6898, %v6891
    %v7382 = vpack.c.b16 %v6899, %v6892
    %v7383 = vpack.c.b16 %v6907, %v6900
    %v7384 = vpack.c.b16 %v6908, %v6901
    %v7385 = vpack.c.b16 %v6909, %v6902
    %v7386 = vpack.c.b16 %v6910, %v6903
    %v7387 = vpack.c.b16 %v6911, %v6904
    %v7388 = vpack.c.b16 %v6912, %v6905
    %v7389 = vpack.c.b16 %v6913, %v6906
    %v7390 = vpack.c.b16 %v6921, %v6914
    %v7391 = vpack.c.b16 %v6922, %v6915
    %v7392 = vpack.c.b16 %v6923, %v6916
    %v7393 = vpack.c.b16 %v6924, %v6917
    %v7394 = vpack.c.b16 %v6925, %v6918
    %v7395 = vpack.c.b16 %v6926, %v6919
    %v7396 = vpack.c.b16 %v6927, %v6920
    %v7397 = vpack.c.b16 %v6935, %v6928
    %v7398 = vpack.c.b16 %v6936, %v6929
    %v7399 = vpack.c.b16 %v6937, %v6930
    %v7400 = vpack.c.b16 %v6938, %v6931
    %v7401 = vpack.c.b16 %v6939, %v6932
    %v7402 = vpack.c.b16 %v6940, %v6933
    %v7403 = vpack.c.b16 %v6941, %v6934
    %v7404 = vpack.c.b16 %v6949, %v6942
    %v7405 = vpack.c.b16 %v6950, %v6943
    %v7406 = vpack.c.b16 %v6951, %v6944
    %v7407 = vpack.c.b16 %v6952, %v6945
    %v7408 = vpack.c.b16 %v6953, %v6946
    %v7409 = vpack.c.b16 %v6954, %v6947
    %v7410 = vpack.c.b16 %v6955, %v6948
    %v7411 = vpack.c.b16 %v6963, %v6956
    %v7412 = vpack.c.b16 %v6964, %v6957
    %v7413 = vpack.c.b16 %v6965, %v6958
    %v7414 = vpack.c.b16 %v6966, %v6959
    %v7415 = vpack.c.b16 %v6967, %v6960
    %v7416 = vpack.c.b16 %v6968, %v6961
    %v7417 = vpack.c.b16 %v6969, %v6962
    %v7418 = vpack.c.b16 %v6977, %v6970
    %v7419 = vpack.c.b16 %v6978, %v6971
    %v7420 = vpack.c.b16 %v6979, %v6972
    %v7421 = vpack.c.b16 %v6980, %v6973
    %v7422 = vpack.c.b16 %v6981, %v6974
    %v7423 = vpack.c.b16 %v6982, %v6975
    %v7424 = vpack.c.b16 %v6983, %v6976
    %v7425 = vpack.c.b16 %v6991, %v6984
    %v7426 = vpack.c.b16 %v6992, %v6985
    %v7427 = vpack.c.b16 %v6993, %v6986
    %v7428 = vpack.c.b16 %v6994, %v6987
    %v7429 = vpack.c.b16 %v6995, %v6988
    %v7430 = vpack.c.b16 %v6996, %v6989
    %v7431 = vpack.c.b16 %v6997, %v6990
    %v7432 = vpack.c.b16 %v7005, %v6998
    %v7433 = vpack.c.b16 %v7006, %v6999
    %v7434 = vpack.c.b16 %v7007, %v7000
    %v7435 = vpack.c.b16 %v7008, %v7001
    %v7436 = vpack.c.b16 %v7009, %v7002
    %v7437 = vpack.c.b16 %v7010, %v7003
    %v7438 = vpack.c.b16 %v7011, %v7004
    %v7439 = vpack.c.b16 %v7019, %v7012
    %v7440 = vpack.c.b16 %v7020, %v7013
    %v7441 = vpack.c.b16 %v7021, %v7014
    %v7442 = vpack.c.b16 %v7022, %v7015
    %v7443 = vpack.c.b16 %v7023, %v7016
    %v7444 = vpack.c.b16 %v7024, %v7017
    %v7445 = vpack.c.b16 %v7025, %v7018
    %v7446 = vpack.c.b16 %v7033, %v7026
    %v7447 = vpack.c.b16 %v7034, %v7027
    %v7448 = vpack.c.b16 %v7035, %v7028
    %v7449 = vpack.c.b16 %v7036, %v7029
    %v7450 = vpack.c.b16 %v7037, %v7030
    %v7451 = vpack.c.b16 %v7038, %v7031
    %v7452 = vpack.c.b16 %v7039, %v7032
    %v7453 = vpack.c.b16 %v7047, %v7040
    %v7454 = vpack.c.b16 %v7048, %v7041
    %v7455 = vpack.c.b16 %v7049, %v7042
    %v7456 = vpack.c.b16 %v7050, %v7043
    %v7457 = vpack.c.b16 %v7051, %v7044
    %v7458 = vpack.c.b16 %v7052, %v7045
    %v7459 = vpack.c.b16 %v7053, %v7046
    %v7460 = vpack.c.b16 %v7061, %v7054
    %v7461 = vpack.c.b16 %v7062, %v7055
    %v7462 = vpack.c.b16 %v7063, %v7056
    %v7463 = vpack.c.b16 %v7064, %v7057
    %v7464 = vpack.c.b16 %v7065, %v7058
    %v7465 = vpack.c.b16 %v7066, %v7059
    %v7466 = vpack.c.b16 %v7067, %v7060
    %v7467 = vpack.c.b16 %v7075, %v7068
    %v7468 = vpack.c.b16 %v7076, %v7069
    %v7469 = vpack.c.b16 %v7077, %v7070
    %v7470 = vpack.c.b16 %v7078, %v7071
    %v7471 = vpack.c.b16 %v7079, %v7072
    %v7472 = vpack.c.b16 %v7080, %v7073
    %v7473 = vpack.c.b16 %v7081, %v7074
    %v7474 = vpack.c.b16 %v7089, %v7082
    %v7475 = vpack.c.b16 %v7090, %v7083
    %v7476 = vpack.c.b16 %v7091, %v7084
    %v7477 = vpack.c.b16 %v7092, %v7085
    %v7478 = vpack.c.b16 %v7093, %v7086
    %v7479 = vpack.c.b16 %v7094, %v7087
    %v7480 = vpack.c.b16 %v7095, %v7088
    %v7481 = vpack.c.b16 %v7103, %v7096
    %v7482 = vpack.c.b16 %v7104, %v7097
    %v7483 = vpack.c.b16 %v7105, %v7098
    %v7484 = vpack.c.b16 %v7106, %v7099
    %v7485 = vpack.c.b16 %v7107, %v7100
    %v7486 = vpack.c.b16 %v7108, %v7101
    %v7487 = vpack.c.b16 %v7109, %v7102
    %v7488 = vpack.c.b16 %v7117, %v7110
    %v7489 = vpack.c.b16 %v7118, %v7111
    %v7490 = vpack.c.b16 %v7119, %v7112
    %v7491 = vpack.c.b16 %v7120, %v7113
    %v7492 = vpack.c.b16 %v7121, %v7114
    %v7493 = vpack.c.b16 %v7122, %v7115
    %v7494 = vpack.c.b16 %v7123, %v7116
    %v7495 = vpack.c.b16 %v7131, %v7124
    %v7496 = vpack.c.b16 %v7132, %v7125
    %v7497 = vpack.c.b16 %v7133, %v7126
    %v7498 = vpack.c.b16 %v7134, %v7127
    %v7499 = vpack.c.b16 %v7135, %v7128
    %v7500 = vpack.c.b16 %v7136, %v7129
    %v7501 = vpack.c.b16 %v7137, %v7130
    %v7502 = vpack.c.b16 %v7145, %v7138
    %v7503 = vpack.c.b16 %v7146, %v7139
    %v7504 = vpack.c.b16 %v7147, %v7140
    %v7505 = vpack.c.b16 %v7148, %v7141
    %v7506 = vpack.c.b16 %v7149, %v7142
    %v7507 = vpack.c.b16 %v7150, %v7143
    %v7508 = vpack.c.b16 %v7151, %v7144
    %v7509 = vpack.c.b16 %v7159, %v7152
    %v7510 = vpack.c.b16 %v7160, %v7153
    %v7511 = vpack.c.b16 %v7161, %v7154
    %v7512 = vpack.c.b16 %v7162, %v7155
    %v7513 = vpack.c.b16 %v7163, %v7156
    %v7514 = vpack.c.b16 %v7164, %v7157
    %v7515 = vpack.c.b16 %v7165, %v7158
    %v7516 = vpack.c.b16 %v7173, %v7166
    %v7517 = vpack.c.b16 %v7174, %v7167
    %v7518 = vpack.c.b16 %v7175, %v7168
    %v7519 = vpack.c.b16 %v7176, %v7169
    %v7520 = vpack.c.b16 %v7177, %v7170
    %v7521 = vpack.c.b16 %v7178, %v7171
    %v7522 = vpack.c.b16 %v7179, %v7172
    %7866 = vmatprep.subr.bf16.mxu0 %v7230
    %7867 = vmatpush1.bf16.msra.mxu0 %v7229
    %7868 = vmatprep.subr.bf16.mxu0 %v7223
    %7869 = vmatpush1.bf16.msra.mxu0 %v7222
    %7870 = vmatprep.subr.bf16.mxu0 %v7216
    %7871 = vmatpush1.bf16.msra.mxu0 %v7215
    %7872 = vmatprep.subr.bf16.mxu0 %v7209
    %7873 = vmatpush1.bf16.msra.mxu0 %v7208
    %7874 = vmatprep.subr.bf16.mxu0 %v7202
    %7875 = vmatpush1.bf16.msra.mxu0 %v7201
    %7876 = vmatprep.subr.bf16.mxu0 %v7195
    %7877 = vmatpush1.bf16.msra.mxu0 %v7194
    %7878 = vmatprep.subr.bf16.mxu0 %v7188
    %7879 = vmatpush1.bf16.msra.mxu0 %v7187
    %7880 = vmatprep.subr.bf16.mxu0 %v7181
    %7881 = vmatpush1.bf16.msra.mxu0 %v7180
    %7882 = vmatprep.subr.bf16.mxu0 %v7286
    %7883 = vmatpush2.bf16.msra.mxu0 %v7285
    %7884 = vmatprep.subr.bf16.mxu0 %v7279
    %7885 = vmatpush2.bf16.msra.mxu0 %v7278
    %7886 = vmatprep.subr.bf16.mxu0 %v7272
    %7887 = vmatpush2.bf16.msra.mxu0 %v7271
    %7888 = vmatprep.subr.bf16.mxu0 %v7265
    %7889 = vmatpush2.bf16.msra.mxu0 %v7264
    %7890 = vmatprep.subr.bf16.mxu0 %v7258
    %7891 = vmatpush2.bf16.msra.mxu0 %v7257
    %7892 = vmatprep.subr.bf16.mxu0 %v7251
    %7893 = vmatpush2.bf16.msra.mxu0 %v7250
    %7894 = vmatprep.subr.bf16.mxu0 %v7244
    %7895 = vmatpush2.bf16.msra.mxu0 %v7243
    %7896 = vmatprep.subr.bf16.mxu0 %v7237
    %7897 = vmatpush2.bf16.msra.mxu0 %v7236
    %7898 = vmatprep.mubr.bf16.mxu0 %v461
    %7899 = vmatmul.mubr.bf16.gmra.mxu0 %v460
    %v7900 = vpop.f32.mrf.mxu0
    %v7901 = vadd.f32 0.0, %v7900
    %v7902 = vpop.f32.mrf.mxu0
    %v7903 = vadd.f32 0.0, %v7902
    %v7904 = vpop.f32.mrf.mxu0
    %v7905 = vpop.f32.mrf.mxu0
    %7906 = vdwg.mxu0
    %7907 = vmatprep.subr.bf16.mxu0 %v7342
    %7908 = vmatpush1.bf16.msra.mxu0 %v7341
    %7909 = vmatprep.subr.bf16.mxu0 %v7335
    %7910 = vmatpush1.bf16.msra.mxu0 %v7334
    %7911 = vmatprep.subr.bf16.mxu0 %v7328
    %7912 = vmatpush1.bf16.msra.mxu0 %v7327
    %7913 = vmatprep.subr.bf16.mxu0 %v7321
    %7914 = vmatpush1.bf16.msra.mxu0 %v7320
    %7915 = vmatprep.subr.bf16.mxu0 %v7314
    %7916 = vmatpush1.bf16.msra.mxu0 %v7313
    %7917 = vmatprep.subr.bf16.mxu0 %v7307
    %7918 = vmatpush1.bf16.msra.mxu0 %v7306
    %7919 = vmatprep.subr.bf16.mxu0 %v7300
    %7920 = vmatpush1.bf16.msra.mxu0 %v7299
    %7921 = vmatprep.subr.bf16.mxu0 %v7293
    %7922 = vmatpush1.bf16.msra.mxu0 %v7292
    %7923 = vmatprep.subr.bf16.mxu0 %v7398
    %7924 = vmatpush2.bf16.msra.mxu0 %v7397
    %7925 = vmatprep.subr.bf16.mxu0 %v7391
    %7926 = vmatpush2.bf16.msra.mxu0 %v7390
    %7927 = vmatprep.subr.bf16.mxu0 %v7384
    %7928 = vmatpush2.bf16.msra.mxu0 %v7383
    %7929 = vmatprep.subr.bf16.mxu0 %v7377
    %7930 = vmatpush2.bf16.msra.mxu0 %v7376
    %7931 = vmatprep.subr.bf16.mxu0 %v7370
    %7932 = vmatpush2.bf16.msra.mxu0 %v7369
    %7933 = vmatprep.subr.bf16.mxu0 %v7363
    %7934 = vmatpush2.bf16.msra.mxu0 %v7362
    %7935 = vmatprep.subr.bf16.mxu0 %v7356
    %7936 = vmatpush2.bf16.msra.mxu0 %v7355
    %7937 = vmatprep.subr.bf16.mxu0 %v7349
    %7938 = vmatpush2.bf16.msra.mxu0 %v7348
    %7939 = vmatprep.mubr.bf16.mxu0 %v463
    %7940 = vmatmul.mubr.bf16.gmra.mxu0 %v462
    %v7941 = vpop.f32.mrf.mxu0
    %v7942 = vadd.f32 %v7901, %v7941
    %v7943 = vpop.f32.mrf.mxu0
    %v7944 = vadd.f32 %v7903, %v7943
    %v7945 = vpop.f32.mrf.mxu0
    %v7946 = vpop.f32.mrf.mxu0
    %7947 = vdwg.mxu0
    %7948 = vmatprep.subr.bf16.mxu0 %v7454
    %7949 = vmatpush1.bf16.msra.mxu0 %v7453
    %7950 = vmatprep.subr.bf16.mxu0 %v7447
    %7951 = vmatpush1.bf16.msra.mxu0 %v7446
    %7952 = vmatprep.subr.bf16.mxu0 %v7440
    %7953 = vmatpush1.bf16.msra.mxu0 %v7439
    %7954 = vmatprep.subr.bf16.mxu0 %v7433
    %7955 = vmatpush1.bf16.msra.mxu0 %v7432
    %7956 = vmatprep.subr.bf16.mxu0 %v7426
    %7957 = vmatpush1.bf16.msra.mxu0 %v7425
    %7958 = vmatprep.subr.bf16.mxu0 %v7419
    %7959 = vmatpush1.bf16.msra.mxu0 %v7418
    %7960 = vmatprep.subr.bf16.mxu0 %v7412
    %7961 = vmatpush1.bf16.msra.mxu0 %v7411
    %7962 = vmatprep.subr.bf16.mxu0 %v7405
    %7963 = vmatpush1.bf16.msra.mxu0 %v7404
    %7964 = vmatprep.subr.bf16.mxu0 %v7510
    %7965 = vmatpush2.bf16.msra.mxu0 %v7509
    %7966 = vmatprep.subr.bf16.mxu0 %v7503
    %7967 = vmatpush2.bf16.msra.mxu0 %v7502
    %7968 = vmatprep.subr.bf16.mxu0 %v7496
    %7969 = vmatpush2.bf16.msra.mxu0 %v7495
    %7970 = vmatprep.subr.bf16.mxu0 %v7489
    %7971 = vmatpush2.bf16.msra.mxu0 %v7488
    %7972 = vmatprep.subr.bf16.mxu0 %v7482
    %7973 = vmatpush2.bf16.msra.mxu0 %v7481
    %7974 = vmatprep.subr.bf16.mxu0 %v7475
    %7975 = vmatpush2.bf16.msra.mxu0 %v7474
    %7976 = vmatprep.subr.bf16.mxu0 %v7468
    %7977 = vmatpush2.bf16.msra.mxu0 %v7467
    %7978 = vmatprep.subr.bf16.mxu0 %v7461
    %7979 = vmatpush2.bf16.msra.mxu0 %v7460
    %7980 = vmatprep.mubr.bf16.mxu0 %v465
    %7981 = vmatmul.mubr.bf16.gmra.mxu0 %v464
    %v7982 = vpop.f32.mrf.mxu0
    %v7983 = vadd.f32 %v7942, %v7982
    %v7984 = vpop.f32.mrf.mxu0
    %v7985 = vadd.f32 %v7944, %v7984
    %v7986 = vpop.f32.mrf.mxu0
    %v7987 = vpop.f32.mrf.mxu0
    %7988 = vdwg.mxu0
    %7989 = vmatprep.subr.bf16.mxu0 0
    %7990 = vmatpush1.bf16.msra.mxu0 0
    %7991 = vmatprep.subr.bf16.mxu0 0
    %7992 = vmatpush1.bf16.msra.mxu0 0
    %7993 = vmatprep.subr.bf16.mxu0 0
    %7994 = vmatpush1.bf16.msra.mxu0 0
    %7995 = vmatprep.subr.bf16.mxu0 0
    %7996 = vmatpush1.bf16.msra.mxu0 0
    %7997 = vmatprep.subr.bf16.mxu0 0
    %7998 = vmatpush1.bf16.msra.mxu0 0
    %7999 = vmatprep.subr.bf16.mxu0 0
    %8000 = vmatpush1.bf16.msra.mxu0 0
    %8001 = vmatprep.subr.bf16.mxu0 0
    %8002 = vmatpush1.bf16.msra.mxu0 0
    %8003 = vmatprep.subr.bf16.mxu0 %v7517
    %8004 = vmatpush1.bf16.msra.mxu0 %v7516
    %8005 = vmatprep.subr.bf16.mxu0 0
    %8006 = vmatpush2.bf16.msra.mxu0 0
    %8007 = vmatprep.subr.bf16.mxu0 0
    %8008 = vmatpush2.bf16.msra.mxu0 0
    %8009 = vmatprep.subr.bf16.mxu0 0
    %8010 = vmatpush2.bf16.msra.mxu0 0
    %8011 = vmatprep.subr.bf16.mxu0 0
    %8012 = vmatpush2.bf16.msra.mxu0 0
    %8013 = vmatprep.subr.bf16.mxu0 0
    %8014 = vmatpush2.bf16.msra.mxu0 0
    %8015 = vmatprep.subr.bf16.mxu0 0
    %8016 = vmatpush2.bf16.msra.mxu0 0
    %8017 = vmatprep.subr.bf16.mxu0 0
    %8018 = vmatpush2.bf16.msra.mxu0 0
    %8019 = vmatprep.subr.bf16.mxu0 0
    %8020 = vmatpush2.bf16.msra.mxu0 0
    %8021 = vmatprep.mubr.bf16.mxu0 0
    %8022 = vmatmul.mubr.bf16.gmra.mxu0 %v2239
    %v8023 = vpop.f32.mrf.mxu0
    %v8024 = vadd.f32 %v7983, %v8023
    %v8025 = vpop.f32.mrf.mxu0
    %v8026 = vadd.f32 %v7985, %v8025
    %v8027 = vpop.f32.mrf.mxu0
    %v8028 = vpop.f32.mrf.mxu0
    %8029 = vdwg.mxu0
    %8030 = vmatprep.subr.bf16.mxu0 %v7232
    %8031 = vmatpush1.bf16.msra.mxu0 %v7231
    %8032 = vmatprep.subr.bf16.mxu0 %v7225
    %8033 = vmatpush1.bf16.msra.mxu0 %v7224
    %8034 = vmatprep.subr.bf16.mxu0 %v7218
    %8035 = vmatpush1.bf16.msra.mxu0 %v7217
    %8036 = vmatprep.subr.bf16.mxu0 %v7211
    %8037 = vmatpush1.bf16.msra.mxu0 %v7210
    %8038 = vmatprep.subr.bf16.mxu0 %v7204
    %8039 = vmatpush1.bf16.msra.mxu0 %v7203
    %8040 = vmatprep.subr.bf16.mxu0 %v7197
    %8041 = vmatpush1.bf16.msra.mxu0 %v7196
    %8042 = vmatprep.subr.bf16.mxu0 %v7190
    %8043 = vmatpush1.bf16.msra.mxu0 %v7189
    %8044 = vmatprep.subr.bf16.mxu0 %v7183
    %8045 = vmatpush1.bf16.msra.mxu0 %v7182
    %8046 = vmatprep.subr.bf16.mxu0 %v7288
    %8047 = vmatpush2.bf16.msra.mxu0 %v7287
    %8048 = vmatprep.subr.bf16.mxu0 %v7281
    %8049 = vmatpush2.bf16.msra.mxu0 %v7280
    %8050 = vmatprep.subr.bf16.mxu0 %v7274
    %8051 = vmatpush2.bf16.msra.mxu0 %v7273
    %8052 = vmatprep.subr.bf16.mxu0 %v7267
    %8053 = vmatpush2.bf16.msra.mxu0 %v7266
    %8054 = vmatprep.subr.bf16.mxu0 %v7260
    %8055 = vmatpush2.bf16.msra.mxu0 %v7259
    %8056 = vmatprep.subr.bf16.mxu0 %v7253
    %8057 = vmatpush2.bf16.msra.mxu0 %v7252
    %8058 = vmatprep.subr.bf16.mxu0 %v7246
    %8059 = vmatpush2.bf16.msra.mxu0 %v7245
    %8060 = vmatprep.subr.bf16.mxu0 %v7239
    %8061 = vmatpush2.bf16.msra.mxu0 %v7238
    %8062 = vmatprep.mubr.bf16.mxu0 %v461
    %8063 = vmatmul.mubr.bf16.gmra.mxu0 %v460
    %v8064 = vpop.f32.mrf.mxu0
    %v8065 = vadd.f32 0.0, %v8064
    %v8066 = vpop.f32.mrf.mxu0
    %v8067 = vadd.f32 0.0, %v8066
    %v8068 = vpop.f32.mrf.mxu0
    %v8069 = vpop.f32.mrf.mxu0
    %8070 = vdwg.mxu0
    %8071 = vmatprep.subr.bf16.mxu0 %v7344
    %8072 = vmatpush1.bf16.msra.mxu0 %v7343
    %8073 = vmatprep.subr.bf16.mxu0 %v7337
    %8074 = vmatpush1.bf16.msra.mxu0 %v7336
    %8075 = vmatprep.subr.bf16.mxu0 %v7330
    %8076 = vmatpush1.bf16.msra.mxu0 %v7329
    %8077 = vmatprep.subr.bf16.mxu0 %v7323
    %8078 = vmatpush1.bf16.msra.mxu0 %v7322
    %8079 = vmatprep.subr.bf16.mxu0 %v7316
    %8080 = vmatpush1.bf16.msra.mxu0 %v7315
    %8081 = vmatprep.subr.bf16.mxu0 %v7309
    %8082 = vmatpush1.bf16.msra.mxu0 %v7308
    %8083 = vmatprep.subr.bf16.mxu0 %v7302
    %8084 = vmatpush1.bf16.msra.mxu0 %v7301
    %8085 = vmatprep.subr.bf16.mxu0 %v7295
    %8086 = vmatpush1.bf16.msra.mxu0 %v7294
    %8087 = vmatprep.subr.bf16.mxu0 %v7400
    %8088 = vmatpush2.bf16.msra.mxu0 %v7399
    %8089 = vmatprep.subr.bf16.mxu0 %v7393
    %8090 = vmatpush2.bf16.msra.mxu0 %v7392
    %8091 = vmatprep.subr.bf16.mxu0 %v7386
    %8092 = vmatpush2.bf16.msra.mxu0 %v7385
    %8093 = vmatprep.subr.bf16.mxu0 %v7379
    %8094 = vmatpush2.bf16.msra.mxu0 %v7378
    %8095 = vmatprep.subr.bf16.mxu0 %v7372
    %8096 = vmatpush2.bf16.msra.mxu0 %v7371
    %8097 = vmatprep.subr.bf16.mxu0 %v7365
    %8098 = vmatpush2.bf16.msra.mxu0 %v7364
    %8099 = vmatprep.subr.bf16.mxu0 %v7358
    %8100 = vmatpush2.bf16.msra.mxu0 %v7357
    %8101 = vmatprep.subr.bf16.mxu0 %v7351
    %8102 = vmatpush2.bf16.msra.mxu0 %v7350
    %8103 = vmatprep.mubr.bf16.mxu0 %v463
    %8104 = vmatmul.mubr.bf16.gmra.mxu0 %v462
    %v8105 = vpop.f32.mrf.mxu0
    %v8106 = vadd.f32 %v8065, %v8105
    %v8107 = vpop.f32.mrf.mxu0
    %v8108 = vadd.f32 %v8067, %v8107
    %v8109 = vpop.f32.mrf.mxu0
    %v8110 = vpop.f32.mrf.mxu0
    %8111 = vdwg.mxu0
    %8112 = vmatprep.subr.bf16.mxu0 %v7456
    %8113 = vmatpush1.bf16.msra.mxu0 %v7455
    %8114 = vmatprep.subr.bf16.mxu0 %v7449
    %8115 = vmatpush1.bf16.msra.mxu0 %v7448
    %8116 = vmatprep.subr.bf16.mxu0 %v7442
    %8117 = vmatpush1.bf16.msra.mxu0 %v7441
    %8118 = vmatprep.subr.bf16.mxu0 %v7435
    %8119 = vmatpush1.bf16.msra.mxu0 %v7434
    %8120 = vmatprep.subr.bf16.mxu0 %v7428
    %8121 = vmatpush1.bf16.msra.mxu0 %v7427
    %8122 = vmatprep.subr.bf16.mxu0 %v7421
    %8123 = vmatpush1.bf16.msra.mxu0 %v7420
    %8124 = vmatprep.subr.bf16.mxu0 %v7414
    %8125 = vmatpush1.bf16.msra.mxu0 %v7413
    %8126 = vmatprep.subr.bf16.mxu0 %v7407
    %8127 = vmatpush1.bf16.msra.mxu0 %v7406
    %8128 = vmatprep.subr.bf16.mxu0 %v7512
    %8129 = vmatpush2.bf16.msra.mxu0 %v7511
    %8130 = vmatprep.subr.bf16.mxu0 %v7505
    %8131 = vmatpush2.bf16.msra.mxu0 %v7504
    %8132 = vmatprep.subr.bf16.mxu0 %v7498
    %8133 = vmatpush2.bf16.msra.mxu0 %v7497
    %8134 = vmatprep.subr.bf16.mxu0 %v7491
    %8135 = vmatpush2.bf16.msra.mxu0 %v7490
    %8136 = vmatprep.subr.bf16.mxu0 %v7484
    %8137 = vmatpush2.bf16.msra.mxu0 %v7483
    %8138 = vmatprep.subr.bf16.mxu0 %v7477
    %8139 = vmatpush2.bf16.msra.mxu0 %v7476
    %8140 = vmatprep.subr.bf16.mxu0 %v7470
    %8141 = vmatpush2.bf16.msra.mxu0 %v7469
    %8142 = vmatprep.subr.bf16.mxu0 %v7463
    %8143 = vmatpush2.bf16.msra.mxu0 %v7462
    %8144 = vmatprep.mubr.bf16.mxu0 %v465
    %8145 = vmatmul.mubr.bf16.gmra.mxu0 %v464
    %v8146 = vpop.f32.mrf.mxu0
    %v8147 = vadd.f32 %v8106, %v8146
    %v8148 = vpop.f32.mrf.mxu0
    %v8149 = vadd.f32 %v8108, %v8148
    %v8150 = vpop.f32.mrf.mxu0
    %v8151 = vpop.f32.mrf.mxu0
    %8152 = vdwg.mxu0
    %8153 = vmatprep.subr.bf16.mxu0 0
    %8154 = vmatpush1.bf16.msra.mxu0 0
    %8155 = vmatprep.subr.bf16.mxu0 0
    %8156 = vmatpush1.bf16.msra.mxu0 0
    %8157 = vmatprep.subr.bf16.mxu0 0
    %8158 = vmatpush1.bf16.msra.mxu0 0
    %8159 = vmatprep.subr.bf16.mxu0 0
    %8160 = vmatpush1.bf16.msra.mxu0 0
    %8161 = vmatprep.subr.bf16.mxu0 0
    %8162 = vmatpush1.bf16.msra.mxu0 0
    %8163 = vmatprep.subr.bf16.mxu0 0
    %8164 = vmatpush1.bf16.msra.mxu0 0
    %8165 = vmatprep.subr.bf16.mxu0 0
    %8166 = vmatpush1.bf16.msra.mxu0 0
    %8167 = vmatprep.subr.bf16.mxu0 %v7519
    %8168 = vmatpush1.bf16.msra.mxu0 %v7518
    %8169 = vmatprep.subr.bf16.mxu0 0
    %8170 = vmatpush2.bf16.msra.mxu0 0
    %8171 = vmatprep.subr.bf16.mxu0 0
    %8172 = vmatpush2.bf16.msra.mxu0 0
    %8173 = vmatprep.subr.bf16.mxu0 0
    %8174 = vmatpush2.bf16.msra.mxu0 0
    %8175 = vmatprep.subr.bf16.mxu0 0
    %8176 = vmatpush2.bf16.msra.mxu0 0
    %8177 = vmatprep.subr.bf16.mxu0 0
    %8178 = vmatpush2.bf16.msra.mxu0 0
    %8179 = vmatprep.subr.bf16.mxu0 0
    %8180 = vmatpush2.bf16.msra.mxu0 0
    %8181 = vmatprep.subr.bf16.mxu0 0
    %8182 = vmatpush2.bf16.msra.mxu0 0
    %8183 = vmatprep.subr.bf16.mxu0 0
    %8184 = vmatpush2.bf16.msra.mxu0 0
    %8185 = vmatprep.mubr.bf16.mxu0 0
    %8186 = vmatmul.mubr.bf16.gmra.mxu0 %v2239
    %v8187 = vpop.f32.mrf.mxu0
    %v8188 = vadd.f32 %v8147, %v8187
    %v8189 = vpop.f32.mrf.mxu0
    %v8190 = vadd.f32 %v8149, %v8189
    %v8191 = vpop.f32.mrf.mxu0
    %v8192 = vpop.f32.mrf.mxu0
    %8193 = vdwg.mxu0
    %8194 = vmatprep.subr.bf16.mxu0 %v7234
    %8195 = vmatpush1.bf16.msra.mxu0 %v7233
    %8196 = vmatprep.subr.bf16.mxu0 %v7227
    %8197 = vmatpush1.bf16.msra.mxu0 %v7226
    %8198 = vmatprep.subr.bf16.mxu0 %v7220
    %8199 = vmatpush1.bf16.msra.mxu0 %v7219
    %8200 = vmatprep.subr.bf16.mxu0 %v7213
    %8201 = vmatpush1.bf16.msra.mxu0 %v7212
    %8202 = vmatprep.subr.bf16.mxu0 %v7206
    %8203 = vmatpush1.bf16.msra.mxu0 %v7205
    %8204 = vmatprep.subr.bf16.mxu0 %v7199
    %8205 = vmatpush1.bf16.msra.mxu0 %v7198
    %8206 = vmatprep.subr.bf16.mxu0 %v7192
    %8207 = vmatpush1.bf16.msra.mxu0 %v7191
    %8208 = vmatprep.subr.bf16.mxu0 %v7185
    %8209 = vmatpush1.bf16.msra.mxu0 %v7184
    %8210 = vmatprep.subr.bf16.mxu0 %v7290
    %8211 = vmatpush2.bf16.msra.mxu0 %v7289
    %8212 = vmatprep.subr.bf16.mxu0 %v7283
    %8213 = vmatpush2.bf16.msra.mxu0 %v7282
    %8214 = vmatprep.subr.bf16.mxu0 %v7276
    %8215 = vmatpush2.bf16.msra.mxu0 %v7275
    %8216 = vmatprep.subr.bf16.mxu0 %v7269
    %8217 = vmatpush2.bf16.msra.mxu0 %v7268
    %8218 = vmatprep.subr.bf16.mxu0 %v7262
    %8219 = vmatpush2.bf16.msra.mxu0 %v7261
    %8220 = vmatprep.subr.bf16.mxu0 %v7255
    %8221 = vmatpush2.bf16.msra.mxu0 %v7254
    %8222 = vmatprep.subr.bf16.mxu0 %v7248
    %8223 = vmatpush2.bf16.msra.mxu0 %v7247
    %8224 = vmatprep.subr.bf16.mxu0 %v7241
    %8225 = vmatpush2.bf16.msra.mxu0 %v7240
    %8226 = vmatprep.mubr.bf16.mxu0 %v461
    %8227 = vmatmul.mubr.bf16.gmra.mxu0 %v460
    %v8228 = vpop.f32.mrf.mxu0
    %v8229 = vadd.f32 0.0, %v8228
    %v8230 = vpop.f32.mrf.mxu0
    %v8231 = vadd.f32 0.0, %v8230
    %v8232 = vpop.f32.mrf.mxu0
    %v8233 = vpop.f32.mrf.mxu0
    %8234 = vdwg.mxu0
    %8235 = vmatprep.subr.bf16.mxu0 %v7346
    %8236 = vmatpush1.bf16.msra.mxu0 %v7345
    %8237 = vmatprep.subr.bf16.mxu0 %v7339
    %8238 = vmatpush1.bf16.msra.mxu0 %v7338
    %8239 = vmatprep.subr.bf16.mxu0 %v7332
    %8240 = vmatpush1.bf16.msra.mxu0 %v7331
    %8241 = vmatprep.subr.bf16.mxu0 %v7325
    %8242 = vmatpush1.bf16.msra.mxu0 %v7324
    %8243 = vmatprep.subr.bf16.mxu0 %v7318
    %8244 = vmatpush1.bf16.msra.mxu0 %v7317
    %8245 = vmatprep.subr.bf16.mxu0 %v7311
    %8246 = vmatpush1.bf16.msra.mxu0 %v7310
    %8247 = vmatprep.subr.bf16.mxu0 %v7304
    %8248 = vmatpush1.bf16.msra.mxu0 %v7303
    %8249 = vmatprep.subr.bf16.mxu0 %v7297
    %8250 = vmatpush1.bf16.msra.mxu0 %v7296
    %8251 = vmatprep.subr.bf16.mxu0 %v7402
    %8252 = vmatpush2.bf16.msra.mxu0 %v7401
    %8253 = vmatprep.subr.bf16.mxu0 %v7395
    %8254 = vmatpush2.bf16.msra.mxu0 %v7394
    %8255 = vmatprep.subr.bf16.mxu0 %v7388
    %8256 = vmatpush2.bf16.msra.mxu0 %v7387
    %8257 = vmatprep.subr.bf16.mxu0 %v7381
    %8258 = vmatpush2.bf16.msra.mxu0 %v7380
    %8259 = vmatprep.subr.bf16.mxu0 %v7374
    %8260 = vmatpush2.bf16.msra.mxu0 %v7373
    %8261 = vmatprep.subr.bf16.mxu0 %v7367
    %8262 = vmatpush2.bf16.msra.mxu0 %v7366
    %8263 = vmatprep.subr.bf16.mxu0 %v7360
    %8264 = vmatpush2.bf16.msra.mxu0 %v7359
    %8265 = vmatprep.subr.bf16.mxu0 %v7353
    %8266 = vmatpush2.bf16.msra.mxu0 %v7352
    %8267 = vmatprep.mubr.bf16.mxu0 %v463
    %8268 = vmatmul.mubr.bf16.gmra.mxu0 %v462
    %v8269 = vpop.f32.mrf.mxu0
    %v8270 = vadd.f32 %v8229, %v8269
    %v8271 = vpop.f32.mrf.mxu0
    %v8272 = vadd.f32 %v8231, %v8271
    %v8273 = vpop.f32.mrf.mxu0
    %v8274 = vpop.f32.mrf.mxu0
    %8275 = vdwg.mxu0
    %8276 = vmatprep.subr.bf16.mxu0 %v7458
    %8277 = vmatpush1.bf16.msra.mxu0 %v7457
    %8278 = vmatprep.subr.bf16.mxu0 %v7451
    %8279 = vmatpush1.bf16.msra.mxu0 %v7450
    %8280 = vmatprep.subr.bf16.mxu0 %v7444
    %8281 = vmatpush1.bf16.msra.mxu0 %v7443
    %8282 = vmatprep.subr.bf16.mxu0 %v7437
    %8283 = vmatpush1.bf16.msra.mxu0 %v7436
    %8284 = vmatprep.subr.bf16.mxu0 %v7430
    %8285 = vmatpush1.bf16.msra.mxu0 %v7429
    %8286 = vmatprep.subr.bf16.mxu0 %v7423
    %8287 = vmatpush1.bf16.msra.mxu0 %v7422
    %8288 = vmatprep.subr.bf16.mxu0 %v7416
    %8289 = vmatpush1.bf16.msra.mxu0 %v7415
    %8290 = vmatprep.subr.bf16.mxu0 %v7409
    %8291 = vmatpush1.bf16.msra.mxu0 %v7408
    %8292 = vmatprep.subr.bf16.mxu0 %v7514
    %8293 = vmatpush2.bf16.msra.mxu0 %v7513
    %8294 = vmatprep.subr.bf16.mxu0 %v7507
    %8295 = vmatpush2.bf16.msra.mxu0 %v7506
    %8296 = vmatprep.subr.bf16.mxu0 %v7500
    %8297 = vmatpush2.bf16.msra.mxu0 %v7499
    %8298 = vmatprep.subr.bf16.mxu0 %v7493
    %8299 = vmatpush2.bf16.msra.mxu0 %v7492
    %8300 = vmatprep.subr.bf16.mxu0 %v7486
    %8301 = vmatpush2.bf16.msra.mxu0 %v7485
    %8302 = vmatprep.subr.bf16.mxu0 %v7479
    %8303 = vmatpush2.bf16.msra.mxu0 %v7478
    %8304 = vmatprep.subr.bf16.mxu0 %v7472
    %8305 = vmatpush2.bf16.msra.mxu0 %v7471
    %8306 = vmatprep.subr.bf16.mxu0 %v7465
    %8307 = vmatpush2.bf16.msra.mxu0 %v7464
    %8308 = vmatprep.mubr.bf16.mxu0 %v465
    %8309 = vmatmul.mubr.bf16.gmra.mxu0 %v464
    %v8310 = vpop.f32.mrf.mxu0
    %v8311 = vadd.f32 %v8270, %v8310
    %v8312 = vpop.f32.mrf.mxu0
    %v8313 = vadd.f32 %v8272, %v8312
    %v8314 = vpop.f32.mrf.mxu0
    %v8315 = vpop.f32.mrf.mxu0
    %8316 = vdwg.mxu0
    %8317 = vmatprep.subr.bf16.mxu0 0
    %8318 = vmatpush1.bf16.msra.mxu0 0
    %8319 = vmatprep.subr.bf16.mxu0 0
    %8320 = vmatpush1.bf16.msra.mxu0 0
    %8321 = vmatprep.subr.bf16.mxu0 0
    %8322 = vmatpush1.bf16.msra.mxu0 0
    %8323 = vmatprep.subr.bf16.mxu0 0
    %8324 = vmatpush1.bf16.msra.mxu0 0
    %8325 = vmatprep.subr.bf16.mxu0 0
    %8326 = vmatpush1.bf16.msra.mxu0 0
    %8327 = vmatprep.subr.bf16.mxu0 0
    %8328 = vmatpush1.bf16.msra.mxu0 0
    %8329 = vmatprep.subr.bf16.mxu0 0
    %8330 = vmatpush1.bf16.msra.mxu0 0
    %8331 = vmatprep.subr.bf16.mxu0 %v7521
    %8332 = vmatpush1.bf16.msra.mxu0 %v7520
    %8333 = vmatprep.subr.bf16.mxu0 0
    %8334 = vmatpush2.bf16.msra.mxu0 0
    %8335 = vmatprep.subr.bf16.mxu0 0
    %8336 = vmatpush2.bf16.msra.mxu0 0
    %8337 = vmatprep.subr.bf16.mxu0 0
    %8338 = vmatpush2.bf16.msra.mxu0 0
    %8339 = vmatprep.subr.bf16.mxu0 0
    %8340 = vmatpush2.bf16.msra.mxu0 0
    %8341 = vmatprep.subr.bf16.mxu0 0
    %8342 = vmatpush2.bf16.msra.mxu0 0
    %8343 = vmatprep.subr.bf16.mxu0 0
    %8344 = vmatpush2.bf16.msra.mxu0 0
    %8345 = vmatprep.subr.bf16.mxu0 0
    %8346 = vmatpush2.bf16.msra.mxu0 0
    %8347 = vmatprep.subr.bf16.mxu0 0
    %8348 = vmatpush2.bf16.msra.mxu0 0
    %8349 = vmatprep.mubr.bf16.mxu0 0
    %8350 = vmatmul.mubr.bf16.gmra.mxu0 %v2239
    %v8351 = vpop.f32.mrf.mxu0
    %v8352 = vadd.f32 %v8311, %v8351
    %v8353 = vpop.f32.mrf.mxu0
    %v8354 = vadd.f32 %v8313, %v8353
    %v8355 = vpop.f32.mrf.mxu0
    %v8356 = vpop.f32.mrf.mxu0
    %8357 = vdwg.mxu0
    %8358 = vmatprep.subr.bf16.mxu0 0
    %8359 = vmatpush1.bf16.msra.mxu0 %v7235
    %8360 = vmatprep.subr.bf16.mxu0 0
    %8361 = vmatpush1.bf16.msra.mxu0 %v7228
    %8362 = vmatprep.subr.bf16.mxu0 0
    %8363 = vmatpush1.bf16.msra.mxu0 %v7221
    %8364 = vmatprep.subr.bf16.mxu0 0
    %8365 = vmatpush1.bf16.msra.mxu0 %v7214
    %8366 = vmatprep.subr.bf16.mxu0 0
    %8367 = vmatpush1.bf16.msra.mxu0 %v7207
    %8368 = vmatprep.subr.bf16.mxu0 0
    %8369 = vmatpush1.bf16.msra.mxu0 %v7200
    %8370 = vmatprep.subr.bf16.mxu0 0
    %8371 = vmatpush1.bf16.msra.mxu0 %v7193
    %8372 = vmatprep.subr.bf16.mxu0 0
    %8373 = vmatpush1.bf16.msra.mxu0 %v7186
    %8374 = vmatprep.subr.bf16.mxu0 0
    %8375 = vmatpush2.bf16.msra.mxu0 %v7291
    %8376 = vmatprep.subr.bf16.mxu0 0
    %8377 = vmatpush2.bf16.msra.mxu0 %v7284
    %8378 = vmatprep.subr.bf16.mxu0 0
    %8379 = vmatpush2.bf16.msra.mxu0 %v7277
    %8380 = vmatprep.subr.bf16.mxu0 0
    %8381 = vmatpush2.bf16.msra.mxu0 %v7270
    %8382 = vmatprep.subr.bf16.mxu0 0
    %8383 = vmatpush2.bf16.msra.mxu0 %v7263
    %8384 = vmatprep.subr.bf16.mxu0 0
    %8385 = vmatpush2.bf16.msra.mxu0 %v7256
    %8386 = vmatprep.subr.bf16.mxu0 0
    %8387 = vmatpush2.bf16.msra.mxu0 %v7249
    %8388 = vmatprep.subr.bf16.mxu0 0
    %8389 = vmatpush2.bf16.msra.mxu0 %v7242
    %8390 = vmatprep.mubr.bf16.mxu0 %v461
    %8391 = vmatmul.mubr.bf16.gmra.mxu0 %v460
    %v8392 = vpop.f32.mrf.mxu0
    %v8393 = vadd.f32 0.0, %v8392
    %v8394 = vpop.f32.mrf.mxu0
    %v8395 = vpop.f32.mrf.mxu0
    %v8396 = vpop.f32.mrf.mxu0
    %8397 = vdwg.mxu0
    %8398 = vmatprep.subr.bf16.mxu0 0
    %8399 = vmatpush1.bf16.msra.mxu0 %v7347
    %8400 = vmatprep.subr.bf16.mxu0 0
    %8401 = vmatpush1.bf16.msra.mxu0 %v7340
    %8402 = vmatprep.subr.bf16.mxu0 0
    %8403 = vmatpush1.bf16.msra.mxu0 %v7333
    %8404 = vmatprep.subr.bf16.mxu0 0
    %8405 = vmatpush1.bf16.msra.mxu0 %v7326
    %8406 = vmatprep.subr.bf16.mxu0 0
    %8407 = vmatpush1.bf16.msra.mxu0 %v7319
    %8408 = vmatprep.subr.bf16.mxu0 0
    %8409 = vmatpush1.bf16.msra.mxu0 %v7312
    %8410 = vmatprep.subr.bf16.mxu0 0
    %8411 = vmatpush1.bf16.msra.mxu0 %v7305
    %8412 = vmatprep.subr.bf16.mxu0 0
    %8413 = vmatpush1.bf16.msra.mxu0 %v7298
    %8414 = vmatprep.subr.bf16.mxu0 0
    %8415 = vmatpush2.bf16.msra.mxu0 %v7403
    %8416 = vmatprep.subr.bf16.mxu0 0
    %8417 = vmatpush2.bf16.msra.mxu0 %v7396
    %8418 = vmatprep.subr.bf16.mxu0 0
    %8419 = vmatpush2.bf16.msra.mxu0 %v7389
    %8420 = vmatprep.subr.bf16.mxu0 0
    %8421 = vmatpush2.bf16.msra.mxu0 %v7382
    %8422 = vmatprep.subr.bf16.mxu0 0
    %8423 = vmatpush2.bf16.msra.mxu0 %v7375
    %8424 = vmatprep.subr.bf16.mxu0 0
    %8425 = vmatpush2.bf16.msra.mxu0 %v7368
    %8426 = vmatprep.subr.bf16.mxu0 0
    %8427 = vmatpush2.bf16.msra.mxu0 %v7361
    %8428 = vmatprep.subr.bf16.mxu0 0
    %8429 = vmatpush2.bf16.msra.mxu0 %v7354
    %8430 = vmatprep.mubr.bf16.mxu0 %v463
    %8431 = vmatmul.mubr.bf16.gmra.mxu0 %v462
    %v8432 = vpop.f32.mrf.mxu0
    %v8433 = vadd.f32 %v8393, %v8432
    %v8434 = vpop.f32.mrf.mxu0
    %v8435 = vpop.f32.mrf.mxu0
    %v8436 = vpop.f32.mrf.mxu0
    %8437 = vdwg.mxu0
    %8438 = vmatprep.subr.bf16.mxu0 0
    %8439 = vmatpush1.bf16.msra.mxu0 %v7459
    %8440 = vmatprep.subr.bf16.mxu0 0
    %8441 = vmatpush1.bf16.msra.mxu0 %v7452
    %8442 = vmatprep.subr.bf16.mxu0 0
    %8443 = vmatpush1.bf16.msra.mxu0 %v7445
    %8444 = vmatprep.subr.bf16.mxu0 0
    %8445 = vmatpush1.bf16.msra.mxu0 %v7438
    %8446 = vmatprep.subr.bf16.mxu0 0
    %8447 = vmatpush1.bf16.msra.mxu0 %v7431
    %8448 = vmatprep.subr.bf16.mxu0 0
    %8449 = vmatpush1.bf16.msra.mxu0 %v7424
    %8450 = vmatprep.subr.bf16.mxu0 0
    %8451 = vmatpush1.bf16.msra.mxu0 %v7417
    %8452 = vmatprep.subr.bf16.mxu0 0
    %8453 = vmatpush1.bf16.msra.mxu0 %v7410
    %8454 = vmatprep.subr.bf16.mxu0 0
    %8455 = vmatpush2.bf16.msra.mxu0 %v7515
    %8456 = vmatprep.subr.bf16.mxu0 0
    %8457 = vmatpush2.bf16.msra.mxu0 %v7508
    %8458 = vmatprep.subr.bf16.mxu0 0
    %8459 = vmatpush2.bf16.msra.mxu0 %v7501
    %8460 = vmatprep.subr.bf16.mxu0 0
    %8461 = vmatpush2.bf16.msra.mxu0 %v7494
    %8462 = vmatprep.subr.bf16.mxu0 0
    %8463 = vmatpush2.bf16.msra.mxu0 %v7487
    %8464 = vmatprep.subr.bf16.mxu0 0
    %8465 = vmatpush2.bf16.msra.mxu0 %v7480
    %8466 = vmatprep.subr.bf16.mxu0 0
    %8467 = vmatpush2.bf16.msra.mxu0 %v7473
    %8468 = vmatprep.subr.bf16.mxu0 0
    %8469 = vmatpush2.bf16.msra.mxu0 %v7466
    %8470 = vmatprep.mubr.bf16.mxu0 %v465
    %8471 = vmatmul.mubr.bf16.gmra.mxu0 %v464
    %v8472 = vpop.f32.mrf.mxu0
    %v8473 = vadd.f32 %v8433, %v8472
    %v8474 = vpop.f32.mrf.mxu0
    %v8475 = vpop.f32.mrf.mxu0
    %v8476 = vpop.f32.mrf.mxu0
    %8477 = vdwg.mxu0
    %8478 = vmatprep.subr.bf16.mxu0 0
    %8479 = vmatpush1.bf16.msra.mxu0 0
    %8480 = vmatprep.subr.bf16.mxu0 0
    %8481 = vmatpush1.bf16.msra.mxu0 0
    %8482 = vmatprep.subr.bf16.mxu0 0
    %8483 = vmatpush1.bf16.msra.mxu0 0
    %8484 = vmatprep.subr.bf16.mxu0 0
    %8485 = vmatpush1.bf16.msra.mxu0 0
    %8486 = vmatprep.subr.bf16.mxu0 0
    %8487 = vmatpush1.bf16.msra.mxu0 0
    %8488 = vmatprep.subr.bf16.mxu0 0
    %8489 = vmatpush1.bf16.msra.mxu0 0
    %8490 = vmatprep.subr.bf16.mxu0 0
    %8491 = vmatpush1.bf16.msra.mxu0 0
    %8492 = vmatprep.subr.bf16.mxu0 0
    %8493 = vmatpush1.bf16.msra.mxu0 %v7522
    %8494 = vmatprep.subr.bf16.mxu0 0
    %8495 = vmatpush2.bf16.msra.mxu0 0
    %8496 = vmatprep.subr.bf16.mxu0 0
    %8497 = vmatpush2.bf16.msra.mxu0 0
    %8498 = vmatprep.subr.bf16.mxu0 0
    %8499 = vmatpush2.bf16.msra.mxu0 0
    %8500 = vmatprep.subr.bf16.mxu0 0
    %8501 = vmatpush2.bf16.msra.mxu0 0
    %8502 = vmatprep.subr.bf16.mxu0 0
    %8503 = vmatpush2.bf16.msra.mxu0 0
    %8504 = vmatprep.subr.bf16.mxu0 0
    %8505 = vmatpush2.bf16.msra.mxu0 0
    %8506 = vmatprep.subr.bf16.mxu0 0
    %8507 = vmatpush2.bf16.msra.mxu0 0
    %8508 = vmatprep.subr.bf16.mxu0 0
    %8509 = vmatpush2.bf16.msra.mxu0 0
    %8510 = vmatprep.mubr.bf16.mxu0 0
    %8511 = vmatmul.mubr.bf16.gmra.mxu0 %v2239
    %v8512 = vpop.f32.mrf.mxu0
    %v8513 = vadd.f32 %v8473, %v8512
    %v8514 = vpop.f32.mrf.mxu0
    %v8515 = vpop.f32.mrf.mxu0
    %v8516 = vpop.f32.mrf.mxu0
    %8517 = vdwg.mxu0
    %v8518 = vmax.f32 %v5702, %v8024
    %v8519 = vmax.f32 %v5703, %v8026
    %v8520 = vmax.f32 %v5704, %v8188
    %v8521 = vmax.f32 %v5705, %v8190
    %v8522 = vmax.f32 %v5706, %v8352
    %v8523 = vmax.f32 %v5707, %v8354
    %v8524 = vmax.f32 %v5708, %v8513
    %s8525 = scalar_lea.vmem [#allocation2], 8232
    %v8526 = vld [vmem:[%s8525] sm:$0xff]
    %v8527 = vld [vmem:[%s8525 + $0x8] sm:$0xff]
    %v8528 = vld [vmem:[%s8525 + $0x10] sm:$0xff]
    %v8529 = vld [vmem:[%s8525 + $0x18] sm:$0xf]
    %v8530 = vld [vmem:[%s8525 + $0x1c] sm:$0xff]
    %v8531 = vld [vmem:[%s8525 + $0x24] sm:$0xff]
    %v8532 = vld [vmem:[%s8525 + $0x2c] sm:$0xff]
    %v8533 = vld [vmem:[%s8525 + $0x34] sm:$0xf]
    %v8534 = vld [vmem:[%s8525 + $0x38] sm:$0xff]
    %v8535 = vld [vmem:[%s8525 + $0x40] sm:$0xff]
    %v8536 = vld [vmem:[%s8525 + $0x48] sm:$0xff]
    %v8537 = vld [vmem:[%s8525 + $0x50] sm:$0xf]
    %v8538 = vld [vmem:[%s8525 + $0x54] sm:$0xff]
    %v8539 = vld [vmem:[%s8525 + $0x5c] sm:$0xff]
    %v8540 = vld [vmem:[%s8525 + $0x64] sm:$0xff]
    %v8541 = vld [vmem:[%s8525 + $0x6c] sm:$0xf]
    %v8542 = vld [vmem:[%s8525 + $0x70] sm:$0xff]
    %v8543 = vld [vmem:[%s8525 + $0x78] sm:$0xff]
    %v8544 = vld [vmem:[%s8525 + $0x80] sm:$0xff]
    %v8545 = vld [vmem:[%s8525 + $0x88] sm:$0xf]
    %v8546 = vld [vmem:[%s8525 + $0x8c] sm:$0xff]
    %v8547 = vld [vmem:[%s8525 + $0x94] sm:$0xff]
    %v8548 = vld [vmem:[%s8525 + $0x9c] sm:$0xff]
    %v8549 = vld [vmem:[%s8525 + $0xa4] sm:$0xf]
    %v8550 = vld [vmem:[%s8525 + $0xa8] sm:$0xff]
    %v8551 = vld [vmem:[%s8525 + $0xb0] sm:$0xff]
    %v8552 = vld [vmem:[%s8525 + $0xb8] sm:$0xff]
    %v8553 = vld [vmem:[%s8525 + $0xc0] sm:$0xf]
    %v8554 = vld [vmem:[%s8525 + $0xc4] sm:$0xff]
    %v8555 = vld [vmem:[%s8525 + $0xcc] sm:$0xff]
    %v8556 = vld [vmem:[%s8525 + $0xd4] sm:$0xff]
    %v8557 = vld [vmem:[%s8525 + $0xdc] sm:$0xf]
    %v8558 = vld [vmem:[%s8525 + $0xe0] sm:$0xff]
    %v8559 = vld [vmem:[%s8525 + $0xe8] sm:$0xff]
    %v8560 = vld [vmem:[%s8525 + $0xf0] sm:$0xff]
    %v8561 = vld [vmem:[%s8525 + $0xf8] sm:$0xf]
    %v8562 = vld [vmem:[%s8525 + $0xfc] sm:$0xff]
    %v8563 = vld [vmem:[%s8525 + $0x104] sm:$0xff]
    %v8564 = vld [vmem:[%s8525 + $0x10c] sm:$0xff]
    %v8565 = vld [vmem:[%s8525 + $0x114] sm:$0xf]
    %v8566 = vld [vmem:[%s8525 + $0x118] sm:$0xff]
    %v8567 = vld [vmem:[%s8525 + $0x120] sm:$0xff]
    %v8568 = vld [vmem:[%s8525 + $0x128] sm:$0xff]
    %v8569 = vld [vmem:[%s8525 + $0x130] sm:$0xf]
    %v8570 = vld [vmem:[%s8525 + $0x134] sm:$0xff]
    %v8571 = vld [vmem:[%s8525 + $0x13c] sm:$0xff]
    %v8572 = vld [vmem:[%s8525 + $0x144] sm:$0xff]
    %v8573 = vld [vmem:[%s8525 + $0x14c] sm:$0xf]
    %v8574 = vld [vmem:[%s8525 + $0x150] sm:$0xff]
    %v8575 = vld [vmem:[%s8525 + $0x158] sm:$0xff]
    %v8576 = vld [vmem:[%s8525 + $0x160] sm:$0xff]
    %v8577 = vld [vmem:[%s8525 + $0x168] sm:$0xf]
    %v8578 = vld [vmem:[%s8525 + $0x16c] sm:$0xff]
    %v8579 = vld [vmem:[%s8525 + $0x174] sm:$0xff]
    %v8580 = vld [vmem:[%s8525 + $0x17c] sm:$0xff]
    %v8581 = vld [vmem:[%s8525 + $0x184] sm:$0xf]
    %v8582 = vld [vmem:[%s8525 + $0x188] sm:$0xff]
    %v8583 = vld [vmem:[%s8525 + $0x190] sm:$0xff]
    %v8584 = vld [vmem:[%s8525 + $0x198] sm:$0xff]
    %v8585 = vld [vmem:[%s8525 + $0x1a0] sm:$0xf]
    %v8586 = vld [vmem:[%s8525 + $0x1a4] sm:$0xff]
    %v8587 = vld [vmem:[%s8525 + $0x1ac] sm:$0xff]
    %v8588 = vld [vmem:[%s8525 + $0x1b4] sm:$0xff]
    %v8589 = vld [vmem:[%s8525 + $0x1bc] sm:$0xf]
    %v8590 = vld [vmem:[%s8525 + $0x1c0] sm:$0xff]
    %v8591 = vld [vmem:[%s8525 + $0x1c8] sm:$0xff]
    %v8592 = vld [vmem:[%s8525 + $0x1d0] sm:$0xff]
    %v8593 = vld [vmem:[%s8525 + $0x1d8] sm:$0xf]
    %v8594 = vld [vmem:[%s8525 + $0x1dc] sm:$0xff]
    %v8595 = vld [vmem:[%s8525 + $0x1e4] sm:$0xff]
    %v8596 = vld [vmem:[%s8525 + $0x1ec] sm:$0xff]
    %v8597 = vld [vmem:[%s8525 + $0x1f4] sm:$0xf]
    %v8598 = vld [vmem:[%s8525 + $0x1f8] sm:$0xff]
    %v8599 = vld [vmem:[%s8525 + $0x200] sm:$0xff]
    %v8600 = vld [vmem:[%s8525 + $0x208] sm:$0xff]
    %v8601 = vld [vmem:[%s8525 + $0x210] sm:$0xf]
    %v8602 = vld [vmem:[%s8525 + $0x214] sm:$0xff]
    %v8603 = vld [vmem:[%s8525 + $0x21c] sm:$0xff]
    %v8604 = vld [vmem:[%s8525 + $0x224] sm:$0xff]
    %v8605 = vld [vmem:[%s8525 + $0x22c] sm:$0xf]
    %v8606 = vld [vmem:[%s8525 + $0x230] sm:$0xff]
    %v8607 = vld [vmem:[%s8525 + $0x238] sm:$0xff]
    %v8608 = vld [vmem:[%s8525 + $0x240] sm:$0xff]
    %v8609 = vld [vmem:[%s8525 + $0x248] sm:$0xf]
    %v8610 = vld [vmem:[%s8525 + $0x24c] sm:$0xff]
    %v8611 = vld [vmem:[%s8525 + $0x254] sm:$0xff]
    %v8612 = vld [vmem:[%s8525 + $0x25c] sm:$0xff]
    %v8613 = vld [vmem:[%s8525 + $0x264] sm:$0xf]
    %v8614 = vld [vmem:[%s8525 + $0x268] sm:$0xff]
    %v8615 = vld [vmem:[%s8525 + $0x270] sm:$0xff]
    %v8616 = vld [vmem:[%s8525 + $0x278] sm:$0xff]
    %v8617 = vld [vmem:[%s8525 + $0x280] sm:$0xf]
    %v8618 = vld [vmem:[%s8525 + $0x284] sm:$0xff]
    %v8619 = vld [vmem:[%s8525 + $0x28c] sm:$0xff]
    %v8620 = vld [vmem:[%s8525 + $0x294] sm:$0xff]
    %v8621 = vld [vmem:[%s8525 + $0x29c] sm:$0xf]
    %v8622 = vld [vmem:[%s8525 + $0x2a0] sm:$0xff]
    %v8623 = vld [vmem:[%s8525 + $0x2a8] sm:$0xff]
    %v8624 = vld [vmem:[%s8525 + $0x2b0] sm:$0xff]
    %v8625 = vld [vmem:[%s8525 + $0x2b8] sm:$0xf]
    %v8626 = vld [vmem:[%s8525 + $0x2bc] sm:$0xff]
    %v8627 = vld [vmem:[%s8525 + $0x2c4] sm:$0xff]
    %v8628 = vld [vmem:[%s8525 + $0x2cc] sm:$0xff]
    %v8629 = vld [vmem:[%s8525 + $0x2d4] sm:$0xf]
    %v8630 = vld [vmem:[%s8525 + $0x2d8] sm:$0xff]
    %v8631 = vld [vmem:[%s8525 + $0x2e0] sm:$0xff]
    %v8632 = vld [vmem:[%s8525 + $0x2e8] sm:$0xff]
    %v8633 = vld [vmem:[%s8525 + $0x2f0] sm:$0xf]
    %v8634 = vld [vmem:[%s8525 + $0x2f4] sm:$0xff]
    %v8635 = vld [vmem:[%s8525 + $0x2fc] sm:$0xff]
    %v8636 = vld [vmem:[%s8525 + $0x304] sm:$0xff]
    %v8637 = vld [vmem:[%s8525 + $0x30c] sm:$0xf]
    %v8638 = vld [vmem:[%s8525 + $0x310] sm:$0xff]
    %v8639 = vld [vmem:[%s8525 + $0x318] sm:$0xff]
    %v8640 = vld [vmem:[%s8525 + $0x320] sm:$0xff]
    %v8641 = vld [vmem:[%s8525 + $0x328] sm:$0xf]
    %v8642 = vld [vmem:[%s8525 + $0x32c] sm:$0xff]
    %v8643 = vld [vmem:[%s8525 + $0x334] sm:$0xff]
    %v8644 = vld [vmem:[%s8525 + $0x33c] sm:$0xff]
    %v8645 = vld [vmem:[%s8525 + $0x344] sm:$0xf]
    %v8646 = vld [vmem:[%s8525 + $0x348] sm:$0xff]
    %v8647 = vld [vmem:[%s8525 + $0x350] sm:$0xff]
    %v8648 = vld [vmem:[%s8525 + $0x358] sm:$0xff]
    %v8649 = vld [vmem:[%s8525 + $0x360] sm:$0xf]
    %v8650 = vld [vmem:[%s8525 + $0x364] sm:$0xff]
    %v8651 = vld [vmem:[%s8525 + $0x36c] sm:$0xff]
    %v8652 = vld [vmem:[%s8525 + $0x374] sm:$0xff]
    %v8653 = vld [vmem:[%s8525 + $0x37c] sm:$0xf]
    %v8654 = vld [vmem:[%s8525 + $0x380] sm:$0xff]
    %v8655 = vld [vmem:[%s8525 + $0x388] sm:$0xff]
    %v8656 = vld [vmem:[%s8525 + $0x390] sm:$0xff]
    %v8657 = vld [vmem:[%s8525 + $0x398] sm:$0xf]
    %v8658 = vld [vmem:[%s8525 + $0x39c] sm:$0xff]
    %v8659 = vld [vmem:[%s8525 + $0x3a4] sm:$0xff]
    %v8660 = vld [vmem:[%s8525 + $0x3ac] sm:$0xff]
    %v8661 = vld [vmem:[%s8525 + $0x3b4] sm:$0xf]
    %v8662 = vld [vmem:[%s8525 + $0x3b8] sm:$0xff]
    %v8663 = vld [vmem:[%s8525 + $0x3c0] sm:$0xff]
    %v8664 = vld [vmem:[%s8525 + $0x3c8] sm:$0xff]
    %v8665 = vld [vmem:[%s8525 + $0x3d0] sm:$0xf]
    %v8666 = vld [vmem:[%s8525 + $0x3d4] sm:$0xff]
    %v8667 = vld [vmem:[%s8525 + $0x3dc] sm:$0xff]
    %v8668 = vld [vmem:[%s8525 + $0x3e4] sm:$0xff]
    %v8669 = vld [vmem:[%s8525 + $0x3ec] sm:$0xf]
    %v8670 = vld [vmem:[%s8525 + $0x3f0] sm:$0xff]
    %v8671 = vld [vmem:[%s8525 + $0x3f8] sm:$0xff]
    %v8672 = vld [vmem:[%s8525 + $0x400] sm:$0xff]
    %v8673 = vld [vmem:[%s8525 + $0x408] sm:$0xf]
    %v8674 = vld [vmem:[%s8525 + $0x40c] sm:$0xff]
    %v8675 = vld [vmem:[%s8525 + $0x414] sm:$0xff]
    %v8676 = vld [vmem:[%s8525 + $0x41c] sm:$0xff]
    %v8677 = vld [vmem:[%s8525 + $0x424] sm:$0xf]
    %v8678 = vld [vmem:[%s8525 + $0x428] sm:$0xff]
    %v8679 = vld [vmem:[%s8525 + $0x430] sm:$0xff]
    %v8680 = vld [vmem:[%s8525 + $0x438] sm:$0xff]
    %v8681 = vld [vmem:[%s8525 + $0x440] sm:$0xf]
    %v8682 = vld [vmem:[%s8525 + $0x444] sm:$0xff]
    %v8683 = vld [vmem:[%s8525 + $0x44c] sm:$0xff]
    %v8684 = vld [vmem:[%s8525 + $0x454] sm:$0xff]
    %v8685 = vld [vmem:[%s8525 + $0x45c] sm:$0xf]
    %v8686 = vld [vmem:[%s8525 + $0x460] sm:$0xff]
    %v8687 = vld [vmem:[%s8525 + $0x468] sm:$0xff]
    %v8688 = vld [vmem:[%s8525 + $0x470] sm:$0xff]
    %v8689 = vld [vmem:[%s8525 + $0x478] sm:$0xf]
    %v8690 = vld [vmem:[%s8525 + $0x47c] sm:$0xff]
    %v8691 = vld [vmem:[%s8525 + $0x484] sm:$0xff]
    %v8692 = vld [vmem:[%s8525 + $0x48c] sm:$0xff]
    %v8693 = vld [vmem:[%s8525 + $0x494] sm:$0xf]
    %v8694 = vld [vmem:[%s8525 + $0x498] sm:$0xff]
    %v8695 = vld [vmem:[%s8525 + $0x4a0] sm:$0xff]
    %v8696 = vld [vmem:[%s8525 + $0x4a8] sm:$0xff]
    %v8697 = vld [vmem:[%s8525 + $0x4b0] sm:$0xf]
    %v8698 = vld [vmem:[%s8525 + $0x4b4] sm:$0xff]
    %v8699 = vld [vmem:[%s8525 + $0x4bc] sm:$0xff]
    %v8700 = vld [vmem:[%s8525 + $0x4c4] sm:$0xff]
    %v8701 = vld [vmem:[%s8525 + $0x4cc] sm:$0xf]
    %v8702 = vld [vmem:[%s8525 + $0x4d0] sm:$0xff]
    %v8703 = vld [vmem:[%s8525 + $0x4d8] sm:$0xff]
    %v8704 = vld [vmem:[%s8525 + $0x4e0] sm:$0xff]
    %v8705 = vld [vmem:[%s8525 + $0x4e8] sm:$0xf]
    %v8706 = vld [vmem:[%s8525 + $0x4ec] sm:$0xff]
    %v8707 = vld [vmem:[%s8525 + $0x4f4] sm:$0xff]
    %v8708 = vld [vmem:[%s8525 + $0x4fc] sm:$0xff]
    %v8709 = vld [vmem:[%s8525 + $0x504] sm:$0xf]
    %v8710 = vld [vmem:[%s8525 + $0x508] sm:$0xff]
    %v8711 = vld [vmem:[%s8525 + $0x510] sm:$0xff]
    %v8712 = vld [vmem:[%s8525 + $0x518] sm:$0xff]
    %v8713 = vld [vmem:[%s8525 + $0x520] sm:$0xf]
    %v8714 = vld [vmem:[%s8525 + $0x524] sm:$0xff]
    %v8715 = vld [vmem:[%s8525 + $0x52c] sm:$0xff]
    %v8716 = vld [vmem:[%s8525 + $0x534] sm:$0xff]
    %v8717 = vld [vmem:[%s8525 + $0x53c] sm:$0xf]
    %v8718 = vld [vmem:[%s8525 + $0x540] sm:$0xff]
    %v8719 = vld [vmem:[%s8525 + $0x548] sm:$0xff]
    %v8720 = vld [vmem:[%s8525 + $0x550] sm:$0xff]
    %v8721 = vld [vmem:[%s8525 + $0x558] sm:$0xf]
    %v8722 = vld [vmem:[%s8525 + $0x55c] sm:$0xff]
    %v8723 = vld [vmem:[%s8525 + $0x564] sm:$0xff]
    %v8724 = vld [vmem:[%s8525 + $0x56c] sm:$0xff]
    %v8725 = vld [vmem:[%s8525 + $0x574] sm:$0xf]
    %v8726 = vld [vmem:[%s8525 + $0x578] sm:$0xff]
    %v8727 = vld [vmem:[%s8525 + $0x580] sm:$0xff]
    %v8728 = vld [vmem:[%s8525 + $0x588] sm:$0xff]
    %v8729 = vld [vmem:[%s8525 + $0x590] sm:$0xf]
    %v8730 = vld [vmem:[%s8525 + $0x594] sm:$0xff]
    %v8731 = vld [vmem:[%s8525 + $0x59c] sm:$0xff]
    %v8732 = vld [vmem:[%s8525 + $0x5a4] sm:$0xff]
    %v8733 = vld [vmem:[%s8525 + $0x5ac] sm:$0xf]
    %v8734 = vld [vmem:[%s8525 + $0x5b0] sm:$0xff]
    %v8735 = vld [vmem:[%s8525 + $0x5b8] sm:$0xff]
    %v8736 = vld [vmem:[%s8525 + $0x5c0] sm:$0xff]
    %v8737 = vld [vmem:[%s8525 + $0x5c8] sm:$0xf]
    %v8738 = vld [vmem:[%s8525 + $0x5cc] sm:$0xff]
    %v8739 = vld [vmem:[%s8525 + $0x5d4] sm:$0xff]
    %v8740 = vld [vmem:[%s8525 + $0x5dc] sm:$0xff]
    %v8741 = vld [vmem:[%s8525 + $0x5e4] sm:$0xf]
    %v8742 = vld [vmem:[%s8525 + $0x5e8] sm:$0xff]
    %v8743 = vld [vmem:[%s8525 + $0x5f0] sm:$0xff]
    %v8744 = vld [vmem:[%s8525 + $0x5f8] sm:$0xff]
    %v8745 = vld [vmem:[%s8525 + $0x600] sm:$0xf]
    %v8746 = vld [vmem:[%s8525 + $0x604] sm:$0xff]
    %v8747 = vld [vmem:[%s8525 + $0x60c] sm:$0xff]
    %v8748 = vld [vmem:[%s8525 + $0x614] sm:$0xff]
    %v8749 = vld [vmem:[%s8525 + $0x61c] sm:$0xf]
    %v8750 = vld [vmem:[%s8525 + $0x620] sm:$0xff]
    %v8751 = vld [vmem:[%s8525 + $0x628] sm:$0xff]
    %v8752 = vld [vmem:[%s8525 + $0x630] sm:$0xff]
    %v8753 = vld [vmem:[%s8525 + $0x638] sm:$0xf]
    %v8754 = vld [vmem:[%s8525 + $0x63c] sm:$0xff]
    %v8755 = vld [vmem:[%s8525 + $0x644] sm:$0xff]
    %v8756 = vld [vmem:[%s8525 + $0x64c] sm:$0xff]
    %v8757 = vld [vmem:[%s8525 + $0x654] sm:$0xf]
    %v8758 = vld [vmem:[%s8525 + $0x658] sm:$0xff]
    %v8759 = vld [vmem:[%s8525 + $0x660] sm:$0xff]
    %v8760 = vld [vmem:[%s8525 + $0x668] sm:$0xff]
    %v8761 = vld [vmem:[%s8525 + $0x670] sm:$0xf]
    %v8762 = vld [vmem:[%s8525 + $0x674] sm:$0xff]
    %v8763 = vld [vmem:[%s8525 + $0x67c] sm:$0xff]
    %v8764 = vld [vmem:[%s8525 + $0x684] sm:$0xff]
    %v8765 = vld [vmem:[%s8525 + $0x68c] sm:$0xf]
    %v8766 = vld [vmem:[%s8525 + $0x690] sm:$0xff]
    %v8767 = vld [vmem:[%s8525 + $0x698] sm:$0xff]
    %v8768 = vld [vmem:[%s8525 + $0x6a0] sm:$0xff]
    %v8769 = vld [vmem:[%s8525 + $0x6a8] sm:$0xf]
    %v8770 = vld [vmem:[%s8525 + $0x6ac] sm:$0xff]
    %v8771 = vld [vmem:[%s8525 + $0x6b4] sm:$0xff]
    %v8772 = vld [vmem:[%s8525 + $0x6bc] sm:$0xff]
    %v8773 = vld [vmem:[%s8525 + $0x6c4] sm:$0xf]
    %v8774 = vld [vmem:[%s8525 + $0x6c8] sm:$0xff]
    %v8775 = vld [vmem:[%s8525 + $0x6d0] sm:$0xff]
    %v8776 = vld [vmem:[%s8525 + $0x6d8] sm:$0xff]
    %v8777 = vld [vmem:[%s8525 + $0x6e0] sm:$0xf]
    %v8778 = vld [vmem:[%s8525 + $0x6e4] sm:$0xff]
    %v8779 = vld [vmem:[%s8525 + $0x6ec] sm:$0xff]
    %v8780 = vld [vmem:[%s8525 + $0x6f4] sm:$0xff]
    %v8781 = vld [vmem:[%s8525 + $0x6fc] sm:$0xf]
    %v8782 = vld [vmem:[%s8525 + $0x700] sm:$0xff]
    %v8783 = vld [vmem:[%s8525 + $0x708] sm:$0xff]
    %v8784 = vld [vmem:[%s8525 + $0x710] sm:$0xff]
    %v8785 = vld [vmem:[%s8525 + $0x718] sm:$0xf]
    %v8786 = vld [vmem:[%s8525 + $0x71c] sm:$0xff]
    %v8787 = vld [vmem:[%s8525 + $0x724] sm:$0xff]
    %v8788 = vld [vmem:[%s8525 + $0x72c] sm:$0xff]
    %v8789 = vld [vmem:[%s8525 + $0x734] sm:$0xf]
    %v8790 = vld [vmem:[%s8525 + $0x738] sm:$0xff]
    %v8791 = vld [vmem:[%s8525 + $0x740] sm:$0xff]
    %v8792 = vld [vmem:[%s8525 + $0x748] sm:$0xff]
    %v8793 = vld [vmem:[%s8525 + $0x750] sm:$0xf]
    %v8794 = vld [vmem:[%s8525 + $0x754] sm:$0xff]
    %v8795 = vld [vmem:[%s8525 + $0x75c] sm:$0xff]
    %v8796 = vld [vmem:[%s8525 + $0x764] sm:$0xff]
    %v8797 = vld [vmem:[%s8525 + $0x76c] sm:$0xf]
    %v8798 = vld [vmem:[%s8525 + $0x770] sm:$0xff]
    %v8799 = vld [vmem:[%s8525 + $0x778] sm:$0xff]
    %v8800 = vld [vmem:[%s8525 + $0x780] sm:$0xff]
    %v8801 = vld [vmem:[%s8525 + $0x788] sm:$0xf]
    %v8802 = vld [vmem:[%s8525 + $0x78c] sm:$0xff]
    %v8803 = vld [vmem:[%s8525 + $0x794] sm:$0xff]
    %v8804 = vld [vmem:[%s8525 + $0x79c] sm:$0xff]
    %v8805 = vld [vmem:[%s8525 + $0x7a4] sm:$0xf]
    %v8806 = vld [vmem:[%s8525 + $0x7a8] sm:$0xff]
    %v8807 = vld [vmem:[%s8525 + $0x7b0] sm:$0xff]
    %v8808 = vld [vmem:[%s8525 + $0x7b8] sm:$0xff]
    %v8809 = vld [vmem:[%s8525 + $0x7c0] sm:$0xf]
    %v8810 = vld [vmem:[%s8525 + $0x7c4] sm:$0xff]
    %v8811 = vld [vmem:[%s8525 + $0x7cc] sm:$0xff]
    %v8812 = vld [vmem:[%s8525 + $0x7d4] sm:$0xff]
    %v8813 = vld [vmem:[%s8525 + $0x7dc] sm:$0xf]
    %v8814 = vld [vmem:[%s8525 + $0x7e0] sm:$0xff]
    %v8815 = vld [vmem:[%s8525 + $0x7e8] sm:$0xff]
    %v8816 = vld [vmem:[%s8525 + $0x7f0] sm:$0xff]
    %v8817 = vld [vmem:[%s8525 + $0x7f8] sm:$0xf]
    %v8818 = vld [vmem:[%s8525 + $0x7fc] sm:$0xff]
    %v8819 = vld [vmem:[%s8525 + $0x804] sm:$0xff]
    %v8820 = vld [vmem:[%s8525 + $0x80c] sm:$0xff]
    %v8821 = vld [vmem:[%s8525 + $0x814] sm:$0xf]
    %v8822 = vld [vmem:[%s8525 + $0x818] sm:$0xff]
    %v8823 = vld [vmem:[%s8525 + $0x820] sm:$0xff]
    %v8824 = vld [vmem:[%s8525 + $0x828] sm:$0xff]
    %v8825 = vld [vmem:[%s8525 + $0x830] sm:$0xf]
    %v8826 = vld [vmem:[%s8525 + $0x834] sm:$0xff]
    %v8827 = vld [vmem:[%s8525 + $0x83c] sm:$0xff]
    %v8828 = vld [vmem:[%s8525 + $0x844] sm:$0xff]
    %v8829 = vld [vmem:[%s8525 + $0x84c] sm:$0xf]
    %v8830 = vld [vmem:[%s8525 + $0x850] sm:$0xff]
    %v8831 = vld [vmem:[%s8525 + $0x858] sm:$0xff]
    %v8832 = vld [vmem:[%s8525 + $0x860] sm:$0xff]
    %v8833 = vld [vmem:[%s8525 + $0x868] sm:$0xf]
    %v8834 = vld [vmem:[%s8525 + $0x86c] sm:$0xff]
    %v8835 = vld [vmem:[%s8525 + $0x874] sm:$0xff]
    %v8836 = vld [vmem:[%s8525 + $0x87c] sm:$0xff]
    %v8837 = vld [vmem:[%s8525 + $0x884] sm:$0xf]
    %v8838 = vld [vmem:[%s8525 + $0x888] sm:$0xff]
    %v8839 = vld [vmem:[%s8525 + $0x890] sm:$0xff]
    %v8840 = vld [vmem:[%s8525 + $0x898] sm:$0xff]
    %v8841 = vld [vmem:[%s8525 + $0x8a0] sm:$0xf]
    %v8842 = vld [vmem:[%s8525 + $0x8a4] sm:$0xff]
    %v8843 = vld [vmem:[%s8525 + $0x8ac] sm:$0xff]
    %v8844 = vld [vmem:[%s8525 + $0x8b4] sm:$0xff]
    %v8845 = vld [vmem:[%s8525 + $0x8bc] sm:$0xf]
    %v8846 = vld [vmem:[%s8525 + $0x8c0] sm:$0xff]
    %v8847 = vld [vmem:[%s8525 + $0x8c8] sm:$0xff]
    %v8848 = vld [vmem:[%s8525 + $0x8d0] sm:$0xff]
    %v8849 = vld [vmem:[%s8525 + $0x8d8] sm:$0xf]
    %v8850 = vld [vmem:[%s8525 + $0x8dc] sm:$0xff]
    %v8851 = vld [vmem:[%s8525 + $0x8e4] sm:$0xff]
    %v8852 = vld [vmem:[%s8525 + $0x8ec] sm:$0xff]
    %v8853 = vld [vmem:[%s8525 + $0x8f4] sm:$0xf]
    %v8854 = vld [vmem:[%s8525 + $0x8f8] sm:$0xff]
    %v8855 = vld [vmem:[%s8525 + $0x900] sm:$0xff]
    %v8856 = vld [vmem:[%s8525 + $0x908] sm:$0xff]
    %v8857 = vld [vmem:[%s8525 + $0x910] sm:$0xf]
    %v8858 = vld [vmem:[%s8525 + $0x914] sm:$0xff]
    %v8859 = vld [vmem:[%s8525 + $0x91c] sm:$0xff]
    %v8860 = vld [vmem:[%s8525 + $0x924] sm:$0xff]
    %v8861 = vld [vmem:[%s8525 + $0x92c] sm:$0xf]
    %v8862 = vld [vmem:[%s8525 + $0x930] sm:$0xff]
    %v8863 = vld [vmem:[%s8525 + $0x938] sm:$0xff]
    %v8864 = vld [vmem:[%s8525 + $0x940] sm:$0xff]
    %v8865 = vld [vmem:[%s8525 + $0x948] sm:$0xf]
    %v8866 = vld [vmem:[%s8525 + $0x94c] sm:$0xff]
    %v8867 = vld [vmem:[%s8525 + $0x954] sm:$0xff]
    %v8868 = vld [vmem:[%s8525 + $0x95c] sm:$0xff]
    %v8869 = vld [vmem:[%s8525 + $0x964] sm:$0xf]
    %v8870 = vld [vmem:[%s8525 + $0x968] sm:$0xff]
    %v8871 = vld [vmem:[%s8525 + $0x970] sm:$0xff]
    %v8872 = vld [vmem:[%s8525 + $0x978] sm:$0xff]
    %v8873 = vld [vmem:[%s8525 + $0x980] sm:$0xf]
    %v8874 = vld [vmem:[%s8525 + $0x984] sm:$0xff]
    %v8875 = vld [vmem:[%s8525 + $0x98c] sm:$0xff]
    %v8876 = vld [vmem:[%s8525 + $0x994] sm:$0xff]
    %v8877 = vld [vmem:[%s8525 + $0x99c] sm:$0xf]
    %v8878 = vld [vmem:[%s8525 + $0x9a0] sm:$0xff]
    %v8879 = vld [vmem:[%s8525 + $0x9a8] sm:$0xff]
    %v8880 = vld [vmem:[%s8525 + $0x9b0] sm:$0xff]
    %v8881 = vld [vmem:[%s8525 + $0x9b8] sm:$0xf]
    %v8882 = vld [vmem:[%s8525 + $0x9bc] sm:$0xff]
    %v8883 = vld [vmem:[%s8525 + $0x9c4] sm:$0xff]
    %v8884 = vld [vmem:[%s8525 + $0x9cc] sm:$0xff]
    %v8885 = vld [vmem:[%s8525 + $0x9d4] sm:$0xf]
    %v8886 = vld [vmem:[%s8525 + $0x9d8] sm:$0xff]
    %v8887 = vld [vmem:[%s8525 + $0x9e0] sm:$0xff]
    %v8888 = vld [vmem:[%s8525 + $0x9e8] sm:$0xff]
    %v8889 = vld [vmem:[%s8525 + $0x9f0] sm:$0xf]
    %v8890 = vld [vmem:[%s8525 + $0x9f4] sm:$0xff]
    %v8891 = vld [vmem:[%s8525 + $0x9fc] sm:$0xff]
    %v8892 = vld [vmem:[%s8525 + $0xa04] sm:$0xff]
    %v8893 = vld [vmem:[%s8525 + $0xa0c] sm:$0xf]
    %v8894 = vld [vmem:[%s8525 + $0xa10] sm:$0xff]
    %v8895 = vld [vmem:[%s8525 + $0xa18] sm:$0xff]
    %v8896 = vld [vmem:[%s8525 + $0xa20] sm:$0xff]
    %v8897 = vld [vmem:[%s8525 + $0xa28] sm:$0xf]
    %v8898 = vld [vmem:[%s8525 + $0xa2c] sm:$0xff]
    %v8899 = vld [vmem:[%s8525 + $0xa34] sm:$0xff]
    %v8900 = vld [vmem:[%s8525 + $0xa3c] sm:$0xff]
    %v8901 = vld [vmem:[%s8525 + $0xa44] sm:$0xf]
    %v8902 = vld [vmem:[%s8525 + $0xa48] sm:$0xff]
    %v8903 = vld [vmem:[%s8525 + $0xa50] sm:$0xff]
    %v8904 = vld [vmem:[%s8525 + $0xa58] sm:$0xff]
    %v8905 = vld [vmem:[%s8525 + $0xa60] sm:$0xf]
    %v8906 = vld [vmem:[%s8525 + $0xa64] sm:$0xff]
    %v8907 = vld [vmem:[%s8525 + $0xa6c] sm:$0xff]
    %v8908 = vld [vmem:[%s8525 + $0xa74] sm:$0xff]
    %v8909 = vld [vmem:[%s8525 + $0xa7c] sm:$0xf]
    %v8910 = vld [vmem:[%s8525 + $0xa80] sm:$0xff]
    %v8911 = vld [vmem:[%s8525 + $0xa88] sm:$0xff]
    %v8912 = vld [vmem:[%s8525 + $0xa90] sm:$0xff]
    %v8913 = vld [vmem:[%s8525 + $0xa98] sm:$0xf]
    %v8914 = vld [vmem:[%s8525 + $0xa9c] sm:$0xff]
    %v8915 = vld [vmem:[%s8525 + $0xaa4] sm:$0xff]
    %v8916 = vld [vmem:[%s8525 + $0xaac] sm:$0xff]
    %v8917 = vld [vmem:[%s8525 + $0xab4] sm:$0xf]
    %v9310 = vunpack.c.l.b16 %v8526
    %v9311 = vunpack.c.h.b16 %v8526
    %v9312 = vunpack.c.l.b16 %v8527
    %v9313 = vunpack.c.h.b16 %v8527
    %v9314 = vunpack.c.l.b16 %v8528
    %v9315 = vunpack.c.h.b16 %v8528
    %v9316 = vunpack.c.l.b16 %v8529
    %v9317 = vunpack.c.l.b16 %v8530
    %v9318 = vunpack.c.h.b16 %v8530
    %v9319 = vunpack.c.l.b16 %v8531
    %v9320 = vunpack.c.h.b16 %v8531
    %v9321 = vunpack.c.l.b16 %v8532
    %v9322 = vunpack.c.h.b16 %v8532
    %v9323 = vunpack.c.l.b16 %v8533
    %v9324 = vunpack.c.l.b16 %v8534
    %v9325 = vunpack.c.h.b16 %v8534
    %v9326 = vunpack.c.l.b16 %v8535
    %v9327 = vunpack.c.h.b16 %v8535
    %v9328 = vunpack.c.l.b16 %v8536
    %v9329 = vunpack.c.h.b16 %v8536
    %v9330 = vunpack.c.l.b16 %v8537
    %v9331 = vunpack.c.l.b16 %v8538
    %v9332 = vunpack.c.h.b16 %v8538
    %v9333 = vunpack.c.l.b16 %v8539
    %v9334 = vunpack.c.h.b16 %v8539
    %v9335 = vunpack.c.l.b16 %v8540
    %v9336 = vunpack.c.h.b16 %v8540
    %v9337 = vunpack.c.l.b16 %v8541
    %v9338 = vunpack.c.l.b16 %v8542
    %v9339 = vunpack.c.h.b16 %v8542
    %v9340 = vunpack.c.l.b16 %v8543
    %v9341 = vunpack.c.h.b16 %v8543
    %v9342 = vunpack.c.l.b16 %v8544
    %v9343 = vunpack.c.h.b16 %v8544
    %v9344 = vunpack.c.l.b16 %v8545
    %v9345 = vunpack.c.l.b16 %v8546
    %v9346 = vunpack.c.h.b16 %v8546
    %v9347 = vunpack.c.l.b16 %v8547
    %v9348 = vunpack.c.h.b16 %v8547
    %v9349 = vunpack.c.l.b16 %v8548
    %v9350 = vunpack.c.h.b16 %v8548
    %v9351 = vunpack.c.l.b16 %v8549
    %v9352 = vunpack.c.l.b16 %v8550
    %v9353 = vunpack.c.h.b16 %v8550
    %v9354 = vunpack.c.l.b16 %v8551
    %v9355 = vunpack.c.h.b16 %v8551
    %v9356 = vunpack.c.l.b16 %v8552
    %v9357 = vunpack.c.h.b16 %v8552
    %v9358 = vunpack.c.l.b16 %v8553
    %v9359 = vunpack.c.l.b16 %v8554
    %v9360 = vunpack.c.h.b16 %v8554
    %v9361 = vunpack.c.l.b16 %v8555
    %v9362 = vunpack.c.h.b16 %v8555
    %v9363 = vunpack.c.l.b16 %v8556
    %v9364 = vunpack.c.h.b16 %v8556
    %v9365 = vunpack.c.l.b16 %v8557
    %v9366 = vunpack.c.l.b16 %v8558
    %v9367 = vunpack.c.h.b16 %v8558
    %v9368 = vunpack.c.l.b16 %v8559
    %v9369 = vunpack.c.h.b16 %v8559
    %v9370 = vunpack.c.l.b16 %v8560
    %v9371 = vunpack.c.h.b16 %v8560
    %v9372 = vunpack.c.l.b16 %v8561
    %v9373 = vunpack.c.l.b16 %v8562
    %v9374 = vunpack.c.h.b16 %v8562
    %v9375 = vunpack.c.l.b16 %v8563
    %v9376 = vunpack.c.h.b16 %v8563
    %v9377 = vunpack.c.l.b16 %v8564
    %v9378 = vunpack.c.h.b16 %v8564
    %v9379 = vunpack.c.l.b16 %v8565
    %v9380 = vunpack.c.l.b16 %v8566
    %v9381 = vunpack.c.h.b16 %v8566
    %v9382 = vunpack.c.l.b16 %v8567
    %v9383 = vunpack.c.h.b16 %v8567
    %v9384 = vunpack.c.l.b16 %v8568
    %v9385 = vunpack.c.h.b16 %v8568
    %v9386 = vunpack.c.l.b16 %v8569
    %v9387 = vunpack.c.l.b16 %v8570
    %v9388 = vunpack.c.h.b16 %v8570
    %v9389 = vunpack.c.l.b16 %v8571
    %v9390 = vunpack.c.h.b16 %v8571
    %v9391 = vunpack.c.l.b16 %v8572
    %v9392 = vunpack.c.h.b16 %v8572
    %v9393 = vunpack.c.l.b16 %v8573
    %v9394 = vunpack.c.l.b16 %v8574
    %v9395 = vunpack.c.h.b16 %v8574
    %v9396 = vunpack.c.l.b16 %v8575
    %v9397 = vunpack.c.h.b16 %v8575
    %v9398 = vunpack.c.l.b16 %v8576
    %v9399 = vunpack.c.h.b16 %v8576
    %v9400 = vunpack.c.l.b16 %v8577
    %v9401 = vunpack.c.l.b16 %v8578
    %v9402 = vunpack.c.h.b16 %v8578
    %v9403 = vunpack.c.l.b16 %v8579
    %v9404 = vunpack.c.h.b16 %v8579
    %v9405 = vunpack.c.l.b16 %v8580
    %v9406 = vunpack.c.h.b16 %v8580
    %v9407 = vunpack.c.l.b16 %v8581
    %v9408 = vunpack.c.l.b16 %v8582
    %v9409 = vunpack.c.h.b16 %v8582
    %v9410 = vunpack.c.l.b16 %v8583
    %v9411 = vunpack.c.h.b16 %v8583
    %v9412 = vunpack.c.l.b16 %v8584
    %v9413 = vunpack.c.h.b16 %v8584
    %v9414 = vunpack.c.l.b16 %v8585
    %v9415 = vunpack.c.l.b16 %v8586
    %v9416 = vunpack.c.h.b16 %v8586
    %v9417 = vunpack.c.l.b16 %v8587
    %v9418 = vunpack.c.h.b16 %v8587
    %v9419 = vunpack.c.l.b16 %v8588
    %v9420 = vunpack.c.h.b16 %v8588
    %v9421 = vunpack.c.l.b16 %v8589
    %v9422 = vunpack.c.l.b16 %v8590
    %v9423 = vunpack.c.h.b16 %v8590
    %v9424 = vunpack.c.l.b16 %v8591
    %v9425 = vunpack.c.h.b16 %v8591
    %v9426 = vunpack.c.l.b16 %v8592
    %v9427 = vunpack.c.h.b16 %v8592
    %v9428 = vunpack.c.l.b16 %v8593
    %v9429 = vunpack.c.l.b16 %v8594
    %v9430 = vunpack.c.h.b16 %v8594
    %v9431 = vunpack.c.l.b16 %v8595
    %v9432 = vunpack.c.h.b16 %v8595
    %v9433 = vunpack.c.l.b16 %v8596
    %v9434 = vunpack.c.h.b16 %v8596
    %v9435 = vunpack.c.l.b16 %v8597
    %v9436 = vunpack.c.l.b16 %v8598
    %v9437 = vunpack.c.h.b16 %v8598
    %v9438 = vunpack.c.l.b16 %v8599
    %v9439 = vunpack.c.h.b16 %v8599
    %v9440 = vunpack.c.l.b16 %v8600
    %v9441 = vunpack.c.h.b16 %v8600
    %v9442 = vunpack.c.l.b16 %v8601
    %v9443 = vunpack.c.l.b16 %v8602
    %v9444 = vunpack.c.h.b16 %v8602
    %v9445 = vunpack.c.l.b16 %v8603
    %v9446 = vunpack.c.h.b16 %v8603
    %v9447 = vunpack.c.l.b16 %v8604
    %v9448 = vunpack.c.h.b16 %v8604
    %v9449 = vunpack.c.l.b16 %v8605
    %v9450 = vunpack.c.l.b16 %v8606
    %v9451 = vunpack.c.h.b16 %v8606
    %v9452 = vunpack.c.l.b16 %v8607
    %v9453 = vunpack.c.h.b16 %v8607
    %v9454 = vunpack.c.l.b16 %v8608
    %v9455 = vunpack.c.h.b16 %v8608
    %v9456 = vunpack.c.l.b16 %v8609
    %v9457 = vunpack.c.l.b16 %v8610
    %v9458 = vunpack.c.h.b16 %v8610
    %v9459 = vunpack.c.l.b16 %v8611
    %v9460 = vunpack.c.h.b16 %v8611
    %v9461 = vunpack.c.l.b16 %v8612
    %v9462 = vunpack.c.h.b16 %v8612
    %v9463 = vunpack.c.l.b16 %v8613
    %v9464 = vunpack.c.l.b16 %v8614
    %v9465 = vunpack.c.h.b16 %v8614
    %v9466 = vunpack.c.l.b16 %v8615
    %v9467 = vunpack.c.h.b16 %v8615
    %v9468 = vunpack.c.l.b16 %v8616
    %v9469 = vunpack.c.h.b16 %v8616
    %v9470 = vunpack.c.l.b16 %v8617
    %v9471 = vunpack.c.l.b16 %v8618
    %v9472 = vunpack.c.h.b16 %v8618
    %v9473 = vunpack.c.l.b16 %v8619
    %v9474 = vunpack.c.h.b16 %v8619
    %v9475 = vunpack.c.l.b16 %v8620
    %v9476 = vunpack.c.h.b16 %v8620
    %v9477 = vunpack.c.l.b16 %v8621
    %v9478 = vunpack.c.l.b16 %v8622
    %v9479 = vunpack.c.h.b16 %v8622
    %v9480 = vunpack.c.l.b16 %v8623
    %v9481 = vunpack.c.h.b16 %v8623
    %v9482 = vunpack.c.l.b16 %v8624
    %v9483 = vunpack.c.h.b16 %v8624
    %v9484 = vunpack.c.l.b16 %v8625
    %v9485 = vunpack.c.l.b16 %v8626
    %v9486 = vunpack.c.h.b16 %v8626
    %v9487 = vunpack.c.l.b16 %v8627
    %v9488 = vunpack.c.h.b16 %v8627
    %v9489 = vunpack.c.l.b16 %v8628
    %v9490 = vunpack.c.h.b16 %v8628
    %v9491 = vunpack.c.l.b16 %v8629
    %v9492 = vunpack.c.l.b16 %v8630
    %v9493 = vunpack.c.h.b16 %v8630
    %v9494 = vunpack.c.l.b16 %v8631
    %v9495 = vunpack.c.h.b16 %v8631
    %v9496 = vunpack.c.l.b16 %v8632
    %v9497 = vunpack.c.h.b16 %v8632
    %v9498 = vunpack.c.l.b16 %v8633
    %v9499 = vunpack.c.l.b16 %v8634
    %v9500 = vunpack.c.h.b16 %v8634
    %v9501 = vunpack.c.l.b16 %v8635
    %v9502 = vunpack.c.h.b16 %v8635
    %v9503 = vunpack.c.l.b16 %v8636
    %v9504 = vunpack.c.h.b16 %v8636
    %v9505 = vunpack.c.l.b16 %v8637
    %v9506 = vunpack.c.l.b16 %v8638
    %v9507 = vunpack.c.h.b16 %v8638
    %v9508 = vunpack.c.l.b16 %v8639
    %v9509 = vunpack.c.h.b16 %v8639
    %v9510 = vunpack.c.l.b16 %v8640
    %v9511 = vunpack.c.h.b16 %v8640
    %v9512 = vunpack.c.l.b16 %v8641
    %v9513 = vunpack.c.l.b16 %v8642
    %v9514 = vunpack.c.h.b16 %v8642
    %v9515 = vunpack.c.l.b16 %v8643
    %v9516 = vunpack.c.h.b16 %v8643
    %v9517 = vunpack.c.l.b16 %v8644
    %v9518 = vunpack.c.h.b16 %v8644
    %v9519 = vunpack.c.l.b16 %v8645
    %v9520 = vunpack.c.l.b16 %v8646
    %v9521 = vunpack.c.h.b16 %v8646
    %v9522 = vunpack.c.l.b16 %v8647
    %v9523 = vunpack.c.h.b16 %v8647
    %v9524 = vunpack.c.l.b16 %v8648
    %v9525 = vunpack.c.h.b16 %v8648
    %v9526 = vunpack.c.l.b16 %v8649
    %v9527 = vunpack.c.l.b16 %v8650
    %v9528 = vunpack.c.h.b16 %v8650
    %v9529 = vunpack.c.l.b16 %v8651
    %v9530 = vunpack.c.h.b16 %v8651
    %v9531 = vunpack.c.l.b16 %v8652
    %v9532 = vunpack.c.h.b16 %v8652
    %v9533 = vunpack.c.l.b16 %v8653
    %v9534 = vunpack.c.l.b16 %v8654
    %v9535 = vunpack.c.h.b16 %v8654
    %v9536 = vunpack.c.l.b16 %v8655
    %v9537 = vunpack.c.h.b16 %v8655
    %v9538 = vunpack.c.l.b16 %v8656
    %v9539 = vunpack.c.h.b16 %v8656
    %v9540 = vunpack.c.l.b16 %v8657
    %v9541 = vunpack.c.l.b16 %v8658
    %v9542 = vunpack.c.h.b16 %v8658
    %v9543 = vunpack.c.l.b16 %v8659
    %v9544 = vunpack.c.h.b16 %v8659
    %v9545 = vunpack.c.l.b16 %v8660
    %v9546 = vunpack.c.h.b16 %v8660
    %v9547 = vunpack.c.l.b16 %v8661
    %v9548 = vunpack.c.l.b16 %v8662
    %v9549 = vunpack.c.h.b16 %v8662
    %v9550 = vunpack.c.l.b16 %v8663
    %v9551 = vunpack.c.h.b16 %v8663
    %v9552 = vunpack.c.l.b16 %v8664
    %v9553 = vunpack.c.h.b16 %v8664
    %v9554 = vunpack.c.l.b16 %v8665
    %v9555 = vunpack.c.l.b16 %v8666
    %v9556 = vunpack.c.h.b16 %v8666
    %v9557 = vunpack.c.l.b16 %v8667
    %v9558 = vunpack.c.h.b16 %v8667
    %v9559 = vunpack.c.l.b16 %v8668
    %v9560 = vunpack.c.h.b16 %v8668
    %v9561 = vunpack.c.l.b16 %v8669
    %v9562 = vunpack.c.l.b16 %v8670
    %v9563 = vunpack.c.h.b16 %v8670
    %v9564 = vunpack.c.l.b16 %v8671
    %v9565 = vunpack.c.h.b16 %v8671
    %v9566 = vunpack.c.l.b16 %v8672
    %v9567 = vunpack.c.h.b16 %v8672
    %v9568 = vunpack.c.l.b16 %v8673
    %v9569 = vunpack.c.l.b16 %v8674
    %v9570 = vunpack.c.h.b16 %v8674
    %v9571 = vunpack.c.l.b16 %v8675
    %v9572 = vunpack.c.h.b16 %v8675
    %v9573 = vunpack.c.l.b16 %v8676
    %v9574 = vunpack.c.h.b16 %v8676
    %v9575 = vunpack.c.l.b16 %v8677
    %v9576 = vunpack.c.l.b16 %v8678
    %v9577 = vunpack.c.h.b16 %v8678
    %v9578 = vunpack.c.l.b16 %v8679
    %v9579 = vunpack.c.h.b16 %v8679
    %v9580 = vunpack.c.l.b16 %v8680
    %v9581 = vunpack.c.h.b16 %v8680
    %v9582 = vunpack.c.l.b16 %v8681
    %v9583 = vunpack.c.l.b16 %v8682
    %v9584 = vunpack.c.h.b16 %v8682
    %v9585 = vunpack.c.l.b16 %v8683
    %v9586 = vunpack.c.h.b16 %v8683
    %v9587 = vunpack.c.l.b16 %v8684
    %v9588 = vunpack.c.h.b16 %v8684
    %v9589 = vunpack.c.l.b16 %v8685
    %v9590 = vunpack.c.l.b16 %v8686
    %v9591 = vunpack.c.h.b16 %v8686
    %v9592 = vunpack.c.l.b16 %v8687
    %v9593 = vunpack.c.h.b16 %v8687
    %v9594 = vunpack.c.l.b16 %v8688
    %v9595 = vunpack.c.h.b16 %v8688
    %v9596 = vunpack.c.l.b16 %v8689
    %v9597 = vunpack.c.l.b16 %v8690
    %v9598 = vunpack.c.h.b16 %v8690
    %v9599 = vunpack.c.l.b16 %v8691
    %v9600 = vunpack.c.h.b16 %v8691
    %v9601 = vunpack.c.l.b16 %v8692
    %v9602 = vunpack.c.h.b16 %v8692
    %v9603 = vunpack.c.l.b16 %v8693
    %v9604 = vunpack.c.l.b16 %v8694
    %v9605 = vunpack.c.h.b16 %v8694
    %v9606 = vunpack.c.l.b16 %v8695
    %v9607 = vunpack.c.h.b16 %v8695
    %v9608 = vunpack.c.l.b16 %v8696
    %v9609 = vunpack.c.h.b16 %v8696
    %v9610 = vunpack.c.l.b16 %v8697
    %v9611 = vunpack.c.l.b16 %v8698
    %v9612 = vunpack.c.h.b16 %v8698
    %v9613 = vunpack.c.l.b16 %v8699
    %v9614 = vunpack.c.h.b16 %v8699
    %v9615 = vunpack.c.l.b16 %v8700
    %v9616 = vunpack.c.h.b16 %v8700
    %v9617 = vunpack.c.l.b16 %v8701
    %v9618 = vunpack.c.l.b16 %v8702
    %v9619 = vunpack.c.h.b16 %v8702
    %v9620 = vunpack.c.l.b16 %v8703
    %v9621 = vunpack.c.h.b16 %v8703
    %v9622 = vunpack.c.l.b16 %v8704
    %v9623 = vunpack.c.h.b16 %v8704
    %v9624 = vunpack.c.l.b16 %v8705
    %v9625 = vunpack.c.l.b16 %v8706
    %v9626 = vunpack.c.h.b16 %v8706
    %v9627 = vunpack.c.l.b16 %v8707
    %v9628 = vunpack.c.h.b16 %v8707
    %v9629 = vunpack.c.l.b16 %v8708
    %v9630 = vunpack.c.h.b16 %v8708
    %v9631 = vunpack.c.l.b16 %v8709
    %v9632 = vunpack.c.l.b16 %v8710
    %v9633 = vunpack.c.h.b16 %v8710
    %v9634 = vunpack.c.l.b16 %v8711
    %v9635 = vunpack.c.h.b16 %v8711
    %v9636 = vunpack.c.l.b16 %v8712
    %v9637 = vunpack.c.h.b16 %v8712
    %v9638 = vunpack.c.l.b16 %v8713
    %v9639 = vunpack.c.l.b16 %v8714
    %v9640 = vunpack.c.h.b16 %v8714
    %v9641 = vunpack.c.l.b16 %v8715
    %v9642 = vunpack.c.h.b16 %v8715
    %v9643 = vunpack.c.l.b16 %v8716
    %v9644 = vunpack.c.h.b16 %v8716
    %v9645 = vunpack.c.l.b16 %v8717
    %v9646 = vunpack.c.l.b16 %v8718
    %v9647 = vunpack.c.h.b16 %v8718
    %v9648 = vunpack.c.l.b16 %v8719
    %v9649 = vunpack.c.h.b16 %v8719
    %v9650 = vunpack.c.l.b16 %v8720
    %v9651 = vunpack.c.h.b16 %v8720
    %v9652 = vunpack.c.l.b16 %v8721
    %v9653 = vunpack.c.l.b16 %v8722
    %v9654 = vunpack.c.h.b16 %v8722
    %v9655 = vunpack.c.l.b16 %v8723
    %v9656 = vunpack.c.h.b16 %v8723
    %v9657 = vunpack.c.l.b16 %v8724
    %v9658 = vunpack.c.h.b16 %v8724
    %v9659 = vunpack.c.l.b16 %v8725
    %v9660 = vunpack.c.l.b16 %v8726
    %v9661 = vunpack.c.h.b16 %v8726
    %v9662 = vunpack.c.l.b16 %v8727
    %v9663 = vunpack.c.h.b16 %v8727
    %v9664 = vunpack.c.l.b16 %v8728
    %v9665 = vunpack.c.h.b16 %v8728
    %v9666 = vunpack.c.l.b16 %v8729
    %v9667 = vunpack.c.l.b16 %v8730
    %v9668 = vunpack.c.h.b16 %v8730
    %v9669 = vunpack.c.l.b16 %v8731
    %v9670 = vunpack.c.h.b16 %v8731
    %v9671 = vunpack.c.l.b16 %v8732
    %v9672 = vunpack.c.h.b16 %v8732
    %v9673 = vunpack.c.l.b16 %v8733
    %v9674 = vunpack.c.l.b16 %v8734
    %v9675 = vunpack.c.h.b16 %v8734
    %v9676 = vunpack.c.l.b16 %v8735
    %v9677 = vunpack.c.h.b16 %v8735
    %v9678 = vunpack.c.l.b16 %v8736
    %v9679 = vunpack.c.h.b16 %v8736
    %v9680 = vunpack.c.l.b16 %v8737
    %v9681 = vunpack.c.l.b16 %v8738
    %v9682 = vunpack.c.h.b16 %v8738
    %v9683 = vunpack.c.l.b16 %v8739
    %v9684 = vunpack.c.h.b16 %v8739
    %v9685 = vunpack.c.l.b16 %v8740
    %v9686 = vunpack.c.h.b16 %v8740
    %v9687 = vunpack.c.l.b16 %v8741
    %v9688 = vunpack.c.l.b16 %v8742
    %v9689 = vunpack.c.h.b16 %v8742
    %v9690 = vunpack.c.l.b16 %v8743
    %v9691 = vunpack.c.h.b16 %v8743
    %v9692 = vunpack.c.l.b16 %v8744
    %v9693 = vunpack.c.h.b16 %v8744
    %v9694 = vunpack.c.l.b16 %v8745
    %v9695 = vunpack.c.l.b16 %v8746
    %v9696 = vunpack.c.h.b16 %v8746
    %v9697 = vunpack.c.l.b16 %v8747
    %v9698 = vunpack.c.h.b16 %v8747
    %v9699 = vunpack.c.l.b16 %v8748
    %v9700 = vunpack.c.h.b16 %v8748
    %v9701 = vunpack.c.l.b16 %v8749
    %v9702 = vunpack.c.l.b16 %v8750
    %v9703 = vunpack.c.h.b16 %v8750
    %v9704 = vunpack.c.l.b16 %v8751
    %v9705 = vunpack.c.h.b16 %v8751
    %v9706 = vunpack.c.l.b16 %v8752
    %v9707 = vunpack.c.h.b16 %v8752
    %v9708 = vunpack.c.l.b16 %v8753
    %v9709 = vunpack.c.l.b16 %v8754
    %v9710 = vunpack.c.h.b16 %v8754
    %v9711 = vunpack.c.l.b16 %v8755
    %v9712 = vunpack.c.h.b16 %v8755
    %v9713 = vunpack.c.l.b16 %v8756
    %v9714 = vunpack.c.h.b16 %v8756
    %v9715 = vunpack.c.l.b16 %v8757
    %v9716 = vunpack.c.l.b16 %v8758
    %v9717 = vunpack.c.h.b16 %v8758
    %v9718 = vunpack.c.l.b16 %v8759
    %v9719 = vunpack.c.h.b16 %v8759
    %v9720 = vunpack.c.l.b16 %v8760
    %v9721 = vunpack.c.h.b16 %v8760
    %v9722 = vunpack.c.l.b16 %v8761
    %v9723 = vunpack.c.l.b16 %v8762
    %v9724 = vunpack.c.h.b16 %v8762
    %v9725 = vunpack.c.l.b16 %v8763
    %v9726 = vunpack.c.h.b16 %v8763
    %v9727 = vunpack.c.l.b16 %v8764
    %v9728 = vunpack.c.h.b16 %v8764
    %v9729 = vunpack.c.l.b16 %v8765
    %v9730 = vunpack.c.l.b16 %v8766
    %v9731 = vunpack.c.h.b16 %v8766
    %v9732 = vunpack.c.l.b16 %v8767
    %v9733 = vunpack.c.h.b16 %v8767
    %v9734 = vunpack.c.l.b16 %v8768
    %v9735 = vunpack.c.h.b16 %v8768
    %v9736 = vunpack.c.l.b16 %v8769
    %v9737 = vunpack.c.l.b16 %v8770
    %v9738 = vunpack.c.h.b16 %v8770
    %v9739 = vunpack.c.l.b16 %v8771
    %v9740 = vunpack.c.h.b16 %v8771
    %v9741 = vunpack.c.l.b16 %v8772
    %v9742 = vunpack.c.h.b16 %v8772
    %v9743 = vunpack.c.l.b16 %v8773
    %v9744 = vunpack.c.l.b16 %v8774
    %v9745 = vunpack.c.h.b16 %v8774
    %v9746 = vunpack.c.l.b16 %v8775
    %v9747 = vunpack.c.h.b16 %v8775
    %v9748 = vunpack.c.l.b16 %v8776
    %v9749 = vunpack.c.h.b16 %v8776
    %v9750 = vunpack.c.l.b16 %v8777
    %v9751 = vunpack.c.l.b16 %v8778
    %v9752 = vunpack.c.h.b16 %v8778
    %v9753 = vunpack.c.l.b16 %v8779
    %v9754 = vunpack.c.h.b16 %v8779
    %v9755 = vunpack.c.l.b16 %v8780
    %v9756 = vunpack.c.h.b16 %v8780
    %v9757 = vunpack.c.l.b16 %v8781
    %v9758 = vunpack.c.l.b16 %v8782
    %v9759 = vunpack.c.h.b16 %v8782
    %v9760 = vunpack.c.l.b16 %v8783
    %v9761 = vunpack.c.h.b16 %v8783
    %v9762 = vunpack.c.l.b16 %v8784
    %v9763 = vunpack.c.h.b16 %v8784
    %v9764 = vunpack.c.l.b16 %v8785
    %v9765 = vunpack.c.l.b16 %v8786
    %v9766 = vunpack.c.h.b16 %v8786
    %v9767 = vunpack.c.l.b16 %v8787
    %v9768 = vunpack.c.h.b16 %v8787
    %v9769 = vunpack.c.l.b16 %v8788
    %v9770 = vunpack.c.h.b16 %v8788
    %v9771 = vunpack.c.l.b16 %v8789
    %v9772 = vunpack.c.l.b16 %v8790
    %v9773 = vunpack.c.h.b16 %v8790
    %v9774 = vunpack.c.l.b16 %v8791
    %v9775 = vunpack.c.h.b16 %v8791
    %v9776 = vunpack.c.l.b16 %v8792
    %v9777 = vunpack.c.h.b16 %v8792
    %v9778 = vunpack.c.l.b16 %v8793
    %v9779 = vunpack.c.l.b16 %v8794
    %v9780 = vunpack.c.h.b16 %v8794
    %v9781 = vunpack.c.l.b16 %v8795
    %v9782 = vunpack.c.h.b16 %v8795
    %v9783 = vunpack.c.l.b16 %v8796
    %v9784 = vunpack.c.h.b16 %v8796
    %v9785 = vunpack.c.l.b16 %v8797
    %v9786 = vunpack.c.l.b16 %v8798
    %v9787 = vunpack.c.h.b16 %v8798
    %v9788 = vunpack.c.l.b16 %v8799
    %v9789 = vunpack.c.h.b16 %v8799
    %v9790 = vunpack.c.l.b16 %v8800
    %v9791 = vunpack.c.h.b16 %v8800
    %v9792 = vunpack.c.l.b16 %v8801
    %v9793 = vunpack.c.l.b16 %v8802
    %v9794 = vunpack.c.h.b16 %v8802
    %v9795 = vunpack.c.l.b16 %v8803
    %v9796 = vunpack.c.h.b16 %v8803
    %v9797 = vunpack.c.l.b16 %v8804
    %v9798 = vunpack.c.h.b16 %v8804
    %v9799 = vunpack.c.l.b16 %v8805
    %v9800 = vunpack.c.l.b16 %v8806
    %v9801 = vunpack.c.h.b16 %v8806
    %v9802 = vunpack.c.l.b16 %v8807
    %v9803 = vunpack.c.h.b16 %v8807
    %v9804 = vunpack.c.l.b16 %v8808
    %v9805 = vunpack.c.h.b16 %v8808
    %v9806 = vunpack.c.l.b16 %v8809
    %v9807 = vunpack.c.l.b16 %v8810
    %v9808 = vunpack.c.h.b16 %v8810
    %v9809 = vunpack.c.l.b16 %v8811
    %v9810 = vunpack.c.h.b16 %v8811
    %v9811 = vunpack.c.l.b16 %v8812
    %v9812 = vunpack.c.h.b16 %v8812
    %v9813 = vunpack.c.l.b16 %v8813
    %v9814 = vunpack.c.l.b16 %v8814
    %v9815 = vunpack.c.h.b16 %v8814
    %v9816 = vunpack.c.l.b16 %v8815
    %v9817 = vunpack.c.h.b16 %v8815
    %v9818 = vunpack.c.l.b16 %v8816
    %v9819 = vunpack.c.h.b16 %v8816
    %v9820 = vunpack.c.l.b16 %v8817
    %v9821 = vunpack.c.l.b16 %v8818
    %v9822 = vunpack.c.h.b16 %v8818
    %v9823 = vunpack.c.l.b16 %v8819
    %v9824 = vunpack.c.h.b16 %v8819
    %v9825 = vunpack.c.l.b16 %v8820
    %v9826 = vunpack.c.h.b16 %v8820
    %v9827 = vunpack.c.l.b16 %v8821
    %v9828 = vunpack.c.l.b16 %v8822
    %v9829 = vunpack.c.h.b16 %v8822
    %v9830 = vunpack.c.l.b16 %v8823
    %v9831 = vunpack.c.h.b16 %v8823
    %v9832 = vunpack.c.l.b16 %v8824
    %v9833 = vunpack.c.h.b16 %v8824
    %v9834 = vunpack.c.l.b16 %v8825
    %v9835 = vunpack.c.l.b16 %v8826
    %v9836 = vunpack.c.h.b16 %v8826
    %v9837 = vunpack.c.l.b16 %v8827
    %v9838 = vunpack.c.h.b16 %v8827
    %v9839 = vunpack.c.l.b16 %v8828
    %v9840 = vunpack.c.h.b16 %v8828
    %v9841 = vunpack.c.l.b16 %v8829
    %v9842 = vunpack.c.l.b16 %v8830
    %v9843 = vunpack.c.h.b16 %v8830
    %v9844 = vunpack.c.l.b16 %v8831
    %v9845 = vunpack.c.h.b16 %v8831
    %v9846 = vunpack.c.l.b16 %v8832
    %v9847 = vunpack.c.h.b16 %v8832
    %v9848 = vunpack.c.l.b16 %v8833
    %v9849 = vunpack.c.l.b16 %v8834
    %v9850 = vunpack.c.h.b16 %v8834
    %v9851 = vunpack.c.l.b16 %v8835
    %v9852 = vunpack.c.h.b16 %v8835
    %v9853 = vunpack.c.l.b16 %v8836
    %v9854 = vunpack.c.h.b16 %v8836
    %v9855 = vunpack.c.l.b16 %v8837
    %v9856 = vunpack.c.l.b16 %v8838
    %v9857 = vunpack.c.h.b16 %v8838
    %v9858 = vunpack.c.l.b16 %v8839
    %v9859 = vunpack.c.h.b16 %v8839
    %v9860 = vunpack.c.l.b16 %v8840
    %v9861 = vunpack.c.h.b16 %v8840
    %v9862 = vunpack.c.l.b16 %v8841
    %v9863 = vunpack.c.l.b16 %v8842
    %v9864 = vunpack.c.h.b16 %v8842
    %v9865 = vunpack.c.l.b16 %v8843
    %v9866 = vunpack.c.h.b16 %v8843
    %v9867 = vunpack.c.l.b16 %v8844
    %v9868 = vunpack.c.h.b16 %v8844
    %v9869 = vunpack.c.l.b16 %v8845
    %v9870 = vunpack.c.l.b16 %v8846
    %v9871 = vunpack.c.h.b16 %v8846
    %v9872 = vunpack.c.l.b16 %v8847
    %v9873 = vunpack.c.h.b16 %v8847
    %v9874 = vunpack.c.l.b16 %v8848
    %v9875 = vunpack.c.h.b16 %v8848
    %v9876 = vunpack.c.l.b16 %v8849
    %v9877 = vunpack.c.l.b16 %v8850
    %v9878 = vunpack.c.h.b16 %v8850
    %v9879 = vunpack.c.l.b16 %v8851
    %v9880 = vunpack.c.h.b16 %v8851
    %v9881 = vunpack.c.l.b16 %v8852
    %v9882 = vunpack.c.h.b16 %v8852
    %v9883 = vunpack.c.l.b16 %v8853
    %v9884 = vunpack.c.l.b16 %v8854
    %v9885 = vunpack.c.h.b16 %v8854
    %v9886 = vunpack.c.l.b16 %v8855
    %v9887 = vunpack.c.h.b16 %v8855
    %v9888 = vunpack.c.l.b16 %v8856
    %v9889 = vunpack.c.h.b16 %v8856
    %v9890 = vunpack.c.l.b16 %v8857
    %v9891 = vunpack.c.l.b16 %v8858
    %v9892 = vunpack.c.h.b16 %v8858
    %v9893 = vunpack.c.l.b16 %v8859
    %v9894 = vunpack.c.h.b16 %v8859
    %v9895 = vunpack.c.l.b16 %v8860
    %v9896 = vunpack.c.h.b16 %v8860
    %v9897 = vunpack.c.l.b16 %v8861
    %v9898 = vunpack.c.l.b16 %v8862
    %v9899 = vunpack.c.h.b16 %v8862
    %v9900 = vunpack.c.l.b16 %v8863
    %v9901 = vunpack.c.h.b16 %v8863
    %v9902 = vunpack.c.l.b16 %v8864
    %v9903 = vunpack.c.h.b16 %v8864
    %v9904 = vunpack.c.l.b16 %v8865
    %v9905 = vunpack.c.l.b16 %v8866
    %v9906 = vunpack.c.h.b16 %v8866
    %v9907 = vunpack.c.l.b16 %v8867
    %v9908 = vunpack.c.h.b16 %v8867
    %v9909 = vunpack.c.l.b16 %v8868
    %v9910 = vunpack.c.h.b16 %v8868
    %v9911 = vunpack.c.l.b16 %v8869
    %v9912 = vunpack.c.l.b16 %v8870
    %v9913 = vunpack.c.h.b16 %v8870
    %v9914 = vunpack.c.l.b16 %v8871
    %v9915 = vunpack.c.h.b16 %v8871
    %v9916 = vunpack.c.l.b16 %v8872
    %v9917 = vunpack.c.h.b16 %v8872
    %v9918 = vunpack.c.l.b16 %v8873
    %v9919 = vunpack.c.l.b16 %v8874
    %v9920 = vunpack.c.h.b16 %v8874
    %v9921 = vunpack.c.l.b16 %v8875
    %v9922 = vunpack.c.h.b16 %v8875
    %v9923 = vunpack.c.l.b16 %v8876
    %v9924 = vunpack.c.h.b16 %v8876
    %v9925 = vunpack.c.l.b16 %v8877
    %v9926 = vunpack.c.l.b16 %v8878
    %v9927 = vunpack.c.h.b16 %v8878
    %v9928 = vunpack.c.l.b16 %v8879
    %v9929 = vunpack.c.h.b16 %v8879
    %v9930 = vunpack.c.l.b16 %v8880
    %v9931 = vunpack.c.h.b16 %v8880
    %v9932 = vunpack.c.l.b16 %v8881
    %v9933 = vunpack.c.l.b16 %v8882
    %v9934 = vunpack.c.h.b16 %v8882
    %v9935 = vunpack.c.l.b16 %v8883
    %v9936 = vunpack.c.h.b16 %v8883
    %v9937 = vunpack.c.l.b16 %v8884
    %v9938 = vunpack.c.h.b16 %v8884
    %v9939 = vunpack.c.l.b16 %v8885
    %v9940 = vunpack.c.l.b16 %v8886
    %v9941 = vunpack.c.h.b16 %v8886
    %v9942 = vunpack.c.l.b16 %v8887
    %v9943 = vunpack.c.h.b16 %v8887
    %v9944 = vunpack.c.l.b16 %v8888
    %v9945 = vunpack.c.h.b16 %v8888
    %v9946 = vunpack.c.l.b16 %v8889
    %v9947 = vunpack.c.l.b16 %v8890
    %v9948 = vunpack.c.h.b16 %v8890
    %v9949 = vunpack.c.l.b16 %v8891
    %v9950 = vunpack.c.h.b16 %v8891
    %v9951 = vunpack.c.l.b16 %v8892
    %v9952 = vunpack.c.h.b16 %v8892
    %v9953 = vunpack.c.l.b16 %v8893
    %v9954 = vunpack.c.l.b16 %v8894
    %v9955 = vunpack.c.h.b16 %v8894
    %v9956 = vunpack.c.l.b16 %v8895
    %v9957 = vunpack.c.h.b16 %v8895
    %v9958 = vunpack.c.l.b16 %v8896
    %v9959 = vunpack.c.h.b16 %v8896
    %v9960 = vunpack.c.l.b16 %v8897
    %v9961 = vunpack.c.l.b16 %v8898
    %v9962 = vunpack.c.h.b16 %v8898
    %v9963 = vunpack.c.l.b16 %v8899
    %v9964 = vunpack.c.h.b16 %v8899
    %v9965 = vunpack.c.l.b16 %v8900
    %v9966 = vunpack.c.h.b16 %v8900
    %v9967 = vunpack.c.l.b16 %v8901
    %v9968 = vunpack.c.l.b16 %v8902
    %v9969 = vunpack.c.h.b16 %v8902
    %v9970 = vunpack.c.l.b16 %v8903
    %v9971 = vunpack.c.h.b16 %v8903
    %v9972 = vunpack.c.l.b16 %v8904
    %v9973 = vunpack.c.h.b16 %v8904
    %v9974 = vunpack.c.l.b16 %v8905
    %v9975 = vunpack.c.l.b16 %v8906
    %v9976 = vunpack.c.h.b16 %v8906
    %v9977 = vunpack.c.l.b16 %v8907
    %v9978 = vunpack.c.h.b16 %v8907
    %v9979 = vunpack.c.l.b16 %v8908
    %v9980 = vunpack.c.h.b16 %v8908
    %v9981 = vunpack.c.l.b16 %v8909
    %v9982 = vunpack.c.l.b16 %v8910
    %v9983 = vunpack.c.h.b16 %v8910
    %v9984 = vunpack.c.l.b16 %v8911
    %v9985 = vunpack.c.h.b16 %v8911
    %v9986 = vunpack.c.l.b16 %v8912
    %v9987 = vunpack.c.h.b16 %v8912
    %v9988 = vunpack.c.l.b16 %v8913
    %v9989 = vunpack.c.l.b16 %v8914
    %v9990 = vunpack.c.h.b16 %v8914
    %v9991 = vunpack.c.l.b16 %v8915
    %v9992 = vunpack.c.h.b16 %v8915
    %v9993 = vunpack.c.l.b16 %v8916
    %v9994 = vunpack.c.h.b16 %v8916
    %v9995 = vunpack.c.l.b16 %v8917
    %v9996 = vpack.c.b16 %v9317, %v9310
    %v9997 = vpack.c.b16 %v9318, %v9311
    %v9998 = vpack.c.b16 %v9319, %v9312
    %v9999 = vpack.c.b16 %v9320, %v9313
    %v10000 = vpack.c.b16 %v9321, %v9314
    %v10001 = vpack.c.b16 %v9322, %v9315
    %v10002 = vpack.c.b16 %v9323, %v9316
    %v10003 = vpack.c.b16 %v9331, %v9324
    %v10004 = vpack.c.b16 %v9332, %v9325
    %v10005 = vpack.c.b16 %v9333, %v9326
    %v10006 = vpack.c.b16 %v9334, %v9327
    %v10007 = vpack.c.b16 %v9335, %v9328
    %v10008 = vpack.c.b16 %v9336, %v9329
    %v10009 = vpack.c.b16 %v9337, %v9330
    %v10010 = vpack.c.b16 %v9345, %v9338
    %v10011 = vpack.c.b16 %v9346, %v9339
    %v10012 = vpack.c.b16 %v9347, %v9340
    %v10013 = vpack.c.b16 %v9348, %v9341
    %v10014 = vpack.c.b16 %v9349, %v9342
    %v10015 = vpack.c.b16 %v9350, %v9343
    %v10016 = vpack.c.b16 %v9351, %v9344
    %v10017 = vpack.c.b16 %v9359, %v9352
    %v10018 = vpack.c.b16 %v9360, %v9353
    %v10019 = vpack.c.b16 %v9361, %v9354
    %v10020 = vpack.c.b16 %v9362, %v9355
    %v10021 = vpack.c.b16 %v9363, %v9356
    %v10022 = vpack.c.b16 %v9364, %v9357
    %v10023 = vpack.c.b16 %v9365, %v9358
    %v10024 = vpack.c.b16 %v9373, %v9366
    %v10025 = vpack.c.b16 %v9374, %v9367
    %v10026 = vpack.c.b16 %v9375, %v9368
    %v10027 = vpack.c.b16 %v9376, %v9369
    %v10028 = vpack.c.b16 %v9377, %v9370
    %v10029 = vpack.c.b16 %v9378, %v9371
    %v10030 = vpack.c.b16 %v9379, %v9372
    %v10031 = vpack.c.b16 %v9387, %v9380
    %v10032 = vpack.c.b16 %v9388, %v9381
    %v10033 = vpack.c.b16 %v9389, %v9382
    %v10034 = vpack.c.b16 %v9390, %v9383
    %v10035 = vpack.c.b16 %v9391, %v9384
    %v10036 = vpack.c.b16 %v9392, %v9385
    %v10037 = vpack.c.b16 %v9393, %v9386
    %v10038 = vpack.c.b16 %v9401, %v9394
    %v10039 = vpack.c.b16 %v9402, %v9395
    %v10040 = vpack.c.b16 %v9403, %v9396
    %v10041 = vpack.c.b16 %v9404, %v9397
    %v10042 = vpack.c.b16 %v9405, %v9398
    %v10043 = vpack.c.b16 %v9406, %v9399
    %v10044 = vpack.c.b16 %v9407, %v9400
    %v10045 = vpack.c.b16 %v9415, %v9408
    %v10046 = vpack.c.b16 %v9416, %v9409
    %v10047 = vpack.c.b16 %v9417, %v9410
    %v10048 = vpack.c.b16 %v9418, %v9411
    %v10049 = vpack.c.b16 %v9419, %v9412
    %v10050 = vpack.c.b16 %v9420, %v9413
    %v10051 = vpack.c.b16 %v9421, %v9414
    %v10052 = vpack.c.b16 %v9429, %v9422
    %v10053 = vpack.c.b16 %v9430, %v9423
    %v10054 = vpack.c.b16 %v9431, %v9424
    %v10055 = vpack.c.b16 %v9432, %v9425
    %v10056 = vpack.c.b16 %v9433, %v9426
    %v10057 = vpack.c.b16 %v9434, %v9427
    %v10058 = vpack.c.b16 %v9435, %v9428
    %v10059 = vpack.c.b16 %v9443, %v9436
    %v10060 = vpack.c.b16 %v9444, %v9437
    %v10061 = vpack.c.b16 %v9445, %v9438
    %v10062 = vpack.c.b16 %v9446, %v9439
    %v10063 = vpack.c.b16 %v9447, %v9440
    %v10064 = vpack.c.b16 %v9448, %v9441
    %v10065 = vpack.c.b16 %v9449, %v9442
    %v10066 = vpack.c.b16 %v9457, %v9450
    %v10067 = vpack.c.b16 %v9458, %v9451
    %v10068 = vpack.c.b16 %v9459, %v9452
    %v10069 = vpack.c.b16 %v9460, %v9453
    %v10070 = vpack.c.b16 %v9461, %v9454
    %v10071 = vpack.c.b16 %v9462, %v9455
    %v10072 = vpack.c.b16 %v9463, %v9456
    %v10073 = vpack.c.b16 %v9471, %v9464
    %v10074 = vpack.c.b16 %v9472, %v9465
    %v10075 = vpack.c.b16 %v9473, %v9466
    %v10076 = vpack.c.b16 %v9474, %v9467
    %v10077 = vpack.c.b16 %v9475, %v9468
    %v10078 = vpack.c.b16 %v9476, %v9469
    %v10079 = vpack.c.b16 %v9477, %v9470
    %v10080 = vpack.c.b16 %v9485, %v9478
    %v10081 = vpack.c.b16 %v9486, %v9479
    %v10082 = vpack.c.b16 %v9487, %v9480
    %v10083 = vpack.c.b16 %v9488, %v9481
    %v10084 = vpack.c.b16 %v9489, %v9482
    %v10085 = vpack.c.b16 %v9490, %v9483
    %v10086 = vpack.c.b16 %v9491, %v9484
    %v10087 = vpack.c.b16 %v9499, %v9492
    %v10088 = vpack.c.b16 %v9500, %v9493
    %v10089 = vpack.c.b16 %v9501, %v9494
    %v10090 = vpack.c.b16 %v9502, %v9495
    %v10091 = vpack.c.b16 %v9503, %v9496
    %v10092 = vpack.c.b16 %v9504, %v9497
    %v10093 = vpack.c.b16 %v9505, %v9498
    %v10094 = vpack.c.b16 %v9513, %v9506
    %v10095 = vpack.c.b16 %v9514, %v9507
    %v10096 = vpack.c.b16 %v9515, %v9508
    %v10097 = vpack.c.b16 %v9516, %v9509
    %v10098 = vpack.c.b16 %v9517, %v9510
    %v10099 = vpack.c.b16 %v9518, %v9511
    %v10100 = vpack.c.b16 %v9519, %v9512
    %v10101 = vpack.c.b16 %v9527, %v9520
    %v10102 = vpack.c.b16 %v9528, %v9521
    %v10103 = vpack.c.b16 %v9529, %v9522
    %v10104 = vpack.c.b16 %v9530, %v9523
    %v10105 = vpack.c.b16 %v9531, %v9524
    %v10106 = vpack.c.b16 %v9532, %v9525
    %v10107 = vpack.c.b16 %v9533, %v9526
    %v10108 = vpack.c.b16 %v9541, %v9534
    %v10109 = vpack.c.b16 %v9542, %v9535
    %v10110 = vpack.c.b16 %v9543, %v9536
    %v10111 = vpack.c.b16 %v9544, %v9537
    %v10112 = vpack.c.b16 %v9545, %v9538
    %v10113 = vpack.c.b16 %v9546, %v9539
    %v10114 = vpack.c.b16 %v9547, %v9540
    %v10115 = vpack.c.b16 %v9555, %v9548
    %v10116 = vpack.c.b16 %v9556, %v9549
    %v10117 = vpack.c.b16 %v9557, %v9550
    %v10118 = vpack.c.b16 %v9558, %v9551
    %v10119 = vpack.c.b16 %v9559, %v9552
    %v10120 = vpack.c.b16 %v9560, %v9553
    %v10121 = vpack.c.b16 %v9561, %v9554
    %v10122 = vpack.c.b16 %v9569, %v9562
    %v10123 = vpack.c.b16 %v9570, %v9563
    %v10124 = vpack.c.b16 %v9571, %v9564
    %v10125 = vpack.c.b16 %v9572, %v9565
    %v10126 = vpack.c.b16 %v9573, %v9566
    %v10127 = vpack.c.b16 %v9574, %v9567
    %v10128 = vpack.c.b16 %v9575, %v9568
    %v10129 = vpack.c.b16 %v9583, %v9576
    %v10130 = vpack.c.b16 %v9584, %v9577
    %v10131 = vpack.c.b16 %v9585, %v9578
    %v10132 = vpack.c.b16 %v9586, %v9579
    %v10133 = vpack.c.b16 %v9587, %v9580
    %v10134 = vpack.c.b16 %v9588, %v9581
    %v10135 = vpack.c.b16 %v9589, %v9582
    %v10136 = vpack.c.b16 %v9597, %v9590
    %v10137 = vpack.c.b16 %v9598, %v9591
    %v10138 = vpack.c.b16 %v9599, %v9592
    %v10139 = vpack.c.b16 %v9600, %v9593
    %v10140 = vpack.c.b16 %v9601, %v9594
    %v10141 = vpack.c.b16 %v9602, %v9595
    %v10142 = vpack.c.b16 %v9603, %v9596
    %v10143 = vpack.c.b16 %v9611, %v9604
    %v10144 = vpack.c.b16 %v9612, %v9605
    %v10145 = vpack.c.b16 %v9613, %v9606
    %v10146 = vpack.c.b16 %v9614, %v9607
    %v10147 = vpack.c.b16 %v9615, %v9608
    %v10148 = vpack.c.b16 %v9616, %v9609
    %v10149 = vpack.c.b16 %v9617, %v9610
    %v10150 = vpack.c.b16 %v9625, %v9618
    %v10151 = vpack.c.b16 %v9626, %v9619
    %v10152 = vpack.c.b16 %v9627, %v9620
    %v10153 = vpack.c.b16 %v9628, %v9621
    %v10154 = vpack.c.b16 %v9629, %v9622
    %v10155 = vpack.c.b16 %v9630, %v9623
    %v10156 = vpack.c.b16 %v9631, %v9624
    %v10157 = vpack.c.b16 %v9639, %v9632
    %v10158 = vpack.c.b16 %v9640, %v9633
    %v10159 = vpack.c.b16 %v9641, %v9634
    %v10160 = vpack.c.b16 %v9642, %v9635
    %v10161 = vpack.c.b16 %v9643, %v9636
    %v10162 = vpack.c.b16 %v9644, %v9637
    %v10163 = vpack.c.b16 %v9645, %v9638
    %v10164 = vpack.c.b16 %v9653, %v9646
    %v10165 = vpack.c.b16 %v9654, %v9647
    %v10166 = vpack.c.b16 %v9655, %v9648
    %v10167 = vpack.c.b16 %v9656, %v9649
    %v10168 = vpack.c.b16 %v9657, %v9650
    %v10169 = vpack.c.b16 %v9658, %v9651
    %v10170 = vpack.c.b16 %v9659, %v9652
    %v10171 = vpack.c.b16 %v9667, %v9660
    %v10172 = vpack.c.b16 %v9668, %v9661
    %v10173 = vpack.c.b16 %v9669, %v9662
    %v10174 = vpack.c.b16 %v9670, %v9663
    %v10175 = vpack.c.b16 %v9671, %v9664
    %v10176 = vpack.c.b16 %v9672, %v9665
    %v10177 = vpack.c.b16 %v9673, %v9666
    %v10178 = vpack.c.b16 %v9681, %v9674
    %v10179 = vpack.c.b16 %v9682, %v9675
    %v10180 = vpack.c.b16 %v9683, %v9676
    %v10181 = vpack.c.b16 %v9684, %v9677
    %v10182 = vpack.c.b16 %v9685, %v9678
    %v10183 = vpack.c.b16 %v9686, %v9679
    %v10184 = vpack.c.b16 %v9687, %v9680
    %v10185 = vpack.c.b16 %v9695, %v9688
    %v10186 = vpack.c.b16 %v9696, %v9689
    %v10187 = vpack.c.b16 %v9697, %v9690
    %v10188 = vpack.c.b16 %v9698, %v9691
    %v10189 = vpack.c.b16 %v9699, %v9692
    %v10190 = vpack.c.b16 %v9700, %v9693
    %v10191 = vpack.c.b16 %v9701, %v9694
    %v10192 = vpack.c.b16 %v9709, %v9702
    %v10193 = vpack.c.b16 %v9710, %v9703
    %v10194 = vpack.c.b16 %v9711, %v9704
    %v10195 = vpack.c.b16 %v9712, %v9705
    %v10196 = vpack.c.b16 %v9713, %v9706
    %v10197 = vpack.c.b16 %v9714, %v9707
    %v10198 = vpack.c.b16 %v9715, %v9708
    %v10199 = vpack.c.b16 %v9723, %v9716
    %v10200 = vpack.c.b16 %v9724, %v9717
    %v10201 = vpack.c.b16 %v9725, %v9718
    %v10202 = vpack.c.b16 %v9726, %v9719
    %v10203 = vpack.c.b16 %v9727, %v9720
    %v10204 = vpack.c.b16 %v9728, %v9721
    %v10205 = vpack.c.b16 %v9729, %v9722
    %v10206 = vpack.c.b16 %v9737, %v9730
    %v10207 = vpack.c.b16 %v9738, %v9731
    %v10208 = vpack.c.b16 %v9739, %v9732
    %v10209 = vpack.c.b16 %v9740, %v9733
    %v10210 = vpack.c.b16 %v9741, %v9734
    %v10211 = vpack.c.b16 %v9742, %v9735
    %v10212 = vpack.c.b16 %v9743, %v9736
    %v10213 = vpack.c.b16 %v9751, %v9744
    %v10214 = vpack.c.b16 %v9752, %v9745
    %v10215 = vpack.c.b16 %v9753, %v9746
    %v10216 = vpack.c.b16 %v9754, %v9747
    %v10217 = vpack.c.b16 %v9755, %v9748
    %v10218 = vpack.c.b16 %v9756, %v9749
    %v10219 = vpack.c.b16 %v9757, %v9750
    %v10220 = vpack.c.b16 %v9765, %v9758
    %v10221 = vpack.c.b16 %v9766, %v9759
    %v10222 = vpack.c.b16 %v9767, %v9760
    %v10223 = vpack.c.b16 %v9768, %v9761
    %v10224 = vpack.c.b16 %v9769, %v9762
    %v10225 = vpack.c.b16 %v9770, %v9763
    %v10226 = vpack.c.b16 %v9771, %v9764
    %v10227 = vpack.c.b16 %v9779, %v9772
    %v10228 = vpack.c.b16 %v9780, %v9773
    %v10229 = vpack.c.b16 %v9781, %v9774
    %v10230 = vpack.c.b16 %v9782, %v9775
    %v10231 = vpack.c.b16 %v9783, %v9776
    %v10232 = vpack.c.b16 %v9784, %v9777
    %v10233 = vpack.c.b16 %v9785, %v9778
    %v10234 = vpack.c.b16 %v9793, %v9786
    %v10235 = vpack.c.b16 %v9794, %v9787
    %v10236 = vpack.c.b16 %v9795, %v9788
    %v10237 = vpack.c.b16 %v9796, %v9789
    %v10238 = vpack.c.b16 %v9797, %v9790
    %v10239 = vpack.c.b16 %v9798, %v9791
    %v10240 = vpack.c.b16 %v9799, %v9792
    %v10241 = vpack.c.b16 %v9807, %v9800
    %v10242 = vpack.c.b16 %v9808, %v9801
    %v10243 = vpack.c.b16 %v9809, %v9802
    %v10244 = vpack.c.b16 %v9810, %v9803
    %v10245 = vpack.c.b16 %v9811, %v9804
    %v10246 = vpack.c.b16 %v9812, %v9805
    %v10247 = vpack.c.b16 %v9813, %v9806
    %v10248 = vpack.c.b16 %v9821, %v9814
    %v10249 = vpack.c.b16 %v9822, %v9815
    %v10250 = vpack.c.b16 %v9823, %v9816
    %v10251 = vpack.c.b16 %v9824, %v9817
    %v10252 = vpack.c.b16 %v9825, %v9818
    %v10253 = vpack.c.b16 %v9826, %v9819
    %v10254 = vpack.c.b16 %v9827, %v9820
    %v10255 = vpack.c.b16 %v9835, %v9828
    %v10256 = vpack.c.b16 %v9836, %v9829
    %v10257 = vpack.c.b16 %v9837, %v9830
    %v10258 = vpack.c.b16 %v9838, %v9831
    %v10259 = vpack.c.b16 %v9839, %v9832
    %v10260 = vpack.c.b16 %v9840, %v9833
    %v10261 = vpack.c.b16 %v9841, %v9834
    %v10262 = vpack.c.b16 %v9849, %v9842
    %v10263 = vpack.c.b16 %v9850, %v9843
    %v10264 = vpack.c.b16 %v9851, %v9844
    %v10265 = vpack.c.b16 %v9852, %v9845
    %v10266 = vpack.c.b16 %v9853, %v9846
    %v10267 = vpack.c.b16 %v9854, %v9847
    %v10268 = vpack.c.b16 %v9855, %v9848
    %v10269 = vpack.c.b16 %v9863, %v9856
    %v10270 = vpack.c.b16 %v9864, %v9857
    %v10271 = vpack.c.b16 %v9865, %v9858
    %v10272 = vpack.c.b16 %v9866, %v9859
    %v10273 = vpack.c.b16 %v9867, %v9860
    %v10274 = vpack.c.b16 %v9868, %v9861
    %v10275 = vpack.c.b16 %v9869, %v9862
    %v10276 = vpack.c.b16 %v9877, %v9870
    %v10277 = vpack.c.b16 %v9878, %v9871
    %v10278 = vpack.c.b16 %v9879, %v9872
    %v10279 = vpack.c.b16 %v9880, %v9873
    %v10280 = vpack.c.b16 %v9881, %v9874
    %v10281 = vpack.c.b16 %v9882, %v9875
    %v10282 = vpack.c.b16 %v9883, %v9876
    %v10283 = vpack.c.b16 %v9891, %v9884
    %v10284 = vpack.c.b16 %v9892, %v9885
    %v10285 = vpack.c.b16 %v9893, %v9886
    %v10286 = vpack.c.b16 %v9894, %v9887
    %v10287 = vpack.c.b16 %v9895, %v9888
    %v10288 = vpack.c.b16 %v9896, %v9889
    %v10289 = vpack.c.b16 %v9897, %v9890
    %v10290 = vpack.c.b16 %v9905, %v9898
    %v10291 = vpack.c.b16 %v9906, %v9899
    %v10292 = vpack.c.b16 %v9907, %v9900
    %v10293 = vpack.c.b16 %v9908, %v9901
    %v10294 = vpack.c.b16 %v9909, %v9902
    %v10295 = vpack.c.b16 %v9910, %v9903
    %v10296 = vpack.c.b16 %v9911, %v9904
    %v10297 = vpack.c.b16 %v9919, %v9912
    %v10298 = vpack.c.b16 %v9920, %v9913
    %v10299 = vpack.c.b16 %v9921, %v9914
    %v10300 = vpack.c.b16 %v9922, %v9915
    %v10301 = vpack.c.b16 %v9923, %v9916
    %v10302 = vpack.c.b16 %v9924, %v9917
    %v10303 = vpack.c.b16 %v9925, %v9918
    %v10304 = vpack.c.b16 %v9933, %v9926
    %v10305 = vpack.c.b16 %v9934, %v9927
    %v10306 = vpack.c.b16 %v9935, %v9928
    %v10307 = vpack.c.b16 %v9936, %v9929
    %v10308 = vpack.c.b16 %v9937, %v9930
    %v10309 = vpack.c.b16 %v9938, %v9931
    %v10310 = vpack.c.b16 %v9939, %v9932
    %v10311 = vpack.c.b16 %v9947, %v9940
    %v10312 = vpack.c.b16 %v9948, %v9941
    %v10313 = vpack.c.b16 %v9949, %v9942
    %v10314 = vpack.c.b16 %v9950, %v9943
    %v10315 = vpack.c.b16 %v9951, %v9944
    %v10316 = vpack.c.b16 %v9952, %v9945
    %v10317 = vpack.c.b16 %v9953, %v9946
    %v10318 = vpack.c.b16 %v9961, %v9954
    %v10319 = vpack.c.b16 %v9962, %v9955
    %v10320 = vpack.c.b16 %v9963, %v9956
    %v10321 = vpack.c.b16 %v9964, %v9957
    %v10322 = vpack.c.b16 %v9965, %v9958
    %v10323 = vpack.c.b16 %v9966, %v9959
    %v10324 = vpack.c.b16 %v9967, %v9960
    %v10325 = vpack.c.b16 %v9975, %v9968
    %v10326 = vpack.c.b16 %v9976, %v9969
    %v10327 = vpack.c.b16 %v9977, %v9970
    %v10328 = vpack.c.b16 %v9978, %v9971
    %v10329 = vpack.c.b16 %v9979, %v9972
    %v10330 = vpack.c.b16 %v9980, %v9973
    %v10331 = vpack.c.b16 %v9981, %v9974
    %v10332 = vpack.c.b16 %v9989, %v9982
    %v10333 = vpack.c.b16 %v9990, %v9983
    %v10334 = vpack.c.b16 %v9991, %v9984
    %v10335 = vpack.c.b16 %v9992, %v9985
    %v10336 = vpack.c.b16 %v9993, %v9986
    %v10337 = vpack.c.b16 %v9994, %v9987
    %v10338 = vpack.c.b16 %v9995, %v9988
    %10682 = vmatprep.subr.bf16.mxu0 %v10046
    %10683 = vmatpush1.bf16.msra.mxu0 %v10045
    %10684 = vmatprep.subr.bf16.mxu0 %v10039
    %10685 = vmatpush1.bf16.msra.mxu0 %v10038
    %10686 = vmatprep.subr.bf16.mxu0 %v10032
    %10687 = vmatpush1.bf16.msra.mxu0 %v10031
    %10688 = vmatprep.subr.bf16.mxu0 %v10025
    %10689 = vmatpush1.bf16.msra.mxu0 %v10024
    %10690 = vmatprep.subr.bf16.mxu0 %v10018
    %10691 = vmatpush1.bf16.msra.mxu0 %v10017
    %10692 = vmatprep.subr.bf16.mxu0 %v10011
    %10693 = vmatpush1.bf16.msra.mxu0 %v10010
    %10694 = vmatprep.subr.bf16.mxu0 %v10004
    %10695 = vmatpush1.bf16.msra.mxu0 %v10003
    %10696 = vmatprep.subr.bf16.mxu0 %v9997
    %10697 = vmatpush1.bf16.msra.mxu0 %v9996
    %10698 = vmatprep.subr.bf16.mxu0 %v10102
    %10699 = vmatpush2.bf16.msra.mxu0 %v10101
    %10700 = vmatprep.subr.bf16.mxu0 %v10095
    %10701 = vmatpush2.bf16.msra.mxu0 %v10094
    %10702 = vmatprep.subr.bf16.mxu0 %v10088
    %10703 = vmatpush2.bf16.msra.mxu0 %v10087
    %10704 = vmatprep.subr.bf16.mxu0 %v10081
    %10705 = vmatpush2.bf16.msra.mxu0 %v10080
    %10706 = vmatprep.subr.bf16.mxu0 %v10074
    %10707 = vmatpush2.bf16.msra.mxu0 %v10073
    %10708 = vmatprep.subr.bf16.mxu0 %v10067
    %10709 = vmatpush2.bf16.msra.mxu0 %v10066
    %10710 = vmatprep.subr.bf16.mxu0 %v10060
    %10711 = vmatpush2.bf16.msra.mxu0 %v10059
    %10712 = vmatprep.subr.bf16.mxu0 %v10053
    %10713 = vmatpush2.bf16.msra.mxu0 %v10052
    %10714 = vmatprep.mubr.bf16.mxu0 %v461
    %10715 = vmatmul.mubr.bf16.gmra.mxu0 %v460
    %v10716 = vpop.f32.mrf.mxu0
    %v10717 = vadd.f32 0.0, %v10716
    %v10718 = vpop.f32.mrf.mxu0
    %v10719 = vadd.f32 0.0, %v10718
    %v10720 = vpop.f32.mrf.mxu0
    %v10721 = vpop.f32.mrf.mxu0
    %10722 = vdwg.mxu0
    %10723 = vmatprep.subr.bf16.mxu0 %v10158
    %10724 = vmatpush1.bf16.msra.mxu0 %v10157
    %10725 = vmatprep.subr.bf16.mxu0 %v10151
    %10726 = vmatpush1.bf16.msra.mxu0 %v10150
    %10727 = vmatprep.subr.bf16.mxu0 %v10144
    %10728 = vmatpush1.bf16.msra.mxu0 %v10143
    %10729 = vmatprep.subr.bf16.mxu0 %v10137
    %10730 = vmatpush1.bf16.msra.mxu0 %v10136
    %10731 = vmatprep.subr.bf16.mxu0 %v10130
    %10732 = vmatpush1.bf16.msra.mxu0 %v10129
    %10733 = vmatprep.subr.bf16.mxu0 %v10123
    %10734 = vmatpush1.bf16.msra.mxu0 %v10122
    %10735 = vmatprep.subr.bf16.mxu0 %v10116
    %10736 = vmatpush1.bf16.msra.mxu0 %v10115
    %10737 = vmatprep.subr.bf16.mxu0 %v10109
    %10738 = vmatpush1.bf16.msra.mxu0 %v10108
    %10739 = vmatprep.subr.bf16.mxu0 %v10214
    %10740 = vmatpush2.bf16.msra.mxu0 %v10213
    %10741 = vmatprep.subr.bf16.mxu0 %v10207
    %10742 = vmatpush2.bf16.msra.mxu0 %v10206
    %10743 = vmatprep.subr.bf16.mxu0 %v10200
    %10744 = vmatpush2.bf16.msra.mxu0 %v10199
    %10745 = vmatprep.subr.bf16.mxu0 %v10193
    %10746 = vmatpush2.bf16.msra.mxu0 %v10192
    %10747 = vmatprep.subr.bf16.mxu0 %v10186
    %10748 = vmatpush2.bf16.msra.mxu0 %v10185
    %10749 = vmatprep.subr.bf16.mxu0 %v10179
    %10750 = vmatpush2.bf16.msra.mxu0 %v10178
    %10751 = vmatprep.subr.bf16.mxu0 %v10172
    %10752 = vmatpush2.bf16.msra.mxu0 %v10171
    %10753 = vmatprep.subr.bf16.mxu0 %v10165
    %10754 = vmatpush2.bf16.msra.mxu0 %v10164
    %10755 = vmatprep.mubr.bf16.mxu0 %v463
    %10756 = vmatmul.mubr.bf16.gmra.mxu0 %v462
    %v10757 = vpop.f32.mrf.mxu0
    %v10758 = vadd.f32 %v10717, %v10757
    %v10759 = vpop.f32.mrf.mxu0
    %v10760 = vadd.f32 %v10719, %v10759
    %v10761 = vpop.f32.mrf.mxu0
    %v10762 = vpop.f32.mrf.mxu0
    %10763 = vdwg.mxu0
    %10764 = vmatprep.subr.bf16.mxu0 %v10270
    %10765 = vmatpush1.bf16.msra.mxu0 %v10269
    %10766 = vmatprep.subr.bf16.mxu0 %v10263
    %10767 = vmatpush1.bf16.msra.mxu0 %v10262
    %10768 = vmatprep.subr.bf16.mxu0 %v10256
    %10769 = vmatpush1.bf16.msra.mxu0 %v10255
    %10770 = vmatprep.subr.bf16.mxu0 %v10249
    %10771 = vmatpush1.bf16.msra.mxu0 %v10248
    %10772 = vmatprep.subr.bf16.mxu0 %v10242
    %10773 = vmatpush1.bf16.msra.mxu0 %v10241
    %10774 = vmatprep.subr.bf16.mxu0 %v10235
    %10775 = vmatpush1.bf16.msra.mxu0 %v10234
    %10776 = vmatprep.subr.bf16.mxu0 %v10228
    %10777 = vmatpush1.bf16.msra.mxu0 %v10227
    %10778 = vmatprep.subr.bf16.mxu0 %v10221
    %10779 = vmatpush1.bf16.msra.mxu0 %v10220
    %10780 = vmatprep.subr.bf16.mxu0 %v10326
    %10781 = vmatpush2.bf16.msra.mxu0 %v10325
    %10782 = vmatprep.subr.bf16.mxu0 %v10319
    %10783 = vmatpush2.bf16.msra.mxu0 %v10318
    %10784 = vmatprep.subr.bf16.mxu0 %v10312
    %10785 = vmatpush2.bf16.msra.mxu0 %v10311
    %10786 = vmatprep.subr.bf16.mxu0 %v10305
    %10787 = vmatpush2.bf16.msra.mxu0 %v10304
    %10788 = vmatprep.subr.bf16.mxu0 %v10298
    %10789 = vmatpush2.bf16.msra.mxu0 %v10297
    %10790 = vmatprep.subr.bf16.mxu0 %v10291
    %10791 = vmatpush2.bf16.msra.mxu0 %v10290
    %10792 = vmatprep.subr.bf16.mxu0 %v10284
    %10793 = vmatpush2.bf16.msra.mxu0 %v10283
    %10794 = vmatprep.subr.bf16.mxu0 %v10277
    %10795 = vmatpush2.bf16.msra.mxu0 %v10276
    %10796 = vmatprep.mubr.bf16.mxu0 %v465
    %10797 = vmatmul.mubr.bf16.gmra.mxu0 %v464
    %v10798 = vpop.f32.mrf.mxu0
    %v10799 = vadd.f32 %v10758, %v10798
    %v10800 = vpop.f32.mrf.mxu0
    %v10801 = vadd.f32 %v10760, %v10800
    %v10802 = vpop.f32.mrf.mxu0
    %v10803 = vpop.f32.mrf.mxu0
    %10804 = vdwg.mxu0
    %10805 = vmatprep.subr.bf16.mxu0 0
    %10806 = vmatpush1.bf16.msra.mxu0 0
    %10807 = vmatprep.subr.bf16.mxu0 0
    %10808 = vmatpush1.bf16.msra.mxu0 0
    %10809 = vmatprep.subr.bf16.mxu0 0
    %10810 = vmatpush1.bf16.msra.mxu0 0
    %10811 = vmatprep.subr.bf16.mxu0 0
    %10812 = vmatpush1.bf16.msra.mxu0 0
    %10813 = vmatprep.subr.bf16.mxu0 0
    %10814 = vmatpush1.bf16.msra.mxu0 0
    %10815 = vmatprep.subr.bf16.mxu0 0
    %10816 = vmatpush1.bf16.msra.mxu0 0
    %10817 = vmatprep.subr.bf16.mxu0 0
    %10818 = vmatpush1.bf16.msra.mxu0 0
    %10819 = vmatprep.subr.bf16.mxu0 %v10333
    %10820 = vmatpush1.bf16.msra.mxu0 %v10332
    %10821 = vmatprep.subr.bf16.mxu0 0
    %10822 = vmatpush2.bf16.msra.mxu0 0
    %10823 = vmatprep.subr.bf16.mxu0 0
    %10824 = vmatpush2.bf16.msra.mxu0 0
    %10825 = vmatprep.subr.bf16.mxu0 0
    %10826 = vmatpush2.bf16.msra.mxu0 0
    %10827 = vmatprep.subr.bf16.mxu0 0
    %10828 = vmatpush2.bf16.msra.mxu0 0
    %10829 = vmatprep.subr.bf16.mxu0 0
    %10830 = vmatpush2.bf16.msra.mxu0 0
    %10831 = vmatprep.subr.bf16.mxu0 0
    %10832 = vmatpush2.bf16.msra.mxu0 0
    %10833 = vmatprep.subr.bf16.mxu0 0
    %10834 = vmatpush2.bf16.msra.mxu0 0
    %10835 = vmatprep.subr.bf16.mxu0 0
    %10836 = vmatpush2.bf16.msra.mxu0 0
    %10837 = vmatprep.mubr.bf16.mxu0 0
    %10838 = vmatmul.mubr.bf16.gmra.mxu0 %v2239
    %v10839 = vpop.f32.mrf.mxu0
    %v10840 = vadd.f32 %v10799, %v10839
    %v10841 = vpop.f32.mrf.mxu0
    %v10842 = vadd.f32 %v10801, %v10841
    %v10843 = vpop.f32.mrf.mxu0
    %v10844 = vpop.f32.mrf.mxu0
    %10845 = vdwg.mxu0
    %10846 = vmatprep.subr.bf16.mxu0 %v10048
    %10847 = vmatpush1.bf16.msra.mxu0 %v10047
    %10848 = vmatprep.subr.bf16.mxu0 %v10041
    %10849 = vmatpush1.bf16.msra.mxu0 %v10040
    %10850 = vmatprep.subr.bf16.mxu0 %v10034
    %10851 = vmatpush1.bf16.msra.mxu0 %v10033
    %10852 = vmatprep.subr.bf16.mxu0 %v10027
    %10853 = vmatpush1.bf16.msra.mxu0 %v10026
    %10854 = vmatprep.subr.bf16.mxu0 %v10020
    %10855 = vmatpush1.bf16.msra.mxu0 %v10019
    %10856 = vmatprep.subr.bf16.mxu0 %v10013
    %10857 = vmatpush1.bf16.msra.mxu0 %v10012
    %10858 = vmatprep.subr.bf16.mxu0 %v10006
    %10859 = vmatpush1.bf16.msra.mxu0 %v10005
    %10860 = vmatprep.subr.bf16.mxu0 %v9999
    %10861 = vmatpush1.bf16.msra.mxu0 %v9998
    %10862 = vmatprep.subr.bf16.mxu0 %v10104
    %10863 = vmatpush2.bf16.msra.mxu0 %v10103
    %10864 = vmatprep.subr.bf16.mxu0 %v10097
    %10865 = vmatpush2.bf16.msra.mxu0 %v10096
    %10866 = vmatprep.subr.bf16.mxu0 %v10090
    %10867 = vmatpush2.bf16.msra.mxu0 %v10089
    %10868 = vmatprep.subr.bf16.mxu0 %v10083
    %10869 = vmatpush2.bf16.msra.mxu0 %v10082
    %10870 = vmatprep.subr.bf16.mxu0 %v10076
    %10871 = vmatpush2.bf16.msra.mxu0 %v10075
    %10872 = vmatprep.subr.bf16.mxu0 %v10069
    %10873 = vmatpush2.bf16.msra.mxu0 %v10068
    %10874 = vmatprep.subr.bf16.mxu0 %v10062
    %10875 = vmatpush2.bf16.msra.mxu0 %v10061
    %10876 = vmatprep.subr.bf16.mxu0 %v10055
    %10877 = vmatpush2.bf16.msra.mxu0 %v10054
    %10878 = vmatprep.mubr.bf16.mxu0 %v461
    %10879 = vmatmul.mubr.bf16.gmra.mxu0 %v460
    %v10880 = vpop.f32.mrf.mxu0
    %v10881 = vadd.f32 0.0, %v10880
    %v10882 = vpop.f32.mrf.mxu0
    %v10883 = vadd.f32 0.0, %v10882
    %v10884 = vpop.f32.mrf.mxu0
    %v10885 = vpop.f32.mrf.mxu0
    %10886 = vdwg.mxu0
    %10887 = vmatprep.subr.bf16.mxu0 %v10160
    %10888 = vmatpush1.bf16.msra.mxu0 %v10159
    %10889 = vmatprep.subr.bf16.mxu0 %v10153
    %10890 = vmatpush1.bf16.msra.mxu0 %v10152
    %10891 = vmatprep.subr.bf16.mxu0 %v10146
    %10892 = vmatpush1.bf16.msra.mxu0 %v10145
    %10893 = vmatprep.subr.bf16.mxu0 %v10139
    %10894 = vmatpush1.bf16.msra.mxu0 %v10138
    %10895 = vmatprep.subr.bf16.mxu0 %v10132
    %10896 = vmatpush1.bf16.msra.mxu0 %v10131
    %10897 = vmatprep.subr.bf16.mxu0 %v10125
    %10898 = vmatpush1.bf16.msra.mxu0 %v10124
    %10899 = vmatprep.subr.bf16.mxu0 %v10118
    %10900 = vmatpush1.bf16.msra.mxu0 %v10117
    %10901 = vmatprep.subr.bf16.mxu0 %v10111
    %10902 = vmatpush1.bf16.msra.mxu0 %v10110
    %10903 = vmatprep.subr.bf16.mxu0 %v10216
    %10904 = vmatpush2.bf16.msra.mxu0 %v10215
    %10905 = vmatprep.subr.bf16.mxu0 %v10209
    %10906 = vmatpush2.bf16.msra.mxu0 %v10208
    %10907 = vmatprep.subr.bf16.mxu0 %v10202
    %10908 = vmatpush2.bf16.msra.mxu0 %v10201
    %10909 = vmatprep.subr.bf16.mxu0 %v10195
    %10910 = vmatpush2.bf16.msra.mxu0 %v10194
    %10911 = vmatprep.subr.bf16.mxu0 %v10188
    %10912 = vmatpush2.bf16.msra.mxu0 %v10187
    %10913 = vmatprep.subr.bf16.mxu0 %v10181
    %10914 = vmatpush2.bf16.msra.mxu0 %v10180
    %10915 = vmatprep.subr.bf16.mxu0 %v10174
    %10916 = vmatpush2.bf16.msra.mxu0 %v10173
    %10917 = vmatprep.subr.bf16.mxu0 %v10167
    %10918 = vmatpush2.bf16.msra.mxu0 %v10166
    %10919 = vmatprep.mubr.bf16.mxu0 %v463
    %10920 = vmatmul.mubr.bf16.gmra.mxu0 %v462
    %v10921 = vpop.f32.mrf.mxu0
    %v10922 = vadd.f32 %v10881, %v10921
    %v10923 = vpop.f32.mrf.mxu0
    %v10924 = vadd.f32 %v10883, %v10923
    %v10925 = vpop.f32.mrf.mxu0
    %v10926 = vpop.f32.mrf.mxu0
    %10927 = vdwg.mxu0
    %10928 = vmatprep.subr.bf16.mxu0 %v10272
    %10929 = vmatpush1.bf16.msra.mxu0 %v10271
    %10930 = vmatprep.subr.bf16.mxu0 %v10265
    %10931 = vmatpush1.bf16.msra.mxu0 %v10264
    %10932 = vmatprep.subr.bf16.mxu0 %v10258
    %10933 = vmatpush1.bf16.msra.mxu0 %v10257
    %10934 = vmatprep.subr.bf16.mxu0 %v10251
    %10935 = vmatpush1.bf16.msra.mxu0 %v10250
    %10936 = vmatprep.subr.bf16.mxu0 %v10244
    %10937 = vmatpush1.bf16.msra.mxu0 %v10243
    %10938 = vmatprep.subr.bf16.mxu0 %v10237
    %10939 = vmatpush1.bf16.msra.mxu0 %v10236
    %10940 = vmatprep.subr.bf16.mxu0 %v10230
    %10941 = vmatpush1.bf16.msra.mxu0 %v10229
    %10942 = vmatprep.subr.bf16.mxu0 %v10223
    %10943 = vmatpush1.bf16.msra.mxu0 %v10222
    %10944 = vmatprep.subr.bf16.mxu0 %v10328
    %10945 = vmatpush2.bf16.msra.mxu0 %v10327
    %10946 = vmatprep.subr.bf16.mxu0 %v10321
    %10947 = vmatpush2.bf16.msra.mxu0 %v10320
    %10948 = vmatprep.subr.bf16.mxu0 %v10314
    %10949 = vmatpush2.bf16.msra.mxu0 %v10313
    %10950 = vmatprep.subr.bf16.mxu0 %v10307
    %10951 = vmatpush2.bf16.msra.mxu0 %v10306
    %10952 = vmatprep.subr.bf16.mxu0 %v10300
    %10953 = vmatpush2.bf16.msra.mxu0 %v10299
    %10954 = vmatprep.subr.bf16.mxu0 %v10293
    %10955 = vmatpush2.bf16.msra.mxu0 %v10292
    %10956 = vmatprep.subr.bf16.mxu0 %v10286
    %10957 = vmatpush2.bf16.msra.mxu0 %v10285
    %10958 = vmatprep.subr.bf16.mxu0 %v10279
    %10959 = vmatpush2.bf16.msra.mxu0 %v10278
    %10960 = vmatprep.mubr.bf16.mxu0 %v465
    %10961 = vmatmul.mubr.bf16.gmra.mxu0 %v464
    %v10962 = vpop.f32.mrf.mxu0
    %v10963 = vadd.f32 %v10922, %v10962
    %v10964 = vpop.f32.mrf.mxu0
    %v10965 = vadd.f32 %v10924, %v10964
    %v10966 = vpop.f32.mrf.mxu0
    %v10967 = vpop.f32.mrf.mxu0
    %10968 = vdwg.mxu0
    %10969 = vmatprep.subr.bf16.mxu0 0
    %10970 = vmatpush1.bf16.msra.mxu0 0
    %10971 = vmatprep.subr.bf16.mxu0 0
    %10972 = vmatpush1.bf16.msra.mxu0 0
    %10973 = vmatprep.subr.bf16.mxu0 0
    %10974 = vmatpush1.bf16.msra.mxu0 0
    %10975 = vmatprep.subr.bf16.mxu0 0
    %10976 = vmatpush1.bf16.msra.mxu0 0
    %10977 = vmatprep.subr.bf16.mxu0 0
    %10978 = vmatpush1.bf16.msra.mxu0 0
    %10979 = vmatprep.subr.bf16.mxu0 0
    %10980 = vmatpush1.bf16.msra.mxu0 0
    %10981 = vmatprep.subr.bf16.mxu0 0
    %10982 = vmatpush1.bf16.msra.mxu0 0
    %10983 = vmatprep.subr.bf16.mxu0 %v10335
    %10984 = vmatpush1.bf16.msra.mxu0 %v10334
    %10985 = vmatprep.subr.bf16.mxu0 0
    %10986 = vmatpush2.bf16.msra.mxu0 0
    %10987 = vmatprep.subr.bf16.mxu0 0
    %10988 = vmatpush2.bf16.msra.mxu0 0
    %10989 = vmatprep.subr.bf16.mxu0 0
    %10990 = vmatpush2.bf16.msra.mxu0 0
    %10991 = vmatprep.subr.bf16.mxu0 0
    %10992 = vmatpush2.bf16.msra.mxu0 0
    %10993 = vmatprep.subr.bf16.mxu0 0
    %10994 = vmatpush2.bf16.msra.mxu0 0
    %10995 = vmatprep.subr.bf16.mxu0 0
    %10996 = vmatpush2.bf16.msra.mxu0 0
    %10997 = vmatprep.subr.bf16.mxu0 0
    %10998 = vmatpush2.bf16.msra.mxu0 0
    %10999 = vmatprep.subr.bf16.mxu0 0
    %11000 = vmatpush2.bf16.msra.mxu0 0
    %11001 = vmatprep.mubr.bf16.mxu0 0
    %11002 = vmatmul.mubr.bf16.gmra.mxu0 %v2239
    %v11003 = vpop.f32.mrf.mxu0
    %v11004 = vadd.f32 %v10963, %v11003
    %v11005 = vpop.f32.mrf.mxu0
    %v11006 = vadd.f32 %v10965, %v11005
    %v11007 = vpop.f32.mrf.mxu0
    %v11008 = vpop.f32.mrf.mxu0
    %11009 = vdwg.mxu0
    %11010 = vmatprep.subr.bf16.mxu0 %v10050
    %11011 = vmatpush1.bf16.msra.mxu0 %v10049
    %11012 = vmatprep.subr.bf16.mxu0 %v10043
    %11013 = vmatpush1.bf16.msra.mxu0 %v10042
    %11014 = vmatprep.subr.bf16.mxu0 %v10036
    %11015 = vmatpush1.bf16.msra.mxu0 %v10035
    %11016 = vmatprep.subr.bf16.mxu0 %v10029
    %11017 = vmatpush1.bf16.msra.mxu0 %v10028
    %11018 = vmatprep.subr.bf16.mxu0 %v10022
    %11019 = vmatpush1.bf16.msra.mxu0 %v10021
    %11020 = vmatprep.subr.bf16.mxu0 %v10015
    %11021 = vmatpush1.bf16.msra.mxu0 %v10014
    %11022 = vmatprep.subr.bf16.mxu0 %v10008
    %11023 = vmatpush1.bf16.msra.mxu0 %v10007
    %11024 = vmatprep.subr.bf16.mxu0 %v10001
    %11025 = vmatpush1.bf16.msra.mxu0 %v10000
    %11026 = vmatprep.subr.bf16.mxu0 %v10106
    %11027 = vmatpush2.bf16.msra.mxu0 %v10105
    %11028 = vmatprep.subr.bf16.mxu0 %v10099
    %11029 = vmatpush2.bf16.msra.mxu0 %v10098
    %11030 = vmatprep.subr.bf16.mxu0 %v10092
    %11031 = vmatpush2.bf16.msra.mxu0 %v10091
    %11032 = vmatprep.subr.bf16.mxu0 %v10085
    %11033 = vmatpush2.bf16.msra.mxu0 %v10084
    %11034 = vmatprep.subr.bf16.mxu0 %v10078
    %11035 = vmatpush2.bf16.msra.mxu0 %v10077
    %11036 = vmatprep.subr.bf16.mxu0 %v10071
    %11037 = vmatpush2.bf16.msra.mxu0 %v10070
    %11038 = vmatprep.subr.bf16.mxu0 %v10064
    %11039 = vmatpush2.bf16.msra.mxu0 %v10063
    %11040 = vmatprep.subr.bf16.mxu0 %v10057
    %11041 = vmatpush2.bf16.msra.mxu0 %v10056
    %11042 = vmatprep.mubr.bf16.mxu0 %v461
    %11043 = vmatmul.mubr.bf16.gmra.mxu0 %v460
    %v11044 = vpop.f32.mrf.mxu0
    %v11045 = vadd.f32 0.0, %v11044
    %v11046 = vpop.f32.mrf.mxu0
    %v11047 = vadd.f32 0.0, %v11046
    %v11048 = vpop.f32.mrf.mxu0
    %v11049 = vpop.f32.mrf.mxu0
    %11050 = vdwg.mxu0
    %11051 = vmatprep.subr.bf16.mxu0 %v10162
    %11052 = vmatpush1.bf16.msra.mxu0 %v10161
    %11053 = vmatprep.subr.bf16.mxu0 %v10155
    %11054 = vmatpush1.bf16.msra.mxu0 %v10154
    %11055 = vmatprep.subr.bf16.mxu0 %v10148
    %11056 = vmatpush1.bf16.msra.mxu0 %v10147
    %11057 = vmatprep.subr.bf16.mxu0 %v10141
    %11058 = vmatpush1.bf16.msra.mxu0 %v10140
    %11059 = vmatprep.subr.bf16.mxu0 %v10134
    %11060 = vmatpush1.bf16.msra.mxu0 %v10133
    %11061 = vmatprep.subr.bf16.mxu0 %v10127
    %11062 = vmatpush1.bf16.msra.mxu0 %v10126
    %11063 = vmatprep.subr.bf16.mxu0 %v10120
    %11064 = vmatpush1.bf16.msra.mxu0 %v10119
    %11065 = vmatprep.subr.bf16.mxu0 %v10113
    %11066 = vmatpush1.bf16.msra.mxu0 %v10112
    %11067 = vmatprep.subr.bf16.mxu0 %v10218
    %11068 = vmatpush2.bf16.msra.mxu0 %v10217
    %11069 = vmatprep.subr.bf16.mxu0 %v10211
    %11070 = vmatpush2.bf16.msra.mxu0 %v10210
    %11071 = vmatprep.subr.bf16.mxu0 %v10204
    %11072 = vmatpush2.bf16.msra.mxu0 %v10203
    %11073 = vmatprep.subr.bf16.mxu0 %v10197
    %11074 = vmatpush2.bf16.msra.mxu0 %v10196
    %11075 = vmatprep.subr.bf16.mxu0 %v10190
    %11076 = vmatpush2.bf16.msra.mxu0 %v10189
    %11077 = vmatprep.subr.bf16.mxu0 %v10183
    %11078 = vmatpush2.bf16.msra.mxu0 %v10182
    %11079 = vmatprep.subr.bf16.mxu0 %v10176
    %11080 = vmatpush2.bf16.msra.mxu0 %v10175
    %11081 = vmatprep.subr.bf16.mxu0 %v10169
    %11082 = vmatpush2.bf16.msra.mxu0 %v10168
    %11083 = vmatprep.mubr.bf16.mxu0 %v463
    %11084 = vmatmul.mubr.bf16.gmra.mxu0 %v462
    %v11085 = vpop.f32.mrf.mxu0
    %v11086 = vadd.f32 %v11045, %v11085
    %v11087 = vpop.f32.mrf.mxu0
    %v11088 = vadd.f32 %v11047, %v11087
    %v11089 = vpop.f32.mrf.mxu0
    %v11090 = vpop.f32.mrf.mxu0
    %11091 = vdwg.mxu0
    %11092 = vmatprep.subr.bf16.mxu0 %v10274
    %11093 = vmatpush1.bf16.msra.mxu0 %v10273
    %11094 = vmatprep.subr.bf16.mxu0 %v10267
    %11095 = vmatpush1.bf16.msra.mxu0 %v10266
    %11096 = vmatprep.subr.bf16.mxu0 %v10260
    %11097 = vmatpush1.bf16.msra.mxu0 %v10259
    %11098 = vmatprep.subr.bf16.mxu0 %v10253
    %11099 = vmatpush1.bf16.msra.mxu0 %v10252
    %11100 = vmatprep.subr.bf16.mxu0 %v10246
    %11101 = vmatpush1.bf16.msra.mxu0 %v10245
    %11102 = vmatprep.subr.bf16.mxu0 %v10239
    %11103 = vmatpush1.bf16.msra.mxu0 %v10238
    %11104 = vmatprep.subr.bf16.mxu0 %v10232
    %11105 = vmatpush1.bf16.msra.mxu0 %v10231
    %11106 = vmatprep.subr.bf16.mxu0 %v10225
    %11107 = vmatpush1.bf16.msra.mxu0 %v10224
    %11108 = vmatprep.subr.bf16.mxu0 %v10330
    %11109 = vmatpush2.bf16.msra.mxu0 %v10329
    %11110 = vmatprep.subr.bf16.mxu0 %v10323
    %11111 = vmatpush2.bf16.msra.mxu0 %v10322
    %11112 = vmatprep.subr.bf16.mxu0 %v10316
    %11113 = vmatpush2.bf16.msra.mxu0 %v10315
    %11114 = vmatprep.subr.bf16.mxu0 %v10309
    %11115 = vmatpush2.bf16.msra.mxu0 %v10308
    %11116 = vmatprep.subr.bf16.mxu0 %v10302
    %11117 = vmatpush2.bf16.msra.mxu0 %v10301
    %11118 = vmatprep.subr.bf16.mxu0 %v10295
    %11119 = vmatpush2.bf16.msra.mxu0 %v10294
    %11120 = vmatprep.subr.bf16.mxu0 %v10288
    %11121 = vmatpush2.bf16.msra.mxu0 %v10287
    %11122 = vmatprep.subr.bf16.mxu0 %v10281
    %11123 = vmatpush2.bf16.msra.mxu0 %v10280
    %11124 = vmatprep.mubr.bf16.mxu0 %v465
    %11125 = vmatmul.mubr.bf16.gmra.mxu0 %v464
    %v11126 = vpop.f32.mrf.mxu0
    %v11127 = vadd.f32 %v11086, %v11126
    %v11128 = vpop.f32.mrf.mxu0
    %v11129 = vadd.f32 %v11088, %v11128
    %v11130 = vpop.f32.mrf.mxu0
    %v11131 = vpop.f32.mrf.mxu0
    %11132 = vdwg.mxu0
    %11133 = vmatprep.subr.bf16.mxu0 0
    %11134 = vmatpush1.bf16.msra.mxu0 0
    %11135 = vmatprep.subr.bf16.mxu0 0
    %11136 = vmatpush1.bf16.msra.mxu0 0
    %11137 = vmatprep.subr.bf16.mxu0 0
    %11138 = vmatpush1.bf16.msra.mxu0 0
    %11139 = vmatprep.subr.bf16.mxu0 0
    %11140 = vmatpush1.bf16.msra.mxu0 0
    %11141 = vmatprep.subr.bf16.mxu0 0
    %11142 = vmatpush1.bf16.msra.mxu0 0
    %11143 = vmatprep.subr.bf16.mxu0 0
    %11144 = vmatpush1.bf16.msra.mxu0 0
    %11145 = vmatprep.subr.bf16.mxu0 0
    %11146 = vmatpush1.bf16.msra.mxu0 0
    %11147 = vmatprep.subr.bf16.mxu0 %v10337
    %11148 = vmatpush1.bf16.msra.mxu0 %v10336
    %11149 = vmatprep.subr.bf16.mxu0 0
    %11150 = vmatpush2.bf16.msra.mxu0 0
    %11151 = vmatprep.subr.bf16.mxu0 0
    %11152 = vmatpush2.bf16.msra.mxu0 0
    %11153 = vmatprep.subr.bf16.mxu0 0
    %11154 = vmatpush2.bf16.msra.mxu0 0
    %11155 = vmatprep.subr.bf16.mxu0 0
    %11156 = vmatpush2.bf16.msra.mxu0 0
    %11157 = vmatprep.subr.bf16.mxu0 0
    %11158 = vmatpush2.bf16.msra.mxu0 0
    %11159 = vmatprep.subr.bf16.mxu0 0
    %11160 = vmatpush2.bf16.msra.mxu0 0
    %11161 = vmatprep.subr.bf16.mxu0 0
    %11162 = vmatpush2.bf16.msra.mxu0 0
    %11163 = vmatprep.subr.bf16.mxu0 0
    %11164 = vmatpush2.bf16.msra.mxu0 0
    %11165 = vmatprep.mubr.bf16.mxu0 0
    %11166 = vmatmul.mubr.bf16.gmra.mxu0 %v2239
    %v11167 = vpop.f32.mrf.mxu0
    %v11168 = vadd.f32 %v11127, %v11167
    %v11169 = vpop.f32.mrf.mxu0
    %v11170 = vadd.f32 %v11129, %v11169
    %v11171 = vpop.f32.mrf.mxu0
    %v11172 = vpop.f32.mrf.mxu0
    %11173 = vdwg.mxu0
    %11174 = vmatprep.subr.bf16.mxu0 0
    %11175 = vmatpush1.bf16.msra.mxu0 %v10051
    %11176 = vmatprep.subr.bf16.mxu0 0
    %11177 = vmatpush1.bf16.msra.mxu0 %v10044
    %11178 = vmatprep.subr.bf16.mxu0 0
    %11179 = vmatpush1.bf16.msra.mxu0 %v10037
    %11180 = vmatprep.subr.bf16.mxu0 0
    %11181 = vmatpush1.bf16.msra.mxu0 %v10030
    %11182 = vmatprep.subr.bf16.mxu0 0
    %11183 = vmatpush1.bf16.msra.mxu0 %v10023
    %11184 = vmatprep.subr.bf16.mxu0 0
    %11185 = vmatpush1.bf16.msra.mxu0 %v10016
    %11186 = vmatprep.subr.bf16.mxu0 0
    %11187 = vmatpush1.bf16.msra.mxu0 %v10009
    %11188 = vmatprep.subr.bf16.mxu0 0
    %11189 = vmatpush1.bf16.msra.mxu0 %v10002
    %11190 = vmatprep.subr.bf16.mxu0 0
    %11191 = vmatpush2.bf16.msra.mxu0 %v10107
    %11192 = vmatprep.subr.bf16.mxu0 0
    %11193 = vmatpush2.bf16.msra.mxu0 %v10100
    %11194 = vmatprep.subr.bf16.mxu0 0
    %11195 = vmatpush2.bf16.msra.mxu0 %v10093
    %11196 = vmatprep.subr.bf16.mxu0 0
    %11197 = vmatpush2.bf16.msra.mxu0 %v10086
    %11198 = vmatprep.subr.bf16.mxu0 0
    %11199 = vmatpush2.bf16.msra.mxu0 %v10079
    %11200 = vmatprep.subr.bf16.mxu0 0
    %11201 = vmatpush2.bf16.msra.mxu0 %v10072
    %11202 = vmatprep.subr.bf16.mxu0 0
    %11203 = vmatpush2.bf16.msra.mxu0 %v10065
    %11204 = vmatprep.subr.bf16.mxu0 0
    %11205 = vmatpush2.bf16.msra.mxu0 %v10058
    %11206 = vmatprep.mubr.bf16.mxu0 %v461
    %11207 = vmatmul.mubr.bf16.gmra.mxu0 %v460
    %v11208 = vpop.f32.mrf.mxu0
    %v11209 = vadd.f32 0.0, %v11208
    %v11210 = vpop.f32.mrf.mxu0
    %v11211 = vpop.f32.mrf.mxu0
    %v11212 = vpop.f32.mrf.mxu0
    %11213 = vdwg.mxu0
    %11214 = vmatprep.subr.bf16.mxu0 0
    %11215 = vmatpush1.bf16.msra.mxu0 %v10163
    %11216 = vmatprep.subr.bf16.mxu0 0
    %11217 = vmatpush1.bf16.msra.mxu0 %v10156
    %11218 = vmatprep.subr.bf16.mxu0 0
    %11219 = vmatpush1.bf16.msra.mxu0 %v10149
    %11220 = vmatprep.subr.bf16.mxu0 0
    %11221 = vmatpush1.bf16.msra.mxu0 %v10142
    %11222 = vmatprep.subr.bf16.mxu0 0
    %11223 = vmatpush1.bf16.msra.mxu0 %v10135
    %11224 = vmatprep.subr.bf16.mxu0 0
    %11225 = vmatpush1.bf16.msra.mxu0 %v10128
    %11226 = vmatprep.subr.bf16.mxu0 0
    %11227 = vmatpush1.bf16.msra.mxu0 %v10121
    %11228 = vmatprep.subr.bf16.mxu0 0
    %11229 = vmatpush1.bf16.msra.mxu0 %v10114
    %11230 = vmatprep.subr.bf16.mxu0 0
    %11231 = vmatpush2.bf16.msra.mxu0 %v10219
    %11232 = vmatprep.subr.bf16.mxu0 0
    %11233 = vmatpush2.bf16.msra.mxu0 %v10212
    %11234 = vmatprep.subr.bf16.mxu0 0
    %11235 = vmatpush2.bf16.msra.mxu0 %v10205
    %11236 = vmatprep.subr.bf16.mxu0 0
    %11237 = vmatpush2.bf16.msra.mxu0 %v10198
    %11238 = vmatprep.subr.bf16.mxu0 0
    %11239 = vmatpush2.bf16.msra.mxu0 %v10191
    %11240 = vmatprep.subr.bf16.mxu0 0
    %11241 = vmatpush2.bf16.msra.mxu0 %v10184
    %11242 = vmatprep.subr.bf16.mxu0 0
    %11243 = vmatpush2.bf16.msra.mxu0 %v10177
    %11244 = vmatprep.subr.bf16.mxu0 0
    %11245 = vmatpush2.bf16.msra.mxu0 %v10170
    %11246 = vmatprep.mubr.bf16.mxu0 %v463
    %11247 = vmatmul.mubr.bf16.gmra.mxu0 %v462
    %v11248 = vpop.f32.mrf.mxu0
    %v11249 = vadd.f32 %v11209, %v11248
    %v11250 = vpop.f32.mrf.mxu0
    %v11251 = vpop.f32.mrf.mxu0
    %v11252 = vpop.f32.mrf.mxu0
    %11253 = vdwg.mxu0
    %11254 = vmatprep.subr.bf16.mxu0 0
    %11255 = vmatpush1.bf16.msra.mxu0 %v10275
    %11256 = vmatprep.subr.bf16.mxu0 0
    %11257 = vmatpush1.bf16.msra.mxu0 %v10268
    %11258 = vmatprep.subr.bf16.mxu0 0
    %11259 = vmatpush1.bf16.msra.mxu0 %v10261
    %11260 = vmatprep.subr.bf16.mxu0 0
    %11261 = vmatpush1.bf16.msra.mxu0 %v10254
    %11262 = vmatprep.subr.bf16.mxu0 0
    %11263 = vmatpush1.bf16.msra.mxu0 %v10247
    %11264 = vmatprep.subr.bf16.mxu0 0
    %11265 = vmatpush1.bf16.msra.mxu0 %v10240
    %11266 = vmatprep.subr.bf16.mxu0 0
    %11267 = vmatpush1.bf16.msra.mxu0 %v10233
    %11268 = vmatprep.subr.bf16.mxu0 0
    %11269 = vmatpush1.bf16.msra.mxu0 %v10226
    %11270 = vmatprep.subr.bf16.mxu0 0
    %11271 = vmatpush2.bf16.msra.mxu0 %v10331
    %11272 = vmatprep.subr.bf16.mxu0 0
    %11273 = vmatpush2.bf16.msra.mxu0 %v10324
    %11274 = vmatprep.subr.bf16.mxu0 0
    %11275 = vmatpush2.bf16.msra.mxu0 %v10317
    %11276 = vmatprep.subr.bf16.mxu0 0
    %11277 = vmatpush2.bf16.msra.mxu0 %v10310
    %11278 = vmatprep.subr.bf16.mxu0 0
    %11279 = vmatpush2.bf16.msra.mxu0 %v10303
    %11280 = vmatprep.subr.bf16.mxu0 0
    %11281 = vmatpush2.bf16.msra.mxu0 %v10296
    %11282 = vmatprep.subr.bf16.mxu0 0
    %11283 = vmatpush2.bf16.msra.mxu0 %v10289
    %11284 = vmatprep.subr.bf16.mxu0 0
    %11285 = vmatpush2.bf16.msra.mxu0 %v10282
    %11286 = vmatprep.mubr.bf16.mxu0 %v465
    %11287 = vmatmul.mubr.bf16.gmra.mxu0 %v464
    %v11288 = vpop.f32.mrf.mxu0
    %v11289 = vadd.f32 %v11249, %v11288
    %v11290 = vpop.f32.mrf.mxu0
    %v11291 = vpop.f32.mrf.mxu0
    %v11292 = vpop.f32.mrf.mxu0
    %11293 = vdwg.mxu0
    %11294 = vmatprep.subr.bf16.mxu0 0
    %11295 = vmatpush1.bf16.msra.mxu0 0
    %11296 = vmatprep.subr.bf16.mxu0 0
    %11297 = vmatpush1.bf16.msra.mxu0 0
    %11298 = vmatprep.subr.bf16.mxu0 0
    %11299 = vmatpush1.bf16.msra.mxu0 0
    %11300 = vmatprep.subr.bf16.mxu0 0
    %11301 = vmatpush1.bf16.msra.mxu0 0
    %11302 = vmatprep.subr.bf16.mxu0 0
    %11303 = vmatpush1.bf16.msra.mxu0 0
    %11304 = vmatprep.subr.bf16.mxu0 0
    %11305 = vmatpush1.bf16.msra.mxu0 0
    %11306 = vmatprep.subr.bf16.mxu0 0
    %11307 = vmatpush1.bf16.msra.mxu0 0
    %11308 = vmatprep.subr.bf16.mxu0 0
    %11309 = vmatpush1.bf16.msra.mxu0 %v10338
    %11310 = vmatprep.subr.bf16.mxu0 0
    %11311 = vmatpush2.bf16.msra.mxu0 0
    %11312 = vmatprep.subr.bf16.mxu0 0
    %11313 = vmatpush2.bf16.msra.mxu0 0
    %11314 = vmatprep.subr.bf16.mxu0 0
    %11315 = vmatpush2.bf16.msra.mxu0 0
    %11316 = vmatprep.subr.bf16.mxu0 0
    %11317 = vmatpush2.bf16.msra.mxu0 0
    %11318 = vmatprep.subr.bf16.mxu0 0
    %11319 = vmatpush2.bf16.msra.mxu0 0
    %11320 = vmatprep.subr.bf16.mxu0 0
    %11321 = vmatpush2.bf16.msra.mxu0 0
    %11322 = vmatprep.subr.bf16.mxu0 0
    %11323 = vmatpush2.bf16.msra.mxu0 0
    %11324 = vmatprep.subr.bf16.mxu0 0
    %11325 = vmatpush2.bf16.msra.mxu0 0
    %11326 = vmatprep.mubr.bf16.mxu0 0
    %11327 = vmatmul.mubr.bf16.gmra.mxu0 %v2239
    %v11328 = vpop.f32.mrf.mxu0
    %v11329 = vadd.f32 %v11289, %v11328
    %v11330 = vpop.f32.mrf.mxu0
    %v11331 = vpop.f32.mrf.mxu0
    %v11332 = vpop.f32.mrf.mxu0
    %11333 = vdwg.mxu0
    %v11334 = vmax.f32 %v8518, %v10840
    %v11335 = vmax.f32 %v8519, %v10842
    %v11336 = vmax.f32 %v8520, %v11004
    %v11337 = vmax.f32 %v8521, %v11006
    %v11338 = vmax.f32 %v8522, %v11168
    %v11339 = vmax.f32 %v8523, %v11170
    %v11340 = vmax.f32 %v8524, %v11329
    %v11341 = vld [vmem:[%s2] sm:$0x7f]
    %v11343 = vlaneseq
    %v11344 = vshrl.u32 %v11343, 7
    %v11345 = vsub.s32 0, %v11344
    %v11346 = vrot.slane %v11341, %v11345
    %v11347 = vlaneseq
    %v11348 = vshrl.u32 %v11347, 7
    %v11349 = vsub.s32 1, %v11348
    %v11350 = vrot.slane %v11341, %v11349
    %v11351 = vlaneseq
    %v11352 = vshrl.u32 %v11351, 7
    %v11353 = vsub.s32 2, %v11352
    %v11354 = vrot.slane %v11341, %v11353
    %v11355 = vlaneseq
    %v11356 = vshrl.u32 %v11355, 7
    %v11357 = vsub.s32 3, %v11356
    %v11358 = vrot.slane %v11341, %v11357
    %v11359 = vlaneseq
    %v11360 = vshrl.u32 %v11359, 7
    %v11361 = vsub.s32 4, %v11360
    %v11362 = vrot.slane %v11341, %v11361
    %v11363 = vlaneseq
    %v11364 = vshrl.u32 %v11363, 7
    %v11365 = vsub.s32 5, %v11364
    %v11366 = vrot.slane %v11341, %v11365
    %v11367 = vlaneseq
    %v11368 = vshrl.u32 %v11367, 7
    %v11369 = vsub.s32 6, %v11368
    %v11370 = vrot.slane %v11341, %v11369
    %v11378 = vadd.f32 %v11334, %v11346
    %v11379 = vadd.f32 %v11335, %v11350
    %v11380 = vadd.f32 %v11336, %v11354
    %v11381 = vadd.f32 %v11337, %v11358
    %v11382 = vadd.f32 %v11338, %v11362
    %v11383 = vadd.f32 %v11339, %v11366
    %v11384 = vadd.f32 %v11340, %v11370
    %v11385 = vmax.f32 %v11378, 0.0
    %v11386 = vmax.f32 %v11379, 0.0
    %v11387 = vmax.f32 %v11380, 0.0
    %v11388 = vmax.f32 %v11381, 0.0
    %v11389 = vmax.f32 %v11382, 0.0
    %v11390 = vmax.f32 %v11383, 0.0
    %v11391 = vmax.f32 %v11384, 0.0
    %v11392 = vpack.c.bf16 %v11385, %v11385
    %v11393 = vpack.c.bf16 %v11386, %v11386
    %v11394 = vpack.c.bf16 %v11387, %v11387
    %v11395 = vpack.c.bf16 %v11388, %v11388
    %v11396 = vpack.c.bf16 %v11389, %v11389
    %v11397 = vpack.c.bf16 %v11390, %v11390
    %v11398 = vpack.c.bf16 %v11391, %v11391
    %v11399 = vld [vmem:[%s3] sm:$0xff]
    %v11400 = vld [vmem:[%s3 + $0x8] sm:$0xff]
    %v11401 = vld [vmem:[%s3 + $0x10] sm:$0xff]
    %v11402 = vld [vmem:[%s3 + $0x18] sm:$0xff]
    %v11403 = vld [vmem:[%s3 + $0x20] sm:$0xff]
    %v11404 = vld [vmem:[%s3 + $0x28] sm:$0xff]
    %v11405 = vld [vmem:[%s3 + $0x30] sm:$0xff]
    %v11406 = vld [vmem:[%s3 + $0x38] sm:$0xff]
    %v11407 = vld [vmem:[%s3 + $0x40] sm:$0xff]
    %v11408 = vld [vmem:[%s3 + $0x48] sm:$0xff]
    %v11409 = vld [vmem:[%s3 + $0x50] sm:$0xff]
    %v11410 = vld [vmem:[%s3 + $0x58] sm:$0xff]
    %v11411 = vld [vmem:[%s3 + $0x60] sm:$0xff]
    %v11412 = vld [vmem:[%s3 + $0x68] sm:$0xff]
    %v11413 = vld [vmem:[%s3 + $0x70] sm:$0xff]
    %v11414 = vld [vmem:[%s3 + $0x78] sm:$0xff]
    %v11415 = vld [vmem:[%s3 + $0x80] sm:$0xff]
    %v11416 = vld [vmem:[%s3 + $0x88] sm:$0xff]
    %v11417 = vld [vmem:[%s3 + $0x90] sm:$0xff]
    %v11418 = vld [vmem:[%s3 + $0x98] sm:$0xff]
    %v11419 = vld [vmem:[%s3 + $0xa0] sm:$0xff]
    %v11420 = vld [vmem:[%s3 + $0xa8] sm:$0xff]
    %v11421 = vld [vmem:[%s3 + $0xb0] sm:$0xff]
    %v11422 = vld [vmem:[%s3 + $0xb8] sm:$0xff]
    %v11423 = vld [vmem:[%s3 + $0xc0] sm:$0xff]
    %v11424 = vld [vmem:[%s3 + $0xc8] sm:$0xff]
    %v11425 = vld [vmem:[%s3 + $0xd0] sm:$0xff]
    %v11426 = vld [vmem:[%s3 + $0xd8] sm:$0xff]
    %v11427 = vld [vmem:[%s3 + $0xe0] sm:$0xff]
    %v11428 = vld [vmem:[%s3 + $0xe8] sm:$0xff]
    %v11429 = vld [vmem:[%s3 + $0xf0] sm:$0xff]
    %v11430 = vld [vmem:[%s3 + $0xf8] sm:$0xff]
    %v11431 = vld [vmem:[%s3 + $0x100] sm:$0xff]
    %v11432 = vld [vmem:[%s3 + $0x108] sm:$0xff]
    %v11433 = vld [vmem:[%s3 + $0x110] sm:$0xff]
    %v11434 = vld [vmem:[%s3 + $0x118] sm:$0xff]
    %v11435 = vld [vmem:[%s3 + $0x120] sm:$0xff]
    %v11436 = vld [vmem:[%s3 + $0x128] sm:$0xff]
    %v11437 = vld [vmem:[%s3 + $0x130] sm:$0xff]
    %v11438 = vld [vmem:[%s3 + $0x138] sm:$0xff]
    %v11439 = vld [vmem:[%s3 + $0x140] sm:$0xff]
    %v11440 = vld [vmem:[%s3 + $0x148] sm:$0xff]
    %v11441 = vld [vmem:[%s3 + $0x150] sm:$0xff]
    %v11442 = vld [vmem:[%s3 + $0x158] sm:$0xff]
    %v11443 = vld [vmem:[%s3 + $0x160] sm:$0xff]
    %v11444 = vld [vmem:[%s3 + $0x168] sm:$0xff]
    %v11445 = vld [vmem:[%s3 + $0x170] sm:$0xff]
    %v11446 = vld [vmem:[%s3 + $0x178] sm:$0xff]
    %v11447 = vld [vmem:[%s3 + $0x180] sm:$0xff]
    %v11448 = vld [vmem:[%s3 + $0x188] sm:$0xff]
    %v11449 = vld [vmem:[%s3 + $0x190] sm:$0xff]
    %v11450 = vld [vmem:[%s3 + $0x198] sm:$0xff]
    %v11451 = vld [vmem:[%s3 + $0x1a0] sm:$0xff]
    %v11452 = vld [vmem:[%s3 + $0x1a8] sm:$0xff]
    %v11453 = vld [vmem:[%s3 + $0x1b0] sm:$0xff]
    %v11454 = vld [vmem:[%s3 + $0x1b8] sm:$0xff]
    %v11455 = vld [vmem:[%s3 + $0x1c0] sm:$0xff]
    %v11456 = vld [vmem:[%s3 + $0x1c8] sm:$0xff]
    %v11457 = vld [vmem:[%s3 + $0x1d0] sm:$0xff]
    %v11458 = vld [vmem:[%s3 + $0x1d8] sm:$0xff]
    %v11459 = vld [vmem:[%s3 + $0x1e0] sm:$0xff]
    %v11460 = vld [vmem:[%s3 + $0x1e8] sm:$0xff]
    %v11461 = vld [vmem:[%s3 + $0x1f0] sm:$0xff]
    %v11462 = vld [vmem:[%s3 + $0x1f8] sm:$0xff]
    %v11463 = vld [vmem:[%s3 + $0x200] sm:$0xff]
    %v11464 = vld [vmem:[%s3 + $0x208] sm:$0xff]
    %v11465 = vld [vmem:[%s3 + $0x210] sm:$0xff]
    %v11466 = vld [vmem:[%s3 + $0x218] sm:$0xff]
    %v11467 = vld [vmem:[%s3 + $0x220] sm:$0xff]
    %v11468 = vld [vmem:[%s3 + $0x228] sm:$0xff]
    %v11469 = vld [vmem:[%s3 + $0x230] sm:$0xff]
    %v11470 = vld [vmem:[%s3 + $0x238] sm:$0xff]
    %v11471 = vld [vmem:[%s3 + $0x240] sm:$0xff]
    %v11472 = vld [vmem:[%s3 + $0x248] sm:$0xff]
    %v11473 = vld [vmem:[%s3 + $0x250] sm:$0xff]
    %v11474 = vld [vmem:[%s3 + $0x258] sm:$0xff]
    %v11475 = vld [vmem:[%s3 + $0x260] sm:$0xff]
    %v11476 = vld [vmem:[%s3 + $0x268] sm:$0xff]
    %v11477 = vld [vmem:[%s3 + $0x270] sm:$0xff]
    %v11478 = vld [vmem:[%s3 + $0x278] sm:$0xff]
    %v11479 = vld [vmem:[%s3 + $0x280] sm:$0xff]
    %v11480 = vld [vmem:[%s3 + $0x288] sm:$0xff]
    %v11481 = vld [vmem:[%s3 + $0x290] sm:$0xff]
    %v11482 = vld [vmem:[%s3 + $0x298] sm:$0xff]
    %v11483 = vld [vmem:[%s3 + $0x2a0] sm:$0xff]
    %v11484 = vld [vmem:[%s3 + $0x2a8] sm:$0xff]
    %v11485 = vld [vmem:[%s3 + $0x2b0] sm:$0xff]
    %v11486 = vld [vmem:[%s3 + $0x2b8] sm:$0xff]
    %v11487 = vld [vmem:[%s3 + $0x2c0] sm:$0xff]
    %v11488 = vld [vmem:[%s3 + $0x2c8] sm:$0xff]
    %v11489 = vld [vmem:[%s3 + $0x2d0] sm:$0xff]
    %v11490 = vld [vmem:[%s3 + $0x2d8] sm:$0xff]
    %v11491 = vld [vmem:[%s3 + $0x2e0] sm:$0xff]
    %v11492 = vld [vmem:[%s3 + $0x2e8] sm:$0xff]
    %v11493 = vld [vmem:[%s3 + $0x2f0] sm:$0xff]
    %v11494 = vld [vmem:[%s3 + $0x2f8] sm:$0xff]
    %v11495 = vld [vmem:[%s3 + $0x300] sm:$0xff]
    %v11496 = vld [vmem:[%s3 + $0x308] sm:$0xff]
    %v11497 = vld [vmem:[%s3 + $0x310] sm:$0xff]
    %v11498 = vld [vmem:[%s3 + $0x318] sm:$0xff]
    %v11499 = vld [vmem:[%s3 + $0x320] sm:$0xff]
    %v11500 = vld [vmem:[%s3 + $0x328] sm:$0xff]
    %v11501 = vld [vmem:[%s3 + $0x330] sm:$0xff]
    %v11502 = vld [vmem:[%s3 + $0x338] sm:$0xff]
    %v11503 = vld [vmem:[%s3 + $0x340] sm:$0xff]
    %v11504 = vld [vmem:[%s3 + $0x348] sm:$0xff]
    %v11505 = vld [vmem:[%s3 + $0x350] sm:$0xff]
    %v11506 = vld [vmem:[%s3 + $0x358] sm:$0xff]
    %v11615 = vunpack.c.l.b16 %v11399
    %v11616 = vunpack.c.h.b16 %v11399
    %v11617 = vunpack.c.l.b16 %v11400
    %v11618 = vunpack.c.h.b16 %v11400
    %v11619 = vunpack.c.l.b16 %v11401
    %v11620 = vunpack.c.h.b16 %v11401
    %v11621 = vunpack.c.l.b16 %v11402
    %v11622 = vunpack.c.h.b16 %v11402
    %v11623 = vunpack.c.l.b16 %v11403
    %v11624 = vunpack.c.h.b16 %v11403
    %v11625 = vunpack.c.l.b16 %v11404
    %v11626 = vunpack.c.h.b16 %v11404
    %v11627 = vunpack.c.l.b16 %v11405
    %v11628 = vunpack.c.h.b16 %v11405
    %v11629 = vunpack.c.l.b16 %v11406
    %v11630 = vunpack.c.h.b16 %v11406
    %v11631 = vunpack.c.l.b16 %v11407
    %v11632 = vunpack.c.h.b16 %v11407
    %v11633 = vunpack.c.l.b16 %v11408
    %v11634 = vunpack.c.h.b16 %v11408
    %v11635 = vunpack.c.l.b16 %v11409
    %v11636 = vunpack.c.h.b16 %v11409
    %v11637 = vunpack.c.l.b16 %v11410
    %v11638 = vunpack.c.h.b16 %v11410
    %v11639 = vunpack.c.l.b16 %v11411
    %v11640 = vunpack.c.h.b16 %v11411
    %v11641 = vunpack.c.l.b16 %v11412
    %v11642 = vunpack.c.h.b16 %v11412
    %v11643 = vunpack.c.l.b16 %v11413
    %v11644 = vunpack.c.h.b16 %v11413
    %v11645 = vunpack.c.l.b16 %v11414
    %v11646 = vunpack.c.h.b16 %v11414
    %v11647 = vunpack.c.l.b16 %v11415
    %v11648 = vunpack.c.h.b16 %v11415
    %v11649 = vunpack.c.l.b16 %v11416
    %v11650 = vunpack.c.h.b16 %v11416
    %v11651 = vunpack.c.l.b16 %v11417
    %v11652 = vunpack.c.h.b16 %v11417
    %v11653 = vunpack.c.l.b16 %v11418
    %v11654 = vunpack.c.h.b16 %v11418
    %v11655 = vunpack.c.l.b16 %v11419
    %v11656 = vunpack.c.h.b16 %v11419
    %v11657 = vunpack.c.l.b16 %v11420
    %v11658 = vunpack.c.h.b16 %v11420
    %v11659 = vunpack.c.l.b16 %v11421
    %v11660 = vunpack.c.h.b16 %v11421
    %v11661 = vunpack.c.l.b16 %v11422
    %v11662 = vunpack.c.h.b16 %v11422
    %v11663 = vunpack.c.l.b16 %v11423
    %v11664 = vunpack.c.h.b16 %v11423
    %v11665 = vunpack.c.l.b16 %v11424
    %v11666 = vunpack.c.h.b16 %v11424
    %v11667 = vunpack.c.l.b16 %v11425
    %v11668 = vunpack.c.h.b16 %v11425
    %v11669 = vunpack.c.l.b16 %v11426
    %v11670 = vunpack.c.h.b16 %v11426
    %v11671 = vunpack.c.l.b16 %v11427
    %v11672 = vunpack.c.h.b16 %v11427
    %v11673 = vunpack.c.l.b16 %v11428
    %v11674 = vunpack.c.h.b16 %v11428
    %v11675 = vunpack.c.l.b16 %v11429
    %v11676 = vunpack.c.h.b16 %v11429
    %v11677 = vunpack.c.l.b16 %v11430
    %v11678 = vunpack.c.h.b16 %v11430
    %v11679 = vunpack.c.l.b16 %v11431
    %v11680 = vunpack.c.h.b16 %v11431
    %v11681 = vunpack.c.l.b16 %v11432
    %v11682 = vunpack.c.h.b16 %v11432
    %v11683 = vunpack.c.l.b16 %v11433
    %v11684 = vunpack.c.h.b16 %v11433
    %v11685 = vunpack.c.l.b16 %v11434
    %v11686 = vunpack.c.h.b16 %v11434
    %v11687 = vunpack.c.l.b16 %v11435
    %v11688 = vunpack.c.h.b16 %v11435
    %v11689 = vunpack.c.l.b16 %v11436
    %v11690 = vunpack.c.h.b16 %v11436
    %v11691 = vunpack.c.l.b16 %v11437
    %v11692 = vunpack.c.h.b16 %v11437
    %v11693 = vunpack.c.l.b16 %v11438
    %v11694 = vunpack.c.h.b16 %v11438
    %v11695 = vunpack.c.l.b16 %v11439
    %v11696 = vunpack.c.h.b16 %v11439
    %v11697 = vunpack.c.l.b16 %v11440
    %v11698 = vunpack.c.h.b16 %v11440
    %v11699 = vunpack.c.l.b16 %v11441
    %v11700 = vunpack.c.h.b16 %v11441
    %v11701 = vunpack.c.l.b16 %v11442
    %v11702 = vunpack.c.h.b16 %v11442
    %v11703 = vunpack.c.l.b16 %v11443
    %v11704 = vunpack.c.h.b16 %v11443
    %v11705 = vunpack.c.l.b16 %v11444
    %v11706 = vunpack.c.h.b16 %v11444
    %v11707 = vunpack.c.l.b16 %v11445
    %v11708 = vunpack.c.h.b16 %v11445
    %v11709 = vunpack.c.l.b16 %v11446
    %v11710 = vunpack.c.h.b16 %v11446
    %v11711 = vunpack.c.l.b16 %v11447
    %v11712 = vunpack.c.h.b16 %v11447
    %v11713 = vunpack.c.l.b16 %v11448
    %v11714 = vunpack.c.h.b16 %v11448
    %v11715 = vunpack.c.l.b16 %v11449
    %v11716 = vunpack.c.h.b16 %v11449
    %v11717 = vunpack.c.l.b16 %v11450
    %v11718 = vunpack.c.h.b16 %v11450
    %v11719 = vunpack.c.l.b16 %v11451
    %v11720 = vunpack.c.h.b16 %v11451
    %v11721 = vunpack.c.l.b16 %v11452
    %v11722 = vunpack.c.h.b16 %v11452
    %v11723 = vunpack.c.l.b16 %v11453
    %v11724 = vunpack.c.h.b16 %v11453
    %v11725 = vunpack.c.l.b16 %v11454
    %v11726 = vunpack.c.h.b16 %v11454
    %v11727 = vunpack.c.l.b16 %v11455
    %v11728 = vunpack.c.h.b16 %v11455
    %v11729 = vunpack.c.l.b16 %v11456
    %v11730 = vunpack.c.h.b16 %v11456
    %v11731 = vunpack.c.l.b16 %v11457
    %v11732 = vunpack.c.h.b16 %v11457
    %v11733 = vunpack.c.l.b16 %v11458
    %v11734 = vunpack.c.h.b16 %v11458
    %v11735 = vunpack.c.l.b16 %v11459
    %v11736 = vunpack.c.h.b16 %v11459
    %v11737 = vunpack.c.l.b16 %v11460
    %v11738 = vunpack.c.h.b16 %v11460
    %v11739 = vunpack.c.l.b16 %v11461
    %v11740 = vunpack.c.h.b16 %v11461
    %v11741 = vunpack.c.l.b16 %v11462
    %v11742 = vunpack.c.h.b16 %v11462
    %v11743 = vunpack.c.l.b16 %v11463
    %v11744 = vunpack.c.h.b16 %v11463
    %v11745 = vunpack.c.l.b16 %v11464
    %v11746 = vunpack.c.h.b16 %v11464
    %v11747 = vunpack.c.l.b16 %v11465
    %v11748 = vunpack.c.h.b16 %v11465
    %v11749 = vunpack.c.l.b16 %v11466
    %v11750 = vunpack.c.h.b16 %v11466
    %v11751 = vunpack.c.l.b16 %v11467
    %v11752 = vunpack.c.h.b16 %v11467
    %v11753 = vunpack.c.l.b16 %v11468
    %v11754 = vunpack.c.h.b16 %v11468
    %v11755 = vunpack.c.l.b16 %v11469
    %v11756 = vunpack.c.h.b16 %v11469
    %v11757 = vunpack.c.l.b16 %v11470
    %v11758 = vunpack.c.h.b16 %v11470
    %v11759 = vunpack.c.l.b16 %v11471
    %v11760 = vunpack.c.h.b16 %v11471
    %v11761 = vunpack.c.l.b16 %v11472
    %v11762 = vunpack.c.h.b16 %v11472
    %v11763 = vunpack.c.l.b16 %v11473
    %v11764 = vunpack.c.h.b16 %v11473
    %v11765 = vunpack.c.l.b16 %v11474
    %v11766 = vunpack.c.h.b16 %v11474
    %v11767 = vunpack.c.l.b16 %v11475
    %v11768 = vunpack.c.h.b16 %v11475
    %v11769 = vunpack.c.l.b16 %v11476
    %v11770 = vunpack.c.h.b16 %v11476
    %v11771 = vunpack.c.l.b16 %v11477
    %v11772 = vunpack.c.h.b16 %v11477
    %v11773 = vunpack.c.l.b16 %v11478
    %v11774 = vunpack.c.h.b16 %v11478
    %v11775 = vunpack.c.l.b16 %v11479
    %v11776 = vunpack.c.h.b16 %v11479
    %v11777 = vunpack.c.l.b16 %v11480
    %v11778 = vunpack.c.h.b16 %v11480
    %v11779 = vunpack.c.l.b16 %v11481
    %v11780 = vunpack.c.h.b16 %v11481
    %v11781 = vunpack.c.l.b16 %v11482
    %v11782 = vunpack.c.h.b16 %v11482
    %v11783 = vunpack.c.l.b16 %v11483
    %v11784 = vunpack.c.h.b16 %v11483
    %v11785 = vunpack.c.l.b16 %v11484
    %v11786 = vunpack.c.h.b16 %v11484
    %v11787 = vunpack.c.l.b16 %v11485
    %v11788 = vunpack.c.h.b16 %v11485
    %v11789 = vunpack.c.l.b16 %v11486
    %v11790 = vunpack.c.h.b16 %v11486
    %v11791 = vunpack.c.l.b16 %v11487
    %v11792 = vunpack.c.h.b16 %v11487
    %v11793 = vunpack.c.l.b16 %v11488
    %v11794 = vunpack.c.h.b16 %v11488
    %v11795 = vunpack.c.l.b16 %v11489
    %v11796 = vunpack.c.h.b16 %v11489
    %v11797 = vunpack.c.l.b16 %v11490
    %v11798 = vunpack.c.h.b16 %v11490
    %v11799 = vunpack.c.l.b16 %v11491
    %v11800 = vunpack.c.h.b16 %v11491
    %v11801 = vunpack.c.l.b16 %v11492
    %v11802 = vunpack.c.h.b16 %v11492
    %v11803 = vunpack.c.l.b16 %v11493
    %v11804 = vunpack.c.h.b16 %v11493
    %v11805 = vunpack.c.l.b16 %v11494
    %v11806 = vunpack.c.h.b16 %v11494
    %v11807 = vunpack.c.l.b16 %v11495
    %v11808 = vunpack.c.h.b16 %v11495
    %v11809 = vunpack.c.l.b16 %v11496
    %v11810 = vunpack.c.h.b16 %v11496
    %v11811 = vunpack.c.l.b16 %v11497
    %v11812 = vunpack.c.h.b16 %v11497
    %v11813 = vunpack.c.l.b16 %v11498
    %v11814 = vunpack.c.h.b16 %v11498
    %v11815 = vunpack.c.l.b16 %v11499
    %v11816 = vunpack.c.h.b16 %v11499
    %v11817 = vunpack.c.l.b16 %v11500
    %v11818 = vunpack.c.h.b16 %v11500
    %v11819 = vunpack.c.l.b16 %v11501
    %v11820 = vunpack.c.h.b16 %v11501
    %v11821 = vunpack.c.l.b16 %v11502
    %v11822 = vunpack.c.h.b16 %v11502
    %v11823 = vunpack.c.l.b16 %v11503
    %v11824 = vunpack.c.h.b16 %v11503
    %v11825 = vunpack.c.l.b16 %v11504
    %v11826 = vunpack.c.h.b16 %v11504
    %v11827 = vunpack.c.l.b16 %v11505
    %v11828 = vunpack.c.h.b16 %v11505
    %v11829 = vunpack.c.l.b16 %v11506
    %v11830 = vunpack.c.h.b16 %v11506
    %v11831 = vpack.c.b16 %v11617, %v11615
    %v11832 = vpack.c.b16 %v11618, %v11616
    %v11833 = vpack.c.b16 %v11621, %v11619
    %v11834 = vpack.c.b16 %v11622, %v11620
    %v11835 = vpack.c.b16 %v11625, %v11623
    %v11836 = vpack.c.b16 %v11626, %v11624
    %v11837 = vpack.c.b16 %v11629, %v11627
    %v11838 = vpack.c.b16 %v11630, %v11628
    %v11839 = vpack.c.b16 %v11633, %v11631
    %v11840 = vpack.c.b16 %v11634, %v11632
    %v11841 = vpack.c.b16 %v11637, %v11635
    %v11842 = vpack.c.b16 %v11638, %v11636
    %v11843 = vpack.c.b16 %v11641, %v11639
    %v11844 = vpack.c.b16 %v11642, %v11640
    %v11845 = vpack.c.b16 %v11645, %v11643
    %v11846 = vpack.c.b16 %v11646, %v11644
    %v11847 = vpack.c.b16 %v11649, %v11647
    %v11848 = vpack.c.b16 %v11650, %v11648
    %v11849 = vpack.c.b16 %v11653, %v11651
    %v11850 = vpack.c.b16 %v11654, %v11652
    %v11851 = vpack.c.b16 %v11657, %v11655
    %v11852 = vpack.c.b16 %v11658, %v11656
    %v11853 = vpack.c.b16 %v11661, %v11659
    %v11854 = vpack.c.b16 %v11662, %v11660
    %v11855 = vpack.c.b16 %v11665, %v11663
    %v11856 = vpack.c.b16 %v11666, %v11664
    %v11857 = vpack.c.b16 %v11669, %v11667
    %v11858 = vpack.c.b16 %v11670, %v11668
    %v11859 = vpack.c.b16 %v11673, %v11671
    %v11860 = vpack.c.b16 %v11674, %v11672
    %v11861 = vpack.c.b16 %v11677, %v11675
    %v11862 = vpack.c.b16 %v11678, %v11676
    %v11863 = vpack.c.b16 %v11681, %v11679
    %v11864 = vpack.c.b16 %v11682, %v11680
    %v11865 = vpack.c.b16 %v11685, %v11683
    %v11866 = vpack.c.b16 %v11686, %v11684
    %v11867 = vpack.c.b16 %v11689, %v11687
    %v11868 = vpack.c.b16 %v11690, %v11688
    %v11869 = vpack.c.b16 %v11693, %v11691
    %v11870 = vpack.c.b16 %v11694, %v11692
    %v11871 = vpack.c.b16 %v11697, %v11695
    %v11872 = vpack.c.b16 %v11698, %v11696
    %v11873 = vpack.c.b16 %v11701, %v11699
    %v11874 = vpack.c.b16 %v11702, %v11700
    %v11875 = vpack.c.b16 %v11705, %v11703
    %v11876 = vpack.c.b16 %v11706, %v11704
    %v11877 = vpack.c.b16 %v11709, %v11707
    %v11878 = vpack.c.b16 %v11710, %v11708
    %v11879 = vpack.c.b16 %v11713, %v11711
    %v11880 = vpack.c.b16 %v11714, %v11712
    %v11881 = vpack.c.b16 %v11717, %v11715
    %v11882 = vpack.c.b16 %v11718, %v11716
    %v11883 = vpack.c.b16 %v11721, %v11719
    %v11884 = vpack.c.b16 %v11722, %v11720
    %v11885 = vpack.c.b16 %v11725, %v11723
    %v11886 = vpack.c.b16 %v11726, %v11724
    %v11887 = vpack.c.b16 %v11729, %v11727
    %v11888 = vpack.c.b16 %v11730, %v11728
    %v11889 = vpack.c.b16 %v11733, %v11731
    %v11890 = vpack.c.b16 %v11734, %v11732
    %v11891 = vpack.c.b16 %v11737, %v11735
    %v11892 = vpack.c.b16 %v11738, %v11736
    %v11893 = vpack.c.b16 %v11741, %v11739
    %v11894 = vpack.c.b16 %v11742, %v11740
    %v11895 = vpack.c.b16 %v11745, %v11743
    %v11896 = vpack.c.b16 %v11746, %v11744
    %v11897 = vpack.c.b16 %v11749, %v11747
    %v11898 = vpack.c.b16 %v11750, %v11748
    %v11899 = vpack.c.b16 %v11753, %v11751
    %v11900 = vpack.c.b16 %v11754, %v11752
    %v11901 = vpack.c.b16 %v11757, %v11755
    %v11902 = vpack.c.b16 %v11758, %v11756
    %v11903 = vpack.c.b16 %v11761, %v11759
    %v11904 = vpack.c.b16 %v11762, %v11760
    %v11905 = vpack.c.b16 %v11765, %v11763
    %v11906 = vpack.c.b16 %v11766, %v11764
    %v11907 = vpack.c.b16 %v11769, %v11767
    %v11908 = vpack.c.b16 %v11770, %v11768
    %v11909 = vpack.c.b16 %v11773, %v11771
    %v11910 = vpack.c.b16 %v11774, %v11772
    %v11911 = vpack.c.b16 %v11777, %v11775
    %v11912 = vpack.c.b16 %v11778, %v11776
    %v11913 = vpack.c.b16 %v11781, %v11779
    %v11914 = vpack.c.b16 %v11782, %v11780
    %v11915 = vpack.c.b16 %v11785, %v11783
    %v11916 = vpack.c.b16 %v11786, %v11784
    %v11917 = vpack.c.b16 %v11789, %v11787
    %v11918 = vpack.c.b16 %v11790, %v11788
    %v11919 = vpack.c.b16 %v11793, %v11791
    %v11920 = vpack.c.b16 %v11794, %v11792
    %v11921 = vpack.c.b16 %v11797, %v11795
    %v11922 = vpack.c.b16 %v11798, %v11796
    %v11923 = vpack.c.b16 %v11801, %v11799
    %v11924 = vpack.c.b16 %v11802, %v11800
    %v11925 = vpack.c.b16 %v11805, %v11803
    %v11926 = vpack.c.b16 %v11806, %v11804
    %v11927 = vpack.c.b16 %v11809, %v11807
    %v11928 = vpack.c.b16 %v11810, %v11808
    %v11929 = vpack.c.b16 %v11813, %v11811
    %v11930 = vpack.c.b16 %v11814, %v11812
    %v11931 = vpack.c.b16 %v11817, %v11815
    %v11932 = vpack.c.b16 %v11818, %v11816
    %v11933 = vpack.c.b16 %v11821, %v11819
    %v11934 = vpack.c.b16 %v11822, %v11820
    %v11935 = vpack.c.b16 %v11825, %v11823
    %v11936 = vpack.c.b16 %v11826, %v11824
    %v11937 = vpack.c.b16 %v11829, %v11827
    %v11938 = vpack.c.b16 %v11830, %v11828
    %vm12047 = vcmask 785408
    %v12049 = vsel %vm12047, %v11398, 0
    %12051 = vmatprep.subr.bf16.mxu0 %v11846
    %12052 = vmatpush1.bf16.msra.mxu0 %v11845
    %12053 = vmatprep.subr.bf16.mxu0 %v11844
    %12054 = vmatpush1.bf16.msra.mxu0 %v11843
    %12055 = vmatprep.subr.bf16.mxu0 %v11842
    %12056 = vmatpush1.bf16.msra.mxu0 %v11841
    %12057 = vmatprep.subr.bf16.mxu0 %v11840
    %12058 = vmatpush1.bf16.msra.mxu0 %v11839
    %12059 = vmatprep.subr.bf16.mxu0 %v11838
    %12060 = vmatpush1.bf16.msra.mxu0 %v11837
    %12061 = vmatprep.subr.bf16.mxu0 %v11836
    %12062 = vmatpush1.bf16.msra.mxu0 %v11835
    %12063 = vmatprep.subr.bf16.mxu0 %v11834
    %12064 = vmatpush1.bf16.msra.mxu0 %v11833
    %12065 = vmatprep.subr.bf16.mxu0 %v11832
    %12066 = vmatpush1.bf16.msra.mxu0 %v11831
    %12067 = vmatprep.subr.bf16.mxu0 %v11862
    %12068 = vmatpush2.bf16.msra.mxu0 %v11861
    %12069 = vmatprep.subr.bf16.mxu0 %v11860
    %12070 = vmatpush2.bf16.msra.mxu0 %v11859
    %12071 = vmatprep.subr.bf16.mxu0 %v11858
    %12072 = vmatpush2.bf16.msra.mxu0 %v11857
    %12073 = vmatprep.subr.bf16.mxu0 %v11856
    %12074 = vmatpush2.bf16.msra.mxu0 %v11855
    %12075 = vmatprep.subr.bf16.mxu0 %v11854
    %12076 = vmatpush2.bf16.msra.mxu0 %v11853
    %12077 = vmatprep.subr.bf16.mxu0 %v11852
    %12078 = vmatpush2.bf16.msra.mxu0 %v11851
    %12079 = vmatprep.subr.bf16.mxu0 %v11850
    %12080 = vmatpush2.bf16.msra.mxu0 %v11849
    %12081 = vmatprep.subr.bf16.mxu0 %v11848
    %12082 = vmatpush2.bf16.msra.mxu0 %v11847
    %12083 = vmatprep.mubr.bf16.mxu0 %v11393
    %12084 = vmatmul.mubr.bf16.gmra.mxu0 %v11392
    %v12085 = vpop.f32.mrf.mxu0
    %v12086 = vadd.f32 0.0, %v12085
    %v12087 = vpop.f32.mrf.mxu0
    %v12088 = vadd.f32 0.0, %v12087
    %v12089 = vpop.f32.mrf.mxu0
    %v12090 = vpop.f32.mrf.mxu0
    %12091 = vdwg.mxu0
    %12092 = vmatprep.subr.bf16.mxu0 %v11878
    %12093 = vmatpush1.bf16.msra.mxu0 %v11877
    %12094 = vmatprep.subr.bf16.mxu0 %v11876
    %12095 = vmatpush1.bf16.msra.mxu0 %v11875
    %12096 = vmatprep.subr.bf16.mxu0 %v11874
    %12097 = vmatpush1.bf16.msra.mxu0 %v11873
    %12098 = vmatprep.subr.bf16.mxu0 %v11872
    %12099 = vmatpush1.bf16.msra.mxu0 %v11871
    %12100 = vmatprep.subr.bf16.mxu0 %v11870
    %12101 = vmatpush1.bf16.msra.mxu0 %v11869
    %12102 = vmatprep.subr.bf16.mxu0 %v11868
    %12103 = vmatpush1.bf16.msra.mxu0 %v11867
    %12104 = vmatprep.subr.bf16.mxu0 %v11866
    %12105 = vmatpush1.bf16.msra.mxu0 %v11865
    %12106 = vmatprep.subr.bf16.mxu0 %v11864
    %12107 = vmatpush1.bf16.msra.mxu0 %v11863
    %12108 = vmatprep.subr.bf16.mxu0 %v11894
    %12109 = vmatpush2.bf16.msra.mxu0 %v11893
    %12110 = vmatprep.subr.bf16.mxu0 %v11892
    %12111 = vmatpush2.bf16.msra.mxu0 %v11891
    %12112 = vmatprep.subr.bf16.mxu0 %v11890
    %12113 = vmatpush2.bf16.msra.mxu0 %v11889
    %12114 = vmatprep.subr.bf16.mxu0 %v11888
    %12115 = vmatpush2.bf16.msra.mxu0 %v11887
    %12116 = vmatprep.subr.bf16.mxu0 %v11886
    %12117 = vmatpush2.bf16.msra.mxu0 %v11885
    %12118 = vmatprep.subr.bf16.mxu0 %v11884
    %12119 = vmatpush2.bf16.msra.mxu0 %v11883
    %12120 = vmatprep.subr.bf16.mxu0 %v11882
    %12121 = vmatpush2.bf16.msra.mxu0 %v11881
    %12122 = vmatprep.subr.bf16.mxu0 %v11880
    %12123 = vmatpush2.bf16.msra.mxu0 %v11879
    %12124 = vmatprep.mubr.bf16.mxu0 %v11395
    %12125 = vmatmul.mubr.bf16.gmra.mxu0 %v11394
    %v12126 = vpop.f32.mrf.mxu0
    %v12127 = vadd.f32 %v12086, %v12126
    %v12128 = vpop.f32.mrf.mxu0
    %v12129 = vadd.f32 %v12088, %v12128
    %v12130 = vpop.f32.mrf.mxu0
    %v12131 = vpop.f32.mrf.mxu0
    %12132 = vdwg.mxu0
    %12133 = vmatprep.subr.bf16.mxu0 %v11910
    %12134 = vmatpush1.bf16.msra.mxu0 %v11909
    %12135 = vmatprep.subr.bf16.mxu0 %v11908
    %12136 = vmatpush1.bf16.msra.mxu0 %v11907
    %12137 = vmatprep.subr.bf16.mxu0 %v11906
    %12138 = vmatpush1.bf16.msra.mxu0 %v11905
    %12139 = vmatprep.subr.bf16.mxu0 %v11904
    %12140 = vmatpush1.bf16.msra.mxu0 %v11903
    %12141 = vmatprep.subr.bf16.mxu0 %v11902
    %12142 = vmatpush1.bf16.msra.mxu0 %v11901
    %12143 = vmatprep.subr.bf16.mxu0 %v11900
    %12144 = vmatpush1.bf16.msra.mxu0 %v11899
    %12145 = vmatprep.subr.bf16.mxu0 %v11898
    %12146 = vmatpush1.bf16.msra.mxu0 %v11897
    %12147 = vmatprep.subr.bf16.mxu0 %v11896
    %12148 = vmatpush1.bf16.msra.mxu0 %v11895
    %12149 = vmatprep.subr.bf16.mxu0 %v11926
    %12150 = vmatpush2.bf16.msra.mxu0 %v11925
    %12151 = vmatprep.subr.bf16.mxu0 %v11924
    %12152 = vmatpush2.bf16.msra.mxu0 %v11923
    %12153 = vmatprep.subr.bf16.mxu0 %v11922
    %12154 = vmatpush2.bf16.msra.mxu0 %v11921
    %12155 = vmatprep.subr.bf16.mxu0 %v11920
    %12156 = vmatpush2.bf16.msra.mxu0 %v11919
    %12157 = vmatprep.subr.bf16.mxu0 %v11918
    %12158 = vmatpush2.bf16.msra.mxu0 %v11917
    %12159 = vmatprep.subr.bf16.mxu0 %v11916
    %12160 = vmatpush2.bf16.msra.mxu0 %v11915
    %12161 = vmatprep.subr.bf16.mxu0 %v11914
    %12162 = vmatpush2.bf16.msra.mxu0 %v11913
    %12163 = vmatprep.subr.bf16.mxu0 %v11912
    %12164 = vmatpush2.bf16.msra.mxu0 %v11911
    %12165 = vmatprep.mubr.bf16.mxu0 %v11397
    %12166 = vmatmul.mubr.bf16.gmra.mxu0 %v11396
    %v12167 = vpop.f32.mrf.mxu0
    %v12168 = vadd.f32 %v12127, %v12167
    %v12169 = vpop.f32.mrf.mxu0
    %v12170 = vadd.f32 %v12129, %v12169
    %v12171 = vpop.f32.mrf.mxu0
    %v12172 = vpop.f32.mrf.mxu0
    %12173 = vdwg.mxu0
    %12174 = vmatprep.subr.bf16.mxu0 0
    %12175 = vmatpush1.bf16.msra.mxu0 0
    %12176 = vmatprep.subr.bf16.mxu0 0
    %12177 = vmatpush1.bf16.msra.mxu0 0
    %12178 = vmatprep.subr.bf16.mxu0 %v11938
    %12179 = vmatpush1.bf16.msra.mxu0 %v11937
    %12180 = vmatprep.subr.bf16.mxu0 %v11936
    %12181 = vmatpush1.bf16.msra.mxu0 %v11935
    %12182 = vmatprep.subr.bf16.mxu0 %v11934
    %12183 = vmatpush1.bf16.msra.mxu0 %v11933
    %12184 = vmatprep.subr.bf16.mxu0 %v11932
    %12185 = vmatpush1.bf16.msra.mxu0 %v11931
    %12186 = vmatprep.subr.bf16.mxu0 %v11930
    %12187 = vmatpush1.bf16.msra.mxu0 %v11929
    %12188 = vmatprep.subr.bf16.mxu0 %v11928
    %12189 = vmatpush1.bf16.msra.mxu0 %v11927
    %12190 = vmatprep.subr.bf16.mxu0 0
    %12191 = vmatpush2.bf16.msra.mxu0 0
    %12192 = vmatprep.subr.bf16.mxu0 0
    %12193 = vmatpush2.bf16.msra.mxu0 0
    %12194 = vmatprep.subr.bf16.mxu0 0
    %12195 = vmatpush2.bf16.msra.mxu0 0
    %12196 = vmatprep.subr.bf16.mxu0 0
    %12197 = vmatpush2.bf16.msra.mxu0 0
    %12198 = vmatprep.subr.bf16.mxu0 0
    %12199 = vmatpush2.bf16.msra.mxu0 0
    %12200 = vmatprep.subr.bf16.mxu0 0
    %12201 = vmatpush2.bf16.msra.mxu0 0
    %12202 = vmatprep.subr.bf16.mxu0 0
    %12203 = vmatpush2.bf16.msra.mxu0 0
    %12204 = vmatprep.subr.bf16.mxu0 0
    %12205 = vmatpush2.bf16.msra.mxu0 0
    %12206 = vmatprep.mubr.bf16.mxu0 0
    %12207 = vmatmul.mubr.bf16.gmra.mxu0 %v12049
    %v12208 = vpop.f32.mrf.mxu0
    %v12209 = vadd.f32 %v12168, %v12208
    %v12210 = vpop.f32.mrf.mxu0
    %v12211 = vadd.f32 %v12170, %v12210
    %v12212 = vpop.f32.mrf.mxu0
    %v12213 = vpop.f32.mrf.mxu0
    %12214 = vdwg.mxu0
    %s12215 = scalar_lea.vmem %s3, 864
    %v12216 = vld [vmem:[%s12215] sm:$0xff]
    %v12217 = vld [vmem:[%s12215 + $0x8] sm:$0xff]
    %v12218 = vld [vmem:[%s12215 + $0x10] sm:$0xff]
    %v12219 = vld [vmem:[%s12215 + $0x18] sm:$0xff]
    %v12220 = vld [vmem:[%s12215 + $0x20] sm:$0xff]
    %v12221 = vld [vmem:[%s12215 + $0x28] sm:$0xff]
    %v12222 = vld [vmem:[%s12215 + $0x30] sm:$0xff]
    %v12223 = vld [vmem:[%s12215 + $0x38] sm:$0xff]
    %v12224 = vld [vmem:[%s12215 + $0x40] sm:$0xff]
    %v12225 = vld [vmem:[%s12215 + $0x48] sm:$0xff]
    %v12226 = vld [vmem:[%s12215 + $0x50] sm:$0xff]
    %v12227 = vld [vmem:[%s12215 + $0x58] sm:$0xff]
    %v12228 = vld [vmem:[%s12215 + $0x60] sm:$0xff]
    %v12229 = vld [vmem:[%s12215 + $0x68] sm:$0xff]
    %v12230 = vld [vmem:[%s12215 + $0x70] sm:$0xff]
    %v12231 = vld [vmem:[%s12215 + $0x78] sm:$0xff]
    %v12232 = vld [vmem:[%s12215 + $0x80] sm:$0xff]
    %v12233 = vld [vmem:[%s12215 + $0x88] sm:$0xff]
    %v12234 = vld [vmem:[%s12215 + $0x90] sm:$0xff]
    %v12235 = vld [vmem:[%s12215 + $0x98] sm:$0xff]
    %v12236 = vld [vmem:[%s12215 + $0xa0] sm:$0xff]
    %v12237 = vld [vmem:[%s12215 + $0xa8] sm:$0xff]
    %v12238 = vld [vmem:[%s12215 + $0xb0] sm:$0xff]
    %v12239 = vld [vmem:[%s12215 + $0xb8] sm:$0xff]
    %v12240 = vld [vmem:[%s12215 + $0xc0] sm:$0xff]
    %v12241 = vld [vmem:[%s12215 + $0xc8] sm:$0xff]
    %v12242 = vld [vmem:[%s12215 + $0xd0] sm:$0xff]
    %v12243 = vld [vmem:[%s12215 + $0xd8] sm:$0xff]
    %v12244 = vld [vmem:[%s12215 + $0xe0] sm:$0xff]
    %v12245 = vld [vmem:[%s12215 + $0xe8] sm:$0xff]
    %v12246 = vld [vmem:[%s12215 + $0xf0] sm:$0xff]
    %v12247 = vld [vmem:[%s12215 + $0xf8] sm:$0xff]
    %v12248 = vld [vmem:[%s12215 + $0x100] sm:$0xff]
    %v12249 = vld [vmem:[%s12215 + $0x108] sm:$0xff]
    %v12250 = vld [vmem:[%s12215 + $0x110] sm:$0xff]
    %v12251 = vld [vmem:[%s12215 + $0x118] sm:$0xff]
    %v12252 = vld [vmem:[%s12215 + $0x120] sm:$0xff]
    %v12253 = vld [vmem:[%s12215 + $0x128] sm:$0xff]
    %v12254 = vld [vmem:[%s12215 + $0x130] sm:$0xff]
    %v12255 = vld [vmem:[%s12215 + $0x138] sm:$0xff]
    %v12256 = vld [vmem:[%s12215 + $0x140] sm:$0xff]
    %v12257 = vld [vmem:[%s12215 + $0x148] sm:$0xff]
    %v12258 = vld [vmem:[%s12215 + $0x150] sm:$0xff]
    %v12259 = vld [vmem:[%s12215 + $0x158] sm:$0xff]
    %v12260 = vld [vmem:[%s12215 + $0x160] sm:$0xff]
    %v12261 = vld [vmem:[%s12215 + $0x168] sm:$0xff]
    %v12262 = vld [vmem:[%s12215 + $0x170] sm:$0xff]
    %v12263 = vld [vmem:[%s12215 + $0x178] sm:$0xff]
    %v12264 = vld [vmem:[%s12215 + $0x180] sm:$0xff]
    %v12265 = vld [vmem:[%s12215 + $0x188] sm:$0xff]
    %v12266 = vld [vmem:[%s12215 + $0x190] sm:$0xff]
    %v12267 = vld [vmem:[%s12215 + $0x198] sm:$0xff]
    %v12268 = vld [vmem:[%s12215 + $0x1a0] sm:$0xff]
    %v12269 = vld [vmem:[%s12215 + $0x1a8] sm:$0xff]
    %v12270 = vld [vmem:[%s12215 + $0x1b0] sm:$0xff]
    %v12271 = vld [vmem:[%s12215 + $0x1b8] sm:$0xff]
    %v12272 = vld [vmem:[%s12215 + $0x1c0] sm:$0xff]
    %v12273 = vld [vmem:[%s12215 + $0x1c8] sm:$0xff]
    %v12274 = vld [vmem:[%s12215 + $0x1d0] sm:$0xff]
    %v12275 = vld [vmem:[%s12215 + $0x1d8] sm:$0xff]
    %v12276 = vld [vmem:[%s12215 + $0x1e0] sm:$0xff]
    %v12277 = vld [vmem:[%s12215 + $0x1e8] sm:$0xff]
    %v12278 = vld [vmem:[%s12215 + $0x1f0] sm:$0xff]
    %v12279 = vld [vmem:[%s12215 + $0x1f8] sm:$0xff]
    %v12280 = vld [vmem:[%s12215 + $0x200] sm:$0xff]
    %v12281 = vld [vmem:[%s12215 + $0x208] sm:$0xff]
    %v12282 = vld [vmem:[%s12215 + $0x210] sm:$0xff]
    %v12283 = vld [vmem:[%s12215 + $0x218] sm:$0xff]
    %v12284 = vld [vmem:[%s12215 + $0x220] sm:$0xff]
    %v12285 = vld [vmem:[%s12215 + $0x228] sm:$0xff]
    %v12286 = vld [vmem:[%s12215 + $0x230] sm:$0xff]
    %v12287 = vld [vmem:[%s12215 + $0x238] sm:$0xff]
    %v12288 = vld [vmem:[%s12215 + $0x240] sm:$0xff]
    %v12289 = vld [vmem:[%s12215 + $0x248] sm:$0xff]
    %v12290 = vld [vmem:[%s12215 + $0x250] sm:$0xff]
    %v12291 = vld [vmem:[%s12215 + $0x258] sm:$0xff]
    %v12292 = vld [vmem:[%s12215 + $0x260] sm:$0xff]
    %v12293 = vld [vmem:[%s12215 + $0x268] sm:$0xff]
    %v12294 = vld [vmem:[%s12215 + $0x270] sm:$0xff]
    %v12295 = vld [vmem:[%s12215 + $0x278] sm:$0xff]
    %v12296 = vld [vmem:[%s12215 + $0x280] sm:$0xff]
    %v12297 = vld [vmem:[%s12215 + $0x288] sm:$0xff]
    %v12298 = vld [vmem:[%s12215 + $0x290] sm:$0xff]
    %v12299 = vld [vmem:[%s12215 + $0x298] sm:$0xff]
    %v12300 = vld [vmem:[%s12215 + $0x2a0] sm:$0xff]
    %v12301 = vld [vmem:[%s12215 + $0x2a8] sm:$0xff]
    %v12302 = vld [vmem:[%s12215 + $0x2b0] sm:$0xff]
    %v12303 = vld [vmem:[%s12215 + $0x2b8] sm:$0xff]
    %v12304 = vld [vmem:[%s12215 + $0x2c0] sm:$0xff]
    %v12305 = vld [vmem:[%s12215 + $0x2c8] sm:$0xff]
    %v12306 = vld [vmem:[%s12215 + $0x2d0] sm:$0xff]
    %v12307 = vld [vmem:[%s12215 + $0x2d8] sm:$0xff]
    %v12308 = vld [vmem:[%s12215 + $0x2e0] sm:$0xff]
    %v12309 = vld [vmem:[%s12215 + $0x2e8] sm:$0xff]
    %v12310 = vld [vmem:[%s12215 + $0x2f0] sm:$0xff]
    %v12311 = vld [vmem:[%s12215 + $0x2f8] sm:$0xff]
    %v12312 = vld [vmem:[%s12215 + $0x300] sm:$0xff]
    %v12313 = vld [vmem:[%s12215 + $0x308] sm:$0xff]
    %v12314 = vld [vmem:[%s12215 + $0x310] sm:$0xff]
    %v12315 = vld [vmem:[%s12215 + $0x318] sm:$0xff]
    %v12316 = vld [vmem:[%s12215 + $0x320] sm:$0xff]
    %v12317 = vld [vmem:[%s12215 + $0x328] sm:$0xff]
    %v12318 = vld [vmem:[%s12215 + $0x330] sm:$0xff]
    %v12319 = vld [vmem:[%s12215 + $0x338] sm:$0xff]
    %v12320 = vld [vmem:[%s12215 + $0x340] sm:$0xff]
    %v12321 = vld [vmem:[%s12215 + $0x348] sm:$0xff]
    %v12322 = vld [vmem:[%s12215 + $0x350] sm:$0xff]
    %v12323 = vld [vmem:[%s12215 + $0x358] sm:$0xff]
    %v12432 = vunpack.c.l.b16 %v12216
    %v12433 = vunpack.c.h.b16 %v12216
    %v12434 = vunpack.c.l.b16 %v12217
    %v12435 = vunpack.c.h.b16 %v12217
    %v12436 = vunpack.c.l.b16 %v12218
    %v12437 = vunpack.c.h.b16 %v12218
    %v12438 = vunpack.c.l.b16 %v12219
    %v12439 = vunpack.c.h.b16 %v12219
    %v12440 = vunpack.c.l.b16 %v12220
    %v12441 = vunpack.c.h.b16 %v12220
    %v12442 = vunpack.c.l.b16 %v12221
    %v12443 = vunpack.c.h.b16 %v12221
    %v12444 = vunpack.c.l.b16 %v12222
    %v12445 = vunpack.c.h.b16 %v12222
    %v12446 = vunpack.c.l.b16 %v12223
    %v12447 = vunpack.c.h.b16 %v12223
    %v12448 = vunpack.c.l.b16 %v12224
    %v12449 = vunpack.c.h.b16 %v12224
    %v12450 = vunpack.c.l.b16 %v12225
    %v12451 = vunpack.c.h.b16 %v12225
    %v12452 = vunpack.c.l.b16 %v12226
    %v12453 = vunpack.c.h.b16 %v12226
    %v12454 = vunpack.c.l.b16 %v12227
    %v12455 = vunpack.c.h.b16 %v12227
    %v12456 = vunpack.c.l.b16 %v12228
    %v12457 = vunpack.c.h.b16 %v12228
    %v12458 = vunpack.c.l.b16 %v12229
    %v12459 = vunpack.c.h.b16 %v12229
    %v12460 = vunpack.c.l.b16 %v12230
    %v12461 = vunpack.c.h.b16 %v12230
    %v12462 = vunpack.c.l.b16 %v12231
    %v12463 = vunpack.c.h.b16 %v12231
    %v12464 = vunpack.c.l.b16 %v12232
    %v12465 = vunpack.c.h.b16 %v12232
    %v12466 = vunpack.c.l.b16 %v12233
    %v12467 = vunpack.c.h.b16 %v12233
    %v12468 = vunpack.c.l.b16 %v12234
    %v12469 = vunpack.c.h.b16 %v12234
    %v12470 = vunpack.c.l.b16 %v12235
    %v12471 = vunpack.c.h.b16 %v12235
    %v12472 = vunpack.c.l.b16 %v12236
    %v12473 = vunpack.c.h.b16 %v12236
    %v12474 = vunpack.c.l.b16 %v12237
    %v12475 = vunpack.c.h.b16 %v12237
    %v12476 = vunpack.c.l.b16 %v12238
    %v12477 = vunpack.c.h.b16 %v12238
    %v12478 = vunpack.c.l.b16 %v12239
    %v12479 = vunpack.c.h.b16 %v12239
    %v12480 = vunpack.c.l.b16 %v12240
    %v12481 = vunpack.c.h.b16 %v12240
    %v12482 = vunpack.c.l.b16 %v12241
    %v12483 = vunpack.c.h.b16 %v12241
    %v12484 = vunpack.c.l.b16 %v12242
    %v12485 = vunpack.c.h.b16 %v12242
    %v12486 = vunpack.c.l.b16 %v12243
    %v12487 = vunpack.c.h.b16 %v12243
    %v12488 = vunpack.c.l.b16 %v12244
    %v12489 = vunpack.c.h.b16 %v12244
    %v12490 = vunpack.c.l.b16 %v12245
    %v12491 = vunpack.c.h.b16 %v12245
    %v12492 = vunpack.c.l.b16 %v12246
    %v12493 = vunpack.c.h.b16 %v12246
    %v12494 = vunpack.c.l.b16 %v12247
    %v12495 = vunpack.c.h.b16 %v12247
    %v12496 = vunpack.c.l.b16 %v12248
    %v12497 = vunpack.c.h.b16 %v12248
    %v12498 = vunpack.c.l.b16 %v12249
    %v12499 = vunpack.c.h.b16 %v12249
    %v12500 = vunpack.c.l.b16 %v12250
    %v12501 = vunpack.c.h.b16 %v12250
    %v12502 = vunpack.c.l.b16 %v12251
    %v12503 = vunpack.c.h.b16 %v12251
    %v12504 = vunpack.c.l.b16 %v12252
    %v12505 = vunpack.c.h.b16 %v12252
    %v12506 = vunpack.c.l.b16 %v12253
    %v12507 = vunpack.c.h.b16 %v12253
    %v12508 = vunpack.c.l.b16 %v12254
    %v12509 = vunpack.c.h.b16 %v12254
    %v12510 = vunpack.c.l.b16 %v12255
    %v12511 = vunpack.c.h.b16 %v12255
    %v12512 = vunpack.c.l.b16 %v12256
    %v12513 = vunpack.c.h.b16 %v12256
    %v12514 = vunpack.c.l.b16 %v12257
    %v12515 = vunpack.c.h.b16 %v12257
    %v12516 = vunpack.c.l.b16 %v12258
    %v12517 = vunpack.c.h.b16 %v12258
    %v12518 = vunpack.c.l.b16 %v12259
    %v12519 = vunpack.c.h.b16 %v12259
    %v12520 = vunpack.c.l.b16 %v12260
    %v12521 = vunpack.c.h.b16 %v12260
    %v12522 = vunpack.c.l.b16 %v12261
    %v12523 = vunpack.c.h.b16 %v12261
    %v12524 = vunpack.c.l.b16 %v12262
    %v12525 = vunpack.c.h.b16 %v12262
    %v12526 = vunpack.c.l.b16 %v12263
    %v12527 = vunpack.c.h.b16 %v12263
    %v12528 = vunpack.c.l.b16 %v12264
    %v12529 = vunpack.c.h.b16 %v12264
    %v12530 = vunpack.c.l.b16 %v12265
    %v12531 = vunpack.c.h.b16 %v12265
    %v12532 = vunpack.c.l.b16 %v12266
    %v12533 = vunpack.c.h.b16 %v12266
    %v12534 = vunpack.c.l.b16 %v12267
    %v12535 = vunpack.c.h.b16 %v12267
    %v12536 = vunpack.c.l.b16 %v12268
    %v12537 = vunpack.c.h.b16 %v12268
    %v12538 = vunpack.c.l.b16 %v12269
    %v12539 = vunpack.c.h.b16 %v12269
    %v12540 = vunpack.c.l.b16 %v12270
    %v12541 = vunpack.c.h.b16 %v12270
    %v12542 = vunpack.c.l.b16 %v12271
    %v12543 = vunpack.c.h.b16 %v12271
    %v12544 = vunpack.c.l.b16 %v12272
    %v12545 = vunpack.c.h.b16 %v12272
    %v12546 = vunpack.c.l.b16 %v12273
    %v12547 = vunpack.c.h.b16 %v12273
    %v12548 = vunpack.c.l.b16 %v12274
    %v12549 = vunpack.c.h.b16 %v12274
    %v12550 = vunpack.c.l.b16 %v12275
    %v12551 = vunpack.c.h.b16 %v12275
    %v12552 = vunpack.c.l.b16 %v12276
    %v12553 = vunpack.c.h.b16 %v12276
    %v12554 = vunpack.c.l.b16 %v12277
    %v12555 = vunpack.c.h.b16 %v12277
    %v12556 = vunpack.c.l.b16 %v12278
    %v12557 = vunpack.c.h.b16 %v12278
    %v12558 = vunpack.c.l.b16 %v12279
    %v12559 = vunpack.c.h.b16 %v12279
    %v12560 = vunpack.c.l.b16 %v12280
    %v12561 = vunpack.c.h.b16 %v12280
    %v12562 = vunpack.c.l.b16 %v12281
    %v12563 = vunpack.c.h.b16 %v12281
    %v12564 = vunpack.c.l.b16 %v12282
    %v12565 = vunpack.c.h.b16 %v12282
    %v12566 = vunpack.c.l.b16 %v12283
    %v12567 = vunpack.c.h.b16 %v12283
    %v12568 = vunpack.c.l.b16 %v12284
    %v12569 = vunpack.c.h.b16 %v12284
    %v12570 = vunpack.c.l.b16 %v12285
    %v12571 = vunpack.c.h.b16 %v12285
    %v12572 = vunpack.c.l.b16 %v12286
    %v12573 = vunpack.c.h.b16 %v12286
    %v12574 = vunpack.c.l.b16 %v12287
    %v12575 = vunpack.c.h.b16 %v12287
    %v12576 = vunpack.c.l.b16 %v12288
    %v12577 = vunpack.c.h.b16 %v12288
    %v12578 = vunpack.c.l.b16 %v12289
    %v12579 = vunpack.c.h.b16 %v12289
    %v12580 = vunpack.c.l.b16 %v12290
    %v12581 = vunpack.c.h.b16 %v12290
    %v12582 = vunpack.c.l.b16 %v12291
    %v12583 = vunpack.c.h.b16 %v12291
    %v12584 = vunpack.c.l.b16 %v12292
    %v12585 = vunpack.c.h.b16 %v12292
    %v12586 = vunpack.c.l.b16 %v12293
    %v12587 = vunpack.c.h.b16 %v12293
    %v12588 = vunpack.c.l.b16 %v12294
    %v12589 = vunpack.c.h.b16 %v12294
    %v12590 = vunpack.c.l.b16 %v12295
    %v12591 = vunpack.c.h.b16 %v12295
    %v12592 = vunpack.c.l.b16 %v12296
    %v12593 = vunpack.c.h.b16 %v12296
    %v12594 = vunpack.c.l.b16 %v12297
    %v12595 = vunpack.c.h.b16 %v12297
    %v12596 = vunpack.c.l.b16 %v12298
    %v12597 = vunpack.c.h.b16 %v12298
    %v12598 = vunpack.c.l.b16 %v12299
    %v12599 = vunpack.c.h.b16 %v12299
    %v12600 = vunpack.c.l.b16 %v12300
    %v12601 = vunpack.c.h.b16 %v12300
    %v12602 = vunpack.c.l.b16 %v12301
    %v12603 = vunpack.c.h.b16 %v12301
    %v12604 = vunpack.c.l.b16 %v12302
    %v12605 = vunpack.c.h.b16 %v12302
    %v12606 = vunpack.c.l.b16 %v12303
    %v12607 = vunpack.c.h.b16 %v12303
    %v12608 = vunpack.c.l.b16 %v12304
    %v12609 = vunpack.c.h.b16 %v12304
    %v12610 = vunpack.c.l.b16 %v12305
    %v12611 = vunpack.c.h.b16 %v12305
    %v12612 = vunpack.c.l.b16 %v12306
    %v12613 = vunpack.c.h.b16 %v12306
    %v12614 = vunpack.c.l.b16 %v12307
    %v12615 = vunpack.c.h.b16 %v12307
    %v12616 = vunpack.c.l.b16 %v12308
    %v12617 = vunpack.c.h.b16 %v12308
    %v12618 = vunpack.c.l.b16 %v12309
    %v12619 = vunpack.c.h.b16 %v12309
    %v12620 = vunpack.c.l.b16 %v12310
    %v12621 = vunpack.c.h.b16 %v12310
    %v12622 = vunpack.c.l.b16 %v12311
    %v12623 = vunpack.c.h.b16 %v12311
    %v12624 = vunpack.c.l.b16 %v12312
    %v12625 = vunpack.c.h.b16 %v12312
    %v12626 = vunpack.c.l.b16 %v12313
    %v12627 = vunpack.c.h.b16 %v12313
    %v12628 = vunpack.c.l.b16 %v12314
    %v12629 = vunpack.c.h.b16 %v12314
    %v12630 = vunpack.c.l.b16 %v12315
    %v12631 = vunpack.c.h.b16 %v12315
    %v12632 = vunpack.c.l.b16 %v12316
    %v12633 = vunpack.c.h.b16 %v12316
    %v12634 = vunpack.c.l.b16 %v12317
    %v12635 = vunpack.c.h.b16 %v12317
    %v12636 = vunpack.c.l.b16 %v12318
    %v12637 = vunpack.c.h.b16 %v12318
    %v12638 = vunpack.c.l.b16 %v12319
    %v12639 = vunpack.c.h.b16 %v12319
    %v12640 = vunpack.c.l.b16 %v12320
    %v12641 = vunpack.c.h.b16 %v12320
    %v12642 = vunpack.c.l.b16 %v12321
    %v12643 = vunpack.c.h.b16 %v12321
    %v12644 = vunpack.c.l.b16 %v12322
    %v12645 = vunpack.c.h.b16 %v12322
    %v12646 = vunpack.c.l.b16 %v12323
    %v12647 = vunpack.c.h.b16 %v12323
    %v12648 = vpack.c.b16 %v12434, %v12432
    %v12649 = vpack.c.b16 %v12435, %v12433
    %v12650 = vpack.c.b16 %v12438, %v12436
    %v12651 = vpack.c.b16 %v12439, %v12437
    %v12652 = vpack.c.b16 %v12442, %v12440
    %v12653 = vpack.c.b16 %v12443, %v12441
    %v12654 = vpack.c.b16 %v12446, %v12444
    %v12655 = vpack.c.b16 %v12447, %v12445
    %v12656 = vpack.c.b16 %v12450, %v12448
    %v12657 = vpack.c.b16 %v12451, %v12449
    %v12658 = vpack.c.b16 %v12454, %v12452
    %v12659 = vpack.c.b16 %v12455, %v12453
    %v12660 = vpack.c.b16 %v12458, %v12456
    %v12661 = vpack.c.b16 %v12459, %v12457
    %v12662 = vpack.c.b16 %v12462, %v12460
    %v12663 = vpack.c.b16 %v12463, %v12461
    %v12664 = vpack.c.b16 %v12466, %v12464
    %v12665 = vpack.c.b16 %v12467, %v12465
    %v12666 = vpack.c.b16 %v12470, %v12468
    %v12667 = vpack.c.b16 %v12471, %v12469
    %v12668 = vpack.c.b16 %v12474, %v12472
    %v12669 = vpack.c.b16 %v12475, %v12473
    %v12670 = vpack.c.b16 %v12478, %v12476
    %v12671 = vpack.c.b16 %v12479, %v12477
    %v12672 = vpack.c.b16 %v12482, %v12480
    %v12673 = vpack.c.b16 %v12483, %v12481
    %v12674 = vpack.c.b16 %v12486, %v12484
    %v12675 = vpack.c.b16 %v12487, %v12485
    %v12676 = vpack.c.b16 %v12490, %v12488
    %v12677 = vpack.c.b16 %v12491, %v12489
    %v12678 = vpack.c.b16 %v12494, %v12492
    %v12679 = vpack.c.b16 %v12495, %v12493
    %v12680 = vpack.c.b16 %v12498, %v12496
    %v12681 = vpack.c.b16 %v12499, %v12497
    %v12682 = vpack.c.b16 %v12502, %v12500
    %v12683 = vpack.c.b16 %v12503, %v12501
    %v12684 = vpack.c.b16 %v12506, %v12504
    %v12685 = vpack.c.b16 %v12507, %v12505
    %v12686 = vpack.c.b16 %v12510, %v12508
    %v12687 = vpack.c.b16 %v12511, %v12509
    %v12688 = vpack.c.b16 %v12514, %v12512
    %v12689 = vpack.c.b16 %v12515, %v12513
    %v12690 = vpack.c.b16 %v12518, %v12516
    %v12691 = vpack.c.b16 %v12519, %v12517
    %v12692 = vpack.c.b16 %v12522, %v12520
    %v12693 = vpack.c.b16 %v12523, %v12521
    %v12694 = vpack.c.b16 %v12526, %v12524
    %v12695 = vpack.c.b16 %v12527, %v12525
    %v12696 = vpack.c.b16 %v12530, %v12528
    %v12697 = vpack.c.b16 %v12531, %v12529
    %v12698 = vpack.c.b16 %v12534, %v12532
    %v12699 = vpack.c.b16 %v12535, %v12533
    %v12700 = vpack.c.b16 %v12538, %v12536
    %v12701 = vpack.c.b16 %v12539, %v12537
    %v12702 = vpack.c.b16 %v12542, %v12540
    %v12703 = vpack.c.b16 %v12543, %v12541
    %v12704 = vpack.c.b16 %v12546, %v12544
    %v12705 = vpack.c.b16 %v12547, %v12545
    %v12706 = vpack.c.b16 %v12550, %v12548
    %v12707 = vpack.c.b16 %v12551, %v12549
    %v12708 = vpack.c.b16 %v12554, %v12552
    %v12709 = vpack.c.b16 %v12555, %v12553
    %v12710 = vpack.c.b16 %v12558, %v12556
    %v12711 = vpack.c.b16 %v12559, %v12557
    %v12712 = vpack.c.b16 %v12562, %v12560
    %v12713 = vpack.c.b16 %v12563, %v12561
    %v12714 = vpack.c.b16 %v12566, %v12564
    %v12715 = vpack.c.b16 %v12567, %v12565
    %v12716 = vpack.c.b16 %v12570, %v12568
    %v12717 = vpack.c.b16 %v12571, %v12569
    %v12718 = vpack.c.b16 %v12574, %v12572
    %v12719 = vpack.c.b16 %v12575, %v12573
    %v12720 = vpack.c.b16 %v12578, %v12576
    %v12721 = vpack.c.b16 %v12579, %v12577
    %v12722 = vpack.c.b16 %v12582, %v12580
    %v12723 = vpack.c.b16 %v12583, %v12581
    %v12724 = vpack.c.b16 %v12586, %v12584
    %v12725 = vpack.c.b16 %v12587, %v12585
    %v12726 = vpack.c.b16 %v12590, %v12588
    %v12727 = vpack.c.b16 %v12591, %v12589
    %v12728 = vpack.c.b16 %v12594, %v12592
    %v12729 = vpack.c.b16 %v12595, %v12593
    %v12730 = vpack.c.b16 %v12598, %v12596
    %v12731 = vpack.c.b16 %v12599, %v12597
    %v12732 = vpack.c.b16 %v12602, %v12600
    %v12733 = vpack.c.b16 %v12603, %v12601
    %v12734 = vpack.c.b16 %v12606, %v12604
    %v12735 = vpack.c.b16 %v12607, %v12605
    %v12736 = vpack.c.b16 %v12610, %v12608
    %v12737 = vpack.c.b16 %v12611, %v12609
    %v12738 = vpack.c.b16 %v12614, %v12612
    %v12739 = vpack.c.b16 %v12615, %v12613
    %v12740 = vpack.c.b16 %v12618, %v12616
    %v12741 = vpack.c.b16 %v12619, %v12617
    %v12742 = vpack.c.b16 %v12622, %v12620
    %v12743 = vpack.c.b16 %v12623, %v12621
    %v12744 = vpack.c.b16 %v12626, %v12624
    %v12745 = vpack.c.b16 %v12627, %v12625
    %v12746 = vpack.c.b16 %v12630, %v12628
    %v12747 = vpack.c.b16 %v12631, %v12629
    %v12748 = vpack.c.b16 %v12634, %v12632
    %v12749 = vpack.c.b16 %v12635, %v12633
    %v12750 = vpack.c.b16 %v12638, %v12636
    %v12751 = vpack.c.b16 %v12639, %v12637
    %v12752 = vpack.c.b16 %v12642, %v12640
    %v12753 = vpack.c.b16 %v12643, %v12641
    %v12754 = vpack.c.b16 %v12646, %v12644
    %v12755 = vpack.c.b16 %v12647, %v12645
    %12864 = vmatprep.subr.bf16.mxu0 %v12663
    %12865 = vmatpush1.bf16.msra.mxu0 %v12662
    %12866 = vmatprep.subr.bf16.mxu0 %v12661
    %12867 = vmatpush1.bf16.msra.mxu0 %v12660
    %12868 = vmatprep.subr.bf16.mxu0 %v12659
    %12869 = vmatpush1.bf16.msra.mxu0 %v12658
    %12870 = vmatprep.subr.bf16.mxu0 %v12657
    %12871 = vmatpush1.bf16.msra.mxu0 %v12656
    %12872 = vmatprep.subr.bf16.mxu0 %v12655
    %12873 = vmatpush1.bf16.msra.mxu0 %v12654
    %12874 = vmatprep.subr.bf16.mxu0 %v12653
    %12875 = vmatpush1.bf16.msra.mxu0 %v12652
    %12876 = vmatprep.subr.bf16.mxu0 %v12651
    %12877 = vmatpush1.bf16.msra.mxu0 %v12650
    %12878 = vmatprep.subr.bf16.mxu0 %v12649
    %12879 = vmatpush1.bf16.msra.mxu0 %v12648
    %12880 = vmatprep.subr.bf16.mxu0 %v12679
    %12881 = vmatpush2.bf16.msra.mxu0 %v12678
    %12882 = vmatprep.subr.bf16.mxu0 %v12677
    %12883 = vmatpush2.bf16.msra.mxu0 %v12676
    %12884 = vmatprep.subr.bf16.mxu0 %v12675
    %12885 = vmatpush2.bf16.msra.mxu0 %v12674
    %12886 = vmatprep.subr.bf16.mxu0 %v12673
    %12887 = vmatpush2.bf16.msra.mxu0 %v12672
    %12888 = vmatprep.subr.bf16.mxu0 %v12671
    %12889 = vmatpush2.bf16.msra.mxu0 %v12670
    %12890 = vmatprep.subr.bf16.mxu0 %v12669
    %12891 = vmatpush2.bf16.msra.mxu0 %v12668
    %12892 = vmatprep.subr.bf16.mxu0 %v12667
    %12893 = vmatpush2.bf16.msra.mxu0 %v12666
    %12894 = vmatprep.subr.bf16.mxu0 %v12665
    %12895 = vmatpush2.bf16.msra.mxu0 %v12664
    %12896 = vmatprep.mubr.bf16.mxu0 %v11393
    %12897 = vmatmul.mubr.bf16.gmra.mxu0 %v11392
    %v12898 = vpop.f32.mrf.mxu0
    %v12899 = vadd.f32 0.0, %v12898
    %v12900 = vpop.f32.mrf.mxu0
    %v12901 = vadd.f32 0.0, %v12900
    %v12902 = vpop.f32.mrf.mxu0
    %v12903 = vpop.f32.mrf.mxu0
    %12904 = vdwg.mxu0
    %12905 = vmatprep.subr.bf16.mxu0 %v12695
    %12906 = vmatpush1.bf16.msra.mxu0 %v12694
    %12907 = vmatprep.subr.bf16.mxu0 %v12693
    %12908 = vmatpush1.bf16.msra.mxu0 %v12692
    %12909 = vmatprep.subr.bf16.mxu0 %v12691
    %12910 = vmatpush1.bf16.msra.mxu0 %v12690
    %12911 = vmatprep.subr.bf16.mxu0 %v12689
    %12912 = vmatpush1.bf16.msra.mxu0 %v12688
    %12913 = vmatprep.subr.bf16.mxu0 %v12687
    %12914 = vmatpush1.bf16.msra.mxu0 %v12686
    %12915 = vmatprep.subr.bf16.mxu0 %v12685
    %12916 = vmatpush1.bf16.msra.mxu0 %v12684
    %12917 = vmatprep.subr.bf16.mxu0 %v12683
    %12918 = vmatpush1.bf16.msra.mxu0 %v12682
    %12919 = vmatprep.subr.bf16.mxu0 %v12681
    %12920 = vmatpush1.bf16.msra.mxu0 %v12680
    %12921 = vmatprep.subr.bf16.mxu0 %v12711
    %12922 = vmatpush2.bf16.msra.mxu0 %v12710
    %12923 = vmatprep.subr.bf16.mxu0 %v12709
    %12924 = vmatpush2.bf16.msra.mxu0 %v12708
    %12925 = vmatprep.subr.bf16.mxu0 %v12707
    %12926 = vmatpush2.bf16.msra.mxu0 %v12706
    %12927 = vmatprep.subr.bf16.mxu0 %v12705
    %12928 = vmatpush2.bf16.msra.mxu0 %v12704
    %12929 = vmatprep.subr.bf16.mxu0 %v12703
    %12930 = vmatpush2.bf16.msra.mxu0 %v12702
    %12931 = vmatprep.subr.bf16.mxu0 %v12701
    %12932 = vmatpush2.bf16.msra.mxu0 %v12700
    %12933 = vmatprep.subr.bf16.mxu0 %v12699
    %12934 = vmatpush2.bf16.msra.mxu0 %v12698
    %12935 = vmatprep.subr.bf16.mxu0 %v12697
    %12936 = vmatpush2.bf16.msra.mxu0 %v12696
    %12937 = vmatprep.mubr.bf16.mxu0 %v11395
    %12938 = vmatmul.mubr.bf16.gmra.mxu0 %v11394
    %v12939 = vpop.f32.mrf.mxu0
    %v12940 = vadd.f32 %v12899, %v12939
    %v12941 = vpop.f32.mrf.mxu0
    %v12942 = vadd.f32 %v12901, %v12941
    %v12943 = vpop.f32.mrf.mxu0
    %v12944 = vpop.f32.mrf.mxu0
    %12945 = vdwg.mxu0
    %12946 = vmatprep.subr.bf16.mxu0 %v12727
    %12947 = vmatpush1.bf16.msra.mxu0 %v12726
    %12948 = vmatprep.subr.bf16.mxu0 %v12725
    %12949 = vmatpush1.bf16.msra.mxu0 %v12724
    %12950 = vmatprep.subr.bf16.mxu0 %v12723
    %12951 = vmatpush1.bf16.msra.mxu0 %v12722
    %12952 = vmatprep.subr.bf16.mxu0 %v12721
    %12953 = vmatpush1.bf16.msra.mxu0 %v12720
    %12954 = vmatprep.subr.bf16.mxu0 %v12719
    %12955 = vmatpush1.bf16.msra.mxu0 %v12718
    %12956 = vmatprep.subr.bf16.mxu0 %v12717
    %12957 = vmatpush1.bf16.msra.mxu0 %v12716
    %12958 = vmatprep.subr.bf16.mxu0 %v12715
    %12959 = vmatpush1.bf16.msra.mxu0 %v12714
    %12960 = vmatprep.subr.bf16.mxu0 %v12713
    %12961 = vmatpush1.bf16.msra.mxu0 %v12712
    %12962 = vmatprep.subr.bf16.mxu0 %v12743
    %12963 = vmatpush2.bf16.msra.mxu0 %v12742
    %12964 = vmatprep.subr.bf16.mxu0 %v12741
    %12965 = vmatpush2.bf16.msra.mxu0 %v12740
    %12966 = vmatprep.subr.bf16.mxu0 %v12739
    %12967 = vmatpush2.bf16.msra.mxu0 %v12738
    %12968 = vmatprep.subr.bf16.mxu0 %v12737
    %12969 = vmatpush2.bf16.msra.mxu0 %v12736
    %12970 = vmatprep.subr.bf16.mxu0 %v12735
    %12971 = vmatpush2.bf16.msra.mxu0 %v12734
    %12972 = vmatprep.subr.bf16.mxu0 %v12733
    %12973 = vmatpush2.bf16.msra.mxu0 %v12732
    %12974 = vmatprep.subr.bf16.mxu0 %v12731
    %12975 = vmatpush2.bf16.msra.mxu0 %v12730
    %12976 = vmatprep.subr.bf16.mxu0 %v12729
    %12977 = vmatpush2.bf16.msra.mxu0 %v12728
    %12978 = vmatprep.mubr.bf16.mxu0 %v11397
    %12979 = vmatmul.mubr.bf16.gmra.mxu0 %v11396
    %v12980 = vpop.f32.mrf.mxu0
    %v12981 = vadd.f32 %v12940, %v12980
    %v12982 = vpop.f32.mrf.mxu0
    %v12983 = vadd.f32 %v12942, %v12982
    %v12984 = vpop.f32.mrf.mxu0
    %v12985 = vpop.f32.mrf.mxu0
    %12986 = vdwg.mxu0
    %12987 = vmatprep.subr.bf16.mxu0 0
    %12988 = vmatpush1.bf16.msra.mxu0 0
    %12989 = vmatprep.subr.bf16.mxu0 0
    %12990 = vmatpush1.bf16.msra.mxu0 0
    %12991 = vmatprep.subr.bf16.mxu0 %v12755
    %12992 = vmatpush1.bf16.msra.mxu0 %v12754
    %12993 = vmatprep.subr.bf16.mxu0 %v12753
    %12994 = vmatpush1.bf16.msra.mxu0 %v12752
    %12995 = vmatprep.subr.bf16.mxu0 %v12751
    %12996 = vmatpush1.bf16.msra.mxu0 %v12750
    %12997 = vmatprep.subr.bf16.mxu0 %v12749
    %12998 = vmatpush1.bf16.msra.mxu0 %v12748
    %12999 = vmatprep.subr.bf16.mxu0 %v12747
    %13000 = vmatpush1.bf16.msra.mxu0 %v12746
    %13001 = vmatprep.subr.bf16.mxu0 %v12745
    %13002 = vmatpush1.bf16.msra.mxu0 %v12744
    %13003 = vmatprep.subr.bf16.mxu0 0
    %13004 = vmatpush2.bf16.msra.mxu0 0
    %13005 = vmatprep.subr.bf16.mxu0 0
    %13006 = vmatpush2.bf16.msra.mxu0 0
    %13007 = vmatprep.subr.bf16.mxu0 0
    %13008 = vmatpush2.bf16.msra.mxu0 0
    %13009 = vmatprep.subr.bf16.mxu0 0
    %13010 = vmatpush2.bf16.msra.mxu0 0
    %13011 = vmatprep.subr.bf16.mxu0 0
    %13012 = vmatpush2.bf16.msra.mxu0 0
    %13013 = vmatprep.subr.bf16.mxu0 0
    %13014 = vmatpush2.bf16.msra.mxu0 0
    %13015 = vmatprep.subr.bf16.mxu0 0
    %13016 = vmatpush2.bf16.msra.mxu0 0
    %13017 = vmatprep.subr.bf16.mxu0 0
    %13018 = vmatpush2.bf16.msra.mxu0 0
    %13019 = vmatprep.mubr.bf16.mxu0 0
    %13020 = vmatmul.mubr.bf16.gmra.mxu0 %v12049
    %v13021 = vpop.f32.mrf.mxu0
    %v13022 = vadd.f32 %v12981, %v13021
    %v13023 = vpop.f32.mrf.mxu0
    %v13024 = vadd.f32 %v12983, %v13023
    %v13025 = vpop.f32.mrf.mxu0
    %v13026 = vpop.f32.mrf.mxu0
    %13027 = vdwg.mxu0
    %v13028 = vmax.f32 %v12209, %v13022
    %v13029 = vmax.f32 %v12211, %v13024
    %s13030 = scalar_lea.vmem %s3, 1728
    %v13031 = vld [vmem:[%s13030] sm:$0xff]
    %v13032 = vld [vmem:[%s13030 + $0x8] sm:$0xff]
    %v13033 = vld [vmem:[%s13030 + $0x10] sm:$0xff]
    %v13034 = vld [vmem:[%s13030 + $0x18] sm:$0xff]
    %v13035 = vld [vmem:[%s13030 + $0x20] sm:$0xff]
    %v13036 = vld [vmem:[%s13030 + $0x28] sm:$0xff]
    %v13037 = vld [vmem:[%s13030 + $0x30] sm:$0xff]
    %v13038 = vld [vmem:[%s13030 + $0x38] sm:$0xff]
    %v13039 = vld [vmem:[%s13030 + $0x40] sm:$0xff]
    %v13040 = vld [vmem:[%s13030 + $0x48] sm:$0xff]
    %v13041 = vld [vmem:[%s13030 + $0x50] sm:$0xff]
    %v13042 = vld [vmem:[%s13030 + $0x58] sm:$0xff]
    %v13043 = vld [vmem:[%s13030 + $0x60] sm:$0xff]
    %v13044 = vld [vmem:[%s13030 + $0x68] sm:$0xff]
    %v13045 = vld [vmem:[%s13030 + $0x70] sm:$0xff]
    %v13046 = vld [vmem:[%s13030 + $0x78] sm:$0xff]
    %v13047 = vld [vmem:[%s13030 + $0x80] sm:$0xff]
    %v13048 = vld [vmem:[%s13030 + $0x88] sm:$0xff]
    %v13049 = vld [vmem:[%s13030 + $0x90] sm:$0xff]
    %v13050 = vld [vmem:[%s13030 + $0x98] sm:$0xff]
    %v13051 = vld [vmem:[%s13030 + $0xa0] sm:$0xff]
    %v13052 = vld [vmem:[%s13030 + $0xa8] sm:$0xff]
    %v13053 = vld [vmem:[%s13030 + $0xb0] sm:$0xff]
    %v13054 = vld [vmem:[%s13030 + $0xb8] sm:$0xff]
    %v13055 = vld [vmem:[%s13030 + $0xc0] sm:$0xff]
    %v13056 = vld [vmem:[%s13030 + $0xc8] sm:$0xff]
    %v13057 = vld [vmem:[%s13030 + $0xd0] sm:$0xff]
    %v13058 = vld [vmem:[%s13030 + $0xd8] sm:$0xff]
    %v13059 = vld [vmem:[%s13030 + $0xe0] sm:$0xff]
    %v13060 = vld [vmem:[%s13030 + $0xe8] sm:$0xff]
    %v13061 = vld [vmem:[%s13030 + $0xf0] sm:$0xff]
    %v13062 = vld [vmem:[%s13030 + $0xf8] sm:$0xff]
    %v13063 = vld [vmem:[%s13030 + $0x100] sm:$0xff]
    %v13064 = vld [vmem:[%s13030 + $0x108] sm:$0xff]
    %v13065 = vld [vmem:[%s13030 + $0x110] sm:$0xff]
    %v13066 = vld [vmem:[%s13030 + $0x118] sm:$0xff]
    %v13067 = vld [vmem:[%s13030 + $0x120] sm:$0xff]
    %v13068 = vld [vmem:[%s13030 + $0x128] sm:$0xff]
    %v13069 = vld [vmem:[%s13030 + $0x130] sm:$0xff]
    %v13070 = vld [vmem:[%s13030 + $0x138] sm:$0xff]
    %v13071 = vld [vmem:[%s13030 + $0x140] sm:$0xff]
    %v13072 = vld [vmem:[%s13030 + $0x148] sm:$0xff]
    %v13073 = vld [vmem:[%s13030 + $0x150] sm:$0xff]
    %v13074 = vld [vmem:[%s13030 + $0x158] sm:$0xff]
    %v13075 = vld [vmem:[%s13030 + $0x160] sm:$0xff]
    %v13076 = vld [vmem:[%s13030 + $0x168] sm:$0xff]
    %v13077 = vld [vmem:[%s13030 + $0x170] sm:$0xff]
    %v13078 = vld [vmem:[%s13030 + $0x178] sm:$0xff]
    %v13079 = vld [vmem:[%s13030 + $0x180] sm:$0xff]
    %v13080 = vld [vmem:[%s13030 + $0x188] sm:$0xff]
    %v13081 = vld [vmem:[%s13030 + $0x190] sm:$0xff]
    %v13082 = vld [vmem:[%s13030 + $0x198] sm:$0xff]
    %v13083 = vld [vmem:[%s13030 + $0x1a0] sm:$0xff]
    %v13084 = vld [vmem:[%s13030 + $0x1a8] sm:$0xff]
    %v13085 = vld [vmem:[%s13030 + $0x1b0] sm:$0xff]
    %v13086 = vld [vmem:[%s13030 + $0x1b8] sm:$0xff]
    %v13087 = vld [vmem:[%s13030 + $0x1c0] sm:$0xff]
    %v13088 = vld [vmem:[%s13030 + $0x1c8] sm:$0xff]
    %v13089 = vld [vmem:[%s13030 + $0x1d0] sm:$0xff]
    %v13090 = vld [vmem:[%s13030 + $0x1d8] sm:$0xff]
    %v13091 = vld [vmem:[%s13030 + $0x1e0] sm:$0xff]
    %v13092 = vld [vmem:[%s13030 + $0x1e8] sm:$0xff]
    %v13093 = vld [vmem:[%s13030 + $0x1f0] sm:$0xff]
    %v13094 = vld [vmem:[%s13030 + $0x1f8] sm:$0xff]
    %v13095 = vld [vmem:[%s13030 + $0x200] sm:$0xff]
    %v13096 = vld [vmem:[%s13030 + $0x208] sm:$0xff]
    %v13097 = vld [vmem:[%s13030 + $0x210] sm:$0xff]
    %v13098 = vld [vmem:[%s13030 + $0x218] sm:$0xff]
    %v13099 = vld [vmem:[%s13030 + $0x220] sm:$0xff]
    %v13100 = vld [vmem:[%s13030 + $0x228] sm:$0xff]
    %v13101 = vld [vmem:[%s13030 + $0x230] sm:$0xff]
    %v13102 = vld [vmem:[%s13030 + $0x238] sm:$0xff]
    %v13103 = vld [vmem:[%s13030 + $0x240] sm:$0xff]
    %v13104 = vld [vmem:[%s13030 + $0x248] sm:$0xff]
    %v13105 = vld [vmem:[%s13030 + $0x250] sm:$0xff]
    %v13106 = vld [vmem:[%s13030 + $0x258] sm:$0xff]
    %v13107 = vld [vmem:[%s13030 + $0x260] sm:$0xff]
    %v13108 = vld [vmem:[%s13030 + $0x268] sm:$0xff]
    %v13109 = vld [vmem:[%s13030 + $0x270] sm:$0xff]
    %v13110 = vld [vmem:[%s13030 + $0x278] sm:$0xff]
    %v13111 = vld [vmem:[%s13030 + $0x280] sm:$0xff]
    %v13112 = vld [vmem:[%s13030 + $0x288] sm:$0xff]
    %v13113 = vld [vmem:[%s13030 + $0x290] sm:$0xff]
    %v13114 = vld [vmem:[%s13030 + $0x298] sm:$0xff]
    %v13115 = vld [vmem:[%s13030 + $0x2a0] sm:$0xff]
    %v13116 = vld [vmem:[%s13030 + $0x2a8] sm:$0xff]
    %v13117 = vld [vmem:[%s13030 + $0x2b0] sm:$0xff]
    %v13118 = vld [vmem:[%s13030 + $0x2b8] sm:$0xff]
    %v13119 = vld [vmem:[%s13030 + $0x2c0] sm:$0xff]
    %v13120 = vld [vmem:[%s13030 + $0x2c8] sm:$0xff]
    %v13121 = vld [vmem:[%s13030 + $0x2d0] sm:$0xff]
    %v13122 = vld [vmem:[%s13030 + $0x2d8] sm:$0xff]
    %v13123 = vld [vmem:[%s13030 + $0x2e0] sm:$0xff]
    %v13124 = vld [vmem:[%s13030 + $0x2e8] sm:$0xff]
    %v13125 = vld [vmem:[%s13030 + $0x2f0] sm:$0xff]
    %v13126 = vld [vmem:[%s13030 + $0x2f8] sm:$0xff]
    %v13127 = vld [vmem:[%s13030 + $0x300] sm:$0xff]
    %v13128 = vld [vmem:[%s13030 + $0x308] sm:$0xff]
    %v13129 = vld [vmem:[%s13030 + $0x310] sm:$0xff]
    %v13130 = vld [vmem:[%s13030 + $0x318] sm:$0xff]
    %v13131 = vld [vmem:[%s13030 + $0x320] sm:$0xff]
    %v13132 = vld [vmem:[%s13030 + $0x328] sm:$0xff]
    %v13133 = vld [vmem:[%s13030 + $0x330] sm:$0xff]
    %v13134 = vld [vmem:[%s13030 + $0x338] sm:$0xff]
    %v13135 = vld [vmem:[%s13030 + $0x340] sm:$0xff]
    %v13136 = vld [vmem:[%s13030 + $0x348] sm:$0xff]
    %v13137 = vld [vmem:[%s13030 + $0x350] sm:$0xff]
    %v13138 = vld [vmem:[%s13030 + $0x358] sm:$0xff]
    %v13247 = vunpack.c.l.b16 %v13031
    %v13248 = vunpack.c.h.b16 %v13031
    %v13249 = vunpack.c.l.b16 %v13032
    %v13250 = vunpack.c.h.b16 %v13032
    %v13251 = vunpack.c.l.b16 %v13033
    %v13252 = vunpack.c.h.b16 %v13033
    %v13253 = vunpack.c.l.b16 %v13034
    %v13254 = vunpack.c.h.b16 %v13034
    %v13255 = vunpack.c.l.b16 %v13035
    %v13256 = vunpack.c.h.b16 %v13035
    %v13257 = vunpack.c.l.b16 %v13036
    %v13258 = vunpack.c.h.b16 %v13036
    %v13259 = vunpack.c.l.b16 %v13037
    %v13260 = vunpack.c.h.b16 %v13037
    %v13261 = vunpack.c.l.b16 %v13038
    %v13262 = vunpack.c.h.b16 %v13038
    %v13263 = vunpack.c.l.b16 %v13039
    %v13264 = vunpack.c.h.b16 %v13039
    %v13265 = vunpack.c.l.b16 %v13040
    %v13266 = vunpack.c.h.b16 %v13040
    %v13267 = vunpack.c.l.b16 %v13041
    %v13268 = vunpack.c.h.b16 %v13041
    %v13269 = vunpack.c.l.b16 %v13042
    %v13270 = vunpack.c.h.b16 %v13042
    %v13271 = vunpack.c.l.b16 %v13043
    %v13272 = vunpack.c.h.b16 %v13043
    %v13273 = vunpack.c.l.b16 %v13044
    %v13274 = vunpack.c.h.b16 %v13044
    %v13275 = vunpack.c.l.b16 %v13045
    %v13276 = vunpack.c.h.b16 %v13045
    %v13277 = vunpack.c.l.b16 %v13046
    %v13278 = vunpack.c.h.b16 %v13046
    %v13279 = vunpack.c.l.b16 %v13047
    %v13280 = vunpack.c.h.b16 %v13047
    %v13281 = vunpack.c.l.b16 %v13048
    %v13282 = vunpack.c.h.b16 %v13048
    %v13283 = vunpack.c.l.b16 %v13049
    %v13284 = vunpack.c.h.b16 %v13049
    %v13285 = vunpack.c.l.b16 %v13050
    %v13286 = vunpack.c.h.b16 %v13050
    %v13287 = vunpack.c.l.b16 %v13051
    %v13288 = vunpack.c.h.b16 %v13051
    %v13289 = vunpack.c.l.b16 %v13052
    %v13290 = vunpack.c.h.b16 %v13052
    %v13291 = vunpack.c.l.b16 %v13053
    %v13292 = vunpack.c.h.b16 %v13053
    %v13293 = vunpack.c.l.b16 %v13054
    %v13294 = vunpack.c.h.b16 %v13054
    %v13295 = vunpack.c.l.b16 %v13055
    %v13296 = vunpack.c.h.b16 %v13055
    %v13297 = vunpack.c.l.b16 %v13056
    %v13298 = vunpack.c.h.b16 %v13056
    %v13299 = vunpack.c.l.b16 %v13057
    %v13300 = vunpack.c.h.b16 %v13057
    %v13301 = vunpack.c.l.b16 %v13058
    %v13302 = vunpack.c.h.b16 %v13058
    %v13303 = vunpack.c.l.b16 %v13059
    %v13304 = vunpack.c.h.b16 %v13059
    %v13305 = vunpack.c.l.b16 %v13060
    %v13306 = vunpack.c.h.b16 %v13060
    %v13307 = vunpack.c.l.b16 %v13061
    %v13308 = vunpack.c.h.b16 %v13061
    %v13309 = vunpack.c.l.b16 %v13062
    %v13310 = vunpack.c.h.b16 %v13062
    %v13311 = vunpack.c.l.b16 %v13063
    %v13312 = vunpack.c.h.b16 %v13063
    %v13313 = vunpack.c.l.b16 %v13064
    %v13314 = vunpack.c.h.b16 %v13064
    %v13315 = vunpack.c.l.b16 %v13065
    %v13316 = vunpack.c.h.b16 %v13065
    %v13317 = vunpack.c.l.b16 %v13066
    %v13318 = vunpack.c.h.b16 %v13066
    %v13319 = vunpack.c.l.b16 %v13067
    %v13320 = vunpack.c.h.b16 %v13067
    %v13321 = vunpack.c.l.b16 %v13068
    %v13322 = vunpack.c.h.b16 %v13068
    %v13323 = vunpack.c.l.b16 %v13069
    %v13324 = vunpack.c.h.b16 %v13069
    %v13325 = vunpack.c.l.b16 %v13070
    %v13326 = vunpack.c.h.b16 %v13070
    %v13327 = vunpack.c.l.b16 %v13071
    %v13328 = vunpack.c.h.b16 %v13071
    %v13329 = vunpack.c.l.b16 %v13072
    %v13330 = vunpack.c.h.b16 %v13072
    %v13331 = vunpack.c.l.b16 %v13073
    %v13332 = vunpack.c.h.b16 %v13073
    %v13333 = vunpack.c.l.b16 %v13074
    %v13334 = vunpack.c.h.b16 %v13074
    %v13335 = vunpack.c.l.b16 %v13075
    %v13336 = vunpack.c.h.b16 %v13075
    %v13337 = vunpack.c.l.b16 %v13076
    %v13338 = vunpack.c.h.b16 %v13076
    %v13339 = vunpack.c.l.b16 %v13077
    %v13340 = vunpack.c.h.b16 %v13077
    %v13341 = vunpack.c.l.b16 %v13078
    %v13342 = vunpack.c.h.b16 %v13078
    %v13343 = vunpack.c.l.b16 %v13079
    %v13344 = vunpack.c.h.b16 %v13079
    %v13345 = vunpack.c.l.b16 %v13080
    %v13346 = vunpack.c.h.b16 %v13080
    %v13347 = vunpack.c.l.b16 %v13081
    %v13348 = vunpack.c.h.b16 %v13081
    %v13349 = vunpack.c.l.b16 %v13082
    %v13350 = vunpack.c.h.b16 %v13082
    %v13351 = vunpack.c.l.b16 %v13083
    %v13352 = vunpack.c.h.b16 %v13083
    %v13353 = vunpack.c.l.b16 %v13084
    %v13354 = vunpack.c.h.b16 %v13084
    %v13355 = vunpack.c.l.b16 %v13085
    %v13356 = vunpack.c.h.b16 %v13085
    %v13357 = vunpack.c.l.b16 %v13086
    %v13358 = vunpack.c.h.b16 %v13086
    %v13359 = vunpack.c.l.b16 %v13087
    %v13360 = vunpack.c.h.b16 %v13087
    %v13361 = vunpack.c.l.b16 %v13088
    %v13362 = vunpack.c.h.b16 %v13088
    %v13363 = vunpack.c.l.b16 %v13089
    %v13364 = vunpack.c.h.b16 %v13089
    %v13365 = vunpack.c.l.b16 %v13090
    %v13366 = vunpack.c.h.b16 %v13090
    %v13367 = vunpack.c.l.b16 %v13091
    %v13368 = vunpack.c.h.b16 %v13091
    %v13369 = vunpack.c.l.b16 %v13092
    %v13370 = vunpack.c.h.b16 %v13092
    %v13371 = vunpack.c.l.b16 %v13093
    %v13372 = vunpack.c.h.b16 %v13093
    %v13373 = vunpack.c.l.b16 %v13094
    %v13374 = vunpack.c.h.b16 %v13094
    %v13375 = vunpack.c.l.b16 %v13095
    %v13376 = vunpack.c.h.b16 %v13095
    %v13377 = vunpack.c.l.b16 %v13096
    %v13378 = vunpack.c.h.b16 %v13096
    %v13379 = vunpack.c.l.b16 %v13097
    %v13380 = vunpack.c.h.b16 %v13097
    %v13381 = vunpack.c.l.b16 %v13098
    %v13382 = vunpack.c.h.b16 %v13098
    %v13383 = vunpack.c.l.b16 %v13099
    %v13384 = vunpack.c.h.b16 %v13099
    %v13385 = vunpack.c.l.b16 %v13100
    %v13386 = vunpack.c.h.b16 %v13100
    %v13387 = vunpack.c.l.b16 %v13101
    %v13388 = vunpack.c.h.b16 %v13101
    %v13389 = vunpack.c.l.b16 %v13102
    %v13390 = vunpack.c.h.b16 %v13102
    %v13391 = vunpack.c.l.b16 %v13103
    %v13392 = vunpack.c.h.b16 %v13103
    %v13393 = vunpack.c.l.b16 %v13104
    %v13394 = vunpack.c.h.b16 %v13104
    %v13395 = vunpack.c.l.b16 %v13105
    %v13396 = vunpack.c.h.b16 %v13105
    %v13397 = vunpack.c.l.b16 %v13106
    %v13398 = vunpack.c.h.b16 %v13106
    %v13399 = vunpack.c.l.b16 %v13107
    %v13400 = vunpack.c.h.b16 %v13107
    %v13401 = vunpack.c.l.b16 %v13108
    %v13402 = vunpack.c.h.b16 %v13108
    %v13403 = vunpack.c.l.b16 %v13109
    %v13404 = vunpack.c.h.b16 %v13109
    %v13405 = vunpack.c.l.b16 %v13110
    %v13406 = vunpack.c.h.b16 %v13110
    %v13407 = vunpack.c.l.b16 %v13111
    %v13408 = vunpack.c.h.b16 %v13111
    %v13409 = vunpack.c.l.b16 %v13112
    %v13410 = vunpack.c.h.b16 %v13112
    %v13411 = vunpack.c.l.b16 %v13113
    %v13412 = vunpack.c.h.b16 %v13113
    %v13413 = vunpack.c.l.b16 %v13114
    %v13414 = vunpack.c.h.b16 %v13114
    %v13415 = vunpack.c.l.b16 %v13115
    %v13416 = vunpack.c.h.b16 %v13115
    %v13417 = vunpack.c.l.b16 %v13116
    %v13418 = vunpack.c.h.b16 %v13116
    %v13419 = vunpack.c.l.b16 %v13117
    %v13420 = vunpack.c.h.b16 %v13117
    %v13421 = vunpack.c.l.b16 %v13118
    %v13422 = vunpack.c.h.b16 %v13118
    %v13423 = vunpack.c.l.b16 %v13119
    %v13424 = vunpack.c.h.b16 %v13119
    %v13425 = vunpack.c.l.b16 %v13120
    %v13426 = vunpack.c.h.b16 %v13120
    %v13427 = vunpack.c.l.b16 %v13121
    %v13428 = vunpack.c.h.b16 %v13121
    %v13429 = vunpack.c.l.b16 %v13122
    %v13430 = vunpack.c.h.b16 %v13122
    %v13431 = vunpack.c.l.b16 %v13123
    %v13432 = vunpack.c.h.b16 %v13123
    %v13433 = vunpack.c.l.b16 %v13124
    %v13434 = vunpack.c.h.b16 %v13124
    %v13435 = vunpack.c.l.b16 %v13125
    %v13436 = vunpack.c.h.b16 %v13125
    %v13437 = vunpack.c.l.b16 %v13126
    %v13438 = vunpack.c.h.b16 %v13126
    %v13439 = vunpack.c.l.b16 %v13127
    %v13440 = vunpack.c.h.b16 %v13127
    %v13441 = vunpack.c.l.b16 %v13128
    %v13442 = vunpack.c.h.b16 %v13128
    %v13443 = vunpack.c.l.b16 %v13129
    %v13444 = vunpack.c.h.b16 %v13129
    %v13445 = vunpack.c.l.b16 %v13130
    %v13446 = vunpack.c.h.b16 %v13130
    %v13447 = vunpack.c.l.b16 %v13131
    %v13448 = vunpack.c.h.b16 %v13131
    %v13449 = vunpack.c.l.b16 %v13132
    %v13450 = vunpack.c.h.b16 %v13132
    %v13451 = vunpack.c.l.b16 %v13133
    %v13452 = vunpack.c.h.b16 %v13133
    %v13453 = vunpack.c.l.b16 %v13134
    %v13454 = vunpack.c.h.b16 %v13134
    %v13455 = vunpack.c.l.b16 %v13135
    %v13456 = vunpack.c.h.b16 %v13135
    %v13457 = vunpack.c.l.b16 %v13136
    %v13458 = vunpack.c.h.b16 %v13136
    %v13459 = vunpack.c.l.b16 %v13137
    %v13460 = vunpack.c.h.b16 %v13137
    %v13461 = vunpack.c.l.b16 %v13138
    %v13462 = vunpack.c.h.b16 %v13138
    %v13463 = vpack.c.b16 %v13249, %v13247
    %v13464 = vpack.c.b16 %v13250, %v13248
    %v13465 = vpack.c.b16 %v13253, %v13251
    %v13466 = vpack.c.b16 %v13254, %v13252
    %v13467 = vpack.c.b16 %v13257, %v13255
    %v13468 = vpack.c.b16 %v13258, %v13256
    %v13469 = vpack.c.b16 %v13261, %v13259
    %v13470 = vpack.c.b16 %v13262, %v13260
    %v13471 = vpack.c.b16 %v13265, %v13263
    %v13472 = vpack.c.b16 %v13266, %v13264
    %v13473 = vpack.c.b16 %v13269, %v13267
    %v13474 = vpack.c.b16 %v13270, %v13268
    %v13475 = vpack.c.b16 %v13273, %v13271
    %v13476 = vpack.c.b16 %v13274, %v13272
    %v13477 = vpack.c.b16 %v13277, %v13275
    %v13478 = vpack.c.b16 %v13278, %v13276
    %v13479 = vpack.c.b16 %v13281, %v13279
    %v13480 = vpack.c.b16 %v13282, %v13280
    %v13481 = vpack.c.b16 %v13285, %v13283
    %v13482 = vpack.c.b16 %v13286, %v13284
    %v13483 = vpack.c.b16 %v13289, %v13287
    %v13484 = vpack.c.b16 %v13290, %v13288
    %v13485 = vpack.c.b16 %v13293, %v13291
    %v13486 = vpack.c.b16 %v13294, %v13292
    %v13487 = vpack.c.b16 %v13297, %v13295
    %v13488 = vpack.c.b16 %v13298, %v13296
    %v13489 = vpack.c.b16 %v13301, %v13299
    %v13490 = vpack.c.b16 %v13302, %v13300
    %v13491 = vpack.c.b16 %v13305, %v13303
    %v13492 = vpack.c.b16 %v13306, %v13304
    %v13493 = vpack.c.b16 %v13309, %v13307
    %v13494 = vpack.c.b16 %v13310, %v13308
    %v13495 = vpack.c.b16 %v13313, %v13311
    %v13496 = vpack.c.b16 %v13314, %v13312
    %v13497 = vpack.c.b16 %v13317, %v13315
    %v13498 = vpack.c.b16 %v13318, %v13316
    %v13499 = vpack.c.b16 %v13321, %v13319
    %v13500 = vpack.c.b16 %v13322, %v13320
    %v13501 = vpack.c.b16 %v13325, %v13323
    %v13502 = vpack.c.b16 %v13326, %v13324
    %v13503 = vpack.c.b16 %v13329, %v13327
    %v13504 = vpack.c.b16 %v13330, %v13328
    %v13505 = vpack.c.b16 %v13333, %v13331
    %v13506 = vpack.c.b16 %v13334, %v13332
    %v13507 = vpack.c.b16 %v13337, %v13335
    %v13508 = vpack.c.b16 %v13338, %v13336
    %v13509 = vpack.c.b16 %v13341, %v13339
    %v13510 = vpack.c.b16 %v13342, %v13340
    %v13511 = vpack.c.b16 %v13345, %v13343
    %v13512 = vpack.c.b16 %v13346, %v13344
    %v13513 = vpack.c.b16 %v13349, %v13347
    %v13514 = vpack.c.b16 %v13350, %v13348
    %v13515 = vpack.c.b16 %v13353, %v13351
    %v13516 = vpack.c.b16 %v13354, %v13352
    %v13517 = vpack.c.b16 %v13357, %v13355
    %v13518 = vpack.c.b16 %v13358, %v13356
    %v13519 = vpack.c.b16 %v13361, %v13359
    %v13520 = vpack.c.b16 %v13362, %v13360
    %v13521 = vpack.c.b16 %v13365, %v13363
    %v13522 = vpack.c.b16 %v13366, %v13364
    %v13523 = vpack.c.b16 %v13369, %v13367
    %v13524 = vpack.c.b16 %v13370, %v13368
    %v13525 = vpack.c.b16 %v13373, %v13371
    %v13526 = vpack.c.b16 %v13374, %v13372
    %v13527 = vpack.c.b16 %v13377, %v13375
    %v13528 = vpack.c.b16 %v13378, %v13376
    %v13529 = vpack.c.b16 %v13381, %v13379
    %v13530 = vpack.c.b16 %v13382, %v13380
    %v13531 = vpack.c.b16 %v13385, %v13383
    %v13532 = vpack.c.b16 %v13386, %v13384
    %v13533 = vpack.c.b16 %v13389, %v13387
    %v13534 = vpack.c.b16 %v13390, %v13388
    %v13535 = vpack.c.b16 %v13393, %v13391
    %v13536 = vpack.c.b16 %v13394, %v13392
    %v13537 = vpack.c.b16 %v13397, %v13395
    %v13538 = vpack.c.b16 %v13398, %v13396
    %v13539 = vpack.c.b16 %v13401, %v13399
    %v13540 = vpack.c.b16 %v13402, %v13400
    %v13541 = vpack.c.b16 %v13405, %v13403
    %v13542 = vpack.c.b16 %v13406, %v13404
    %v13543 = vpack.c.b16 %v13409, %v13407
    %v13544 = vpack.c.b16 %v13410, %v13408
    %v13545 = vpack.c.b16 %v13413, %v13411
    %v13546 = vpack.c.b16 %v13414, %v13412
    %v13547 = vpack.c.b16 %v13417, %v13415
    %v13548 = vpack.c.b16 %v13418, %v13416
    %v13549 = vpack.c.b16 %v13421, %v13419
    %v13550 = vpack.c.b16 %v13422, %v13420
    %v13551 = vpack.c.b16 %v13425, %v13423
    %v13552 = vpack.c.b16 %v13426, %v13424
    %v13553 = vpack.c.b16 %v13429, %v13427
    %v13554 = vpack.c.b16 %v13430, %v13428
    %v13555 = vpack.c.b16 %v13433, %v13431
    %v13556 = vpack.c.b16 %v13434, %v13432
    %v13557 = vpack.c.b16 %v13437, %v13435
    %v13558 = vpack.c.b16 %v13438, %v13436
    %v13559 = vpack.c.b16 %v13441, %v13439
    %v13560 = vpack.c.b16 %v13442, %v13440
    %v13561 = vpack.c.b16 %v13445, %v13443
    %v13562 = vpack.c.b16 %v13446, %v13444
    %v13563 = vpack.c.b16 %v13449, %v13447
    %v13564 = vpack.c.b16 %v13450, %v13448
    %v13565 = vpack.c.b16 %v13453, %v13451
    %v13566 = vpack.c.b16 %v13454, %v13452
    %v13567 = vpack.c.b16 %v13457, %v13455
    %v13568 = vpack.c.b16 %v13458, %v13456
    %v13569 = vpack.c.b16 %v13461, %v13459
    %v13570 = vpack.c.b16 %v13462, %v13460
    %13679 = vmatprep.subr.bf16.mxu0 %v13478
    %13680 = vmatpush1.bf16.msra.mxu0 %v13477
    %13681 = vmatprep.subr.bf16.mxu0 %v13476
    %13682 = vmatpush1.bf16.msra.mxu0 %v13475
    %13683 = vmatprep.subr.bf16.mxu0 %v13474
    %13684 = vmatpush1.bf16.msra.mxu0 %v13473
    %13685 = vmatprep.subr.bf16.mxu0 %v13472
    %13686 = vmatpush1.bf16.msra.mxu0 %v13471
    %13687 = vmatprep.subr.bf16.mxu0 %v13470
    %13688 = vmatpush1.bf16.msra.mxu0 %v13469
    %13689 = vmatprep.subr.bf16.mxu0 %v13468
    %13690 = vmatpush1.bf16.msra.mxu0 %v13467
    %13691 = vmatprep.subr.bf16.mxu0 %v13466
    %13692 = vmatpush1.bf16.msra.mxu0 %v13465
    %13693 = vmatprep.subr.bf16.mxu0 %v13464
    %13694 = vmatpush1.bf16.msra.mxu0 %v13463
    %13695 = vmatprep.subr.bf16.mxu0 %v13494
    %13696 = vmatpush2.bf16.msra.mxu0 %v13493
    %13697 = vmatprep.subr.bf16.mxu0 %v13492
    %13698 = vmatpush2.bf16.msra.mxu0 %v13491
    %13699 = vmatprep.subr.bf16.mxu0 %v13490
    %13700 = vmatpush2.bf16.msra.mxu0 %v13489
    %13701 = vmatprep.subr.bf16.mxu0 %v13488
    %13702 = vmatpush2.bf16.msra.mxu0 %v13487
    %13703 = vmatprep.subr.bf16.mxu0 %v13486
    %13704 = vmatpush2.bf16.msra.mxu0 %v13485
    %13705 = vmatprep.subr.bf16.mxu0 %v13484
    %13706 = vmatpush2.bf16.msra.mxu0 %v13483
    %13707 = vmatprep.subr.bf16.mxu0 %v13482
    %13708 = vmatpush2.bf16.msra.mxu0 %v13481
    %13709 = vmatprep.subr.bf16.mxu0 %v13480
    %13710 = vmatpush2.bf16.msra.mxu0 %v13479
    %13711 = vmatprep.mubr.bf16.mxu0 %v11393
    %13712 = vmatmul.mubr.bf16.gmra.mxu0 %v11392
    %v13713 = vpop.f32.mrf.mxu0
    %v13714 = vadd.f32 0.0, %v13713
    %v13715 = vpop.f32.mrf.mxu0
    %v13716 = vadd.f32 0.0, %v13715
    %v13717 = vpop.f32.mrf.mxu0
    %v13718 = vpop.f32.mrf.mxu0
    %13719 = vdwg.mxu0
    %13720 = vmatprep.subr.bf16.mxu0 %v13510
    %13721 = vmatpush1.bf16.msra.mxu0 %v13509
    %13722 = vmatprep.subr.bf16.mxu0 %v13508
    %13723 = vmatpush1.bf16.msra.mxu0 %v13507
    %13724 = vmatprep.subr.bf16.mxu0 %v13506
    %13725 = vmatpush1.bf16.msra.mxu0 %v13505
    %13726 = vmatprep.subr.bf16.mxu0 %v13504
    %13727 = vmatpush1.bf16.msra.mxu0 %v13503
    %13728 = vmatprep.subr.bf16.mxu0 %v13502
    %13729 = vmatpush1.bf16.msra.mxu0 %v13501
    %13730 = vmatprep.subr.bf16.mxu0 %v13500
    %13731 = vmatpush1.bf16.msra.mxu0 %v13499
    %13732 = vmatprep.subr.bf16.mxu0 %v13498
    %13733 = vmatpush1.bf16.msra.mxu0 %v13497
    %13734 = vmatprep.subr.bf16.mxu0 %v13496
    %13735 = vmatpush1.bf16.msra.mxu0 %v13495
    %13736 = vmatprep.subr.bf16.mxu0 %v13526
    %13737 = vmatpush2.bf16.msra.mxu0 %v13525
    %13738 = vmatprep.subr.bf16.mxu0 %v13524
    %13739 = vmatpush2.bf16.msra.mxu0 %v13523
    %13740 = vmatprep.subr.bf16.mxu0 %v13522
    %13741 = vmatpush2.bf16.msra.mxu0 %v13521
    %13742 = vmatprep.subr.bf16.mxu0 %v13520
    %13743 = vmatpush2.bf16.msra.mxu0 %v13519
    %13744 = vmatprep.subr.bf16.mxu0 %v13518
    %13745 = vmatpush2.bf16.msra.mxu0 %v13517
    %13746 = vmatprep.subr.bf16.mxu0 %v13516
    %13747 = vmatpush2.bf16.msra.mxu0 %v13515
    %13748 = vmatprep.subr.bf16.mxu0 %v13514
    %13749 = vmatpush2.bf16.msra.mxu0 %v13513
    %13750 = vmatprep.subr.bf16.mxu0 %v13512
    %13751 = vmatpush2.bf16.msra.mxu0 %v13511
    %13752 = vmatprep.mubr.bf16.mxu0 %v11395
    %13753 = vmatmul.mubr.bf16.gmra.mxu0 %v11394
    %v13754 = vpop.f32.mrf.mxu0
    %v13755 = vadd.f32 %v13714, %v13754
    %v13756 = vpop.f32.mrf.mxu0
    %v13757 = vadd.f32 %v13716, %v13756
    %v13758 = vpop.f32.mrf.mxu0
    %v13759 = vpop.f32.mrf.mxu0
    %13760 = vdwg.mxu0
    %13761 = vmatprep.subr.bf16.mxu0 %v13542
    %13762 = vmatpush1.bf16.msra.mxu0 %v13541
    %13763 = vmatprep.subr.bf16.mxu0 %v13540
    %13764 = vmatpush1.bf16.msra.mxu0 %v13539
    %13765 = vmatprep.subr.bf16.mxu0 %v13538
    %13766 = vmatpush1.bf16.msra.mxu0 %v13537
    %13767 = vmatprep.subr.bf16.mxu0 %v13536
    %13768 = vmatpush1.bf16.msra.mxu0 %v13535
    %13769 = vmatprep.subr.bf16.mxu0 %v13534
    %13770 = vmatpush1.bf16.msra.mxu0 %v13533
    %13771 = vmatprep.subr.bf16.mxu0 %v13532
    %13772 = vmatpush1.bf16.msra.mxu0 %v13531
    %13773 = vmatprep.subr.bf16.mxu0 %v13530
    %13774 = vmatpush1.bf16.msra.mxu0 %v13529
    %13775 = vmatprep.subr.bf16.mxu0 %v13528
    %13776 = vmatpush1.bf16.msra.mxu0 %v13527
    %13777 = vmatprep.subr.bf16.mxu0 %v13558
    %13778 = vmatpush2.bf16.msra.mxu0 %v13557
    %13779 = vmatprep.subr.bf16.mxu0 %v13556
    %13780 = vmatpush2.bf16.msra.mxu0 %v13555
    %13781 = vmatprep.subr.bf16.mxu0 %v13554
    %13782 = vmatpush2.bf16.msra.mxu0 %v13553
    %13783 = vmatprep.subr.bf16.mxu0 %v13552
    %13784 = vmatpush2.bf16.msra.mxu0 %v13551
    %13785 = vmatprep.subr.bf16.mxu0 %v13550
    %13786 = vmatpush2.bf16.msra.mxu0 %v13549
    %13787 = vmatprep.subr.bf16.mxu0 %v13548
    %13788 = vmatpush2.bf16.msra.mxu0 %v13547
    %13789 = vmatprep.subr.bf16.mxu0 %v13546
    %13790 = vmatpush2.bf16.msra.mxu0 %v13545
    %13791 = vmatprep.subr.bf16.mxu0 %v13544
    %13792 = vmatpush2.bf16.msra.mxu0 %v13543
    %13793 = vmatprep.mubr.bf16.mxu0 %v11397
    %13794 = vmatmul.mubr.bf16.gmra.mxu0 %v11396
    %v13795 = vpop.f32.mrf.mxu0
    %v13796 = vadd.f32 %v13755, %v13795
    %v13797 = vpop.f32.mrf.mxu0
    %v13798 = vadd.f32 %v13757, %v13797
    %v13799 = vpop.f32.mrf.mxu0
    %v13800 = vpop.f32.mrf.mxu0
    %13801 = vdwg.mxu0
    %13802 = vmatprep.subr.bf16.mxu0 0
    %13803 = vmatpush1.bf16.msra.mxu0 0
    %13804 = vmatprep.subr.bf16.mxu0 0
    %13805 = vmatpush1.bf16.msra.mxu0 0
    %13806 = vmatprep.subr.bf16.mxu0 %v13570
    %13807 = vmatpush1.bf16.msra.mxu0 %v13569
    %13808 = vmatprep.subr.bf16.mxu0 %v13568
    %13809 = vmatpush1.bf16.msra.mxu0 %v13567
    %13810 = vmatprep.subr.bf16.mxu0 %v13566
    %13811 = vmatpush1.bf16.msra.mxu0 %v13565
    %13812 = vmatprep.subr.bf16.mxu0 %v13564
    %13813 = vmatpush1.bf16.msra.mxu0 %v13563
    %13814 = vmatprep.subr.bf16.mxu0 %v13562
    %13815 = vmatpush1.bf16.msra.mxu0 %v13561
    %13816 = vmatprep.subr.bf16.mxu0 %v13560
    %13817 = vmatpush1.bf16.msra.mxu0 %v13559
    %13818 = vmatprep.subr.bf16.mxu0 0
    %13819 = vmatpush2.bf16.msra.mxu0 0
    %13820 = vmatprep.subr.bf16.mxu0 0
    %13821 = vmatpush2.bf16.msra.mxu0 0
    %13822 = vmatprep.subr.bf16.mxu0 0
    %13823 = vmatpush2.bf16.msra.mxu0 0
    %13824 = vmatprep.subr.bf16.mxu0 0
    %13825 = vmatpush2.bf16.msra.mxu0 0
    %13826 = vmatprep.subr.bf16.mxu0 0
    %13827 = vmatpush2.bf16.msra.mxu0 0
    %13828 = vmatprep.subr.bf16.mxu0 0
    %13829 = vmatpush2.bf16.msra.mxu0 0
    %13830 = vmatprep.subr.bf16.mxu0 0
    %13831 = vmatpush2.bf16.msra.mxu0 0
    %13832 = vmatprep.subr.bf16.mxu0 0
    %13833 = vmatpush2.bf16.msra.mxu0 0
    %13834 = vmatprep.mubr.bf16.mxu0 0
    %13835 = vmatmul.mubr.bf16.gmra.mxu0 %v12049
    %v13836 = vpop.f32.mrf.mxu0
    %v13837 = vadd.f32 %v13796, %v13836
    %v13838 = vpop.f32.mrf.mxu0
    %v13839 = vadd.f32 %v13798, %v13838
    %v13840 = vpop.f32.mrf.mxu0
    %v13841 = vpop.f32.mrf.mxu0
    %13842 = vdwg.mxu0
    %v13843 = vmax.f32 %v13028, %v13837
    %v13844 = vmax.f32 %v13029, %v13839
    %s13845 = scalar_lea.vmem %s3, 2592
    %v13846 = vld [vmem:[%s13845] sm:$0xff]
    %v13847 = vld [vmem:[%s13845 + $0x8] sm:$0xff]
    %v13848 = vld [vmem:[%s13845 + $0x10] sm:$0xff]
    %v13849 = vld [vmem:[%s13845 + $0x18] sm:$0xff]
    %v13850 = vld [vmem:[%s13845 + $0x20] sm:$0xff]
    %v13851 = vld [vmem:[%s13845 + $0x28] sm:$0xff]
    %v13852 = vld [vmem:[%s13845 + $0x30] sm:$0xff]
    %v13853 = vld [vmem:[%s13845 + $0x38] sm:$0xff]
    %v13854 = vld [vmem:[%s13845 + $0x40] sm:$0xff]
    %v13855 = vld [vmem:[%s13845 + $0x48] sm:$0xff]
    %v13856 = vld [vmem:[%s13845 + $0x50] sm:$0xff]
    %v13857 = vld [vmem:[%s13845 + $0x58] sm:$0xff]
    %v13858 = vld [vmem:[%s13845 + $0x60] sm:$0xff]
    %v13859 = vld [vmem:[%s13845 + $0x68] sm:$0xff]
    %v13860 = vld [vmem:[%s13845 + $0x70] sm:$0xff]
    %v13861 = vld [vmem:[%s13845 + $0x78] sm:$0xff]
    %v13862 = vld [vmem:[%s13845 + $0x80] sm:$0xff]
    %v13863 = vld [vmem:[%s13845 + $0x88] sm:$0xff]
    %v13864 = vld [vmem:[%s13845 + $0x90] sm:$0xff]
    %v13865 = vld [vmem:[%s13845 + $0x98] sm:$0xff]
    %v13866 = vld [vmem:[%s13845 + $0xa0] sm:$0xff]
    %v13867 = vld [vmem:[%s13845 + $0xa8] sm:$0xff]
    %v13868 = vld [vmem:[%s13845 + $0xb0] sm:$0xff]
    %v13869 = vld [vmem:[%s13845 + $0xb8] sm:$0xff]
    %v13870 = vld [vmem:[%s13845 + $0xc0] sm:$0xff]
    %v13871 = vld [vmem:[%s13845 + $0xc8] sm:$0xff]
    %v13872 = vld [vmem:[%s13845 + $0xd0] sm:$0xff]
    %v13873 = vld [vmem:[%s13845 + $0xd8] sm:$0xff]
    %v13874 = vld [vmem:[%s13845 + $0xe0] sm:$0xff]
    %v13875 = vld [vmem:[%s13845 + $0xe8] sm:$0xff]
    %v13876 = vld [vmem:[%s13845 + $0xf0] sm:$0xff]
    %v13877 = vld [vmem:[%s13845 + $0xf8] sm:$0xff]
    %v13878 = vld [vmem:[%s13845 + $0x100] sm:$0xff]
    %v13879 = vld [vmem:[%s13845 + $0x108] sm:$0xff]
    %v13880 = vld [vmem:[%s13845 + $0x110] sm:$0xff]
    %v13881 = vld [vmem:[%s13845 + $0x118] sm:$0xff]
    %v13882 = vld [vmem:[%s13845 + $0x120] sm:$0xff]
    %v13883 = vld [vmem:[%s13845 + $0x128] sm:$0xff]
    %v13884 = vld [vmem:[%s13845 + $0x130] sm:$0xff]
    %v13885 = vld [vmem:[%s13845 + $0x138] sm:$0xff]
    %v13886 = vld [vmem:[%s13845 + $0x140] sm:$0xff]
    %v13887 = vld [vmem:[%s13845 + $0x148] sm:$0xff]
    %v13888 = vld [vmem:[%s13845 + $0x150] sm:$0xff]
    %v13889 = vld [vmem:[%s13845 + $0x158] sm:$0xff]
    %v13890 = vld [vmem:[%s13845 + $0x160] sm:$0xff]
    %v13891 = vld [vmem:[%s13845 + $0x168] sm:$0xff]
    %v13892 = vld [vmem:[%s13845 + $0x170] sm:$0xff]
    %v13893 = vld [vmem:[%s13845 + $0x178] sm:$0xff]
    %v13894 = vld [vmem:[%s13845 + $0x180] sm:$0xff]
    %v13895 = vld [vmem:[%s13845 + $0x188] sm:$0xff]
    %v13896 = vld [vmem:[%s13845 + $0x190] sm:$0xff]
    %v13897 = vld [vmem:[%s13845 + $0x198] sm:$0xff]
    %v13898 = vld [vmem:[%s13845 + $0x1a0] sm:$0xff]
    %v13899 = vld [vmem:[%s13845 + $0x1a8] sm:$0xff]
    %v13900 = vld [vmem:[%s13845 + $0x1b0] sm:$0xff]
    %v13901 = vld [vmem:[%s13845 + $0x1b8] sm:$0xff]
    %v13902 = vld [vmem:[%s13845 + $0x1c0] sm:$0xff]
    %v13903 = vld [vmem:[%s13845 + $0x1c8] sm:$0xff]
    %v13904 = vld [vmem:[%s13845 + $0x1d0] sm:$0xff]
    %v13905 = vld [vmem:[%s13845 + $0x1d8] sm:$0xff]
    %v13906 = vld [vmem:[%s13845 + $0x1e0] sm:$0xff]
    %v13907 = vld [vmem:[%s13845 + $0x1e8] sm:$0xff]
    %v13908 = vld [vmem:[%s13845 + $0x1f0] sm:$0xff]
    %v13909 = vld [vmem:[%s13845 + $0x1f8] sm:$0xff]
    %v13910 = vld [vmem:[%s13845 + $0x200] sm:$0xff]
    %v13911 = vld [vmem:[%s13845 + $0x208] sm:$0xff]
    %v13912 = vld [vmem:[%s13845 + $0x210] sm:$0xff]
    %v13913 = vld [vmem:[%s13845 + $0x218] sm:$0xff]
    %v13914 = vld [vmem:[%s13845 + $0x220] sm:$0xff]
    %v13915 = vld [vmem:[%s13845 + $0x228] sm:$0xff]
    %v13916 = vld [vmem:[%s13845 + $0x230] sm:$0xff]
    %v13917 = vld [vmem:[%s13845 + $0x238] sm:$0xff]
    %v13918 = vld [vmem:[%s13845 + $0x240] sm:$0xff]
    %v13919 = vld [vmem:[%s13845 + $0x248] sm:$0xff]
    %v13920 = vld [vmem:[%s13845 + $0x250] sm:$0xff]
    %v13921 = vld [vmem:[%s13845 + $0x258] sm:$0xff]
    %v13922 = vld [vmem:[%s13845 + $0x260] sm:$0xff]
    %v13923 = vld [vmem:[%s13845 + $0x268] sm:$0xff]
    %v13924 = vld [vmem:[%s13845 + $0x270] sm:$0xff]
    %v13925 = vld [vmem:[%s13845 + $0x278] sm:$0xff]
    %v13926 = vld [vmem:[%s13845 + $0x280] sm:$0xff]
    %v13927 = vld [vmem:[%s13845 + $0x288] sm:$0xff]
    %v13928 = vld [vmem:[%s13845 + $0x290] sm:$0xff]
    %v13929 = vld [vmem:[%s13845 + $0x298] sm:$0xff]
    %v13930 = vld [vmem:[%s13845 + $0x2a0] sm:$0xff]
    %v13931 = vld [vmem:[%s13845 + $0x2a8] sm:$0xff]
    %v13932 = vld [vmem:[%s13845 + $0x2b0] sm:$0xff]
    %v13933 = vld [vmem:[%s13845 + $0x2b8] sm:$0xff]
    %v13934 = vld [vmem:[%s13845 + $0x2c0] sm:$0xff]
    %v13935 = vld [vmem:[%s13845 + $0x2c8] sm:$0xff]
    %v13936 = vld [vmem:[%s13845 + $0x2d0] sm:$0xff]
    %v13937 = vld [vmem:[%s13845 + $0x2d8] sm:$0xff]
    %v13938 = vld [vmem:[%s13845 + $0x2e0] sm:$0xff]
    %v13939 = vld [vmem:[%s13845 + $0x2e8] sm:$0xff]
    %v13940 = vld [vmem:[%s13845 + $0x2f0] sm:$0xff]
    %v13941 = vld [vmem:[%s13845 + $0x2f8] sm:$0xff]
    %v13942 = vld [vmem:[%s13845 + $0x300] sm:$0xff]
    %v13943 = vld [vmem:[%s13845 + $0x308] sm:$0xff]
    %v13944 = vld [vmem:[%s13845 + $0x310] sm:$0xff]
    %v13945 = vld [vmem:[%s13845 + $0x318] sm:$0xff]
    %v13946 = vld [vmem:[%s13845 + $0x320] sm:$0xff]
    %v13947 = vld [vmem:[%s13845 + $0x328] sm:$0xff]
    %v13948 = vld [vmem:[%s13845 + $0x330] sm:$0xff]
    %v13949 = vld [vmem:[%s13845 + $0x338] sm:$0xff]
    %v13950 = vld [vmem:[%s13845 + $0x340] sm:$0xff]
    %v13951 = vld [vmem:[%s13845 + $0x348] sm:$0xff]
    %v13952 = vld [vmem:[%s13845 + $0x350] sm:$0xff]
    %v13953 = vld [vmem:[%s13845 + $0x358] sm:$0xff]
    %v14062 = vunpack.c.l.b16 %v13846
    %v14063 = vunpack.c.h.b16 %v13846
    %v14064 = vunpack.c.l.b16 %v13847
    %v14065 = vunpack.c.h.b16 %v13847
    %v14066 = vunpack.c.l.b16 %v13848
    %v14067 = vunpack.c.h.b16 %v13848
    %v14068 = vunpack.c.l.b16 %v13849
    %v14069 = vunpack.c.h.b16 %v13849
    %v14070 = vunpack.c.l.b16 %v13850
    %v14071 = vunpack.c.h.b16 %v13850
    %v14072 = vunpack.c.l.b16 %v13851
    %v14073 = vunpack.c.h.b16 %v13851
    %v14074 = vunpack.c.l.b16 %v13852
    %v14075 = vunpack.c.h.b16 %v13852
    %v14076 = vunpack.c.l.b16 %v13853
    %v14077 = vunpack.c.h.b16 %v13853
    %v14078 = vunpack.c.l.b16 %v13854
    %v14079 = vunpack.c.h.b16 %v13854
    %v14080 = vunpack.c.l.b16 %v13855
    %v14081 = vunpack.c.h.b16 %v13855
    %v14082 = vunpack.c.l.b16 %v13856
    %v14083 = vunpack.c.h.b16 %v13856
    %v14084 = vunpack.c.l.b16 %v13857
    %v14085 = vunpack.c.h.b16 %v13857
    %v14086 = vunpack.c.l.b16 %v13858
    %v14087 = vunpack.c.h.b16 %v13858
    %v14088 = vunpack.c.l.b16 %v13859
    %v14089 = vunpack.c.h.b16 %v13859
    %v14090 = vunpack.c.l.b16 %v13860
    %v14091 = vunpack.c.h.b16 %v13860
    %v14092 = vunpack.c.l.b16 %v13861
    %v14093 = vunpack.c.h.b16 %v13861
    %v14094 = vunpack.c.l.b16 %v13862
    %v14095 = vunpack.c.h.b16 %v13862
    %v14096 = vunpack.c.l.b16 %v13863
    %v14097 = vunpack.c.h.b16 %v13863
    %v14098 = vunpack.c.l.b16 %v13864
    %v14099 = vunpack.c.h.b16 %v13864
    %v14100 = vunpack.c.l.b16 %v13865
    %v14101 = vunpack.c.h.b16 %v13865
    %v14102 = vunpack.c.l.b16 %v13866
    %v14103 = vunpack.c.h.b16 %v13866
    %v14104 = vunpack.c.l.b16 %v13867
    %v14105 = vunpack.c.h.b16 %v13867
    %v14106 = vunpack.c.l.b16 %v13868
    %v14107 = vunpack.c.h.b16 %v13868
    %v14108 = vunpack.c.l.b16 %v13869
    %v14109 = vunpack.c.h.b16 %v13869
    %v14110 = vunpack.c.l.b16 %v13870
    %v14111 = vunpack.c.h.b16 %v13870
    %v14112 = vunpack.c.l.b16 %v13871
    %v14113 = vunpack.c.h.b16 %v13871
    %v14114 = vunpack.c.l.b16 %v13872
    %v14115 = vunpack.c.h.b16 %v13872
    %v14116 = vunpack.c.l.b16 %v13873
    %v14117 = vunpack.c.h.b16 %v13873
    %v14118 = vunpack.c.l.b16 %v13874
    %v14119 = vunpack.c.h.b16 %v13874
    %v14120 = vunpack.c.l.b16 %v13875
    %v14121 = vunpack.c.h.b16 %v13875
    %v14122 = vunpack.c.l.b16 %v13876
    %v14123 = vunpack.c.h.b16 %v13876
    %v14124 = vunpack.c.l.b16 %v13877
    %v14125 = vunpack.c.h.b16 %v13877
    %v14126 = vunpack.c.l.b16 %v13878
    %v14127 = vunpack.c.h.b16 %v13878
    %v14128 = vunpack.c.l.b16 %v13879
    %v14129 = vunpack.c.h.b16 %v13879
    %v14130 = vunpack.c.l.b16 %v13880
    %v14131 = vunpack.c.h.b16 %v13880
    %v14132 = vunpack.c.l.b16 %v13881
    %v14133 = vunpack.c.h.b16 %v13881
    %v14134 = vunpack.c.l.b16 %v13882
    %v14135 = vunpack.c.h.b16 %v13882
    %v14136 = vunpack.c.l.b16 %v13883
    %v14137 = vunpack.c.h.b16 %v13883
    %v14138 = vunpack.c.l.b16 %v13884
    %v14139 = vunpack.c.h.b16 %v13884
    %v14140 = vunpack.c.l.b16 %v13885
    %v14141 = vunpack.c.h.b16 %v13885
    %v14142 = vunpack.c.l.b16 %v13886
    %v14143 = vunpack.c.h.b16 %v13886
    %v14144 = vunpack.c.l.b16 %v13887
    %v14145 = vunpack.c.h.b16 %v13887
    %v14146 = vunpack.c.l.b16 %v13888
    %v14147 = vunpack.c.h.b16 %v13888
    %v14148 = vunpack.c.l.b16 %v13889
    %v14149 = vunpack.c.h.b16 %v13889
    %v14150 = vunpack.c.l.b16 %v13890
    %v14151 = vunpack.c.h.b16 %v13890
    %v14152 = vunpack.c.l.b16 %v13891
    %v14153 = vunpack.c.h.b16 %v13891
    %v14154 = vunpack.c.l.b16 %v13892
    %v14155 = vunpack.c.h.b16 %v13892
    %v14156 = vunpack.c.l.b16 %v13893
    %v14157 = vunpack.c.h.b16 %v13893
    %v14158 = vunpack.c.l.b16 %v13894
    %v14159 = vunpack.c.h.b16 %v13894
    %v14160 = vunpack.c.l.b16 %v13895
    %v14161 = vunpack.c.h.b16 %v13895
    %v14162 = vunpack.c.l.b16 %v13896
    %v14163 = vunpack.c.h.b16 %v13896
    %v14164 = vunpack.c.l.b16 %v13897
    %v14165 = vunpack.c.h.b16 %v13897
    %v14166 = vunpack.c.l.b16 %v13898
    %v14167 = vunpack.c.h.b16 %v13898
    %v14168 = vunpack.c.l.b16 %v13899
    %v14169 = vunpack.c.h.b16 %v13899
    %v14170 = vunpack.c.l.b16 %v13900
    %v14171 = vunpack.c.h.b16 %v13900
    %v14172 = vunpack.c.l.b16 %v13901
    %v14173 = vunpack.c.h.b16 %v13901
    %v14174 = vunpack.c.l.b16 %v13902
    %v14175 = vunpack.c.h.b16 %v13902
    %v14176 = vunpack.c.l.b16 %v13903
    %v14177 = vunpack.c.h.b16 %v13903
    %v14178 = vunpack.c.l.b16 %v13904
    %v14179 = vunpack.c.h.b16 %v13904
    %v14180 = vunpack.c.l.b16 %v13905
    %v14181 = vunpack.c.h.b16 %v13905
    %v14182 = vunpack.c.l.b16 %v13906
    %v14183 = vunpack.c.h.b16 %v13906
    %v14184 = vunpack.c.l.b16 %v13907
    %v14185 = vunpack.c.h.b16 %v13907
    %v14186 = vunpack.c.l.b16 %v13908
    %v14187 = vunpack.c.h.b16 %v13908
    %v14188 = vunpack.c.l.b16 %v13909
    %v14189 = vunpack.c.h.b16 %v13909
    %v14190 = vunpack.c.l.b16 %v13910
    %v14191 = vunpack.c.h.b16 %v13910
    %v14192 = vunpack.c.l.b16 %v13911
    %v14193 = vunpack.c.h.b16 %v13911
    %v14194 = vunpack.c.l.b16 %v13912
    %v14195 = vunpack.c.h.b16 %v13912
    %v14196 = vunpack.c.l.b16 %v13913
    %v14197 = vunpack.c.h.b16 %v13913
    %v14198 = vunpack.c.l.b16 %v13914
    %v14199 = vunpack.c.h.b16 %v13914
    %v14200 = vunpack.c.l.b16 %v13915
    %v14201 = vunpack.c.h.b16 %v13915
    %v14202 = vunpack.c.l.b16 %v13916
    %v14203 = vunpack.c.h.b16 %v13916
    %v14204 = vunpack.c.l.b16 %v13917
    %v14205 = vunpack.c.h.b16 %v13917
    %v14206 = vunpack.c.l.b16 %v13918
    %v14207 = vunpack.c.h.b16 %v13918
    %v14208 = vunpack.c.l.b16 %v13919
    %v14209 = vunpack.c.h.b16 %v13919
    %v14210 = vunpack.c.l.b16 %v13920
    %v14211 = vunpack.c.h.b16 %v13920
    %v14212 = vunpack.c.l.b16 %v13921
    %v14213 = vunpack.c.h.b16 %v13921
    %v14214 = vunpack.c.l.b16 %v13922
    %v14215 = vunpack.c.h.b16 %v13922
    %v14216 = vunpack.c.l.b16 %v13923
    %v14217 = vunpack.c.h.b16 %v13923
    %v14218 = vunpack.c.l.b16 %v13924
    %v14219 = vunpack.c.h.b16 %v13924
    %v14220 = vunpack.c.l.b16 %v13925
    %v14221 = vunpack.c.h.b16 %v13925
    %v14222 = vunpack.c.l.b16 %v13926
    %v14223 = vunpack.c.h.b16 %v13926
    %v14224 = vunpack.c.l.b16 %v13927
    %v14225 = vunpack.c.h.b16 %v13927
    %v14226 = vunpack.c.l.b16 %v13928
    %v14227 = vunpack.c.h.b16 %v13928
    %v14228 = vunpack.c.l.b16 %v13929
    %v14229 = vunpack.c.h.b16 %v13929
    %v14230 = vunpack.c.l.b16 %v13930
    %v14231 = vunpack.c.h.b16 %v13930
    %v14232 = vunpack.c.l.b16 %v13931
    %v14233 = vunpack.c.h.b16 %v13931
    %v14234 = vunpack.c.l.b16 %v13932
    %v14235 = vunpack.c.h.b16 %v13932
    %v14236 = vunpack.c.l.b16 %v13933
    %v14237 = vunpack.c.h.b16 %v13933
    %v14238 = vunpack.c.l.b16 %v13934
    %v14239 = vunpack.c.h.b16 %v13934
    %v14240 = vunpack.c.l.b16 %v13935
    %v14241 = vunpack.c.h.b16 %v13935
    %v14242 = vunpack.c.l.b16 %v13936
    %v14243 = vunpack.c.h.b16 %v13936
    %v14244 = vunpack.c.l.b16 %v13937
    %v14245 = vunpack.c.h.b16 %v13937
    %v14246 = vunpack.c.l.b16 %v13938
    %v14247 = vunpack.c.h.b16 %v13938
    %v14248 = vunpack.c.l.b16 %v13939
    %v14249 = vunpack.c.h.b16 %v13939
    %v14250 = vunpack.c.l.b16 %v13940
    %v14251 = vunpack.c.h.b16 %v13940
    %v14252 = vunpack.c.l.b16 %v13941
    %v14253 = vunpack.c.h.b16 %v13941
    %v14254 = vunpack.c.l.b16 %v13942
    %v14255 = vunpack.c.h.b16 %v13942
    %v14256 = vunpack.c.l.b16 %v13943
    %v14257 = vunpack.c.h.b16 %v13943
    %v14258 = vunpack.c.l.b16 %v13944
    %v14259 = vunpack.c.h.b16 %v13944
    %v14260 = vunpack.c.l.b16 %v13945
    %v14261 = vunpack.c.h.b16 %v13945
    %v14262 = vunpack.c.l.b16 %v13946
    %v14263 = vunpack.c.h.b16 %v13946
    %v14264 = vunpack.c.l.b16 %v13947
    %v14265 = vunpack.c.h.b16 %v13947
    %v14266 = vunpack.c.l.b16 %v13948
    %v14267 = vunpack.c.h.b16 %v13948
    %v14268 = vunpack.c.l.b16 %v13949
    %v14269 = vunpack.c.h.b16 %v13949
    %v14270 = vunpack.c.l.b16 %v13950
    %v14271 = vunpack.c.h.b16 %v13950
    %v14272 = vunpack.c.l.b16 %v13951
    %v14273 = vunpack.c.h.b16 %v13951
    %v14274 = vunpack.c.l.b16 %v13952
    %v14275 = vunpack.c.h.b16 %v13952
    %v14276 = vunpack.c.l.b16 %v13953
    %v14277 = vunpack.c.h.b16 %v13953
    %v14278 = vpack.c.b16 %v14064, %v14062
    %v14279 = vpack.c.b16 %v14065, %v14063
    %v14280 = vpack.c.b16 %v14068, %v14066
    %v14281 = vpack.c.b16 %v14069, %v14067
    %v14282 = vpack.c.b16 %v14072, %v14070
    %v14283 = vpack.c.b16 %v14073, %v14071
    %v14284 = vpack.c.b16 %v14076, %v14074
    %v14285 = vpack.c.b16 %v14077, %v14075
    %v14286 = vpack.c.b16 %v14080, %v14078
    %v14287 = vpack.c.b16 %v14081, %v14079
    %v14288 = vpack.c.b16 %v14084, %v14082
    %v14289 = vpack.c.b16 %v14085, %v14083
    %v14290 = vpack.c.b16 %v14088, %v14086
    %v14291 = vpack.c.b16 %v14089, %v14087
    %v14292 = vpack.c.b16 %v14092, %v14090
    %v14293 = vpack.c.b16 %v14093, %v14091
    %v14294 = vpack.c.b16 %v14096, %v14094
    %v14295 = vpack.c.b16 %v14097, %v14095
    %v14296 = vpack.c.b16 %v14100, %v14098
    %v14297 = vpack.c.b16 %v14101, %v14099
    %v14298 = vpack.c.b16 %v14104, %v14102
    %v14299 = vpack.c.b16 %v14105, %v14103
    %v14300 = vpack.c.b16 %v14108, %v14106
    %v14301 = vpack.c.b16 %v14109, %v14107
    %v14302 = vpack.c.b16 %v14112, %v14110
    %v14303 = vpack.c.b16 %v14113, %v14111
    %v14304 = vpack.c.b16 %v14116, %v14114
    %v14305 = vpack.c.b16 %v14117, %v14115
    %v14306 = vpack.c.b16 %v14120, %v14118
    %v14307 = vpack.c.b16 %v14121, %v14119
    %v14308 = vpack.c.b16 %v14124, %v14122
    %v14309 = vpack.c.b16 %v14125, %v14123
    %v14310 = vpack.c.b16 %v14128, %v14126
    %v14311 = vpack.c.b16 %v14129, %v14127
    %v14312 = vpack.c.b16 %v14132, %v14130
    %v14313 = vpack.c.b16 %v14133, %v14131
    %v14314 = vpack.c.b16 %v14136, %v14134
    %v14315 = vpack.c.b16 %v14137, %v14135
    %v14316 = vpack.c.b16 %v14140, %v14138
    %v14317 = vpack.c.b16 %v14141, %v14139
    %v14318 = vpack.c.b16 %v14144, %v14142
    %v14319 = vpack.c.b16 %v14145, %v14143
    %v14320 = vpack.c.b16 %v14148, %v14146
    %v14321 = vpack.c.b16 %v14149, %v14147
    %v14322 = vpack.c.b16 %v14152, %v14150
    %v14323 = vpack.c.b16 %v14153, %v14151
    %v14324 = vpack.c.b16 %v14156, %v14154
    %v14325 = vpack.c.b16 %v14157, %v14155
    %v14326 = vpack.c.b16 %v14160, %v14158
    %v14327 = vpack.c.b16 %v14161, %v14159
    %v14328 = vpack.c.b16 %v14164, %v14162
    %v14329 = vpack.c.b16 %v14165, %v14163
    %v14330 = vpack.c.b16 %v14168, %v14166
    %v14331 = vpack.c.b16 %v14169, %v14167
    %v14332 = vpack.c.b16 %v14172, %v14170
    %v14333 = vpack.c.b16 %v14173, %v14171
    %v14334 = vpack.c.b16 %v14176, %v14174
    %v14335 = vpack.c.b16 %v14177, %v14175
    %v14336 = vpack.c.b16 %v14180, %v14178
    %v14337 = vpack.c.b16 %v14181, %v14179
    %v14338 = vpack.c.b16 %v14184, %v14182
    %v14339 = vpack.c.b16 %v14185, %v14183
    %v14340 = vpack.c.b16 %v14188, %v14186
    %v14341 = vpack.c.b16 %v14189, %v14187
    %v14342 = vpack.c.b16 %v14192, %v14190
    %v14343 = vpack.c.b16 %v14193, %v14191
    %v14344 = vpack.c.b16 %v14196, %v14194
    %v14345 = vpack.c.b16 %v14197, %v14195
    %v14346 = vpack.c.b16 %v14200, %v14198
    %v14347 = vpack.c.b16 %v14201, %v14199
    %v14348 = vpack.c.b16 %v14204, %v14202
    %v14349 = vpack.c.b16 %v14205, %v14203
    %v14350 = vpack.c.b16 %v14208, %v14206
    %v14351 = vpack.c.b16 %v14209, %v14207
    %v14352 = vpack.c.b16 %v14212, %v14210
    %v14353 = vpack.c.b16 %v14213, %v14211
    %v14354 = vpack.c.b16 %v14216, %v14214
    %v14355 = vpack.c.b16 %v14217, %v14215
    %v14356 = vpack.c.b16 %v14220, %v14218
    %v14357 = vpack.c.b16 %v14221, %v14219
    %v14358 = vpack.c.b16 %v14224, %v14222
    %v14359 = vpack.c.b16 %v14225, %v14223
    %v14360 = vpack.c.b16 %v14228, %v14226
    %v14361 = vpack.c.b16 %v14229, %v14227
    %v14362 = vpack.c.b16 %v14232, %v14230
    %v14363 = vpack.c.b16 %v14233, %v14231
    %v14364 = vpack.c.b16 %v14236, %v14234
    %v14365 = vpack.c.b16 %v14237, %v14235
    %v14366 = vpack.c.b16 %v14240, %v14238
    %v14367 = vpack.c.b16 %v14241, %v14239
    %v14368 = vpack.c.b16 %v14244, %v14242
    %v14369 = vpack.c.b16 %v14245, %v14243
    %v14370 = vpack.c.b16 %v14248, %v14246
    %v14371 = vpack.c.b16 %v14249, %v14247
    %v14372 = vpack.c.b16 %v14252, %v14250
    %v14373 = vpack.c.b16 %v14253, %v14251
    %v14374 = vpack.c.b16 %v14256, %v14254
    %v14375 = vpack.c.b16 %v14257, %v14255
    %v14376 = vpack.c.b16 %v14260, %v14258
    %v14377 = vpack.c.b16 %v14261, %v14259
    %v14378 = vpack.c.b16 %v14264, %v14262
    %v14379 = vpack.c.b16 %v14265, %v14263
    %v14380 = vpack.c.b16 %v14268, %v14266
    %v14381 = vpack.c.b16 %v14269, %v14267
    %v14382 = vpack.c.b16 %v14272, %v14270
    %v14383 = vpack.c.b16 %v14273, %v14271
    %v14384 = vpack.c.b16 %v14276, %v14274
    %v14385 = vpack.c.b16 %v14277, %v14275
    %14494 = vmatprep.subr.bf16.mxu0 %v14293
    %14495 = vmatpush1.bf16.msra.mxu0 %v14292
    %14496 = vmatprep.subr.bf16.mxu0 %v14291
    %14497 = vmatpush1.bf16.msra.mxu0 %v14290
    %14498 = vmatprep.subr.bf16.mxu0 %v14289
    %14499 = vmatpush1.bf16.msra.mxu0 %v14288
    %14500 = vmatprep.subr.bf16.mxu0 %v14287
    %14501 = vmatpush1.bf16.msra.mxu0 %v14286
    %14502 = vmatprep.subr.bf16.mxu0 %v14285
    %14503 = vmatpush1.bf16.msra.mxu0 %v14284
    %14504 = vmatprep.subr.bf16.mxu0 %v14283
    %14505 = vmatpush1.bf16.msra.mxu0 %v14282
    %14506 = vmatprep.subr.bf16.mxu0 %v14281
    %14507 = vmatpush1.bf16.msra.mxu0 %v14280
    %14508 = vmatprep.subr.bf16.mxu0 %v14279
    %14509 = vmatpush1.bf16.msra.mxu0 %v14278
    %14510 = vmatprep.subr.bf16.mxu0 %v14309
    %14511 = vmatpush2.bf16.msra.mxu0 %v14308
    %14512 = vmatprep.subr.bf16.mxu0 %v14307
    %14513 = vmatpush2.bf16.msra.mxu0 %v14306
    %14514 = vmatprep.subr.bf16.mxu0 %v14305
    %14515 = vmatpush2.bf16.msra.mxu0 %v14304
    %14516 = vmatprep.subr.bf16.mxu0 %v14303
    %14517 = vmatpush2.bf16.msra.mxu0 %v14302
    %14518 = vmatprep.subr.bf16.mxu0 %v14301
    %14519 = vmatpush2.bf16.msra.mxu0 %v14300
    %14520 = vmatprep.subr.bf16.mxu0 %v14299
    %14521 = vmatpush2.bf16.msra.mxu0 %v14298
    %14522 = vmatprep.subr.bf16.mxu0 %v14297
    %14523 = vmatpush2.bf16.msra.mxu0 %v14296
    %14524 = vmatprep.subr.bf16.mxu0 %v14295
    %14525 = vmatpush2.bf16.msra.mxu0 %v14294
    %14526 = vmatprep.mubr.bf16.mxu0 %v11393
    %14527 = vmatmul.mubr.bf16.gmra.mxu0 %v11392
    %v14528 = vpop.f32.mrf.mxu0
    %v14529 = vadd.f32 0.0, %v14528
    %v14530 = vpop.f32.mrf.mxu0
    %v14531 = vadd.f32 0.0, %v14530
    %v14532 = vpop.f32.mrf.mxu0
    %v14533 = vpop.f32.mrf.mxu0
    %14534 = vdwg.mxu0
    %14535 = vmatprep.subr.bf16.mxu0 %v14325
    %14536 = vmatpush1.bf16.msra.mxu0 %v14324
    %14537 = vmatprep.subr.bf16.mxu0 %v14323
    %14538 = vmatpush1.bf16.msra.mxu0 %v14322
    %14539 = vmatprep.subr.bf16.mxu0 %v14321
    %14540 = vmatpush1.bf16.msra.mxu0 %v14320
    %14541 = vmatprep.subr.bf16.mxu0 %v14319
    %14542 = vmatpush1.bf16.msra.mxu0 %v14318
    %14543 = vmatprep.subr.bf16.mxu0 %v14317
    %14544 = vmatpush1.bf16.msra.mxu0 %v14316
    %14545 = vmatprep.subr.bf16.mxu0 %v14315
    %14546 = vmatpush1.bf16.msra.mxu0 %v14314
    %14547 = vmatprep.subr.bf16.mxu0 %v14313
    %14548 = vmatpush1.bf16.msra.mxu0 %v14312
    %14549 = vmatprep.subr.bf16.mxu0 %v14311
    %14550 = vmatpush1.bf16.msra.mxu0 %v14310
    %14551 = vmatprep.subr.bf16.mxu0 %v14341
    %14552 = vmatpush2.bf16.msra.mxu0 %v14340
    %14553 = vmatprep.subr.bf16.mxu0 %v14339
    %14554 = vmatpush2.bf16.msra.mxu0 %v14338
    %14555 = vmatprep.subr.bf16.mxu0 %v14337
    %14556 = vmatpush2.bf16.msra.mxu0 %v14336
    %14557 = vmatprep.subr.bf16.mxu0 %v14335
    %14558 = vmatpush2.bf16.msra.mxu0 %v14334
    %14559 = vmatprep.subr.bf16.mxu0 %v14333
    %14560 = vmatpush2.bf16.msra.mxu0 %v14332
    %14561 = vmatprep.subr.bf16.mxu0 %v14331
    %14562 = vmatpush2.bf16.msra.mxu0 %v14330
    %14563 = vmatprep.subr.bf16.mxu0 %v14329
    %14564 = vmatpush2.bf16.msra.mxu0 %v14328
    %14565 = vmatprep.subr.bf16.mxu0 %v14327
    %14566 = vmatpush2.bf16.msra.mxu0 %v14326
    %14567 = vmatprep.mubr.bf16.mxu0 %v11395
    %14568 = vmatmul.mubr.bf16.gmra.mxu0 %v11394
    %v14569 = vpop.f32.mrf.mxu0
    %v14570 = vadd.f32 %v14529, %v14569
    %v14571 = vpop.f32.mrf.mxu0
    %v14572 = vadd.f32 %v14531, %v14571
    %v14573 = vpop.f32.mrf.mxu0
    %v14574 = vpop.f32.mrf.mxu0
    %14575 = vdwg.mxu0
    %14576 = vmatprep.subr.bf16.mxu0 %v14357
    %14577 = vmatpush1.bf16.msra.mxu0 %v14356
    %14578 = vmatprep.subr.bf16.mxu0 %v14355
    %14579 = vmatpush1.bf16.msra.mxu0 %v14354
    %14580 = vmatprep.subr.bf16.mxu0 %v14353
    %14581 = vmatpush1.bf16.msra.mxu0 %v14352
    %14582 = vmatprep.subr.bf16.mxu0 %v14351
    %14583 = vmatpush1.bf16.msra.mxu0 %v14350
    %14584 = vmatprep.subr.bf16.mxu0 %v14349
    %14585 = vmatpush1.bf16.msra.mxu0 %v14348
    %14586 = vmatprep.subr.bf16.mxu0 %v14347
    %14587 = vmatpush1.bf16.msra.mxu0 %v14346
    %14588 = vmatprep.subr.bf16.mxu0 %v14345
    %14589 = vmatpush1.bf16.msra.mxu0 %v14344
    %14590 = vmatprep.subr.bf16.mxu0 %v14343
    %14591 = vmatpush1.bf16.msra.mxu0 %v14342
    %14592 = vmatprep.subr.bf16.mxu0 %v14373
    %14593 = vmatpush2.bf16.msra.mxu0 %v14372
    %14594 = vmatprep.subr.bf16.mxu0 %v14371
    %14595 = vmatpush2.bf16.msra.mxu0 %v14370
    %14596 = vmatprep.subr.bf16.mxu0 %v14369
    %14597 = vmatpush2.bf16.msra.mxu0 %v14368
    %14598 = vmatprep.subr.bf16.mxu0 %v14367
    %14599 = vmatpush2.bf16.msra.mxu0 %v14366
    %14600 = vmatprep.subr.bf16.mxu0 %v14365
    %14601 = vmatpush2.bf16.msra.mxu0 %v14364
    %14602 = vmatprep.subr.bf16.mxu0 %v14363
    %14603 = vmatpush2.bf16.msra.mxu0 %v14362
    %14604 = vmatprep.subr.bf16.mxu0 %v14361
    %14605 = vmatpush2.bf16.msra.mxu0 %v14360
    %14606 = vmatprep.subr.bf16.mxu0 %v14359
    %14607 = vmatpush2.bf16.msra.mxu0 %v14358
    %14608 = vmatprep.mubr.bf16.mxu0 %v11397
    %14609 = vmatmul.mubr.bf16.gmra.mxu0 %v11396
    %v14610 = vpop.f32.mrf.mxu0
    %v14611 = vadd.f32 %v14570, %v14610
    %v14612 = vpop.f32.mrf.mxu0
    %v14613 = vadd.f32 %v14572, %v14612
    %v14614 = vpop.f32.mrf.mxu0
    %v14615 = vpop.f32.mrf.mxu0
    %14616 = vdwg.mxu0
    %14617 = vmatprep.subr.bf16.mxu0 0
    %14618 = vmatpush1.bf16.msra.mxu0 0
    %14619 = vmatprep.subr.bf16.mxu0 0
    %14620 = vmatpush1.bf16.msra.mxu0 0
    %14621 = vmatprep.subr.bf16.mxu0 %v14385
    %14622 = vmatpush1.bf16.msra.mxu0 %v14384
    %14623 = vmatprep.subr.bf16.mxu0 %v14383
    %14624 = vmatpush1.bf16.msra.mxu0 %v14382
    %14625 = vmatprep.subr.bf16.mxu0 %v14381
    %14626 = vmatpush1.bf16.msra.mxu0 %v14380
    %14627 = vmatprep.subr.bf16.mxu0 %v14379
    %14628 = vmatpush1.bf16.msra.mxu0 %v14378
    %14629 = vmatprep.subr.bf16.mxu0 %v14377
    %14630 = vmatpush1.bf16.msra.mxu0 %v14376
    %14631 = vmatprep.subr.bf16.mxu0 %v14375
    %14632 = vmatpush1.bf16.msra.mxu0 %v14374
    %14633 = vmatprep.subr.bf16.mxu0 0
    %14634 = vmatpush2.bf16.msra.mxu0 0
    %14635 = vmatprep.subr.bf16.mxu0 0
    %14636 = vmatpush2.bf16.msra.mxu0 0
    %14637 = vmatprep.subr.bf16.mxu0 0
    %14638 = vmatpush2.bf16.msra.mxu0 0
    %14639 = vmatprep.subr.bf16.mxu0 0
    %14640 = vmatpush2.bf16.msra.mxu0 0
    %14641 = vmatprep.subr.bf16.mxu0 0
    %14642 = vmatpush2.bf16.msra.mxu0 0
    %14643 = vmatprep.subr.bf16.mxu0 0
    %14644 = vmatpush2.bf16.msra.mxu0 0
    %14645 = vmatprep.subr.bf16.mxu0 0
    %14646 = vmatpush2.bf16.msra.mxu0 0
    %14647 = vmatprep.subr.bf16.mxu0 0
    %14648 = vmatpush2.bf16.msra.mxu0 0
    %14649 = vmatprep.mubr.bf16.mxu0 0
    %14650 = vmatmul.mubr.bf16.gmra.mxu0 %v12049
    %v14651 = vpop.f32.mrf.mxu0
    %v14652 = vadd.f32 %v14611, %v14651
    %v14653 = vpop.f32.mrf.mxu0
    %v14654 = vadd.f32 %v14613, %v14653
    %v14655 = vpop.f32.mrf.mxu0
    %v14656 = vpop.f32.mrf.mxu0
    %14657 = vdwg.mxu0
    %v14658 = vmax.f32 %v13843, %v14652
    %v14659 = vmax.f32 %v13844, %v14654
    %v14660 = vld [vmem:[%s4] sm:$0x3]
    %v14662 = vlaneseq
    %v14663 = vshrl.u32 %v14662, 7
    %v14664 = vsub.s32 0, %v14663
    %v14665 = vrot.slane %v14660, %v14664
    %v14666 = vlaneseq
    %v14667 = vshrl.u32 %v14666, 7
    %v14668 = vsub.s32 1, %v14667
    %v14669 = vrot.slane %v14660, %v14668
    %v14672 = vadd.f32 %v14658, %v14665
    %v14673 = vadd.f32 %v14659, %v14669
    %v14674 = vmax.f32 %v14672, 0.0
    %v14675 = vmax.f32 %v14673, 0.0
    %v14676 = vpack.c.bf16 %v14674, %v14674
    %v14677 = vpack.c.bf16 %v14675, %v14675
    %v14678 = vld [vmem:[%s5] sm:$0xf]
    %v14679 = vld [vmem:[%s5 + $0x4] sm:$0xf]
    %v14680 = vld [vmem:[%s5 + $0x8] sm:$0xf]
    %v14681 = vld [vmem:[%s5 + $0xc] sm:$0xf]
    %v14682 = vld [vmem:[%s5 + $0x10] sm:$0xf]
    %v14683 = vld [vmem:[%s5 + $0x14] sm:$0xf]
    %v14684 = vld [vmem:[%s5 + $0x18] sm:$0xf]
    %v14685 = vld [vmem:[%s5 + $0x1c] sm:$0xf]
    %v14686 = vld [vmem:[%s5 + $0x20] sm:$0xf]
    %v14687 = vld [vmem:[%s5 + $0x24] sm:$0xf]
    %v14688 = vld [vmem:[%s5 + $0x28] sm:$0xf]
    %v14689 = vld [vmem:[%s5 + $0x2c] sm:$0xf]
    %v14690 = vld [vmem:[%s5 + $0x30] sm:$0xf]
    %v14691 = vld [vmem:[%s5 + $0x34] sm:$0xf]
    %v14692 = vld [vmem:[%s5 + $0x38] sm:$0xf]
    %v14693 = vld [vmem:[%s5 + $0x3c] sm:$0xf]
    %v14694 = vld [vmem:[%s5 + $0x40] sm:$0xf]
    %v14695 = vld [vmem:[%s5 + $0x44] sm:$0xf]
    %v14696 = vld [vmem:[%s5 + $0x48] sm:$0xf]
    %v14697 = vld [vmem:[%s5 + $0x4c] sm:$0xf]
    %v14698 = vld [vmem:[%s5 + $0x50] sm:$0xf]
    %v14699 = vld [vmem:[%s5 + $0x54] sm:$0xf]
    %v14700 = vld [vmem:[%s5 + $0x58] sm:$0xf]
    %v14701 = vld [vmem:[%s5 + $0x5c] sm:$0xf]
    %v14702 = vld [vmem:[%s6] sm:$0x1]
    %v14704 = vlaneseq
    %v14705 = vshrl.u32 %v14704, 7
    %v14706 = vsub.s32 0, %v14705
    %v14707 = vrot.slane %v14702, %v14706
    %v14733 = vunpack.c.l.b16 %v14678
    %v14734 = vunpack.c.l.b16 %v14679
    %v14735 = vunpack.c.l.b16 %v14680
    %v14736 = vunpack.c.l.b16 %v14681
    %v14737 = vunpack.c.l.b16 %v14682
    %v14738 = vunpack.c.l.b16 %v14683
    %v14739 = vunpack.c.l.b16 %v14684
    %v14740 = vunpack.c.l.b16 %v14685
    %v14741 = vunpack.c.l.b16 %v14686
    %v14742 = vunpack.c.l.b16 %v14687
    %v14743 = vunpack.c.l.b16 %v14688
    %v14744 = vunpack.c.l.b16 %v14689
    %v14745 = vunpack.c.l.b16 %v14690
    %v14746 = vunpack.c.l.b16 %v14691
    %v14747 = vunpack.c.l.b16 %v14692
    %v14748 = vunpack.c.l.b16 %v14693
    %v14749 = vunpack.c.l.b16 %v14694
    %v14750 = vunpack.c.l.b16 %v14695
    %v14751 = vunpack.c.l.b16 %v14696
    %v14752 = vunpack.c.l.b16 %v14697
    %v14753 = vunpack.c.l.b16 %v14698
    %v14754 = vunpack.c.l.b16 %v14699
    %v14755 = vunpack.c.l.b16 %v14700
    %v14756 = vunpack.c.l.b16 %v14701
    %v14757 = vpack.c.b16 %v14734, %v14733
    %v14758 = vpack.c.b16 %v14736, %v14735
    %v14759 = vpack.c.b16 %v14738, %v14737
    %v14760 = vpack.c.b16 %v14740, %v14739
    %v14761 = vpack.c.b16 %v14742, %v14741
    %v14762 = vpack.c.b16 %v14744, %v14743
    %v14763 = vpack.c.b16 %v14746, %v14745
    %v14764 = vpack.c.b16 %v14748, %v14747
    %v14765 = vpack.c.b16 %v14750, %v14749
    %v14766 = vpack.c.b16 %v14752, %v14751
    %v14767 = vpack.c.b16 %v14754, %v14753
    %v14768 = vpack.c.b16 %v14756, %v14755
    %vm14781 = vcmask 523264
    %v14783 = vsel %vm14781, %v14677, 0
    %14785 = vmatprep.subr.bf16.mxu0 0
    %14786 = vmatpush1.bf16.msra.mxu0 %v14764
    %14787 = vmatprep.subr.bf16.mxu0 0
    %14788 = vmatpush1.bf16.msra.mxu0 %v14763
    %14789 = vmatprep.subr.bf16.mxu0 0
    %14790 = vmatpush1.bf16.msra.mxu0 %v14762
    %14791 = vmatprep.subr.bf16.mxu0 0
    %14792 = vmatpush1.bf16.msra.mxu0 %v14761
    %14793 = vmatprep.subr.bf16.mxu0 0
    %14794 = vmatpush1.bf16.msra.mxu0 %v14760
    %14795 = vmatprep.subr.bf16.mxu0 0
    %14796 = vmatpush1.bf16.msra.mxu0 %v14759
    %14797 = vmatprep.subr.bf16.mxu0 0
    %14798 = vmatpush1.bf16.msra.mxu0 %v14758
    %14799 = vmatprep.subr.bf16.mxu0 0
    %14800 = vmatpush1.bf16.msra.mxu0 %v14757
    %14801 = vmatprep.subr.bf16.mxu0 0
    %14802 = vmatpush2.bf16.msra.mxu0 0
    %14803 = vmatprep.subr.bf16.mxu0 0
    %14804 = vmatpush2.bf16.msra.mxu0 0
    %14805 = vmatprep.subr.bf16.mxu0 0
    %14806 = vmatpush2.bf16.msra.mxu0 0
    %14807 = vmatprep.subr.bf16.mxu0 0
    %14808 = vmatpush2.bf16.msra.mxu0 0
    %14809 = vmatprep.subr.bf16.mxu0 0
    %14810 = vmatpush2.bf16.msra.mxu0 %v14768
    %14811 = vmatprep.subr.bf16.mxu0 0
    %14812 = vmatpush2.bf16.msra.mxu0 %v14767
    %14813 = vmatprep.subr.bf16.mxu0 0
    %14814 = vmatpush2.bf16.msra.mxu0 %v14766
    %14815 = vmatprep.subr.bf16.mxu0 0
    %14816 = vmatpush2.bf16.msra.mxu0 %v14765
    %14817 = vmatprep.mubr.bf16.mxu0 %v14783
    %14818 = vmatmul.mubr.bf16.gmra.mxu0 %v14676
    %v14819 = vpop.f32.mrf.mxu0
    %v14820 = vadd.f32 %v14707, %v14819
    %v14821 = vpop.f32.mrf.mxu0
    %v14822 = vpop.f32.mrf.mxu0
    %v14823 = vpop.f32.mrf.mxu0
    %14824 = vdwg.mxu0
    %v14825 = vmax.f32 %v14820, 0.0
    %v14826 = vpack.c.bf16 %v14825, %v14825
    %v14827 = vld [vmem:[%s7] sm:$0xf]
    %v14828 = vld [vmem:[%s7 + $0x4] sm:$0xf]
    %v14829 = vld [vmem:[%s7 + $0x8] sm:$0xf]
    %v14830 = vld [vmem:[%s7 + $0xc] sm:$0xf]
    %v14831 = vld [vmem:[%s7 + $0x10] sm:$0xf]
    %v14832 = vld [vmem:[%s7 + $0x14] sm:$0xf]
    %v14833 = vld [vmem:[%s7 + $0x18] sm:$0xf]
    %v14834 = vld [vmem:[%s7 + $0x1c] sm:$0xf]
    %v14835 = vld [vmem:[%s7 + $0x20] sm:$0xf]
    %v14836 = vld [vmem:[%s7 + $0x24] sm:$0xf]
    %v14837 = vld [vmem:[%s7 + $0x28] sm:$0xf]
    %v14838 = vld [vmem:[%s7 + $0x2c] sm:$0xf]
    %v14839 = vld [vmem:[%s7 + $0x30] sm:$0xf]
    %v14840 = vld [vmem:[%s7 + $0x34] sm:$0xf]
    %v14841 = vld [vmem:[%s7 + $0x38] sm:$0xf]
    %v14842 = vld [vmem:[%s8] sm:$0x1]
    %v14844 = vlaneseq
    %v14845 = vshrl.u32 %v14844, 7
    %v14846 = vsub.s32 0, %v14845
    %v14847 = vrot.slane %v14842, %v14846
    %v14864 = vunpack.c.l.b16 %v14827
    %v14865 = vunpack.c.l.b16 %v14828
    %v14866 = vunpack.c.l.b16 %v14829
    %v14867 = vunpack.c.l.b16 %v14830
    %v14868 = vunpack.c.l.b16 %v14831
    %v14869 = vunpack.c.l.b16 %v14832
    %v14870 = vunpack.c.l.b16 %v14833
    %v14871 = vunpack.c.l.b16 %v14834
    %v14872 = vunpack.c.l.b16 %v14835
    %v14873 = vunpack.c.l.b16 %v14836
    %v14874 = vunpack.c.l.b16 %v14837
    %v14875 = vunpack.c.l.b16 %v14838
    %v14876 = vunpack.c.l.b16 %v14839
    %v14877 = vunpack.c.l.b16 %v14840
    %v14878 = vunpack.c.l.b16 %v14841
    %v14879 = vpack.c.b16 %v14865, %v14864
    %v14880 = vpack.c.b16 %v14867, %v14866
    %v14881 = vpack.c.b16 %v14869, %v14868
    %v14882 = vpack.c.b16 %v14871, %v14870
    %v14883 = vpack.c.b16 %v14873, %v14872
    %v14884 = vpack.c.b16 %v14875, %v14874
    %v14885 = vpack.c.b16 %v14877, %v14876
    %v14886 = vpack.c.b16 %v14878, %v14878
    %vm14894 = vcmask 982016
    %v14896 = vsel %vm14894, %v14826, 0
    %vm14898 = vcmask 1043456
    %v14900 = vsel %vm14898, %v14886, 0
    %14902 = vmatprep.subr.bf16.mxu0 0
    %14903 = vmatpush1.bf16.msra.mxu0 %v14900
    %14904 = vmatprep.subr.bf16.mxu0 0
    %14905 = vmatpush1.bf16.msra.mxu0 %v14885
    %14906 = vmatprep.subr.bf16.mxu0 0
    %14907 = vmatpush1.bf16.msra.mxu0 %v14884
    %14908 = vmatprep.subr.bf16.mxu0 0
    %14909 = vmatpush1.bf16.msra.mxu0 %v14883
    %14910 = vmatprep.subr.bf16.mxu0 0
    %14911 = vmatpush1.bf16.msra.mxu0 %v14882
    %14912 = vmatprep.subr.bf16.mxu0 0
    %14913 = vmatpush1.bf16.msra.mxu0 %v14881
    %14914 = vmatprep.subr.bf16.mxu0 0
    %14915 = vmatpush1.bf16.msra.mxu0 %v14880
    %14916 = vmatprep.subr.bf16.mxu0 0
    %14917 = vmatpush1.bf16.msra.mxu0 %v14879
    %14918 = vmatprep.subr.bf16.mxu0 0
    %14919 = vmatpush2.bf16.msra.mxu0 0
    %14920 = vmatprep.subr.bf16.mxu0 0
    %14921 = vmatpush2.bf16.msra.mxu0 0
    %14922 = vmatprep.subr.bf16.mxu0 0
    %14923 = vmatpush2.bf16.msra.mxu0 0
    %14924 = vmatprep.subr.bf16.mxu0 0
    %14925 = vmatpush2.bf16.msra.mxu0 0
    %14926 = vmatprep.subr.bf16.mxu0 0
    %14927 = vmatpush2.bf16.msra.mxu0 0
    %14928 = vmatprep.subr.bf16.mxu0 0
    %14929 = vmatpush2.bf16.msra.mxu0 0
    %14930 = vmatprep.subr.bf16.mxu0 0
    %14931 = vmatpush2.bf16.msra.mxu0 0
    %14932 = vmatprep.subr.bf16.mxu0 0
    %14933 = vmatpush2.bf16.msra.mxu0 0
    %14934 = vmatprep.mubr.bf16.mxu0 0
    %14935 = vmatmul.mubr.bf16.gmra.mxu0 %v14896
    %v14936 = vpop.f32.mrf.mxu0
    %v14937 = vadd.f32 %v14847, %v14936
    %v14938 = vpop.f32.mrf.mxu0
    %v14939 = vpop.f32.mrf.mxu0
    %v14940 = vpop.f32.mrf.mxu0
    %14941 = vdwg.mxu0
    %v14942 = vmax.f32 %v14937, 0.0
    %v14943 = vpack.c.bf16 %v14942, %v14942
    %v14944 = vld [vmem:[%s9] sm:$0xf]
    %v14945 = vld [vmem:[%s9 + $0x4] sm:$0xf]
    %v14946 = vld [vmem:[%s9 + $0x8] sm:$0xf]
    %v14947 = vld [vmem:[%s9 + $0xc] sm:$0xf]
    %v14948 = vld [vmem:[%s9 + $0x10] sm:$0xf]
    %v14949 = vld [vmem:[%s9 + $0x14] sm:$0xf]
    %v14950 = vld [vmem:[%s9 + $0x18] sm:$0xf]
    %v14951 = vld [vmem:[%s9 + $0x1c] sm:$0x3]
    %v14952 = vld [vmem:[%s10] sm:$0x1]
    %v14954 = vlaneseq
    %v14955 = vshrl.u32 %v14954, 7
    %v14956 = vsub.s32 0, %v14955
    %v14957 = vrot.slane %v14952, %v14956
    %v14967 = vunpack.c.l.b16 %v14944
    %v14968 = vunpack.c.l.b16 %v14945
    %v14969 = vunpack.c.l.b16 %v14946
    %v14970 = vunpack.c.l.b16 %v14947
    %v14971 = vunpack.c.l.b16 %v14948
    %v14972 = vunpack.c.l.b16 %v14949
    %v14973 = vunpack.c.l.b16 %v14950
    %v14974 = vunpack.c.l.b16 %v14951
    %v14975 = vpack.c.b16 %v14968, %v14967
    %v14976 = vpack.c.b16 %v14970, %v14969
    %v14977 = vpack.c.b16 %v14972, %v14971
    %v14978 = vpack.c.b16 %v14974, %v14973
    %vm14982 = vcmask 490496
    %v14984 = vsel %vm14982, %v14943, 0
    %vm14986 = vcmask 1045504
    %v14988 = vsel %vm14986, %v14978, 0
    %14990 = vmatprep.subr.bf16.mxu0 0
    %14991 = vmatpush1.bf16.msra.mxu0 0
    %14992 = vmatprep.subr.bf16.mxu0 0
    %14993 = vmatpush1.bf16.msra.mxu0 0
    %14994 = vmatprep.subr.bf16.mxu0 0
    %14995 = vmatpush1.bf16.msra.mxu0 0
    %14996 = vmatprep.subr.bf16.mxu0 0
    %14997 = vmatpush1.bf16.msra.mxu0 0
    %14998 = vmatprep.subr.bf16.mxu0 0
    %14999 = vmatpush1.bf16.msra.mxu0 %v14988
    %15000 = vmatprep.subr.bf16.mxu0 0
    %15001 = vmatpush1.bf16.msra.mxu0 %v14977
    %15002 = vmatprep.subr.bf16.mxu0 0
    %15003 = vmatpush1.bf16.msra.mxu0 %v14976
    %15004 = vmatprep.subr.bf16.mxu0 0
    %15005 = vmatpush1.bf16.msra.mxu0 %v14975
    %15006 = vmatprep.subr.bf16.mxu0 0
    %15007 = vmatpush2.bf16.msra.mxu0 0
    %15008 = vmatprep.subr.bf16.mxu0 0
    %15009 = vmatpush2.bf16.msra.mxu0 0
    %15010 = vmatprep.subr.bf16.mxu0 0
    %15011 = vmatpush2.bf16.msra.mxu0 0
    %15012 = vmatprep.subr.bf16.mxu0 0
    %15013 = vmatpush2.bf16.msra.mxu0 0
    %15014 = vmatprep.subr.bf16.mxu0 0
    %15015 = vmatpush2.bf16.msra.mxu0 0
    %15016 = vmatprep.subr.bf16.mxu0 0
    %15017 = vmatpush2.bf16.msra.mxu0 0
    %15018 = vmatprep.subr.bf16.mxu0 0
    %15019 = vmatpush2.bf16.msra.mxu0 0
    %15020 = vmatprep.subr.bf16.mxu0 0
    %15021 = vmatpush2.bf16.msra.mxu0 0
    %15022 = vmatprep.mubr.bf16.mxu0 0
    %15023 = vmatmul.mubr.bf16.gmra.mxu0 %v14984
    %v15024 = vpop.f32.mrf.mxu0
    %v15025 = vadd.f32 %v14957, %v15024
    %v15026 = vpop.f32.mrf.mxu0
    %v15027 = vpop.f32.mrf.mxu0
    %v15028 = vpop.f32.mrf.mxu0
    %15029 = vdwg.mxu0
    %15030 = vst [vmem:[%s11] sm:$0xff] %v15025
    // Predicated region
    $region50: #{network_forward.1} parent=1 // pred_check
      _
    $region51: #{network_forward.1} parent=1 // pred_check_branch
      %15032 = sbr.rel (0) target = $region53
    $region52: #{network_forward.1} parent=1 // pred_region
      _
    $region53: #{network_forward.1} parent=1 // pred_fallthru
      _
    // Predicated region
    $region54: #{network_forward.1} parent=1 // pred_check
      _
    $region55: #{network_forward.1} parent=1 // pred_check_branch
      %15034 = sbr.rel (0) target = $region57
    $region56: #{network_forward.1} parent=1 // pred_region
      _
    $region57: #{network_forward.1} parent=1 // pred_fallthru
      _
    %15035 = vsyncpa [#allocation3], 1

</llo_original>
